<compile_context>
chip_gen: v7x
topology: tpu7x:2x2x1
jax: 0.10.0
libtpu: 0.0.40
codegen_flags: <defaults>
</compile_context>

<pallas_src>
import math

import jax
import jax.numpy as jnp
from jax.experimental import pallas as pl
from jax.experimental.pallas import tpu as pltpu

BN_EPS = 1e-5
LRELU_SLOPE = 0.2


def _round_up(x, m):
    return (x + m - 1) // m * m


def _nbytes(shape, dtype):
    return math.prod(shape) * jnp.dtype(dtype).itemsize


def _vmem_limit(nbytes):
    # Caller already counts pipelined operands double-buffered (incl. the
    # grid-invariant weights); add headroom for Mosaic-internal accumulators /
    # relayout temporaries and cap well below v7x's 64 MiB physical VMEM.
    return int(min(max(nbytes + (8 << 20), 16 << 20), 48 << 20))


def _lrelu(x):
    return jnp.where(x >= 0.0, x, LRELU_SLOPE * x)


# ------------------------------ Pallas kernels ------------------------------ #
def _conv12_kernel(p1_ref, w1_ref, sh1_ref, w2_ref, sh2_ref, y2_ref, z1_ref):
    """conv1(+bias)+lrelu fused with conv2(+folded BN)+lrelu for one batch tile.

    p1_ref : (B, 256, K1)      bf16  conv1 im2col rows, grouped by output parity
    w1_ref : (K1, C1p)         bf16
    sh1_ref: (1, C1p)          f32
    w2_ref : (16, C1p, C2p)    bf16  one (Cin,Cout) slab per conv2 tap (ki,kj)
    sh2_ref: (1, C2p)          f32
    y2_ref : (B, 64, C2p)      bf16  conv2 activations, row = oh2*8 + ow2
    z1_ref : (B, 4, 9, 9, C1p) bf16  parity-decomposed, padded conv1 activations
    """
    b = p1_ref.shape[0]
    k1 = p1_ref.shape[2]
    c1p = w1_ref.shape[1]
    c2p = w2_ref.shape[2]

    # ---- conv1 -> leaky_relu, written straight into conv2's s2d layout ----
    y1 = jnp.dot(p1_ref[...].reshape(b * 256, k1), w1_ref[...],
                 preferred_element_type=jnp.float32)
    y1 = _lrelu(y1 + sh1_ref[...])
    y1 = y1.astype(z1_ref.dtype).reshape(b, 4, 8, 8, c1p)

    z1_ref[...] = jnp.zeros(z1_ref.shape, z1_ref.dtype)   # border zeros = conv2 pad
    for p in range(2):            # parity of the padded conv1 row index
        a0 = 1 - p
        for q in range(2):        # parity of the padded conv1 col index
            b0 = 1 - q
            g = p * 2 + q
            z1_ref[:, g:g + 1, a0:a0 + 8, b0:b0 + 8, :] = y1[:, g:g + 1]

    # ---- conv2 (+folded BN) -> leaky_relu: 16 accumulated MXU matmuls ----
    acc = jnp.zeros((b * 64, c2p), jnp.float32)
    for ki in range(4):
        p, u = ki % 2, ki // 2
        for kj in range(4):
            q, v = kj % 2, kj // 2
            g = p * 2 + q
            lhs = z1_ref[:, g:g + 1, u:u + 8, v:v + 8, :].reshape(b * 64, c1p)
            acc = acc + jnp.dot(lhs, w2_ref[ki * 4 + kj],
                                preferred_element_type=jnp.float32)
    acc = _lrelu(acc + sh2_ref[...])
    y2_ref[...] = acc.reshape(b, 64, c2p).astype(y2_ref.dtype)


def _conv34_kernel(z2_ref, w3_ref, sh3_ref, w4_ref, b4_ref, o_ref):
    """conv3(+folded BN)+lrelu fused with conv4(4x4 valid)+sigmoid, one batch tile.

    z2_ref : (B, 4, 5, 5, C2p) bf16  parity-decomposed, padded conv2 activations
    w3_ref : (16, C2p, C3p)    bf16
    sh3_ref: (1, C3p)          f32
    w4_ref : (16, C3p)         f32   conv4 weight, row = oh3*4 + ow3
    b4_ref : (1, 1)            f32
    o_ref  : (B, 1)            f32
    """
    b = z2_ref.shape[0]
    c2p = z2_ref.shape[4]
    c3p = w3_ref.shape[2]

    acc = jnp.zeros((b * 16, c3p), jnp.float32)
    for ki in range(4):
        p, u = ki % 2, ki // 2
        for kj in range(4):
            q, v = kj % 2, kj // 2
            g = p * 2 + q
            lhs = z2_ref[:, g:g + 1, u:u + 4, v:v + 4, :].reshape(b * 16, c2p)
            acc = acc + jnp.dot(lhs, w3_ref[ki * 4 + kj],
                                preferred_element_type=jnp.float32)
    y3 = _lrelu(acc + sh3_ref[...])                       # (B*16, C3p) f32

    # conv4: 4x4 kernel over the whole 4x4 map == per-image weighted sum.
    t = y3.reshape(b, 16, c3p) * w4_ref[...][None, :, :]
    s = jnp.sum(t, axis=2)                                # lane reduce    -> (B, 16)
    s = jnp.sum(s, axis=1, keepdims=True)                 # sublane reduce -> (B, 1)
    y4 = s + b4_ref[...]
    o_ref[...] = pl.reciprocal(1.0 + jnp.exp(-y4), approx=True)   # sigmoid (EUP)


# ------------------------------- glue (JAX) -------------------------------- #
def _conv1_patches(x_nchw):
    """NCHW input -> (N, 256, 16*Cin) bf16 conv1 im2col rows.

    Rows are grouped by the parity of the *padded* conv1-output position so the
    fused kernel can write conv1's activations straight into the space-to-depth
    layout conv2 consumes.  Cin is tiny (1-3), so this costs about the same HBM
    bytes as the raw input (no 4x im2col inflation).
    """
    n, cin, h, w = x_nchw.shape
    assert h == 32 and w == 32, "Discriminator expects 32x32 inputs (32->16->8->4->1)"
    x = jnp.transpose(x_nchw, (0, 2, 3, 1))                      # NHWC
    xp = jnp.pad(x, ((0, 0), (1, 1), (1, 1), (0, 0)))
    cols = []
    for ki in range(4):
        for kj in range(4):
            cols.append(xp[:, ki:ki + 32:2, kj:kj + 32:2, :])    # (N,16,16,Cin)
    p = jnp.stack(cols, axis=3).reshape(n, 16, 16, 16 * cin)     # rows = (oh1, ow1)
    groups = []
    for pr in range(2):
        for qc in range(2):
            groups.append(p[:, (1 - pr)::2, (1 - qc)::2, :])     # (N, 8, 8, 16*Cin)
    p = jnp.stack(groups, axis=1).reshape(n, 256, 16 * cin)
    return p.astype(jnp.bfloat16)


def _space_to_depth_act2(act2):
    """(N, 64, C2p) conv2 activations -> (N, 4, 5, 5, C2p) padded s2d layout."""
    n, _, c2p = act2.shape
    a = act2.reshape(n, 8, 8, c2p)
    a = jnp.pad(a, ((0, 0), (1, 1), (1, 1), (0, 0)))             # conv3's padding
    a = a.reshape(n, 5, 2, 5, 2, c2p)
    return jnp.transpose(a, (0, 2, 4, 1, 3, 5)).reshape(n, 4, 5, 5, c2p)


def _conv12_call(p1, prepped, b_tile):
    n_pad, _, k1 = p1.shape
    w1, sh1 = prepped["w1"], prepped["sh1"]
    w2, sh2 = prepped["w2"], prepped["sh2"]
    c1p, c2p = w1.shape[1], w2.shape[2]

    pipelined = (
        _nbytes((b_tile, 256, k1), jnp.bfloat16)
        + _nbytes(w1.shape, w1.dtype) + _nbytes(sh1.shape, sh1.dtype)
        + _nbytes(w2.shape, w2.dtype) + _nbytes(sh2.shape, sh2.dtype)
        + _nbytes((b_tile, 64, c2p), jnp.bfloat16))
    scratch = _nbytes((b_tile, 4, 9, 9, c1p), jnp.bfloat16)

    return pl.pallas_call(
        _conv12_kernel,
        out_shape=jax.ShapeDtypeStruct((n_pad, 64, c2p), jnp.bfloat16),
        grid_spec=pltpu.PrefetchScalarGridSpec(
            num_scalar_prefetch=0,
            grid=(n_pad // b_tile,),
            in_specs=[
                pl.BlockSpec((b_tile, 256, k1), lambda i: (i, 0, 0)),
                pl.BlockSpec(w1.shape, lambda i: (0, 0)),
                pl.BlockSpec(sh1.shape, lambda i: (0, 0)),
                pl.BlockSpec(w2.shape, lambda i: (0, 0, 0)),
                pl.BlockSpec(sh2.shape, lambda i: (0, 0)),
            ],
            out_specs=pl.BlockSpec((b_tile, 64, c2p), lambda i: (i, 0, 0)),
            scratch_shapes=[pltpu.VMEM((b_tile, 4, 9, 9, c1p), jnp.bfloat16)],
        ),
        compiler_params=pltpu.CompilerParams(
            dimension_semantics=("parallel",),
            vmem_limit_bytes=_vmem_limit(2 * pipelined + scratch)),
    )(p1, w1, sh1, w2, sh2)


def _conv34_call(z2, prepped, b_tile):
    n_pad = z2.shape[0]
    c2p = z2.shape[-1]
    w3, sh3 = prepped["w3"], prepped["sh3"]
    w4, b4 = prepped["w4"], prepped["b4"]

    pipelined = (
        _nbytes((b_tile, 4, 5, 5, c2p), jnp.bfloat16)
        + _nbytes(w3.shape, w3.dtype) + _nbytes(sh3.shape, sh3.dtype)
        + _nbytes(w4.shape, w4.dtype) + _nbytes(b4.shape, b4.dtype)
        + _nbytes((b_tile, 1), jnp.float32))

    return pl.pallas_call(
        _conv34_kernel,
        out_shape=jax.ShapeDtypeStruct((n_pad, 1), jnp.float32),
        grid_spec=pltpu.PrefetchScalarGridSpec(
            num_scalar_prefetch=0,
            grid=(n_pad // b_tile,),
            in_specs=[
                pl.BlockSpec((b_tile, 4, 5, 5, c2p), lambda i: (i, 0, 0, 0, 0)),
                pl.BlockSpec(w3.shape, lambda i: (0, 0, 0)),
                pl.BlockSpec(sh3.shape, lambda i: (0, 0)),
                pl.BlockSpec(w4.shape, lambda i: (0, 0)),
                pl.BlockSpec(b4.shape, lambda i: (0, 0)),
            ],
            out_specs=pl.BlockSpec((b_tile, 1), lambda i: (i, 0)),
        ),
        compiler_params=pltpu.CompilerParams(
            dimension_semantics=("parallel",),
            vmem_limit_bytes=_vmem_limit(2 * pipelined)),
    )(z2, w3, sh3, w4, b4)


# --------------------------- parameters & forward --------------------------- #
def init_params(key, d=16, channels=1, std=0.02):
    ks = jax.random.split(key, 4)

    def conv_w(k, cout, cin, kh=4, kw=4):
        return std * jax.random.normal(k, (cout, cin, kh, kw), jnp.float32)

    def bn(c):
        return dict(gamma=jnp.ones((c,), jnp.float32),
                    beta=jnp.zeros((c,), jnp.float32),
                    mean=jnp.zeros((c,), jnp.float32),
                    var=jnp.ones((c,), jnp.float32))

    return {
        "conv1_1_w": conv_w(ks[0], d // 2, channels),
        "conv1_1_b": jnp.zeros((d // 2,), jnp.float32),
        "conv2_w": conv_w(ks[1], d * 2, d // 2),
        "conv2_b": jnp.zeros((d * 2,), jnp.float32),
        "conv2_bn": bn(d * 2),
        "conv3_w": conv_w(ks[2], d * 4, d * 2),
        "conv3_b": jnp.zeros((d * 4,), jnp.float32),
        "conv3_bn": bn(d * 4),
        "conv4_w": conv_w(ks[3], 1, d * 4),
        "conv4_b": jnp.zeros((1,), jnp.float32),
    }


def _affine_from_bn(bias, bn):
    # eval-mode BN folded with the conv bias:
    #   bn(conv(x) + b) = conv(x)*s + (b*s + beta - mean*s)
    s = bn["gamma"] / jnp.sqrt(bn["var"] + BN_EPS)
    t = bn["beta"] - bn["mean"] * s + bias * s
    return s, t


def preprocess_params(params):
    """One-time parameter preprocessing (hoisted out of the per-step forward):
    transpose to matmul layout, fold conv bias + eval-mode BN scale, pad channels
    to multiples of 128 lanes and cast MXU operands to bf16."""
    c1, cin = params["conv1_1_w"].shape[:2]
    c2 = params["conv2_w"].shape[0]
    c3 = params["conv3_w"].shape[0]
    c1p, c2p, c3p = (_round_up(c, 128) for c in (c1, c2, c3))

    def per_tap(w, scale, cinp, coutp):
        # torch (Cout,Cin,4,4) -> (16, Cin_pad, Cout_pad), scale folded on Cout.
        cout, cin_, kh, kw = w.shape
        wt = jnp.transpose(w, (2, 3, 1, 0)).reshape(kh * kw, cin_, cout)
        wt = wt * scale[None, None, :]
        wt = jnp.pad(wt, ((0, 0), (0, cinp - cin_), (0, coutp - cout)))
        return wt.astype(jnp.bfloat16)

    def shift_row(shift, coutp):
        c = shift.shape[0]
        return jnp.pad(shift.astype(jnp.float32).reshape(1, c),
                       ((0, 0), (0, coutp - c)))

    s2, t2 = _affine_from_bn(params["conv2_b"], params["conv2_bn"])
    s3, t3 = _affine_from_bn(params["conv3_b"], params["conv3_bn"])

    w1 = jnp.transpose(params["conv1_1_w"], (2, 3, 1, 0)).reshape(16 * cin, c1)
    w1 = jnp.pad(w1, ((0, 0), (0, c1p - c1))).astype(jnp.bfloat16)

    w4 = jnp.transpose(params["conv4_w"][0], (1, 2, 0)).reshape(16, c3)
    w4 = jnp.pad(w4, ((0, 0), (0, c3p - c3))).astype(jnp.float32)

    return {
        "w1": w1, "sh1": shift_row(params["conv1_1_b"], c1p),
        "w2": per_tap(params["conv2_w"], s2, c1p, c2p), "sh2": shift_row(t2, c2p),
        "w3": per_tap(params["conv3_w"], s3, c2p, c3p), "sh3": shift_row(t3, c3p),
        "w4": w4,
        "b4": params["conv4_b"].astype(jnp.float32).reshape(1, 1),
    }


def discriminator_forward(prepped, x):
    """x: (N, channels, 32, 32) float32 NCHW -> (N, 1, 1, 1) float32."""
    n = x.shape[0]
    b_tile = 16 if n >= 32 else (8 if n >= 8 else n)
    n_pad = _round_up(n, b_tile)

    p1 = _conv1_patches(x)
    if n_pad != n:
        p1 = jnp.pad(p1, ((0, n_pad - n), (0, 0), (0, 0)))

    act2 = _conv12_call(p1, prepped, b_tile)          # (N_pad, 64, C2p) bf16
    z2 = _space_to_depth_act2(act2)                   # (N_pad, 4, 5, 5, C2p)
    out = _conv34_call(z2, prepped, b_tile)           # (N_pad, 1) f32
    return out[:n].reshape(n, 1, 1, 1)


# ------------------------------ pure-XLA reference --------------------------- #
def reference_forward(params, x):
    """f32 reference (eval-mode BN). Returns (post-conv2 activation NHWC, output)."""
    def conv(v, w, b, stride, pad):
        y = jax.lax.conv_general_dilated(
            v, w, (stride, stride), ((pad, pad), (pad, pad)),
            dimension_numbers=("NCHW", "OIHW", "NCHW"))
        return y + b.reshape(1, -1, 1, 1)

    def bn(y, p):
        s = p["gamma"] / jnp.sqrt(p["var"] + BN_EPS)
        return (y - p["mean"].reshape(1, -1, 1, 1)) * s.reshape(1, -1, 1, 1) \
            + p["beta"].reshape(1, -1, 1, 1)

    a1 = jax.nn.leaky_relu(conv(x, params["conv1_1_w"], params["conv1_1_b"], 2, 1),
                           LRELU_SLOPE)
    a2 = jax.nn.leaky_relu(bn(conv(a1, params["conv2_w"], params["conv2_b"], 2, 1),
                              params["conv2_bn"]), LRELU_SLOPE)
    a3 = jax.nn.leaky_relu(bn(conv(a2, params["conv3_w"], params["conv3_b"], 2, 1),
                              params["conv3_bn"]), LRELU_SLOPE)
    out = jax.nn.sigmoid(conv(a3, params["conv4_w"], params["conv4_b"], 1, 0))
    return jnp.transpose(a2, (0, 2, 3, 1)), out


if __name__ == "__main__":
    key = jax.random.PRNGKey(0)
    k_param, k_input = jax.random.split(key)

    d, channels, batch = 16, 1, 2                 # small test config (module default d=128)
    params = init_params(k_param, d=d, channels=channels, std=0.05)
    prepped = preprocess_params(params)           # one-time weight prep (hoisted)

    # DCGAN discriminator expects 32x32 inputs: 32 -> 16 -> 8 -> 4 -> 1
    x = jax.random.normal(k_input, (batch, channels, 32, 32), jnp.float32)

    fwd = jax.jit(discriminator_forward)
    out = jax.block_until_ready(fwd(prepped, x))

    assert out.shape == (batch, 1, 1, 1), out.shape
    assert bool(jnp.all(jnp.isfinite(out)))
    # approx reciprocal may land a hair outside [0,1]; allow tiny tolerance
    assert bool(jnp.all((out >= -1e-3) & (out <= 1.0 + 1e-3)))

    # self-check against a pure-XLA f32 reference (eval-mode BN)
    act2_ref, out_ref = reference_forward(params, x)
    act2 = _conv12_call(_conv1_patches(x), prepped, b_tile=batch)
    act2 = act2.reshape(batch, 8, 8, -1)[..., :params["conv2_w"].shape[0]]
    assert float(jnp.max(jnp.abs(act2.astype(jnp.float32) - act2_ref))) < 3e-2
    assert float(jnp.max(jnp.abs(out - out_ref))) < 1e-2

    print("KERNEL_OK")
</pallas_src>

<mosaic_0001>
module attributes {stable_mosaic.version = 11 : i64} {
  func.func @_conv12_kernel(%arg0: i32, %arg1: memref<2x256x16xbf16, #tpu.memory_space<vmem>>, %arg2: memref<16x128xbf16, #tpu.memory_space<vmem>>, %arg3: memref<1x128xf32, #tpu.memory_space<vmem>>, %arg4: memref<16x128x128xbf16, #tpu.memory_space<vmem>>, %arg5: memref<1x128xf32, #tpu.memory_space<vmem>>, %arg6: memref<2x64x128xbf16, #tpu.memory_space<vmem>>, %arg7: memref<2x4x9x9x128xbf16, #tpu.memory_space<vmem>>) attributes {dimension_semantics = [#tpu.dimension_semantics<parallel>], iteration_bounds = array<i64: 1>, scalar_prefetch = 0 : i64, scratch_operands = 1 : i64, tpu.core_type = #tpu.core_type<tc>, window_params = [{transform_indices = @transform_0, window_bounds = array<i64: 2, 256, 16>}, {pipeline_mode = #tpu.pipeline_mode<synchronous>, transform_indices = @transform_1, window_bounds = array<i64: 16, 128>}, {pipeline_mode = #tpu.pipeline_mode<synchronous>, transform_indices = @transform_2, window_bounds = array<i64: 1, 128>}, {pipeline_mode = #tpu.pipeline_mode<synchronous>, transform_indices = @transform_3, window_bounds = array<i64: 16, 128, 128>}, {pipeline_mode = #tpu.pipeline_mode<synchronous>, transform_indices = @transform_4, window_bounds = array<i64: 1, 128>}, {transform_indices = @transform_5, window_bounds = array<i64: 2, 64, 128>}]} {
    %c0 = arith.constant 0 : index
    %c0_0 = arith.constant 0 : index
    %c0_1 = arith.constant 0 : index
    %0 = vector.load %arg1[%c0, %c0_0, %c0_1] : memref<2x256x16xbf16, #tpu.memory_space<vmem>>, vector<2x256x16xbf16>
    %1 = vector.shape_cast %0 : vector<2x256x16xbf16> to vector<512x16xbf16>
    %c0_2 = arith.constant 0 : index
    %c0_3 = arith.constant 0 : index
    %2 = vector.load %arg2[%c0_2, %c0_3] : memref<16x128xbf16, #tpu.memory_space<vmem>>, vector<16x128xbf16>
    %cst = arith.constant dense<0.000000e+00> : vector<512x128xf32>
    %3 = tpu.matmul %1, %2, %cst {dimension_numbers = #tpu.dot_dimension_numbers<[1], [0], [0], [1], [0, 0, 1, 1], [], []>} : vector<512x16xbf16>, vector<16x128xbf16>, vector<512x128xf32> -> vector<512x128xf32>
    %c0_4 = arith.constant 0 : index
    %c0_5 = arith.constant 0 : index
    %4 = vector.load %arg3[%c0_4, %c0_5] : memref<1x128xf32, #tpu.memory_space<vmem>>, vector<1x128xf32>
    %5 = vector.broadcast %4 : vector<1x128xf32> to vector<512x128xf32>
    %6 = arith.addf %3, %5 : vector<512x128xf32>
    %cst_6 = arith.constant 0.000000e+00 : f32
    %7 = vector.broadcast %cst_6 : f32 to vector<512x128xf32>
    %8 = arith.cmpf oge, %6, %7 : vector<512x128xf32>
    %cst_7 = arith.constant 2.000000e-01 : f32
    %9 = vector.broadcast %cst_7 : f32 to vector<512x128xf32>
    %10 = arith.mulf %9, %6 : vector<512x128xf32>
    %11 = arith.select %8, %6, %10 : vector<512x128xi1>, vector<512x128xf32>
    %12 = arith.truncf %11 : vector<512x128xf32> to vector<512x128xbf16>
    %13 = vector.shape_cast %12 : vector<512x128xbf16> to vector<2x4x8x8x128xbf16>
    %cst_8 = arith.constant 0.000000e+00 : bf16
    %14 = vector.broadcast %cst_8 : bf16 to vector<2x4x9x9x128xbf16>
    %c0_9 = arith.constant 0 : index
    %c0_10 = arith.constant 0 : index
    %c0_11 = arith.constant 0 : index
    %c0_12 = arith.constant 0 : index
    %c0_13 = arith.constant 0 : index
    %15 = vector.load %arg7[%c0_9, %c0_10, %c0_11, %c0_12, %c0_13] : memref<2x4x9x9x128xbf16, #tpu.memory_space<vmem>>, vector<2x4x9x9x128xbf16>
    tpu.vector_store %arg7[%c0_9, %c0_10, %c0_11, %c0_12, %c0_13], %14 {strides = array<i32>} : memref<2x4x9x9x128xbf16, #tpu.memory_space<vmem>>, vector<2x4x9x9x128xbf16>,
    %16 = vector.extract_strided_slice %13 {offsets = [0, 0, 0, 0, 0], sizes = [2, 1, 8, 8, 128], strides = [1, 1, 1, 1, 1]} : vector<2x4x8x8x128xbf16> to vector<2x1x8x8x128xbf16>
    %c0_14 = arith.constant 0 : index
    %c0_15 = arith.constant 0 : index
    %c1 = arith.constant 1 : index
    %c1_16 = arith.constant 1 : index
    %c0_17 = arith.constant 0 : index
    %17 = vector.load %arg7[%c0_14, %c0_15, %c1, %c1_16, %c0_17] : memref<2x4x9x9x128xbf16, #tpu.memory_space<vmem>>, vector<2x1x8x8x128xbf16>
    tpu.vector_store %arg7[%c0_14, %c0_15, %c1, %c1_16, %c0_17], %16 {strides = array<i32>} : memref<2x4x9x9x128xbf16, #tpu.memory_space<vmem>>, vector<2x1x8x8x128xbf16>,
    %18 = vector.extract_strided_slice %13 {offsets = [0, 1, 0, 0, 0], sizes = [2, 1, 8, 8, 128], strides = [1, 1, 1, 1, 1]} : vector<2x4x8x8x128xbf16> to vector<2x1x8x8x128xbf16>
    %c0_18 = arith.constant 0 : index
    %c1_19 = arith.constant 1 : index
    %c1_20 = arith.constant 1 : index
    %c0_21 = arith.constant 0 : index
    %c0_22 = arith.constant 0 : index
    %19 = vector.load %arg7[%c0_18, %c1_19, %c1_20, %c0_21, %c0_22] : memref<2x4x9x9x128xbf16, #tpu.memory_space<vmem>>, vector<2x1x8x8x128xbf16>
    tpu.vector_store %arg7[%c0_18, %c1_19, %c1_20, %c0_21, %c0_22], %18 {strides = array<i32>} : memref<2x4x9x9x128xbf16, #tpu.memory_space<vmem>>, vector<2x1x8x8x128xbf16>,
    %20 = vector.extract_strided_slice %13 {offsets = [0, 2, 0, 0, 0], sizes = [2, 1, 8, 8, 128], strides = [1, 1, 1, 1, 1]} : vector<2x4x8x8x128xbf16> to vector<2x1x8x8x128xbf16>
    %c0_23 = arith.constant 0 : index
    %c2 = arith.constant 2 : index
    %c0_24 = arith.constant 0 : index
    %c1_25 = arith.constant 1 : index
    %c0_26 = arith.constant 0 : index
    %21 = vector.load %arg7[%c0_23, %c2, %c0_24, %c1_25, %c0_26] : memref<2x4x9x9x128xbf16, #tpu.memory_space<vmem>>, vector<2x1x8x8x128xbf16>
    tpu.vector_store %arg7[%c0_23, %c2, %c0_24, %c1_25, %c0_26], %20 {strides = array<i32>} : memref<2x4x9x9x128xbf16, #tpu.memory_space<vmem>>, vector<2x1x8x8x128xbf16>,
    %22 = vector.extract_strided_slice %13 {offsets = [0, 3, 0, 0, 0], sizes = [2, 1, 8, 8, 128], strides = [1, 1, 1, 1, 1]} : vector<2x4x8x8x128xbf16> to vector<2x1x8x8x128xbf16>
    %c0_27 = arith.constant 0 : index
    %c3 = arith.constant 3 : index
    %c0_28 = arith.constant 0 : index
    %c0_29 = arith.constant 0 : index
    %c0_30 = arith.constant 0 : index
    %23 = vector.load %arg7[%c0_27, %c3, %c0_28, %c0_29, %c0_30] : memref<2x4x9x9x128xbf16, #tpu.memory_space<vmem>>, vector<2x1x8x8x128xbf16>
    tpu.vector_store %arg7[%c0_27, %c3, %c0_28, %c0_29, %c0_30], %22 {strides = array<i32>} : memref<2x4x9x9x128xbf16, #tpu.memory_space<vmem>>, vector<2x1x8x8x128xbf16>,
    %cst_31 = arith.constant 0.000000e+00 : f32
    %24 = vector.broadcast %cst_31 : f32 to vector<128x128xf32>
    %c0_32 = arith.constant 0 : index
    %c0_33 = arith.constant 0 : index
    %c0_34 = arith.constant 0 : index
    %c0_35 = arith.constant 0 : index
    %c0_36 = arith.constant 0 : index
    %25 = vector.load %arg7[%c0_32, %c0_33, %c0_34, %c0_35, %c0_36] : memref<2x4x9x9x128xbf16, #tpu.memory_space<vmem>>, vector<2x1x8x8x128xbf16>
    %26 = vector.shape_cast %25 : vector<2x1x8x8x128xbf16> to vector<128x128xbf16>
    %c0_37 = arith.constant 0 : index
    %c0_38 = arith.constant 0 : index
    %c0_39 = arith.constant 0 : index
    %27 = vector.load %arg4[%c0_37, %c0_38, %c0_39] : memref<16x128x128xbf16, #tpu.memory_space<vmem>>, vector<1x128x128xbf16>
    %28 = vector.shape_cast %27 : vector<1x128x128xbf16> to vector<128x128xbf16>
    %cst_40 = arith.constant dense<0.000000e+00> : vector<128x128xf32>
    %29 = tpu.matmul %26, %28, %cst_40 {dimension_numbers = #tpu.dot_dimension_numbers<[1], [0], [0], [1], [0, 0, 1, 1], [], []>} : vector<128x128xbf16>, vector<128x128xbf16>, vector<128x128xf32> -> vector<128x128xf32>
    %30 = arith.addf %24, %29 : vector<128x128xf32>
    %c0_41 = arith.constant 0 : index
    %c1_42 = arith.constant 1 : index
    %c0_43 = arith.constant 0 : index
    %c0_44 = arith.constant 0 : index
    %c0_45 = arith.constant 0 : index
    %31 = vector.load %arg7[%c0_41, %c1_42, %c0_43, %c0_44, %c0_45] : memref<2x4x9x9x128xbf16, #tpu.memory_space<vmem>>, vector<2x1x8x8x128xbf16>
    %32 = vector.shape_cast %31 : vector<2x1x8x8x128xbf16> to vector<128x128xbf16>
    %c1_46 = arith.constant 1 : index
    %c0_47 = arith.constant 0 : index
    %c0_48 = arith.constant 0 : index
    %33 = vector.load %arg4[%c1_46, %c0_47, %c0_48] : memref<16x128x128xbf16, #tpu.memory_space<vmem>>, vector<1x128x128xbf16>
    %34 = vector.shape_cast %33 : vector<1x128x128xbf16> to vector<128x128xbf16>
    %cst_49 = arith.constant dense<0.000000e+00> : vector<128x128xf32>
    %35 = tpu.matmul %32, %34, %cst_49 {dimension_numbers = #tpu.dot_dimension_numbers<[1], [0], [0], [1], [0, 0, 1, 1], [], []>} : vector<128x128xbf16>, vector<128x128xbf16>, vector<128x128xf32> -> vector<128x128xf32>
    %36 = arith.addf %30, %35 : vector<128x128xf32>
    %c0_50 = arith.constant 0 : index
    %c0_51 = arith.constant 0 : index
    %c0_52 = arith.constant 0 : index
    %c1_53 = arith.constant 1 : index
    %c0_54 = arith.constant 0 : index
    %37 = vector.load %arg7[%c0_50, %c0_51, %c0_52, %c1_53, %c0_54] : memref<2x4x9x9x128xbf16, #tpu.memory_space<vmem>>, vector<2x1x8x8x128xbf16>
    %38 = vector.shape_cast %37 : vector<2x1x8x8x128xbf16> to vector<128x128xbf16>
    %c2_55 = arith.constant 2 : index
    %c0_56 = arith.constant 0 : index
    %c0_57 = arith.constant 0 : index
    %39 = vector.load %arg4[%c2_55, %c0_56, %c0_57] : memref<16x128x128xbf16, #tpu.memory_space<vmem>>, vector<1x128x128xbf16>
    %40 = vector.shape_cast %39 : vector<1x128x128xbf16> to vector<128x128xbf16>
    %cst_58 = arith.constant dense<0.000000e+00> : vector<128x128xf32>
    %41 = tpu.matmul %38, %40, %cst_58 {dimension_numbers = #tpu.dot_dimension_numbers<[1], [0], [0], [1], [0, 0, 1, 1], [], []>} : vector<128x128xbf16>, vector<128x128xbf16>, vector<128x128xf32> -> vector<128x128xf32>
    %42 = arith.addf %36, %41 : vector<128x128xf32>
    %c0_59 = arith.constant 0 : index
    %c1_60 = arith.constant 1 : index
    %c0_61 = arith.constant 0 : index
    %c1_62 = arith.constant 1 : index
    %c0_63 = arith.constant 0 : index
    %43 = vector.load %arg7[%c0_59, %c1_60, %c0_61, %c1_62, %c0_63] : memref<2x4x9x9x128xbf16, #tpu.memory_space<vmem>>, vector<2x1x8x8x128xbf16>
    %44 = vector.shape_cast %43 : vector<2x1x8x8x128xbf16> to vector<128x128xbf16>
    %c3_64 = arith.constant 3 : index
    %c0_65 = arith.constant 0 : index
    %c0_66 = arith.constant 0 : index
    %45 = vector.load %arg4[%c3_64, %c0_65, %c0_66] : memref<16x128x128xbf16, #tpu.memory_space<vmem>>, vector<1x128x128xbf16>
    %46 = vector.shape_cast %45 : vector<1x128x128xbf16> to vector<128x128xbf16>
    %cst_67 = arith.constant dense<0.000000e+00> : vector<128x128xf32>
    %47 = tpu.matmul %44, %46, %cst_67 {dimension_numbers = #tpu.dot_dimension_numbers<[1], [0], [0], [1], [0, 0, 1, 1], [], []>} : vector<128x128xbf16>, vector<128x128xbf16>, vector<128x128xf32> -> vector<128x128xf32>
    %48 = arith.addf %42, %47 : vector<128x128xf32>
    %c0_68 = arith.constant 0 : index
    %c2_69 = arith.constant 2 : index
    %c0_70 = arith.constant 0 : index
    %c0_71 = arith.constant 0 : index
    %c0_72 = arith.constant 0 : index
    %49 = vector.load %arg7[%c0_68, %c2_69, %c0_70, %c0_71, %c0_72] : memref<2x4x9x9x128xbf16, #tpu.memory_space<vmem>>, vector<2x1x8x8x128xbf16>
    %50 = vector.shape_cast %49 : vector<2x1x8x8x128xbf16> to vector<128x128xbf16>
    %c4 = arith.constant 4 : index
    %c0_73 = arith.constant 0 : index
    %c0_74 = arith.constant 0 : index
    %51 = vector.load %arg4[%c4, %c0_73, %c0_74] : memref<16x128x128xbf16, #tpu.memory_space<vmem>>, vector<1x128x128xbf16>
    %52 = vector.shape_cast %51 : vector<1x128x128xbf16> to vector<128x128xbf16>
    %cst_75 = arith.constant dense<0.000000e+00> : vector<128x128xf32>
    %53 = tpu.matmul %50, %52, %cst_75 {dimension_numbers = #tpu.dot_dimension_numbers<[1], [0], [0], [1], [0, 0, 1, 1], [], []>} : vector<128x128xbf16>, vector<128x128xbf16>, vector<128x128xf32> -> vector<128x128xf32>
    %54 = arith.addf %48, %53 : vector<128x128xf32>
    %c0_76 = arith.constant 0 : index
    %c3_77 = arith.constant 3 : index
    %c0_78 = arith.constant 0 : index
    %c0_79 = arith.constant 0 : index
    %c0_80 = arith.constant 0 : index
    %55 = vector.load %arg7[%c0_76, %c3_77, %c0_78, %c0_79, %c0_80] : memref<2x4x9x9x128xbf16, #tpu.memory_space<vmem>>, vector<2x1x8x8x128xbf16>
    %56 = vector.shape_cast %55 : vector<2x1x8x8x128xbf16> to vector<128x128xbf16>
    %c5 = arith.constant 5 : index
    %c0_81 = arith.constant 0 : index
    %c0_82 = arith.constant 0 : index
    %57 = vector.load %arg4[%c5, %c0_81, %c0_82] : memref<16x128x128xbf16, #tpu.memory_space<vmem>>, vector<1x128x128xbf16>
    %58 = vector.shape_cast %57 : vector<1x128x128xbf16> to vector<128x128xbf16>
    %cst_83 = arith.constant dense<0.000000e+00> : vector<128x128xf32>
    %59 = tpu.matmul %56, %58, %cst_83 {dimension_numbers = #tpu.dot_dimension_numbers<[1], [0], [0], [1], [0, 0, 1, 1], [], []>} : vector<128x128xbf16>, vector<128x128xbf16>, vector<128x128xf32> -> vector<128x128xf32>
    %60 = arith.addf %54, %59 : vector<128x128xf32>
    %c0_84 = arith.constant 0 : index
    %c2_85 = arith.constant 2 : index
    %c0_86 = arith.constant 0 : index
    %c1_87 = arith.constant 1 : index
    %c0_88 = arith.constant 0 : index
    %61 = vector.load %arg7[%c0_84, %c2_85, %c0_86, %c1_87, %c0_88] : memref<2x4x9x9x128xbf16, #tpu.memory_space<vmem>>, vector<2x1x8x8x128xbf16>
    %62 = vector.shape_cast %61 : vector<2x1x8x8x128xbf16> to vector<128x128xbf16>
    %c6 = arith.constant 6 : index
    %c0_89 = arith.constant 0 : index
    %c0_90 = arith.constant 0 : index
    %63 = vector.load %arg4[%c6, %c0_89, %c0_90] : memref<16x128x128xbf16, #tpu.memory_space<vmem>>, vector<1x128x128xbf16>
    %64 = vector.shape_cast %63 : vector<1x128x128xbf16> to vector<128x128xbf16>
    %cst_91 = arith.constant dense<0.000000e+00> : vector<128x128xf32>
    %65 = tpu.matmul %62, %64, %cst_91 {dimension_numbers = #tpu.dot_dimension_numbers<[1], [0], [0], [1], [0, 0, 1, 1], [], []>} : vector<128x128xbf16>, vector<128x128xbf16>, vector<128x128xf32> -> vector<128x128xf32>
    %66 = arith.addf %60, %65 : vector<128x128xf32>
    %c0_92 = arith.constant 0 : index
    %c3_93 = arith.constant 3 : index
    %c0_94 = arith.constant 0 : index
    %c1_95 = arith.constant 1 : index
    %c0_96 = arith.constant 0 : index
    %67 = vector.load %arg7[%c0_92, %c3_93, %c0_94, %c1_95, %c0_96] : memref<2x4x9x9x128xbf16, #tpu.memory_space<vmem>>, vector<2x1x8x8x128xbf16>
    %68 = vector.shape_cast %67 : vector<2x1x8x8x128xbf16> to vector<128x128xbf16>
    %c7 = arith.constant 7 : index
    %c0_97 = arith.constant 0 : index
    %c0_98 = arith.constant 0 : index
    %69 = vector.load %arg4[%c7, %c0_97, %c0_98] : memref<16x128x128xbf16, #tpu.memory_space<vmem>>, vector<1x128x128xbf16>
    %70 = vector.shape_cast %69 : vector<1x128x128xbf16> to vector<128x128xbf16>
    %cst_99 = arith.constant dense<0.000000e+00> : vector<128x128xf32>
    %71 = tpu.matmul %68, %70, %cst_99 {dimension_numbers = #tpu.dot_dimension_numbers<[1], [0], [0], [1], [0, 0, 1, 1], [], []>} : vector<128x128xbf16>, vector<128x128xbf16>, vector<128x128xf32> -> vector<128x128xf32>
    %72 = arith.addf %66, %71 : vector<128x128xf32>
    %c0_100 = arith.constant 0 : index
    %c0_101 = arith.constant 0 : index
    %c1_102 = arith.constant 1 : index
    %c0_103 = arith.constant 0 : index
    %c0_104 = arith.constant 0 : index
    %73 = vector.load %arg7[%c0_100, %c0_101, %c1_102, %c0_103, %c0_104] : memref<2x4x9x9x128xbf16, #tpu.memory_space<vmem>>, vector<2x1x8x8x128xbf16>
    %74 = vector.shape_cast %73 : vector<2x1x8x8x128xbf16> to vector<128x128xbf16>
    %c8 = arith.constant 8 : index
    %c0_105 = arith.constant 0 : index
    %c0_106 = arith.constant 0 : index
    %75 = vector.load %arg4[%c8, %c0_105, %c0_106] : memref<16x128x128xbf16, #tpu.memory_space<vmem>>, vector<1x128x128xbf16>
    %76 = vector.shape_cast %75 : vector<1x128x128xbf16> to vector<128x128xbf16>
    %cst_107 = arith.constant dense<0.000000e+00> : vector<128x128xf32>
    %77 = tpu.matmul %74, %76, %cst_107 {dimension_numbers = #tpu.dot_dimension_numbers<[1], [0], [0], [1], [0, 0, 1, 1], [], []>} : vector<128x128xbf16>, vector<128x128xbf16>, vector<128x128xf32> -> vector<128x128xf32>
    %78 = arith.addf %72, %77 : vector<128x128xf32>
    %c0_108 = arith.constant 0 : index
    %c1_109 = arith.constant 1 : index
    %c1_110 = arith.constant 1 : index
    %c0_111 = arith.constant 0 : index
    %c0_112 = arith.constant 0 : index
    %79 = vector.load %arg7[%c0_108, %c1_109, %c1_110, %c0_111, %c0_112] : memref<2x4x9x9x128xbf16, #tpu.memory_space<vmem>>, vector<2x1x8x8x128xbf16>
    %80 = vector.shape_cast %79 : vector<2x1x8x8x128xbf16> to vector<128x128xbf16>
    %c9 = arith.constant 9 : index
    %c0_113 = arith.constant 0 : index
    %c0_114 = arith.constant 0 : index
    %81 = vector.load %arg4[%c9, %c0_113, %c0_114] : memref<16x128x128xbf16, #tpu.memory_space<vmem>>, vector<1x128x128xbf16>
    %82 = vector.shape_cast %81 : vector<1x128x128xbf16> to vector<128x128xbf16>
    %cst_115 = arith.constant dense<0.000000e+00> : vector<128x128xf32>
    %83 = tpu.matmul %80, %82, %cst_115 {dimension_numbers = #tpu.dot_dimension_numbers<[1], [0], [0], [1], [0, 0, 1, 1], [], []>} : vector<128x128xbf16>, vector<128x128xbf16>, vector<128x128xf32> -> vector<128x128xf32>
    %84 = arith.addf %78, %83 : vector<128x128xf32>
    %c0_116 = arith.constant 0 : index
    %c0_117 = arith.constant 0 : index
    %c1_118 = arith.constant 1 : index
    %c1_119 = arith.constant 1 : index
    %c0_120 = arith.constant 0 : index
    %85 = vector.load %arg7[%c0_116, %c0_117, %c1_118, %c1_119, %c0_120] : memref<2x4x9x9x128xbf16, #tpu.memory_space<vmem>>, vector<2x1x8x8x128xbf16>
    %86 = vector.shape_cast %85 : vector<2x1x8x8x128xbf16> to vector<128x128xbf16>
    %c10 = arith.constant 10 : index
    %c0_121 = arith.constant 0 : index
    %c0_122 = arith.constant 0 : index
    %87 = vector.load %arg4[%c10, %c0_121, %c0_122] : memref<16x128x128xbf16, #tpu.memory_space<vmem>>, vector<1x128x128xbf16>
    %88 = vector.shape_cast %87 : vector<1x128x128xbf16> to vector<128x128xbf16>
    %cst_123 = arith.constant dense<0.000000e+00> : vector<128x128xf32>
    %89 = tpu.matmul %86, %88, %cst_123 {dimension_numbers = #tpu.dot_dimension_numbers<[1], [0], [0], [1], [0, 0, 1, 1], [], []>} : vector<128x128xbf16>, vector<128x128xbf16>, vector<128x128xf32> -> vector<128x128xf32>
    %90 = arith.addf %84, %89 : vector<128x128xf32>
    %c0_124 = arith.constant 0 : index
    %c1_125 = arith.constant 1 : index
    %c1_126 = arith.constant 1 : index
    %c1_127 = arith.constant 1 : index
    %c0_128 = arith.constant 0 : index
    %91 = vector.load %arg7[%c0_124, %c1_125, %c1_126, %c1_127, %c0_128] : memref<2x4x9x9x128xbf16, #tpu.memory_space<vmem>>, vector<2x1x8x8x128xbf16>
    %92 = vector.shape_cast %91 : vector<2x1x8x8x128xbf16> to vector<128x128xbf16>
    %c11 = arith.constant 11 : index
    %c0_129 = arith.constant 0 : index
    %c0_130 = arith.constant 0 : index
    %93 = vector.load %arg4[%c11, %c0_129, %c0_130] : memref<16x128x128xbf16, #tpu.memory_space<vmem>>, vector<1x128x128xbf16>
    %94 = vector.shape_cast %93 : vector<1x128x128xbf16> to vector<128x128xbf16>
    %cst_131 = arith.constant dense<0.000000e+00> : vector<128x128xf32>
    %95 = tpu.matmul %92, %94, %cst_131 {dimension_numbers = #tpu.dot_dimension_numbers<[1], [0], [0], [1], [0, 0, 1, 1], [], []>} : vector<128x128xbf16>, vector<128x128xbf16>, vector<128x128xf32> -> vector<128x128xf32>
    %96 = arith.addf %90, %95 : vector<128x128xf32>
    %c0_132 = arith.constant 0 : index
    %c2_133 = arith.constant 2 : index
    %c1_134 = arith.constant 1 : index
    %c0_135 = arith.constant 0 : index
    %c0_136 = arith.constant 0 : index
    %97 = vector.load %arg7[%c0_132, %c2_133, %c1_134, %c0_135, %c0_136] : memref<2x4x9x9x128xbf16, #tpu.memory_space<vmem>>, vector<2x1x8x8x128xbf16>
    %98 = vector.shape_cast %97 : vector<2x1x8x8x128xbf16> to vector<128x128xbf16>
    %c12 = arith.constant 12 : index
    %c0_137 = arith.constant 0 : index
    %c0_138 = arith.constant 0 : index
    %99 = vector.load %arg4[%c12, %c0_137, %c0_138] : memref<16x128x128xbf16, #tpu.memory_space<vmem>>, vector<1x128x128xbf16>
    %100 = vector.shape_cast %99 : vector<1x128x128xbf16> to vector<128x128xbf16>
    %cst_139 = arith.constant dense<0.000000e+00> : vector<128x128xf32>
    %101 = tpu.matmul %98, %100, %cst_139 {dimension_numbers = #tpu.dot_dimension_numbers<[1], [0], [0], [1], [0, 0, 1, 1], [], []>} : vector<128x128xbf16>, vector<128x128xbf16>, vector<128x128xf32> -> vector<128x128xf32>
    %102 = arith.addf %96, %101 : vector<128x128xf32>
    %c0_140 = arith.constant 0 : index
    %c3_141 = arith.constant 3 : index
    %c1_142 = arith.constant 1 : index
    %c0_143 = arith.constant 0 : index
    %c0_144 = arith.constant 0 : index
    %103 = vector.load %arg7[%c0_140, %c3_141, %c1_142, %c0_143, %c0_144] : memref<2x4x9x9x128xbf16, #tpu.memory_space<vmem>>, vector<2x1x8x8x128xbf16>
    %104 = vector.shape_cast %103 : vector<2x1x8x8x128xbf16> to vector<128x128xbf16>
    %c13 = arith.constant 13 : index
    %c0_145 = arith.constant 0 : index
    %c0_146 = arith.constant 0 : index
    %105 = vector.load %arg4[%c13, %c0_145, %c0_146] : memref<16x128x128xbf16, #tpu.memory_space<vmem>>, vector<1x128x128xbf16>
    %106 = vector.shape_cast %105 : vector<1x128x128xbf16> to vector<128x128xbf16>
    %cst_147 = arith.constant dense<0.000000e+00> : vector<128x128xf32>
    %107 = tpu.matmul %104, %106, %cst_147 {dimension_numbers = #tpu.dot_dimension_numbers<[1], [0], [0], [1], [0, 0, 1, 1], [], []>} : vector<128x128xbf16>, vector<128x128xbf16>, vector<128x128xf32> -> vector<128x128xf32>
    %108 = arith.addf %102, %107 : vector<128x128xf32>
    %c0_148 = arith.constant 0 : index
    %c2_149 = arith.constant 2 : index
    %c1_150 = arith.constant 1 : index
    %c1_151 = arith.constant 1 : index
    %c0_152 = arith.constant 0 : index
    %109 = vector.load %arg7[%c0_148, %c2_149, %c1_150, %c1_151, %c0_152] : memref<2x4x9x9x128xbf16, #tpu.memory_space<vmem>>, vector<2x1x8x8x128xbf16>
    %110 = vector.shape_cast %109 : vector<2x1x8x8x128xbf16> to vector<128x128xbf16>
    %c14 = arith.constant 14 : index
    %c0_153 = arith.constant 0 : index
    %c0_154 = arith.constant 0 : index
    %111 = vector.load %arg4[%c14, %c0_153, %c0_154] : memref<16x128x128xbf16, #tpu.memory_space<vmem>>, vector<1x128x128xbf16>
    %112 = vector.shape_cast %111 : vector<1x128x128xbf16> to vector<128x128xbf16>
    %cst_155 = arith.constant dense<0.000000e+00> : vector<128x128xf32>
    %113 = tpu.matmul %110, %112, %cst_155 {dimension_numbers = #tpu.dot_dimension_numbers<[1], [0], [0], [1], [0, 0, 1, 1], [], []>} : vector<128x128xbf16>, vector<128x128xbf16>, vector<128x128xf32> -> vector<128x128xf32>
    %114 = arith.addf %108, %113 : vector<128x128xf32>
    %c0_156 = arith.constant 0 : index
    %c3_157 = arith.constant 3 : index
    %c1_158 = arith.constant 1 : index
    %c1_159 = arith.constant 1 : index
    %c0_160 = arith.constant 0 : index
    %115 = vector.load %arg7[%c0_156, %c3_157, %c1_158, %c1_159, %c0_160] : memref<2x4x9x9x128xbf16, #tpu.memory_space<vmem>>, vector<2x1x8x8x128xbf16>
    %116 = vector.shape_cast %115 : vector<2x1x8x8x128xbf16> to vector<128x128xbf16>
    %c15 = arith.constant 15 : index
    %c0_161 = arith.constant 0 : index
    %c0_162 = arith.constant 0 : index
    %117 = vector.load %arg4[%c15, %c0_161, %c0_162] : memref<16x128x128xbf16, #tpu.memory_space<vmem>>, vector<1x128x128xbf16>
    %118 = vector.shape_cast %117 : vector<1x128x128xbf16> to vector<128x128xbf16>
    %cst_163 = arith.constant dense<0.000000e+00> : vector<128x128xf32>
    %119 = tpu.matmul %116, %118, %cst_163 {dimension_numbers = #tpu.dot_dimension_numbers<[1], [0], [0], [1], [0, 0, 1, 1], [], []>} : vector<128x128xbf16>, vector<128x128xbf16>, vector<128x128xf32> -> vector<128x128xf32>
    %120 = arith.addf %114, %119 : vector<128x128xf32>
    %c0_164 = arith.constant 0 : index
    %c0_165 = arith.constant 0 : index
    %121 = vector.load %arg5[%c0_164, %c0_165] : memref<1x128xf32, #tpu.memory_space<vmem>>, vector<1x128xf32>
    %122 = vector.broadcast %121 : vector<1x128xf32> to vector<128x128xf32>
    %123 = arith.addf %120, %122 : vector<128x128xf32>
    %cst_166 = arith.constant 0.000000e+00 : f32
    %124 = vector.broadcast %cst_166 : f32 to vector<128x128xf32>
    %125 = arith.cmpf oge, %123, %124 : vector<128x128xf32>
    %cst_167 = arith.constant 2.000000e-01 : f32
    %126 = vector.broadcast %cst_167 : f32 to vector<128x128xf32>
    %127 = arith.mulf %126, %123 : vector<128x128xf32>
    %128 = arith.select %125, %123, %127 : vector<128x128xi1>, vector<128x128xf32>
    %129 = vector.shape_cast %128 : vector<128x128xf32> to vector<2x64x128xf32>
    %130 = arith.truncf %129 : vector<2x64x128xf32> to vector<2x64x128xbf16>
    %c0_168 = arith.constant 0 : index
    %c0_169 = arith.constant 0 : index
    %c0_170 = arith.constant 0 : index
    %131 = vector.load %arg6[%c0_168, %c0_169, %c0_170] : memref<2x64x128xbf16, #tpu.memory_space<vmem>>, vector<2x64x128xbf16>
    tpu.vector_store %arg6[%c0_168, %c0_169, %c0_170], %130 {strides = array<i32>} : memref<2x64x128xbf16, #tpu.memory_space<vmem>>, vector<2x64x128xbf16>,
    return
  }
  func.func @transform_0(%arg0: i32) -> (i32, i32, i32) {
    %c0_i32 = arith.constant 0 : i32
    %c0_i32_0 = arith.constant 0 : i32
    %c0_i32_1 = arith.constant 0 : i32
    return %arg0, %c0_i32, %c0_i32_0 : i32, i32, i32
  }
  func.func @transform_1(%arg0: i32) -> (i32, i32) {
    %c0_i32 = arith.constant 0 : i32
    %c0_i32_0 = arith.constant 0 : i32
    %c0_i32_1 = arith.constant 0 : i32
    return %c0_i32, %c0_i32_0 : i32, i32
  }
  func.func @transform_2(%arg0: i32) -> (i32, i32) {
    %c0_i32 = arith.constant 0 : i32
    %c0_i32_0 = arith.constant 0 : i32
    %c0_i32_1 = arith.constant 0 : i32
    return %c0_i32, %c0_i32_0 : i32, i32
  }
  func.func @transform_3(%arg0: i32) -> (i32, i32, i32) {
    %c0_i32 = arith.constant 0 : i32
    %c0_i32_0 = arith.constant 0 : i32
    %c0_i32_1 = arith.constant 0 : i32
    %c0_i32_2 = arith.constant 0 : i32
    return %c0_i32, %c0_i32_0, %c0_i32_1 : i32, i32, i32
  }
  func.func @transform_4(%arg0: i32) -> (i32, i32) {
    %c0_i32 = arith.constant 0 : i32
    %c0_i32_0 = arith.constant 0 : i32
    %c0_i32_1 = arith.constant 0 : i32
    return %c0_i32, %c0_i32_0 : i32, i32
  }
  func.func @transform_5(%arg0: i32) -> (i32, i32, i32) {
    %c0_i32 = arith.constant 0 : i32
    %c0_i32_0 = arith.constant 0 : i32
    %c0_i32_1 = arith.constant 0 : i32
    return %arg0, %c0_i32, %c0_i32_0 : i32, i32, i32
  }
}

module attributes {stable_mosaic.version = 11 : i64} {
  func.func @_conv34_kernel(%arg0: i32, %arg1: memref<2x4x5x5x128xbf16, #tpu.memory_space<vmem>>, %arg2: memref<16x128x128xbf16, #tpu.memory_space<vmem>>, %arg3: memref<1x128xf32, #tpu.memory_space<vmem>>, %arg4: memref<16x128xf32, #tpu.memory_space<vmem>>, %arg5: memref<1x1xf32, #tpu.memory_space<vmem>>, %arg6: memref<2x1xf32, #tpu.memory_space<vmem>>) attributes {dimension_semantics = [#tpu.dimension_semantics<parallel>], iteration_bounds = array<i64: 1>, scalar_prefetch = 0 : i64, scratch_operands = 0 : i64, tpu.core_type = #tpu.core_type<tc>, window_params = [{transform_indices = @transform_0, window_bounds = array<i64: 2, 4, 5, 5, 128>}, {pipeline_mode = #tpu.pipeline_mode<synchronous>, transform_indices = @transform_1, window_bounds = array<i64: 16, 128, 128>}, {pipeline_mode = #tpu.pipeline_mode<synchronous>, transform_indices = @transform_2, window_bounds = array<i64: 1, 128>}, {pipeline_mode = #tpu.pipeline_mode<synchronous>, transform_indices = @transform_3, window_bounds = array<i64: 16, 128>}, {pipeline_mode = #tpu.pipeline_mode<synchronous>, transform_indices = @transform_4, window_bounds = array<i64: 1, 1>}, {transform_indices = @transform_5, window_bounds = array<i64: 2, 1>}]} {
    %cst = arith.constant 0.000000e+00 : f32
    %0 = vector.broadcast %cst : f32 to vector<32x128xf32>
    %c0 = arith.constant 0 : index
    %c0_0 = arith.constant 0 : index
    %c0_1 = arith.constant 0 : index
    %c0_2 = arith.constant 0 : index
    %c0_3 = arith.constant 0 : index
    %1 = vector.load %arg1[%c0, %c0_0, %c0_1, %c0_2, %c0_3] : memref<2x4x5x5x128xbf16, #tpu.memory_space<vmem>>, vector<2x1x4x4x128xbf16>
    %2 = vector.shape_cast %1 : vector<2x1x4x4x128xbf16> to vector<32x128xbf16>
    %c0_4 = arith.constant 0 : index
    %c0_5 = arith.constant 0 : index
    %c0_6 = arith.constant 0 : index
    %3 = vector.load %arg2[%c0_4, %c0_5, %c0_6] : memref<16x128x128xbf16, #tpu.memory_space<vmem>>, vector<1x128x128xbf16>
    %4 = vector.shape_cast %3 : vector<1x128x128xbf16> to vector<128x128xbf16>
    %cst_7 = arith.constant dense<0.000000e+00> : vector<32x128xf32>
    %5 = tpu.matmul %2, %4, %cst_7 {dimension_numbers = #tpu.dot_dimension_numbers<[1], [0], [0], [1], [0, 0, 1, 1], [], []>} : vector<32x128xbf16>, vector<128x128xbf16>, vector<32x128xf32> -> vector<32x128xf32>
    %6 = arith.addf %0, %5 : vector<32x128xf32>
    %c0_8 = arith.constant 0 : index
    %c1 = arith.constant 1 : index
    %c0_9 = arith.constant 0 : index
    %c0_10 = arith.constant 0 : index
    %c0_11 = arith.constant 0 : index
    %7 = vector.load %arg1[%c0_8, %c1, %c0_9, %c0_10, %c0_11] : memref<2x4x5x5x128xbf16, #tpu.memory_space<vmem>>, vector<2x1x4x4x128xbf16>
    %8 = vector.shape_cast %7 : vector<2x1x4x4x128xbf16> to vector<32x128xbf16>
    %c1_12 = arith.constant 1 : index
    %c0_13 = arith.constant 0 : index
    %c0_14 = arith.constant 0 : index
    %9 = vector.load %arg2[%c1_12, %c0_13, %c0_14] : memref<16x128x128xbf16, #tpu.memory_space<vmem>>, vector<1x128x128xbf16>
    %10 = vector.shape_cast %9 : vector<1x128x128xbf16> to vector<128x128xbf16>
    %cst_15 = arith.constant dense<0.000000e+00> : vector<32x128xf32>
    %11 = tpu.matmul %8, %10, %cst_15 {dimension_numbers = #tpu.dot_dimension_numbers<[1], [0], [0], [1], [0, 0, 1, 1], [], []>} : vector<32x128xbf16>, vector<128x128xbf16>, vector<32x128xf32> -> vector<32x128xf32>
    %12 = arith.addf %6, %11 : vector<32x128xf32>
    %c0_16 = arith.constant 0 : index
    %c0_17 = arith.constant 0 : index
    %c0_18 = arith.constant 0 : index
    %c1_19 = arith.constant 1 : index
    %c0_20 = arith.constant 0 : index
    %13 = vector.load %arg1[%c0_16, %c0_17, %c0_18, %c1_19, %c0_20] : memref<2x4x5x5x128xbf16, #tpu.memory_space<vmem>>, vector<2x1x4x4x128xbf16>
    %14 = vector.shape_cast %13 : vector<2x1x4x4x128xbf16> to vector<32x128xbf16>
    %c2 = arith.constant 2 : index
    %c0_21 = arith.constant 0 : index
    %c0_22 = arith.constant 0 : index
    %15 = vector.load %arg2[%c2, %c0_21, %c0_22] : memref<16x128x128xbf16, #tpu.memory_space<vmem>>, vector<1x128x128xbf16>
    %16 = vector.shape_cast %15 : vector<1x128x128xbf16> to vector<128x128xbf16>
    %cst_23 = arith.constant dense<0.000000e+00> : vector<32x128xf32>
    %17 = tpu.matmul %14, %16, %cst_23 {dimension_numbers = #tpu.dot_dimension_numbers<[1], [0], [0], [1], [0, 0, 1, 1], [], []>} : vector<32x128xbf16>, vector<128x128xbf16>, vector<32x128xf32> -> vector<32x128xf32>
    %18 = arith.addf %12, %17 : vector<32x128xf32>
    %c0_24 = arith.constant 0 : index
    %c1_25 = arith.constant 1 : index
    %c0_26 = arith.constant 0 : index
    %c1_27 = arith.constant 1 : index
    %c0_28 = arith.constant 0 : index
    %19 = vector.load %arg1[%c0_24, %c1_25, %c0_26, %c1_27, %c0_28] : memref<2x4x5x5x128xbf16, #tpu.memory_space<vmem>>, vector<2x1x4x4x128xbf16>
    %20 = vector.shape_cast %19 : vector<2x1x4x4x128xbf16> to vector<32x128xbf16>
    %c3 = arith.constant 3 : index
    %c0_29 = arith.constant 0 : index
    %c0_30 = arith.constant 0 : index
    %21 = vector.load %arg2[%c3, %c0_29, %c0_30] : memref<16x128x128xbf16, #tpu.memory_space<vmem>>, vector<1x128x128xbf16>
    %22 = vector.shape_cast %21 : vector<1x128x128xbf16> to vector<128x128xbf16>
    %cst_31 = arith.constant dense<0.000000e+00> : vector<32x128xf32>
    %23 = tpu.matmul %20, %22, %cst_31 {dimension_numbers = #tpu.dot_dimension_numbers<[1], [0], [0], [1], [0, 0, 1, 1], [], []>} : vector<32x128xbf16>, vector<128x128xbf16>, vector<32x128xf32> -> vector<32x128xf32>
    %24 = arith.addf %18, %23 : vector<32x128xf32>
    %c0_32 = arith.constant 0 : index
    %c2_33 = arith.constant 2 : index
    %c0_34 = arith.constant 0 : index
    %c0_35 = arith.constant 0 : index
    %c0_36 = arith.constant 0 : index
    %25 = vector.load %arg1[%c0_32, %c2_33, %c0_34, %c0_35, %c0_36] : memref<2x4x5x5x128xbf16, #tpu.memory_space<vmem>>, vector<2x1x4x4x128xbf16>
    %26 = vector.shape_cast %25 : vector<2x1x4x4x128xbf16> to vector<32x128xbf16>
    %c4 = arith.constant 4 : index
    %c0_37 = arith.constant 0 : index
    %c0_38 = arith.constant 0 : index
    %27 = vector.load %arg2[%c4, %c0_37, %c0_38] : memref<16x128x128xbf16, #tpu.memory_space<vmem>>, vector<1x128x128xbf16>
    %28 = vector.shape_cast %27 : vector<1x128x128xbf16> to vector<128x128xbf16>
    %cst_39 = arith.constant dense<0.000000e+00> : vector<32x128xf32>
    %29 = tpu.matmul %26, %28, %cst_39 {dimension_numbers = #tpu.dot_dimension_numbers<[1], [0], [0], [1], [0, 0, 1, 1], [], []>} : vector<32x128xbf16>, vector<128x128xbf16>, vector<32x128xf32> -> vector<32x128xf32>
    %30 = arith.addf %24, %29 : vector<32x128xf32>
    %c0_40 = arith.constant 0 : index
    %c3_41 = arith.constant 3 : index
    %c0_42 = arith.constant 0 : index
    %c0_43 = arith.constant 0 : index
    %c0_44 = arith.constant 0 : index
    %31 = vector.load %arg1[%c0_40, %c3_41, %c0_42, %c0_43, %c0_44] : memref<2x4x5x5x128xbf16, #tpu.memory_space<vmem>>, vector<2x1x4x4x128xbf16>
    %32 = vector.shape_cast %31 : vector<2x1x4x4x128xbf16> to vector<32x128xbf16>
    %c5 = arith.constant 5 : index
    %c0_45 = arith.constant 0 : index
    %c0_46 = arith.constant 0 : index
    %33 = vector.load %arg2[%c5, %c0_45, %c0_46] : memref<16x128x128xbf16, #tpu.memory_space<vmem>>, vector<1x128x128xbf16>
    %34 = vector.shape_cast %33 : vector<1x128x128xbf16> to vector<128x128xbf16>
    %cst_47 = arith.constant dense<0.000000e+00> : vector<32x128xf32>
    %35 = tpu.matmul %32, %34, %cst_47 {dimension_numbers = #tpu.dot_dimension_numbers<[1], [0], [0], [1], [0, 0, 1, 1], [], []>} : vector<32x128xbf16>, vector<128x128xbf16>, vector<32x128xf32> -> vector<32x128xf32>
    %36 = arith.addf %30, %35 : vector<32x128xf32>
    %c0_48 = arith.constant 0 : index
    %c2_49 = arith.constant 2 : index
    %c0_50 = arith.constant 0 : index
    %c1_51 = arith.constant 1 : index
    %c0_52 = arith.constant 0 : index
    %37 = vector.load %arg1[%c0_48, %c2_49, %c0_50, %c1_51, %c0_52] : memref<2x4x5x5x128xbf16, #tpu.memory_space<vmem>>, vector<2x1x4x4x128xbf16>
    %38 = vector.shape_cast %37 : vector<2x1x4x4x128xbf16> to vector<32x128xbf16>
    %c6 = arith.constant 6 : index
    %c0_53 = arith.constant 0 : index
    %c0_54 = arith.constant 0 : index
    %39 = vector.load %arg2[%c6, %c0_53, %c0_54] : memref<16x128x128xbf16, #tpu.memory_space<vmem>>, vector<1x128x128xbf16>
    %40 = vector.shape_cast %39 : vector<1x128x128xbf16> to vector<128x128xbf16>
    %cst_55 = arith.constant dense<0.000000e+00> : vector<32x128xf32>
    %41 = tpu.matmul %38, %40, %cst_55 {dimension_numbers = #tpu.dot_dimension_numbers<[1], [0], [0], [1], [0, 0, 1, 1], [], []>} : vector<32x128xbf16>, vector<128x128xbf16>, vector<32x128xf32> -> vector<32x128xf32>
    %42 = arith.addf %36, %41 : vector<32x128xf32>
    %c0_56 = arith.constant 0 : index
    %c3_57 = arith.constant 3 : index
    %c0_58 = arith.constant 0 : index
    %c1_59 = arith.constant 1 : index
    %c0_60 = arith.constant 0 : index
    %43 = vector.load %arg1[%c0_56, %c3_57, %c0_58, %c1_59, %c0_60] : memref<2x4x5x5x128xbf16, #tpu.memory_space<vmem>>, vector<2x1x4x4x128xbf16>
    %44 = vector.shape_cast %43 : vector<2x1x4x4x128xbf16> to vector<32x128xbf16>
    %c7 = arith.constant 7 : index
    %c0_61 = arith.constant 0 : index
    %c0_62 = arith.constant 0 : index
    %45 = vector.load %arg2[%c7, %c0_61, %c0_62] : memref<16x128x128xbf16, #tpu.memory_space<vmem>>, vector<1x128x128xbf16>
    %46 = vector.shape_cast %45 : vector<1x128x128xbf16> to vector<128x128xbf16>
    %cst_63 = arith.constant dense<0.000000e+00> : vector<32x128xf32>
    %47 = tpu.matmul %44, %46, %cst_63 {dimension_numbers = #tpu.dot_dimension_numbers<[1], [0], [0], [1], [0, 0, 1, 1], [], []>} : vector<32x128xbf16>, vector<128x128xbf16>, vector<32x128xf32> -> vector<32x128xf32>
    %48 = arith.addf %42, %47 : vector<32x128xf32>
    %c0_64 = arith.constant 0 : index
    %c0_65 = arith.constant 0 : index
    %c1_66 = arith.constant 1 : index
    %c0_67 = arith.constant 0 : index
    %c0_68 = arith.constant 0 : index
    %49 = vector.load %arg1[%c0_64, %c0_65, %c1_66, %c0_67, %c0_68] : memref<2x4x5x5x128xbf16, #tpu.memory_space<vmem>>, vector<2x1x4x4x128xbf16>
    %50 = vector.shape_cast %49 : vector<2x1x4x4x128xbf16> to vector<32x128xbf16>
    %c8 = arith.constant 8 : index
    %c0_69 = arith.constant 0 : index
    %c0_70 = arith.constant 0 : index
    %51 = vector.load %arg2[%c8, %c0_69, %c0_70] : memref<16x128x128xbf16, #tpu.memory_space<vmem>>, vector<1x128x128xbf16>
    %52 = vector.shape_cast %51 : vector<1x128x128xbf16> to vector<128x128xbf16>
    %cst_71 = arith.constant dense<0.000000e+00> : vector<32x128xf32>
    %53 = tpu.matmul %50, %52, %cst_71 {dimension_numbers = #tpu.dot_dimension_numbers<[1], [0], [0], [1], [0, 0, 1, 1], [], []>} : vector<32x128xbf16>, vector<128x128xbf16>, vector<32x128xf32> -> vector<32x128xf32>
    %54 = arith.addf %48, %53 : vector<32x128xf32>
    %c0_72 = arith.constant 0 : index
    %c1_73 = arith.constant 1 : index
    %c1_74 = arith.constant 1 : index
    %c0_75 = arith.constant 0 : index
    %c0_76 = arith.constant 0 : index
    %55 = vector.load %arg1[%c0_72, %c1_73, %c1_74, %c0_75, %c0_76] : memref<2x4x5x5x128xbf16, #tpu.memory_space<vmem>>, vector<2x1x4x4x128xbf16>
    %56 = vector.shape_cast %55 : vector<2x1x4x4x128xbf16> to vector<32x128xbf16>
    %c9 = arith.constant 9 : index
    %c0_77 = arith.constant 0 : index
    %c0_78 = arith.constant 0 : index
    %57 = vector.load %arg2[%c9, %c0_77, %c0_78] : memref<16x128x128xbf16, #tpu.memory_space<vmem>>, vector<1x128x128xbf16>
    %58 = vector.shape_cast %57 : vector<1x128x128xbf16> to vector<128x128xbf16>
    %cst_79 = arith.constant dense<0.000000e+00> : vector<32x128xf32>
    %59 = tpu.matmul %56, %58, %cst_79 {dimension_numbers = #tpu.dot_dimension_numbers<[1], [0], [0], [1], [0, 0, 1, 1], [], []>} : vector<32x128xbf16>, vector<128x128xbf16>, vector<32x128xf32> -> vector<32x128xf32>
    %60 = arith.addf %54, %59 : vector<32x128xf32>
    %c0_80 = arith.constant 0 : index
    %c0_81 = arith.constant 0 : index
    %c1_82 = arith.constant 1 : index
    %c1_83 = arith.constant 1 : index
    %c0_84 = arith.constant 0 : index
    %61 = vector.load %arg1[%c0_80, %c0_81, %c1_82, %c1_83, %c0_84] : memref<2x4x5x5x128xbf16, #tpu.memory_space<vmem>>, vector<2x1x4x4x128xbf16>
    %62 = vector.shape_cast %61 : vector<2x1x4x4x128xbf16> to vector<32x128xbf16>
    %c10 = arith.constant 10 : index
    %c0_85 = arith.constant 0 : index
    %c0_86 = arith.constant 0 : index
    %63 = vector.load %arg2[%c10, %c0_85, %c0_86] : memref<16x128x128xbf16, #tpu.memory_space<vmem>>, vector<1x128x128xbf16>
    %64 = vector.shape_cast %63 : vector<1x128x128xbf16> to vector<128x128xbf16>
    %cst_87 = arith.constant dense<0.000000e+00> : vector<32x128xf32>
    %65 = tpu.matmul %62, %64, %cst_87 {dimension_numbers = #tpu.dot_dimension_numbers<[1], [0], [0], [1], [0, 0, 1, 1], [], []>} : vector<32x128xbf16>, vector<128x128xbf16>, vector<32x128xf32> -> vector<32x128xf32>
    %66 = arith.addf %60, %65 : vector<32x128xf32>
    %c0_88 = arith.constant 0 : index
    %c1_89 = arith.constant 1 : index
    %c1_90 = arith.constant 1 : index
    %c1_91 = arith.constant 1 : index
    %c0_92 = arith.constant 0 : index
    %67 = vector.load %arg1[%c0_88, %c1_89, %c1_90, %c1_91, %c0_92] : memref<2x4x5x5x128xbf16, #tpu.memory_space<vmem>>, vector<2x1x4x4x128xbf16>
    %68 = vector.shape_cast %67 : vector<2x1x4x4x128xbf16> to vector<32x128xbf16>
    %c11 = arith.constant 11 : index
    %c0_93 = arith.constant 0 : index
    %c0_94 = arith.constant 0 : index
    %69 = vector.load %arg2[%c11, %c0_93, %c0_94] : memref<16x128x128xbf16, #tpu.memory_space<vmem>>, vector<1x128x128xbf16>
    %70 = vector.shape_cast %69 : vector<1x128x128xbf16> to vector<128x128xbf16>
    %cst_95 = arith.constant dense<0.000000e+00> : vector<32x128xf32>
    %71 = tpu.matmul %68, %70, %cst_95 {dimension_numbers = #tpu.dot_dimension_numbers<[1], [0], [0], [1], [0, 0, 1, 1], [], []>} : vector<32x128xbf16>, vector<128x128xbf16>, vector<32x128xf32> -> vector<32x128xf32>
    %72 = arith.addf %66, %71 : vector<32x128xf32>
    %c0_96 = arith.constant 0 : index
    %c2_97 = arith.constant 2 : index
    %c1_98 = arith.constant 1 : index
    %c0_99 = arith.constant 0 : index
    %c0_100 = arith.constant 0 : index
    %73 = vector.load %arg1[%c0_96, %c2_97, %c1_98, %c0_99, %c0_100] : memref<2x4x5x5x128xbf16, #tpu.memory_space<vmem>>, vector<2x1x4x4x128xbf16>
    %74 = vector.shape_cast %73 : vector<2x1x4x4x128xbf16> to vector<32x128xbf16>
    %c12 = arith.constant 12 : index
    %c0_101 = arith.constant 0 : index
    %c0_102 = arith.constant 0 : index
    %75 = vector.load %arg2[%c12, %c0_101, %c0_102] : memref<16x128x128xbf16, #tpu.memory_space<vmem>>, vector<1x128x128xbf16>
    %76 = vector.shape_cast %75 : vector<1x128x128xbf16> to vector<128x128xbf16>
    %cst_103 = arith.constant dense<0.000000e+00> : vector<32x128xf32>
    %77 = tpu.matmul %74, %76, %cst_103 {dimension_numbers = #tpu.dot_dimension_numbers<[1], [0], [0], [1], [0, 0, 1, 1], [], []>} : vector<32x128xbf16>, vector<128x128xbf16>, vector<32x128xf32> -> vector<32x128xf32>
    %78 = arith.addf %72, %77 : vector<32x128xf32>
    %c0_104 = arith.constant 0 : index
    %c3_105 = arith.constant 3 : index
    %c1_106 = arith.constant 1 : index
    %c0_107 = arith.constant 0 : index
    %c0_108 = arith.constant 0 : index
    %79 = vector.load %arg1[%c0_104, %c3_105, %c1_106, %c0_107, %c0_108] : memref<2x4x5x5x128xbf16, #tpu.memory_space<vmem>>, vector<2x1x4x4x128xbf16>
    %80 = vector.shape_cast %79 : vector<2x1x4x4x128xbf16> to vector<32x128xbf16>
    %c13 = arith.constant 13 : index
    %c0_109 = arith.constant 0 : index
    %c0_110 = arith.constant 0 : index
    %81 = vector.load %arg2[%c13, %c0_109, %c0_110] : memref<16x128x128xbf16, #tpu.memory_space<vmem>>, vector<1x128x128xbf16>
    %82 = vector.shape_cast %81 : vector<1x128x128xbf16> to vector<128x128xbf16>
    %cst_111 = arith.constant dense<0.000000e+00> : vector<32x128xf32>
    %83 = tpu.matmul %80, %82, %cst_111 {dimension_numbers = #tpu.dot_dimension_numbers<[1], [0], [0], [1], [0, 0, 1, 1], [], []>} : vector<32x128xbf16>, vector<128x128xbf16>, vector<32x128xf32> -> vector<32x128xf32>
    %84 = arith.addf %78, %83 : vector<32x128xf32>
    %c0_112 = arith.constant 0 : index
    %c2_113 = arith.constant 2 : index
    %c1_114 = arith.constant 1 : index
    %c1_115 = arith.constant 1 : index
    %c0_116 = arith.constant 0 : index
    %85 = vector.load %arg1[%c0_112, %c2_113, %c1_114, %c1_115, %c0_116] : memref<2x4x5x5x128xbf16, #tpu.memory_space<vmem>>, vector<2x1x4x4x128xbf16>
    %86 = vector.shape_cast %85 : vector<2x1x4x4x128xbf16> to vector<32x128xbf16>
    %c14 = arith.constant 14 : index
    %c0_117 = arith.constant 0 : index
    %c0_118 = arith.constant 0 : index
    %87 = vector.load %arg2[%c14, %c0_117, %c0_118] : memref<16x128x128xbf16, #tpu.memory_space<vmem>>, vector<1x128x128xbf16>
    %88 = vector.shape_cast %87 : vector<1x128x128xbf16> to vector<128x128xbf16>
    %cst_119 = arith.constant dense<0.000000e+00> : vector<32x128xf32>
    %89 = tpu.matmul %86, %88, %cst_119 {dimension_numbers = #tpu.dot_dimension_numbers<[1], [0], [0], [1], [0, 0, 1, 1], [], []>} : vector<32x128xbf16>, vector<128x128xbf16>, vector<32x128xf32> -> vector<32x128xf32>
    %90 = arith.addf %84, %89 : vector<32x128xf32>
    %c0_120 = arith.constant 0 : index
    %c3_121 = arith.constant 3 : index
    %c1_122 = arith.constant 1 : index
    %c1_123 = arith.constant 1 : index
    %c0_124 = arith.constant 0 : index
    %91 = vector.load %arg1[%c0_120, %c3_121, %c1_122, %c1_123, %c0_124] : memref<2x4x5x5x128xbf16, #tpu.memory_space<vmem>>, vector<2x1x4x4x128xbf16>
    %92 = vector.shape_cast %91 : vector<2x1x4x4x128xbf16> to vector<32x128xbf16>
    %c15 = arith.constant 15 : index
    %c0_125 = arith.constant 0 : index
    %c0_126 = arith.constant 0 : index
    %93 = vector.load %arg2[%c15, %c0_125, %c0_126] : memref<16x128x128xbf16, #tpu.memory_space<vmem>>, vector<1x128x128xbf16>
    %94 = vector.shape_cast %93 : vector<1x128x128xbf16> to vector<128x128xbf16>
    %cst_127 = arith.constant dense<0.000000e+00> : vector<32x128xf32>
    %95 = tpu.matmul %92, %94, %cst_127 {dimension_numbers = #tpu.dot_dimension_numbers<[1], [0], [0], [1], [0, 0, 1, 1], [], []>} : vector<32x128xbf16>, vector<128x128xbf16>, vector<32x128xf32> -> vector<32x128xf32>
    %96 = arith.addf %90, %95 : vector<32x128xf32>
    %c0_128 = arith.constant 0 : index
    %c0_129 = arith.constant 0 : index
    %97 = vector.load %arg3[%c0_128, %c0_129] : memref<1x128xf32, #tpu.memory_space<vmem>>, vector<1x128xf32>
    %98 = vector.broadcast %97 : vector<1x128xf32> to vector<32x128xf32>
    %99 = arith.addf %96, %98 : vector<32x128xf32>
    %cst_130 = arith.constant 0.000000e+00 : f32
    %100 = vector.broadcast %cst_130 : f32 to vector<32x128xf32>
    %101 = arith.cmpf oge, %99, %100 : vector<32x128xf32>
    %cst_131 = arith.constant 2.000000e-01 : f32
    %102 = vector.broadcast %cst_131 : f32 to vector<32x128xf32>
    %103 = arith.mulf %102, %99 : vector<32x128xf32>
    %104 = arith.select %101, %99, %103 : vector<32x128xi1>, vector<32x128xf32>
    %105 = vector.shape_cast %104 : vector<32x128xf32> to vector<2x16x128xf32>
    %c0_132 = arith.constant 0 : index
    %c0_133 = arith.constant 0 : index
    %106 = vector.load %arg4[%c0_132, %c0_133] : memref<16x128xf32, #tpu.memory_space<vmem>>, vector<16x128xf32>
    %107 = vector.shape_cast %106 : vector<16x128xf32> to vector<1x16x128xf32>
    %108 = vector.broadcast %107 : vector<1x16x128xf32> to vector<2x16x128xf32>
    %109 = arith.mulf %105, %108 : vector<2x16x128xf32>
    %cst_134 = arith.constant dense<0.000000e+00> : vector<2x16xf32>
    %110 = vector.multi_reduction <add>, %109, %cst_134 [2] : vector<2x16x128xf32> to vector<2x16xf32>
    %cst_135 = arith.constant dense<0.000000e+00> : vector<2xf32>
    %111 = vector.multi_reduction <add>, %110, %cst_135 [1] : vector<2x16xf32> to vector<2xf32>
    %112 = vector.shape_cast %111 : vector<2xf32> to vector<2x1xf32>
    %c0_136 = arith.constant 0 : index
    %c0_137 = arith.constant 0 : index
    %113 = vector.load %arg5[%c0_136, %c0_137] : memref<1x1xf32, #tpu.memory_space<vmem>>, vector<1x1xf32>
    %114 = vector.broadcast %113 : vector<1x1xf32> to vector<2x1xf32>
    %115 = arith.addf %112, %114 : vector<2x1xf32>
    %cst_138 = arith.constant 0.000000e+00 : f32
    %116 = vector.broadcast %cst_138 : f32 to vector<2x1xf32>
    %117 = arith.subf %116, %115 : vector<2x1xf32>
    %118 = math.exp %117 : vector<2x1xf32>
    %cst_139 = arith.constant 1.000000e+00 : f32
    %119 = vector.broadcast %cst_139 : f32 to vector<2x1xf32>
    %120 = arith.addf %119, %118 : vector<2x1xf32>
    %121 = tpu.reciprocal %120 {approx = true} : vector<2x1xf32> -> vector<2x1xf32>
    %c0_140 = arith.constant 0 : index
    %c0_141 = arith.constant 0 : index
    %122 = vector.load %arg6[%c0_140, %c0_141] : memref<2x1xf32, #tpu.memory_space<vmem>>, vector<2x1xf32>
    tpu.vector_store %arg6[%c0_140, %c0_141], %121 {strides = array<i32>} : memref<2x1xf32, #tpu.memory_space<vmem>>, vector<2x1xf32>,
    return
  }
  func.func @transform_0(%arg0: i32) -> (i32, i32, i32, i32, i32) {
    %c0_i32 = arith.constant 0 : i32
    %c0_i32_0 = arith.constant 0 : i32
    %c0_i32_1 = arith.constant 0 : i32
    %c0_i32_2 = arith.constant 0 : i32
    %c0_i32_3 = arith.constant 0 : i32
    return %arg0, %c0_i32, %c0_i32_0, %c0_i32_1, %c0_i32_2 : i32, i32, i32, i32, i32
  }
  func.func @transform_1(%arg0: i32) -> (i32, i32, i32) {
    %c0_i32 = arith.constant 0 : i32
    %c0_i32_0 = arith.constant 0 : i32
    %c0_i32_1 = arith.constant 0 : i32
    %c0_i32_2 = arith.constant 0 : i32
    return %c0_i32, %c0_i32_0, %c0_i32_1 : i32, i32, i32
  }
  func.func @transform_2(%arg0: i32) -> (i32, i32) {
    %c0_i32 = arith.constant 0 : i32
    %c0_i32_0 = arith.constant 0 : i32
    %c0_i32_1 = arith.constant 0 : i32
    return %c0_i32, %c0_i32_0 : i32, i32
  }
  func.func @transform_3(%arg0: i32) -> (i32, i32) {
    %c0_i32 = arith.constant 0 : i32
    %c0_i32_0 = arith.constant 0 : i32
    %c0_i32_1 = arith.constant 0 : i32
    return %c0_i32, %c0_i32_0 : i32, i32
  }
  func.func @transform_4(%arg0: i32) -> (i32, i32) {
    %c0_i32 = arith.constant 0 : i32
    %c0_i32_0 = arith.constant 0 : i32
    %c0_i32_1 = arith.constant 0 : i32
    return %c0_i32, %c0_i32_0 : i32, i32
  }
  func.func @transform_5(%arg0: i32) -> (i32, i32) {
    %c0_i32 = arith.constant 0 : i32
    %c0_i32_0 = arith.constant 0 : i32
    return %arg0, %c0_i32 : i32, i32
  }
}

</mosaic_0001>

<llo_original>
// kernel: discriminator_forward.3
$region0: #{discriminator_forward.3}
  #allocation0 [shape = 'u32[]', space=smem, size = 0x4, offset = 0x4, fixed_abs, tag = 'smem constant byte address 0x4 - core index']
  #allocation1 [shape = 'u32[144,128]{1,0:T(1,128)}', space=vmem, size = 0x12000, scoped, tag = 'internal scratch']
  #allocation2 [shape = 'f32[1,1]{1,0:T(1,128)S(1)}', space=vmem, size = 0x200, scoped, tag = 'scoped memory for discriminator_forward.3']
  %s0 = inlined_call_operand.vmem [shape: bf16[2,4,5,5,128], index: 0, kind: input, shape index: {}]
  %s1 = inlined_call_operand.vmem [shape: bf16[16,128,128], index: 1, kind: input, shape index: {}]
  %s2 = inlined_call_operand.vmem [shape: f32[1,128], index: 2, kind: input, shape index: {}]
  %s3 = inlined_call_operand.vmem [shape: f32[16,128], index: 3, kind: input, shape index: {}]
  %s4 = inlined_call_operand.<no memory space> [shape: f32[1,1], index: 4, kind: input, shape index: {}]
  %s5 = inlined_call_operand.vmem [shape: f32[2,1], index: 5, kind: output, shape index: {}]
  %s6 = sld [smem:[#allocation0]]
  $region30: #{discriminator_forward.3} parent=0
    _
  %s8 = ssub.s32 1, %s6
  %s9 = scalar_select 0, %s8, %s6
  %v10 = vstv %s4
  %11 = vst [vmem:[#allocation2] sm:$0x1] %v10
  // Predicated region
  $region2: #{discriminator_forward.3} parent=0 // pred_check
    _
  $region3: #{discriminator_forward.3} parent=0 // pred_check_branch
    %13 = sbr.rel (0) target = $region5
  $region4: #{discriminator_forward.3} parent=0 // pred_region
    _
  $region5: #{discriminator_forward.3} parent=0 // pred_fallthru
    _
  // Predicated region
  $region6: #{discriminator_forward.3} parent=0 // pred_check
    _
  $region7: #{discriminator_forward.3} parent=0 // pred_check_branch
    %15 = sbr.rel (0) target = $region9
  $region8: #{discriminator_forward.3} parent=0 // pred_region
    _
  $region9: #{discriminator_forward.3} parent=0 // pred_fallthru
    _
  // Predicated region
  $region10: #{discriminator_forward.3} parent=0 // pred_check
    _
  $region11: #{discriminator_forward.3} parent=0 // pred_check_branch
    %17 = sbr.rel (0) target = $region13
  $region12: #{discriminator_forward.3} parent=0 // pred_region
    _
  $region13: #{discriminator_forward.3} parent=0 // pred_fallthru
    _
  // Predicated region
  $region14: #{discriminator_forward.3} parent=0 // pred_check
    _
  $region15: #{discriminator_forward.3} parent=0 // pred_check_branch
    %19 = sbr.rel (0) target = $region17
  $region16: #{discriminator_forward.3} parent=0 // pred_region
    _
  $region17: #{discriminator_forward.3} parent=0 // pred_fallthru
    _
  // Predicated region
  $region18: #{discriminator_forward.3} parent=0 // pred_check
    _
  $region19: #{discriminator_forward.3} parent=0 // pred_check_branch
    %21 = sbr.rel (0) target = $region21
  $region20: #{discriminator_forward.3} parent=0 // pred_region
    _
  $region21: #{discriminator_forward.3} parent=0 // pred_fallthru
    _
  %v23 = vld [vmem:[%s0] sm:$0x3]
  %v24 = vld [vmem:[%s0 + $0x4] sm:$0x3]
  %v25 = vld [vmem:[%s0 + $0x8] sm:$0x3]
  %v26 = vld [vmem:[%s0 + $0xc] sm:$0x3]
  %v27 = vld [vmem:[%s0 + $0x50] sm:$0x3]
  %v28 = vld [vmem:[%s0 + $0x54] sm:$0x3]
  %v29 = vld [vmem:[%s0 + $0x58] sm:$0x3]
  %v30 = vld [vmem:[%s0 + $0x5c] sm:$0x3]
  %v31 = vld [vmem:[%s1] sm:$0xf]
  %v32 = vld [vmem:[%s1 + $0x4] sm:$0xf]
  %v33 = vld [vmem:[%s1 + $0x8] sm:$0xf]
  %v34 = vld [vmem:[%s1 + $0xc] sm:$0xf]
  %v35 = vld [vmem:[%s1 + $0x10] sm:$0xf]
  %v36 = vld [vmem:[%s1 + $0x14] sm:$0xf]
  %v37 = vld [vmem:[%s1 + $0x18] sm:$0xf]
  %v38 = vld [vmem:[%s1 + $0x1c] sm:$0xf]
  %v39 = vld [vmem:[%s1 + $0x20] sm:$0xf]
  %v40 = vld [vmem:[%s1 + $0x24] sm:$0xf]
  %v41 = vld [vmem:[%s1 + $0x28] sm:$0xf]
  %v42 = vld [vmem:[%s1 + $0x2c] sm:$0xf]
  %v43 = vld [vmem:[%s1 + $0x30] sm:$0xf]
  %v44 = vld [vmem:[%s1 + $0x34] sm:$0xf]
  %v45 = vld [vmem:[%s1 + $0x38] sm:$0xf]
  %v46 = vld [vmem:[%s1 + $0x3c] sm:$0xf]
  %s47 = scalar_lea.vmem %s0, 20
  %v48 = vld [vmem:[%s47] sm:$0x3]
  %v49 = vld [vmem:[%s47 + $0x4] sm:$0x3]
  %v50 = vld [vmem:[%s47 + $0x8] sm:$0x3]
  %v51 = vld [vmem:[%s47 + $0xc] sm:$0x3]
  %v52 = vld [vmem:[%s47 + $0x50] sm:$0x3]
  %v53 = vld [vmem:[%s47 + $0x54] sm:$0x3]
  %v54 = vld [vmem:[%s47 + $0x58] sm:$0x3]
  %v55 = vld [vmem:[%s47 + $0x5c] sm:$0x3]
  %s56 = scalar_lea.vmem %s1, 64
  %v57 = vld [vmem:[%s56] sm:$0xf]
  %v58 = vld [vmem:[%s56 + $0x4] sm:$0xf]
  %v59 = vld [vmem:[%s56 + $0x8] sm:$0xf]
  %v60 = vld [vmem:[%s56 + $0xc] sm:$0xf]
  %v61 = vld [vmem:[%s56 + $0x10] sm:$0xf]
  %v62 = vld [vmem:[%s56 + $0x14] sm:$0xf]
  %v63 = vld [vmem:[%s56 + $0x18] sm:$0xf]
  %v64 = vld [vmem:[%s56 + $0x1c] sm:$0xf]
  %v65 = vld [vmem:[%s56 + $0x20] sm:$0xf]
  %v66 = vld [vmem:[%s56 + $0x24] sm:$0xf]
  %v67 = vld [vmem:[%s56 + $0x28] sm:$0xf]
  %v68 = vld [vmem:[%s56 + $0x2c] sm:$0xf]
  %v69 = vld [vmem:[%s56 + $0x30] sm:$0xf]
  %v70 = vld [vmem:[%s56 + $0x34] sm:$0xf]
  %v71 = vld [vmem:[%s56 + $0x38] sm:$0xf]
  %v72 = vld [vmem:[%s56 + $0x3c] sm:$0xf]
  %v81 = vcombine.low %v48, %v49
  %v82 = vcombine.low %v50, %v51
  %v84 = vunpack.c.l.s4 1983009808
  %v85 = vunpack.c.0.s8 %v84
  %v86 = vlaneseq
  %v87 = vshrl.u32 %v86, 7
  %v88 = vsub.s32 %v85, %v87
  %v89 = vrot.slane %v81, %v88
  %v91 = vunpack.c.l.s4 1983009808
  %v92 = vunpack.c.0.s8 %v91
  %v93 = vlaneseq
  %v94 = vshrl.u32 %v93, 7
  %v95 = vsub.s32 %v92, %v94
  %v96 = vrot.slane %v82, %v95
  %v97 = vcombine.low %v89, %v96
  %v98 = vcombine.low %v52, %v53
  %v99 = vcombine.low %v54, %v55
  %v101 = vunpack.c.l.s4 1983009808
  %v102 = vunpack.c.0.s8 %v101
  %v103 = vlaneseq
  %v104 = vshrl.u32 %v103, 7
  %v105 = vsub.s32 %v102, %v104
  %v106 = vrot.slane %v98, %v105
  %v108 = vunpack.c.l.s4 1983009808
  %v109 = vunpack.c.0.s8 %v108
  %v110 = vlaneseq
  %v111 = vshrl.u32 %v110, 7
  %v112 = vsub.s32 %v109, %v111
  %v113 = vrot.slane %v99, %v112
  %v114 = vcombine.low %v106, %v113
  %v133 = vunpack.c.l.b16 %v57
  %v134 = vunpack.c.l.b16 %v58
  %v135 = vunpack.c.l.b16 %v59
  %v136 = vunpack.c.l.b16 %v60
  %v137 = vunpack.c.l.b16 %v61
  %v138 = vunpack.c.l.b16 %v62
  %v139 = vunpack.c.l.b16 %v63
  %v140 = vunpack.c.l.b16 %v64
  %v141 = vunpack.c.l.b16 %v65
  %v142 = vunpack.c.l.b16 %v66
  %v143 = vunpack.c.l.b16 %v67
  %v144 = vunpack.c.l.b16 %v68
  %v145 = vunpack.c.l.b16 %v69
  %v146 = vunpack.c.l.b16 %v70
  %v147 = vunpack.c.l.b16 %v71
  %v148 = vunpack.c.l.b16 %v72
  %v149 = vpack.c.b16 %v134, %v133
  %v150 = vpack.c.b16 %v136, %v135
  %v151 = vpack.c.b16 %v138, %v137
  %v152 = vpack.c.b16 %v140, %v139
  %v153 = vpack.c.b16 %v142, %v141
  %v154 = vpack.c.b16 %v144, %v143
  %v155 = vpack.c.b16 %v146, %v145
  %v156 = vpack.c.b16 %v148, %v147
  %165 = vmatprep.subr.bf16.mxu0 0
  %166 = vmatpush1.bf16.msra.mxu0 %v149
  %167 = vmatprep.subr.bf16.mxu0 0
  %168 = vmatpush1.bf16.msra.mxu0 %v150
  %169 = vmatprep.subr.bf16.mxu0 0
  %170 = vmatpush1.bf16.msra.mxu0 %v151
  %171 = vmatprep.subr.bf16.mxu0 0
  %172 = vmatpush1.bf16.msra.mxu0 %v152
  %173 = vmatprep.subr.bf16.mxu0 0
  %174 = vmatpush1.bf16.msra.mxu0 %v153
  %175 = vmatprep.subr.bf16.mxu0 0
  %176 = vmatpush1.bf16.msra.mxu0 %v154
  %177 = vmatprep.subr.bf16.mxu0 0
  %178 = vmatpush1.bf16.msra.mxu0 %v155
  %179 = vmatprep.subr.bf16.mxu0 0
  %180 = vmatpush1.bf16.msra.mxu0 %v156
  %181 = vmatprep.subr.bf16.mxu0 0
  %182 = vmatpush1.bf16.msra.mxu0 0
  %183 = vmatprep.subr.bf16.mxu0 0
  %184 = vmatpush1.bf16.msra.mxu0 0
  %185 = vmatprep.subr.bf16.mxu0 0
  %186 = vmatpush1.bf16.msra.mxu0 0
  %187 = vmatprep.subr.bf16.mxu0 0
  %188 = vmatpush1.bf16.msra.mxu0 0
  %189 = vmatprep.subr.bf16.mxu0 0
  %190 = vmatpush1.bf16.msra.mxu0 0
  %191 = vmatprep.subr.bf16.mxu0 0
  %192 = vmatpush1.bf16.msra.mxu0 0
  %193 = vmatprep.subr.bf16.mxu0 0
  %194 = vmatpush1.bf16.msra.mxu0 0
  %195 = vmatprep.subr.bf16.mxu0 0
  %196 = vmatpush1.bf16.msra.mxu0 0
  %197 = vmatprep.mubr.bf16.mxu0 0
  %198 = vmatmul.mubr.bf16.gmra.mrb[0].mxu0 %v97
  %v199 = vpop.f32.mrb[0].mxu0
  %v200 = vadd.f32 0.0, %v199
  %v201 = vpop.f32.mrb[0].mxu0
  %v202 = vpop.f32.mrb[0].mxu0
  %v203 = vadd.f32 0.0, %v202
  %v204 = vpop.f32.mrb[0].mxu0
  %205 = vmatprep.mubr.bf16.mxu0 0
  %206 = vmatmul.mubr.bf16.gmra.mrb[0].mxu0 %v114
  %v207 = vpop.f32.mrb[0].mxu0
  %v208 = vadd.f32 0.0, %v207
  %v209 = vpop.f32.mrb[0].mxu0
  %v210 = vpop.f32.mrb[0].mxu0
  %v211 = vadd.f32 0.0, %v210
  %v212 = vpop.f32.mrb[0].mxu0
  %213 = vdwg.mxu0
  %v222 = vcombine.low %v23, %v24
  %v223 = vcombine.low %v25, %v26
  %v225 = vunpack.c.l.s4 1983009808
  %v226 = vunpack.c.0.s8 %v225
  %v227 = vlaneseq
  %v228 = vshrl.u32 %v227, 7
  %v229 = vsub.s32 %v226, %v228
  %v230 = vrot.slane %v222, %v229
  %v232 = vunpack.c.l.s4 1983009808
  %v233 = vunpack.c.0.s8 %v232
  %v234 = vlaneseq
  %v235 = vshrl.u32 %v234, 7
  %v236 = vsub.s32 %v233, %v235
  %v237 = vrot.slane %v223, %v236
  %v238 = vcombine.low %v230, %v237
  %v239 = vcombine.low %v27, %v28
  %v240 = vcombine.low %v29, %v30
  %v242 = vunpack.c.l.s4 1983009808
  %v243 = vunpack.c.0.s8 %v242
  %v244 = vlaneseq
  %v245 = vshrl.u32 %v244, 7
  %v246 = vsub.s32 %v243, %v245
  %v247 = vrot.slane %v239, %v246
  %v249 = vunpack.c.l.s4 1983009808
  %v250 = vunpack.c.0.s8 %v249
  %v251 = vlaneseq
  %v252 = vshrl.u32 %v251, 7
  %v253 = vsub.s32 %v250, %v252
  %v254 = vrot.slane %v240, %v253
  %v255 = vcombine.low %v247, %v254
  %v274 = vunpack.c.l.b16 %v31
  %v275 = vunpack.c.l.b16 %v32
  %v276 = vunpack.c.l.b16 %v33
  %v277 = vunpack.c.l.b16 %v34
  %v278 = vunpack.c.l.b16 %v35
  %v279 = vunpack.c.l.b16 %v36
  %v280 = vunpack.c.l.b16 %v37
  %v281 = vunpack.c.l.b16 %v38
  %v282 = vunpack.c.l.b16 %v39
  %v283 = vunpack.c.l.b16 %v40
  %v284 = vunpack.c.l.b16 %v41
  %v285 = vunpack.c.l.b16 %v42
  %v286 = vunpack.c.l.b16 %v43
  %v287 = vunpack.c.l.b16 %v44
  %v288 = vunpack.c.l.b16 %v45
  %v289 = vunpack.c.l.b16 %v46
  %v290 = vpack.c.b16 %v275, %v274
  %v291 = vpack.c.b16 %v277, %v276
  %v292 = vpack.c.b16 %v279, %v278
  %v293 = vpack.c.b16 %v281, %v280
  %v294 = vpack.c.b16 %v283, %v282
  %v295 = vpack.c.b16 %v285, %v284
  %v296 = vpack.c.b16 %v287, %v286
  %v297 = vpack.c.b16 %v289, %v288
  %306 = vmatprep.subr.bf16.mxu0 0
  %307 = vmatpush1.bf16.msra.mxu0 %v290
  %308 = vmatprep.subr.bf16.mxu0 0
  %309 = vmatpush1.bf16.msra.mxu0 %v291
  %310 = vmatprep.subr.bf16.mxu0 0
  %311 = vmatpush1.bf16.msra.mxu0 %v292
  %312 = vmatprep.subr.bf16.mxu0 0
  %313 = vmatpush1.bf16.msra.mxu0 %v293
  %314 = vmatprep.subr.bf16.mxu0 0
  %315 = vmatpush1.bf16.msra.mxu0 %v294
  %316 = vmatprep.subr.bf16.mxu0 0
  %317 = vmatpush1.bf16.msra.mxu0 %v295
  %318 = vmatprep.subr.bf16.mxu0 0
  %319 = vmatpush1.bf16.msra.mxu0 %v296
  %320 = vmatprep.subr.bf16.mxu0 0
  %321 = vmatpush1.bf16.msra.mxu0 %v297
  %322 = vmatprep.subr.bf16.mxu0 0
  %323 = vmatpush1.bf16.msra.mxu0 0
  %324 = vmatprep.subr.bf16.mxu0 0
  %325 = vmatpush1.bf16.msra.mxu0 0
  %326 = vmatprep.subr.bf16.mxu0 0
  %327 = vmatpush1.bf16.msra.mxu0 0
  %328 = vmatprep.subr.bf16.mxu0 0
  %329 = vmatpush1.bf16.msra.mxu0 0
  %330 = vmatprep.subr.bf16.mxu0 0
  %331 = vmatpush1.bf16.msra.mxu0 0
  %332 = vmatprep.subr.bf16.mxu0 0
  %333 = vmatpush1.bf16.msra.mxu0 0
  %334 = vmatprep.subr.bf16.mxu0 0
  %335 = vmatpush1.bf16.msra.mxu0 0
  %336 = vmatprep.subr.bf16.mxu0 0
  %337 = vmatpush1.bf16.msra.mxu0 0
  %338 = vmatprep.mubr.bf16.mxu0 0
  %339 = vmatmul.mubr.bf16.gmra.mrb[0].mxu0 %v238
  %v340 = vpop.f32.mrb[0].mxu0
  %v341 = vadd.f32 %v200, %v340
  %v342 = vpop.f32.mrb[0].mxu0
  %v343 = vpop.f32.mrb[0].mxu0
  %v344 = vadd.f32 %v203, %v343
  %v345 = vpop.f32.mrb[0].mxu0
  %346 = vmatprep.mubr.bf16.mxu0 0
  %347 = vmatmul.mubr.bf16.gmra.mrb[0].mxu0 %v255
  %v348 = vpop.f32.mrb[0].mxu0
  %v349 = vadd.f32 %v208, %v348
  %v350 = vpop.f32.mrb[0].mxu0
  %v351 = vpop.f32.mrb[0].mxu0
  %v352 = vadd.f32 %v211, %v351
  %v353 = vpop.f32.mrb[0].mxu0
  %354 = vdwg.mxu0
  %v355 = vld [vmem:[%s0] sm:$0x7]
  %v356 = vld [vmem:[%s0 + $0x4] sm:$0x7]
  %v357 = vld [vmem:[%s0 + $0x8] sm:$0x7]
  %v358 = vld [vmem:[%s0 + $0xc] sm:$0x7]
  %v359 = vld [vmem:[%s0 + $0x50] sm:$0x7]
  %v360 = vld [vmem:[%s0 + $0x54] sm:$0x7]
  %v361 = vld [vmem:[%s0 + $0x58] sm:$0x7]
  %v362 = vld [vmem:[%s0 + $0x5c] sm:$0x7]
  %v372 = vunpack.c.l.s4 1983009808
  %v373 = vunpack.c.0.s8 %v372
  %v374 = vlaneseq
  %v375 = vshrl.u32 %v374, 7
  %v376 = vsub.s32 %v373, %v375
  %v377 = vrot.slane %v355, %v376
  %v378 = vcombine.high %v377, %v377
  %v380 = vunpack.c.l.s4 1983009808
  %v381 = vunpack.c.0.s8 %v380
  %v382 = vlaneseq
  %v383 = vshrl.u32 %v382, 7
  %v384 = vsub.s32 %v381, %v383
  %v385 = vrot.slane %v356, %v384
  %v386 = vcombine.high %v385, %v385
  %v388 = vunpack.c.l.s4 1983009808
  %v389 = vunpack.c.0.s8 %v388
  %v390 = vlaneseq
  %v391 = vshrl.u32 %v390, 7
  %v392 = vsub.s32 %v389, %v391
  %v393 = vrot.slane %v357, %v392
  %v394 = vcombine.high %v393, %v393
  %v396 = vunpack.c.l.s4 1983009808
  %v397 = vunpack.c.0.s8 %v396
  %v398 = vlaneseq
  %v399 = vshrl.u32 %v398, 7
  %v400 = vsub.s32 %v397, %v399
  %v401 = vrot.slane %v358, %v400
  %v402 = vcombine.high %v401, %v401
  %v404 = vunpack.c.l.s4 1983009808
  %v405 = vunpack.c.0.s8 %v404
  %v406 = vlaneseq
  %v407 = vshrl.u32 %v406, 7
  %v408 = vsub.s32 %v405, %v407
  %v409 = vrot.slane %v359, %v408
  %v410 = vcombine.high %v409, %v409
  %v412 = vunpack.c.l.s4 1983009808
  %v413 = vunpack.c.0.s8 %v412
  %v414 = vlaneseq
  %v415 = vshrl.u32 %v414, 7
  %v416 = vsub.s32 %v413, %v415
  %v417 = vrot.slane %v360, %v416
  %v418 = vcombine.high %v417, %v417
  %v420 = vunpack.c.l.s4 1983009808
  %v421 = vunpack.c.0.s8 %v420
  %v422 = vlaneseq
  %v423 = vshrl.u32 %v422, 7
  %v424 = vsub.s32 %v421, %v423
  %v425 = vrot.slane %v361, %v424
  %v426 = vcombine.high %v425, %v425
  %v428 = vunpack.c.l.s4 1983009808
  %v429 = vunpack.c.0.s8 %v428
  %v430 = vlaneseq
  %v431 = vshrl.u32 %v430, 7
  %v432 = vsub.s32 %v429, %v431
  %v433 = vrot.slane %v362, %v432
  %v434 = vcombine.high %v433, %v433
  %vm435 = vsmask.f32 1280
  %vm436 = vsmask.f32 3336
  %vm437 = vmor %vm435, %vm436
  %vm438 = vsmask.f32 5392
  %vm439 = vmor %vm437, %vm438
  %vm440 = vsmask.f32 7448
  %vm441 = vmor %vm439, %vm440
  %v443 = vshrl.u32 %v377, 16
  %v445 = vrot.slane %v443, 6
  %v446 = vshll.u32 %v377, 16
  %v448 = vrot.slane %v446, 7
  %v449 = vor.u32 %v445, %v448
  %v450 = vrot.slane %v449, 2
  %v452 = vshll.u32 %v378, 16
  %v454 = vrot.slane %v452, 7
  %v455 = vsel %vm441, %v450, %v454
  %v457 = vshrl.u32 %v385, 16
  %v459 = vrot.slane %v457, 6
  %v460 = vshll.u32 %v385, 16
  %v462 = vrot.slane %v460, 7
  %v463 = vor.u32 %v459, %v462
  %v464 = vrot.slane %v463, 2
  %v466 = vshll.u32 %v386, 16
  %v468 = vrot.slane %v466, 7
  %v469 = vsel %vm441, %v464, %v468
  %v471 = vshrl.u32 %v393, 16
  %v473 = vrot.slane %v471, 6
  %v474 = vshll.u32 %v393, 16
  %v476 = vrot.slane %v474, 7
  %v477 = vor.u32 %v473, %v476
  %v478 = vrot.slane %v477, 2
  %v480 = vshll.u32 %v394, 16
  %v482 = vrot.slane %v480, 7
  %v483 = vsel %vm441, %v478, %v482
  %v485 = vshrl.u32 %v401, 16
  %v487 = vrot.slane %v485, 6
  %v488 = vshll.u32 %v401, 16
  %v490 = vrot.slane %v488, 7
  %v491 = vor.u32 %v487, %v490
  %v492 = vrot.slane %v491, 2
  %v494 = vshll.u32 %v402, 16
  %v496 = vrot.slane %v494, 7
  %v497 = vsel %vm441, %v492, %v496
  %v499 = vshrl.u32 %v409, 16
  %v501 = vrot.slane %v499, 6
  %v502 = vshll.u32 %v409, 16
  %v504 = vrot.slane %v502, 7
  %v505 = vor.u32 %v501, %v504
  %v506 = vrot.slane %v505, 2
  %v508 = vshll.u32 %v410, 16
  %v510 = vrot.slane %v508, 7
  %v511 = vsel %vm441, %v506, %v510
  %v513 = vshrl.u32 %v417, 16
  %v515 = vrot.slane %v513, 6
  %v516 = vshll.u32 %v417, 16
  %v518 = vrot.slane %v516, 7
  %v519 = vor.u32 %v515, %v518
  %v520 = vrot.slane %v519, 2
  %v522 = vshll.u32 %v418, 16
  %v524 = vrot.slane %v522, 7
  %v525 = vsel %vm441, %v520, %v524
  %v527 = vshrl.u32 %v425, 16
  %v529 = vrot.slane %v527, 6
  %v530 = vshll.u32 %v425, 16
  %v532 = vrot.slane %v530, 7
  %v533 = vor.u32 %v529, %v532
  %v534 = vrot.slane %v533, 2
  %v536 = vshll.u32 %v426, 16
  %v538 = vrot.slane %v536, 7
  %v539 = vsel %vm441, %v534, %v538
  %v541 = vshrl.u32 %v433, 16
  %v543 = vrot.slane %v541, 6
  %v544 = vshll.u32 %v433, 16
  %v546 = vrot.slane %v544, 7
  %v547 = vor.u32 %v543, %v546
  %v548 = vrot.slane %v547, 2
  %v550 = vshll.u32 %v434, 16
  %v552 = vrot.slane %v550, 7
  %v553 = vsel %vm441, %v548, %v552
  %s554 = scalar_lea.vmem %s1, 128
  %v555 = vld [vmem:[%s554] sm:$0xf]
  %v556 = vld [vmem:[%s554 + $0x4] sm:$0xf]
  %v557 = vld [vmem:[%s554 + $0x8] sm:$0xf]
  %v558 = vld [vmem:[%s554 + $0xc] sm:$0xf]
  %v559 = vld [vmem:[%s554 + $0x10] sm:$0xf]
  %v560 = vld [vmem:[%s554 + $0x14] sm:$0xf]
  %v561 = vld [vmem:[%s554 + $0x18] sm:$0xf]
  %v562 = vld [vmem:[%s554 + $0x1c] sm:$0xf]
  %v563 = vld [vmem:[%s554 + $0x20] sm:$0xf]
  %v564 = vld [vmem:[%s554 + $0x24] sm:$0xf]
  %v565 = vld [vmem:[%s554 + $0x28] sm:$0xf]
  %v566 = vld [vmem:[%s554 + $0x2c] sm:$0xf]
  %v567 = vld [vmem:[%s554 + $0x30] sm:$0xf]
  %v568 = vld [vmem:[%s554 + $0x34] sm:$0xf]
  %v569 = vld [vmem:[%s554 + $0x38] sm:$0xf]
  %v570 = vld [vmem:[%s554 + $0x3c] sm:$0xf]
  %v571 = vcombine.low %v455, %v469
  %v572 = vcombine.low %v483, %v497
  %v574 = vunpack.c.l.s4 1983009808
  %v575 = vunpack.c.0.s8 %v574
  %v576 = vlaneseq
  %v577 = vshrl.u32 %v576, 7
  %v578 = vsub.s32 %v575, %v577
  %v579 = vrot.slane %v571, %v578
  %v581 = vunpack.c.l.s4 1983009808
  %v582 = vunpack.c.0.s8 %v581
  %v583 = vlaneseq
  %v584 = vshrl.u32 %v583, 7
  %v585 = vsub.s32 %v582, %v584
  %v586 = vrot.slane %v572, %v585
  %v587 = vcombine.low %v579, %v586
  %v588 = vcombine.low %v511, %v525
  %v589 = vcombine.low %v539, %v553
  %v591 = vunpack.c.l.s4 1983009808
  %v592 = vunpack.c.0.s8 %v591
  %v593 = vlaneseq
  %v594 = vshrl.u32 %v593, 7
  %v595 = vsub.s32 %v592, %v594
  %v596 = vrot.slane %v588, %v595
  %v598 = vunpack.c.l.s4 1983009808
  %v599 = vunpack.c.0.s8 %v598
  %v600 = vlaneseq
  %v601 = vshrl.u32 %v600, 7
  %v602 = vsub.s32 %v599, %v601
  %v603 = vrot.slane %v589, %v602
  %v604 = vcombine.low %v596, %v603
  %v623 = vunpack.c.l.b16 %v555
  %v624 = vunpack.c.l.b16 %v556
  %v625 = vunpack.c.l.b16 %v557
  %v626 = vunpack.c.l.b16 %v558
  %v627 = vunpack.c.l.b16 %v559
  %v628 = vunpack.c.l.b16 %v560
  %v629 = vunpack.c.l.b16 %v561
  %v630 = vunpack.c.l.b16 %v562
  %v631 = vunpack.c.l.b16 %v563
  %v632 = vunpack.c.l.b16 %v564
  %v633 = vunpack.c.l.b16 %v565
  %v634 = vunpack.c.l.b16 %v566
  %v635 = vunpack.c.l.b16 %v567
  %v636 = vunpack.c.l.b16 %v568
  %v637 = vunpack.c.l.b16 %v569
  %v638 = vunpack.c.l.b16 %v570
  %v639 = vpack.c.b16 %v624, %v623
  %v640 = vpack.c.b16 %v626, %v625
  %v641 = vpack.c.b16 %v628, %v627
  %v642 = vpack.c.b16 %v630, %v629
  %v643 = vpack.c.b16 %v632, %v631
  %v644 = vpack.c.b16 %v634, %v633
  %v645 = vpack.c.b16 %v636, %v635
  %v646 = vpack.c.b16 %v638, %v637
  %655 = vmatprep.subr.bf16.mxu0 0
  %656 = vmatpush1.bf16.msra.mxu0 %v639
  %657 = vmatprep.subr.bf16.mxu0 0
  %658 = vmatpush1.bf16.msra.mxu0 %v640
  %659 = vmatprep.subr.bf16.mxu0 0
  %660 = vmatpush1.bf16.msra.mxu0 %v641
  %661 = vmatprep.subr.bf16.mxu0 0
  %662 = vmatpush1.bf16.msra.mxu0 %v642
  %663 = vmatprep.subr.bf16.mxu0 0
  %664 = vmatpush1.bf16.msra.mxu0 %v643
  %665 = vmatprep.subr.bf16.mxu0 0
  %666 = vmatpush1.bf16.msra.mxu0 %v644
  %667 = vmatprep.subr.bf16.mxu0 0
  %668 = vmatpush1.bf16.msra.mxu0 %v645
  %669 = vmatprep.subr.bf16.mxu0 0
  %670 = vmatpush1.bf16.msra.mxu0 %v646
  %671 = vmatprep.subr.bf16.mxu0 0
  %672 = vmatpush1.bf16.msra.mxu0 0
  %673 = vmatprep.subr.bf16.mxu0 0
  %674 = vmatpush1.bf16.msra.mxu0 0
  %675 = vmatprep.subr.bf16.mxu0 0
  %676 = vmatpush1.bf16.msra.mxu0 0
  %677 = vmatprep.subr.bf16.mxu0 0
  %678 = vmatpush1.bf16.msra.mxu0 0
  %679 = vmatprep.subr.bf16.mxu0 0
  %680 = vmatpush1.bf16.msra.mxu0 0
  %681 = vmatprep.subr.bf16.mxu0 0
  %682 = vmatpush1.bf16.msra.mxu0 0
  %683 = vmatprep.subr.bf16.mxu0 0
  %684 = vmatpush1.bf16.msra.mxu0 0
  %685 = vmatprep.subr.bf16.mxu0 0
  %686 = vmatpush1.bf16.msra.mxu0 0
  %687 = vmatprep.mubr.bf16.mxu0 0
  %688 = vmatmul.mubr.bf16.gmra.mrb[0].mxu0 %v587
  %v689 = vpop.f32.mrb[0].mxu0
  %v690 = vadd.f32 0.0, %v689
  %v691 = vpop.f32.mrb[0].mxu0
  %v692 = vpop.f32.mrb[0].mxu0
  %v693 = vadd.f32 0.0, %v692
  %v694 = vpop.f32.mrb[0].mxu0
  %695 = vmatprep.mubr.bf16.mxu0 0
  %696 = vmatmul.mubr.bf16.gmra.mrb[0].mxu0 %v604
  %v697 = vpop.f32.mrb[0].mxu0
  %v698 = vadd.f32 0.0, %v697
  %v699 = vpop.f32.mrb[0].mxu0
  %v700 = vpop.f32.mrb[0].mxu0
  %v701 = vadd.f32 0.0, %v700
  %v702 = vpop.f32.mrb[0].mxu0
  %703 = vdwg.mxu0
  %v704 = vadd.f32 %v341, %v690
  %v705 = vadd.f32 %v344, %v693
  %v706 = vadd.f32 %v349, %v698
  %v707 = vadd.f32 %v352, %v701
  %v708 = vld [vmem:[%s47] sm:$0x7]
  %v709 = vld [vmem:[%s47 + $0x4] sm:$0x7]
  %v710 = vld [vmem:[%s47 + $0x8] sm:$0x7]
  %v711 = vld [vmem:[%s47 + $0xc] sm:$0x7]
  %v712 = vld [vmem:[%s47 + $0x50] sm:$0x7]
  %v713 = vld [vmem:[%s47 + $0x54] sm:$0x7]
  %v714 = vld [vmem:[%s47 + $0x58] sm:$0x7]
  %v715 = vld [vmem:[%s47 + $0x5c] sm:$0x7]
  %v725 = vunpack.c.l.s4 1983009808
  %v726 = vunpack.c.0.s8 %v725
  %v727 = vlaneseq
  %v728 = vshrl.u32 %v727, 7
  %v729 = vsub.s32 %v726, %v728
  %v730 = vrot.slane %v708, %v729
  %v731 = vcombine.high %v730, %v730
  %v733 = vunpack.c.l.s4 1983009808
  %v734 = vunpack.c.0.s8 %v733
  %v735 = vlaneseq
  %v736 = vshrl.u32 %v735, 7
  %v737 = vsub.s32 %v734, %v736
  %v738 = vrot.slane %v709, %v737
  %v739 = vcombine.high %v738, %v738
  %v741 = vunpack.c.l.s4 1983009808
  %v742 = vunpack.c.0.s8 %v741
  %v743 = vlaneseq
  %v744 = vshrl.u32 %v743, 7
  %v745 = vsub.s32 %v742, %v744
  %v746 = vrot.slane %v710, %v745
  %v747 = vcombine.high %v746, %v746
  %v749 = vunpack.c.l.s4 1983009808
  %v750 = vunpack.c.0.s8 %v749
  %v751 = vlaneseq
  %v752 = vshrl.u32 %v751, 7
  %v753 = vsub.s32 %v750, %v752
  %v754 = vrot.slane %v711, %v753
  %v755 = vcombine.high %v754, %v754
  %v757 = vunpack.c.l.s4 1983009808
  %v758 = vunpack.c.0.s8 %v757
  %v759 = vlaneseq
  %v760 = vshrl.u32 %v759, 7
  %v761 = vsub.s32 %v758, %v760
  %v762 = vrot.slane %v712, %v761
  %v763 = vcombine.high %v762, %v762
  %v765 = vunpack.c.l.s4 1983009808
  %v766 = vunpack.c.0.s8 %v765
  %v767 = vlaneseq
  %v768 = vshrl.u32 %v767, 7
  %v769 = vsub.s32 %v766, %v768
  %v770 = vrot.slane %v713, %v769
  %v771 = vcombine.high %v770, %v770
  %v773 = vunpack.c.l.s4 1983009808
  %v774 = vunpack.c.0.s8 %v773
  %v775 = vlaneseq
  %v776 = vshrl.u32 %v775, 7
  %v777 = vsub.s32 %v774, %v776
  %v778 = vrot.slane %v714, %v777
  %v779 = vcombine.high %v778, %v778
  %v781 = vunpack.c.l.s4 1983009808
  %v782 = vunpack.c.0.s8 %v781
  %v783 = vlaneseq
  %v784 = vshrl.u32 %v783, 7
  %v785 = vsub.s32 %v782, %v784
  %v786 = vrot.slane %v715, %v785
  %v787 = vcombine.high %v786, %v786
  %v789 = vshrl.u32 %v730, 16
  %v791 = vrot.slane %v789, 6
  %v792 = vshll.u32 %v730, 16
  %v794 = vrot.slane %v792, 7
  %v795 = vor.u32 %v791, %v794
  %v796 = vrot.slane %v795, 2
  %v798 = vshll.u32 %v731, 16
  %v800 = vrot.slane %v798, 7
  %v801 = vsel %vm441, %v796, %v800
  %v803 = vshrl.u32 %v738, 16
  %v805 = vrot.slane %v803, 6
  %v806 = vshll.u32 %v738, 16
  %v808 = vrot.slane %v806, 7
  %v809 = vor.u32 %v805, %v808
  %v810 = vrot.slane %v809, 2
  %v812 = vshll.u32 %v739, 16
  %v814 = vrot.slane %v812, 7
  %v815 = vsel %vm441, %v810, %v814
  %v817 = vshrl.u32 %v746, 16
  %v819 = vrot.slane %v817, 6
  %v820 = vshll.u32 %v746, 16
  %v822 = vrot.slane %v820, 7
  %v823 = vor.u32 %v819, %v822
  %v824 = vrot.slane %v823, 2
  %v826 = vshll.u32 %v747, 16
  %v828 = vrot.slane %v826, 7
  %v829 = vsel %vm441, %v824, %v828
  %v831 = vshrl.u32 %v754, 16
  %v833 = vrot.slane %v831, 6
  %v834 = vshll.u32 %v754, 16
  %v836 = vrot.slane %v834, 7
  %v837 = vor.u32 %v833, %v836
  %v838 = vrot.slane %v837, 2
  %v840 = vshll.u32 %v755, 16
  %v842 = vrot.slane %v840, 7
  %v843 = vsel %vm441, %v838, %v842
  %v845 = vshrl.u32 %v762, 16
  %v847 = vrot.slane %v845, 6
  %v848 = vshll.u32 %v762, 16
  %v850 = vrot.slane %v848, 7
  %v851 = vor.u32 %v847, %v850
  %v852 = vrot.slane %v851, 2
  %v854 = vshll.u32 %v763, 16
  %v856 = vrot.slane %v854, 7
  %v857 = vsel %vm441, %v852, %v856
  %v859 = vshrl.u32 %v770, 16
  %v861 = vrot.slane %v859, 6
  %v862 = vshll.u32 %v770, 16
  %v864 = vrot.slane %v862, 7
  %v865 = vor.u32 %v861, %v864
  %v866 = vrot.slane %v865, 2
  %v868 = vshll.u32 %v771, 16
  %v870 = vrot.slane %v868, 7
  %v871 = vsel %vm441, %v866, %v870
  %v873 = vshrl.u32 %v778, 16
  %v875 = vrot.slane %v873, 6
  %v876 = vshll.u32 %v778, 16
  %v878 = vrot.slane %v876, 7
  %v879 = vor.u32 %v875, %v878
  %v880 = vrot.slane %v879, 2
  %v882 = vshll.u32 %v779, 16
  %v884 = vrot.slane %v882, 7
  %v885 = vsel %vm441, %v880, %v884
  %v887 = vshrl.u32 %v786, 16
  %v889 = vrot.slane %v887, 6
  %v890 = vshll.u32 %v786, 16
  %v892 = vrot.slane %v890, 7
  %v893 = vor.u32 %v889, %v892
  %v894 = vrot.slane %v893, 2
  %v896 = vshll.u32 %v787, 16
  %v898 = vrot.slane %v896, 7
  %v899 = vsel %vm441, %v894, %v898
  %s900 = scalar_lea.vmem %s1, 192
  %v901 = vld [vmem:[%s900] sm:$0xf]
  %v902 = vld [vmem:[%s900 + $0x4] sm:$0xf]
  %v903 = vld [vmem:[%s900 + $0x8] sm:$0xf]
  %v904 = vld [vmem:[%s900 + $0xc] sm:$0xf]
  %v905 = vld [vmem:[%s900 + $0x10] sm:$0xf]
  %v906 = vld [vmem:[%s900 + $0x14] sm:$0xf]
  %v907 = vld [vmem:[%s900 + $0x18] sm:$0xf]
  %v908 = vld [vmem:[%s900 + $0x1c] sm:$0xf]
  %v909 = vld [vmem:[%s900 + $0x20] sm:$0xf]
  %v910 = vld [vmem:[%s900 + $0x24] sm:$0xf]
  %v911 = vld [vmem:[%s900 + $0x28] sm:$0xf]
  %v912 = vld [vmem:[%s900 + $0x2c] sm:$0xf]
  %v913 = vld [vmem:[%s900 + $0x30] sm:$0xf]
  %v914 = vld [vmem:[%s900 + $0x34] sm:$0xf]
  %v915 = vld [vmem:[%s900 + $0x38] sm:$0xf]
  %v916 = vld [vmem:[%s900 + $0x3c] sm:$0xf]
  %v917 = vcombine.low %v801, %v815
  %v918 = vcombine.low %v829, %v843
  %v920 = vunpack.c.l.s4 1983009808
  %v921 = vunpack.c.0.s8 %v920
  %v922 = vlaneseq
  %v923 = vshrl.u32 %v922, 7
  %v924 = vsub.s32 %v921, %v923
  %v925 = vrot.slane %v917, %v924
  %v927 = vunpack.c.l.s4 1983009808
  %v928 = vunpack.c.0.s8 %v927
  %v929 = vlaneseq
  %v930 = vshrl.u32 %v929, 7
  %v931 = vsub.s32 %v928, %v930
  %v932 = vrot.slane %v918, %v931
  %v933 = vcombine.low %v925, %v932
  %v934 = vcombine.low %v857, %v871
  %v935 = vcombine.low %v885, %v899
  %v937 = vunpack.c.l.s4 1983009808
  %v938 = vunpack.c.0.s8 %v937
  %v939 = vlaneseq
  %v940 = vshrl.u32 %v939, 7
  %v941 = vsub.s32 %v938, %v940
  %v942 = vrot.slane %v934, %v941
  %v944 = vunpack.c.l.s4 1983009808
  %v945 = vunpack.c.0.s8 %v944
  %v946 = vlaneseq
  %v947 = vshrl.u32 %v946, 7
  %v948 = vsub.s32 %v945, %v947
  %v949 = vrot.slane %v935, %v948
  %v950 = vcombine.low %v942, %v949
  %v969 = vunpack.c.l.b16 %v901
  %v970 = vunpack.c.l.b16 %v902
  %v971 = vunpack.c.l.b16 %v903
  %v972 = vunpack.c.l.b16 %v904
  %v973 = vunpack.c.l.b16 %v905
  %v974 = vunpack.c.l.b16 %v906
  %v975 = vunpack.c.l.b16 %v907
  %v976 = vunpack.c.l.b16 %v908
  %v977 = vunpack.c.l.b16 %v909
  %v978 = vunpack.c.l.b16 %v910
  %v979 = vunpack.c.l.b16 %v911
  %v980 = vunpack.c.l.b16 %v912
  %v981 = vunpack.c.l.b16 %v913
  %v982 = vunpack.c.l.b16 %v914
  %v983 = vunpack.c.l.b16 %v915
  %v984 = vunpack.c.l.b16 %v916
  %v985 = vpack.c.b16 %v970, %v969
  %v986 = vpack.c.b16 %v972, %v971
  %v987 = vpack.c.b16 %v974, %v973
  %v988 = vpack.c.b16 %v976, %v975
  %v989 = vpack.c.b16 %v978, %v977
  %v990 = vpack.c.b16 %v980, %v979
  %v991 = vpack.c.b16 %v982, %v981
  %v992 = vpack.c.b16 %v984, %v983
  %1001 = vmatprep.subr.bf16.mxu0 0
  %1002 = vmatpush1.bf16.msra.mxu0 %v985
  %1003 = vmatprep.subr.bf16.mxu0 0
  %1004 = vmatpush1.bf16.msra.mxu0 %v986
  %1005 = vmatprep.subr.bf16.mxu0 0
  %1006 = vmatpush1.bf16.msra.mxu0 %v987
  %1007 = vmatprep.subr.bf16.mxu0 0
  %1008 = vmatpush1.bf16.msra.mxu0 %v988
  %1009 = vmatprep.subr.bf16.mxu0 0
  %1010 = vmatpush1.bf16.msra.mxu0 %v989
  %1011 = vmatprep.subr.bf16.mxu0 0
  %1012 = vmatpush1.bf16.msra.mxu0 %v990
  %1013 = vmatprep.subr.bf16.mxu0 0
  %1014 = vmatpush1.bf16.msra.mxu0 %v991
  %1015 = vmatprep.subr.bf16.mxu0 0
  %1016 = vmatpush1.bf16.msra.mxu0 %v992
  %1017 = vmatprep.subr.bf16.mxu0 0
  %1018 = vmatpush1.bf16.msra.mxu0 0
  %1019 = vmatprep.subr.bf16.mxu0 0
  %1020 = vmatpush1.bf16.msra.mxu0 0
  %1021 = vmatprep.subr.bf16.mxu0 0
  %1022 = vmatpush1.bf16.msra.mxu0 0
  %1023 = vmatprep.subr.bf16.mxu0 0
  %1024 = vmatpush1.bf16.msra.mxu0 0
  %1025 = vmatprep.subr.bf16.mxu0 0
  %1026 = vmatpush1.bf16.msra.mxu0 0
  %1027 = vmatprep.subr.bf16.mxu0 0
  %1028 = vmatpush1.bf16.msra.mxu0 0
  %1029 = vmatprep.subr.bf16.mxu0 0
  %1030 = vmatpush1.bf16.msra.mxu0 0
  %1031 = vmatprep.subr.bf16.mxu0 0
  %1032 = vmatpush1.bf16.msra.mxu0 0
  %1033 = vmatprep.mubr.bf16.mxu0 0
  %1034 = vmatmul.mubr.bf16.gmra.mrb[0].mxu0 %v933
  %v1035 = vpop.f32.mrb[0].mxu0
  %v1036 = vadd.f32 0.0, %v1035
  %v1037 = vpop.f32.mrb[0].mxu0
  %v1038 = vpop.f32.mrb[0].mxu0
  %v1039 = vadd.f32 0.0, %v1038
  %v1040 = vpop.f32.mrb[0].mxu0
  %1041 = vmatprep.mubr.bf16.mxu0 0
  %1042 = vmatmul.mubr.bf16.gmra.mrb[0].mxu0 %v950
  %v1043 = vpop.f32.mrb[0].mxu0
  %v1044 = vadd.f32 0.0, %v1043
  %v1045 = vpop.f32.mrb[0].mxu0
  %v1046 = vpop.f32.mrb[0].mxu0
  %v1047 = vadd.f32 0.0, %v1046
  %v1048 = vpop.f32.mrb[0].mxu0
  %1049 = vdwg.mxu0
  %v1050 = vadd.f32 %v704, %v1036
  %v1051 = vadd.f32 %v705, %v1039
  %v1052 = vadd.f32 %v706, %v1044
  %v1053 = vadd.f32 %v707, %v1047
  %s1054 = scalar_lea.vmem %s0, 40
  %v1055 = vld [vmem:[%s1054] sm:$0x3]
  %v1056 = vld [vmem:[%s1054 + $0x4] sm:$0x3]
  %v1057 = vld [vmem:[%s1054 + $0x8] sm:$0x3]
  %v1058 = vld [vmem:[%s1054 + $0xc] sm:$0x3]
  %v1059 = vld [vmem:[%s1054 + $0x50] sm:$0x3]
  %v1060 = vld [vmem:[%s1054 + $0x54] sm:$0x3]
  %v1061 = vld [vmem:[%s1054 + $0x58] sm:$0x3]
  %v1062 = vld [vmem:[%s1054 + $0x5c] sm:$0x3]
  %s1063 = scalar_lea.vmem %s1, 256
  %v1064 = vld [vmem:[%s1063] sm:$0xf]
  %v1065 = vld [vmem:[%s1063 + $0x4] sm:$0xf]
  %v1066 = vld [vmem:[%s1063 + $0x8] sm:$0xf]
  %v1067 = vld [vmem:[%s1063 + $0xc] sm:$0xf]
  %v1068 = vld [vmem:[%s1063 + $0x10] sm:$0xf]
  %v1069 = vld [vmem:[%s1063 + $0x14] sm:$0xf]
  %v1070 = vld [vmem:[%s1063 + $0x18] sm:$0xf]
  %v1071 = vld [vmem:[%s1063 + $0x1c] sm:$0xf]
  %v1072 = vld [vmem:[%s1063 + $0x20] sm:$0xf]
  %v1073 = vld [vmem:[%s1063 + $0x24] sm:$0xf]
  %v1074 = vld [vmem:[%s1063 + $0x28] sm:$0xf]
  %v1075 = vld [vmem:[%s1063 + $0x2c] sm:$0xf]
  %v1076 = vld [vmem:[%s1063 + $0x30] sm:$0xf]
  %v1077 = vld [vmem:[%s1063 + $0x34] sm:$0xf]
  %v1078 = vld [vmem:[%s1063 + $0x38] sm:$0xf]
  %v1079 = vld [vmem:[%s1063 + $0x3c] sm:$0xf]
  %v1088 = vcombine.low %v1055, %v1056
  %v1089 = vcombine.low %v1057, %v1058
  %v1091 = vunpack.c.l.s4 1983009808
  %v1092 = vunpack.c.0.s8 %v1091
  %v1093 = vlaneseq
  %v1094 = vshrl.u32 %v1093, 7
  %v1095 = vsub.s32 %v1092, %v1094
  %v1096 = vrot.slane %v1088, %v1095
  %v1098 = vunpack.c.l.s4 1983009808
  %v1099 = vunpack.c.0.s8 %v1098
  %v1100 = vlaneseq
  %v1101 = vshrl.u32 %v1100, 7
  %v1102 = vsub.s32 %v1099, %v1101
  %v1103 = vrot.slane %v1089, %v1102
  %v1104 = vcombine.low %v1096, %v1103
  %v1105 = vcombine.low %v1059, %v1060
  %v1106 = vcombine.low %v1061, %v1062
  %v1108 = vunpack.c.l.s4 1983009808
  %v1109 = vunpack.c.0.s8 %v1108
  %v1110 = vlaneseq
  %v1111 = vshrl.u32 %v1110, 7
  %v1112 = vsub.s32 %v1109, %v1111
  %v1113 = vrot.slane %v1105, %v1112
  %v1115 = vunpack.c.l.s4 1983009808
  %v1116 = vunpack.c.0.s8 %v1115
  %v1117 = vlaneseq
  %v1118 = vshrl.u32 %v1117, 7
  %v1119 = vsub.s32 %v1116, %v1118
  %v1120 = vrot.slane %v1106, %v1119
  %v1121 = vcombine.low %v1113, %v1120
  %v1140 = vunpack.c.l.b16 %v1064
  %v1141 = vunpack.c.l.b16 %v1065
  %v1142 = vunpack.c.l.b16 %v1066
  %v1143 = vunpack.c.l.b16 %v1067
  %v1144 = vunpack.c.l.b16 %v1068
  %v1145 = vunpack.c.l.b16 %v1069
  %v1146 = vunpack.c.l.b16 %v1070
  %v1147 = vunpack.c.l.b16 %v1071
  %v1148 = vunpack.c.l.b16 %v1072
  %v1149 = vunpack.c.l.b16 %v1073
  %v1150 = vunpack.c.l.b16 %v1074
  %v1151 = vunpack.c.l.b16 %v1075
  %v1152 = vunpack.c.l.b16 %v1076
  %v1153 = vunpack.c.l.b16 %v1077
  %v1154 = vunpack.c.l.b16 %v1078
  %v1155 = vunpack.c.l.b16 %v1079
  %v1156 = vpack.c.b16 %v1141, %v1140
  %v1157 = vpack.c.b16 %v1143, %v1142
  %v1158 = vpack.c.b16 %v1145, %v1144
  %v1159 = vpack.c.b16 %v1147, %v1146
  %v1160 = vpack.c.b16 %v1149, %v1148
  %v1161 = vpack.c.b16 %v1151, %v1150
  %v1162 = vpack.c.b16 %v1153, %v1152
  %v1163 = vpack.c.b16 %v1155, %v1154
  %1172 = vmatprep.subr.bf16.mxu0 0
  %1173 = vmatpush1.bf16.msra.mxu0 %v1156
  %1174 = vmatprep.subr.bf16.mxu0 0
  %1175 = vmatpush1.bf16.msra.mxu0 %v1157
  %1176 = vmatprep.subr.bf16.mxu0 0
  %1177 = vmatpush1.bf16.msra.mxu0 %v1158
  %1178 = vmatprep.subr.bf16.mxu0 0
  %1179 = vmatpush1.bf16.msra.mxu0 %v1159
  %1180 = vmatprep.subr.bf16.mxu0 0
  %1181 = vmatpush1.bf16.msra.mxu0 %v1160
  %1182 = vmatprep.subr.bf16.mxu0 0
  %1183 = vmatpush1.bf16.msra.mxu0 %v1161
  %1184 = vmatprep.subr.bf16.mxu0 0
  %1185 = vmatpush1.bf16.msra.mxu0 %v1162
  %1186 = vmatprep.subr.bf16.mxu0 0
  %1187 = vmatpush1.bf16.msra.mxu0 %v1163
  %1188 = vmatprep.subr.bf16.mxu0 0
  %1189 = vmatpush1.bf16.msra.mxu0 0
  %1190 = vmatprep.subr.bf16.mxu0 0
  %1191 = vmatpush1.bf16.msra.mxu0 0
  %1192 = vmatprep.subr.bf16.mxu0 0
  %1193 = vmatpush1.bf16.msra.mxu0 0
  %1194 = vmatprep.subr.bf16.mxu0 0
  %1195 = vmatpush1.bf16.msra.mxu0 0
  %1196 = vmatprep.subr.bf16.mxu0 0
  %1197 = vmatpush1.bf16.msra.mxu0 0
  %1198 = vmatprep.subr.bf16.mxu0 0
  %1199 = vmatpush1.bf16.msra.mxu0 0
  %1200 = vmatprep.subr.bf16.mxu0 0
  %1201 = vmatpush1.bf16.msra.mxu0 0
  %1202 = vmatprep.subr.bf16.mxu0 0
  %1203 = vmatpush1.bf16.msra.mxu0 0
  %1204 = vmatprep.mubr.bf16.mxu0 0
  %1205 = vmatmul.mubr.bf16.gmra.mrb[0].mxu0 %v1104
  %v1206 = vpop.f32.mrb[0].mxu0
  %v1207 = vadd.f32 0.0, %v1206
  %v1208 = vpop.f32.mrb[0].mxu0
  %v1209 = vpop.f32.mrb[0].mxu0
  %v1210 = vadd.f32 0.0, %v1209
  %v1211 = vpop.f32.mrb[0].mxu0
  %1212 = vmatprep.mubr.bf16.mxu0 0
  %1213 = vmatmul.mubr.bf16.gmra.mrb[0].mxu0 %v1121
  %v1214 = vpop.f32.mrb[0].mxu0
  %v1215 = vadd.f32 0.0, %v1214
  %v1216 = vpop.f32.mrb[0].mxu0
  %v1217 = vpop.f32.mrb[0].mxu0
  %v1218 = vadd.f32 0.0, %v1217
  %v1219 = vpop.f32.mrb[0].mxu0
  %1220 = vdwg.mxu0
  %v1221 = vadd.f32 %v1050, %v1207
  %v1222 = vadd.f32 %v1051, %v1210
  %v1223 = vadd.f32 %v1052, %v1215
  %v1224 = vadd.f32 %v1053, %v1218
  %s1225 = scalar_lea.vmem %s0, 60
  %v1226 = vld [vmem:[%s1225] sm:$0x3]
  %v1227 = vld [vmem:[%s1225 + $0x4] sm:$0x3]
  %v1228 = vld [vmem:[%s1225 + $0x8] sm:$0x3]
  %v1229 = vld [vmem:[%s1225 + $0xc] sm:$0x3]
  %v1230 = vld [vmem:[%s1225 + $0x50] sm:$0x3]
  %v1231 = vld [vmem:[%s1225 + $0x54] sm:$0x3]
  %v1232 = vld [vmem:[%s1225 + $0x58] sm:$0x3]
  %v1233 = vld [vmem:[%s1225 + $0x5c] sm:$0x3]
  %s1234 = scalar_lea.vmem %s1, 320
  %v1235 = vld [vmem:[%s1234] sm:$0xf]
  %v1236 = vld [vmem:[%s1234 + $0x4] sm:$0xf]
  %v1237 = vld [vmem:[%s1234 + $0x8] sm:$0xf]
  %v1238 = vld [vmem:[%s1234 + $0xc] sm:$0xf]
  %v1239 = vld [vmem:[%s1234 + $0x10] sm:$0xf]
  %v1240 = vld [vmem:[%s1234 + $0x14] sm:$0xf]
  %v1241 = vld [vmem:[%s1234 + $0x18] sm:$0xf]
  %v1242 = vld [vmem:[%s1234 + $0x1c] sm:$0xf]
  %v1243 = vld [vmem:[%s1234 + $0x20] sm:$0xf]
  %v1244 = vld [vmem:[%s1234 + $0x24] sm:$0xf]
  %v1245 = vld [vmem:[%s1234 + $0x28] sm:$0xf]
  %v1246 = vld [vmem:[%s1234 + $0x2c] sm:$0xf]
  %v1247 = vld [vmem:[%s1234 + $0x30] sm:$0xf]
  %v1248 = vld [vmem:[%s1234 + $0x34] sm:$0xf]
  %v1249 = vld [vmem:[%s1234 + $0x38] sm:$0xf]
  %v1250 = vld [vmem:[%s1234 + $0x3c] sm:$0xf]
  %v1259 = vcombine.low %v1226, %v1227
  %v1260 = vcombine.low %v1228, %v1229
  %v1262 = vunpack.c.l.s4 1983009808
  %v1263 = vunpack.c.0.s8 %v1262
  %v1264 = vlaneseq
  %v1265 = vshrl.u32 %v1264, 7
  %v1266 = vsub.s32 %v1263, %v1265
  %v1267 = vrot.slane %v1259, %v1266
  %v1269 = vunpack.c.l.s4 1983009808
  %v1270 = vunpack.c.0.s8 %v1269
  %v1271 = vlaneseq
  %v1272 = vshrl.u32 %v1271, 7
  %v1273 = vsub.s32 %v1270, %v1272
  %v1274 = vrot.slane %v1260, %v1273
  %v1275 = vcombine.low %v1267, %v1274
  %v1276 = vcombine.low %v1230, %v1231
  %v1277 = vcombine.low %v1232, %v1233
  %v1279 = vunpack.c.l.s4 1983009808
  %v1280 = vunpack.c.0.s8 %v1279
  %v1281 = vlaneseq
  %v1282 = vshrl.u32 %v1281, 7
  %v1283 = vsub.s32 %v1280, %v1282
  %v1284 = vrot.slane %v1276, %v1283
  %v1286 = vunpack.c.l.s4 1983009808
  %v1287 = vunpack.c.0.s8 %v1286
  %v1288 = vlaneseq
  %v1289 = vshrl.u32 %v1288, 7
  %v1290 = vsub.s32 %v1287, %v1289
  %v1291 = vrot.slane %v1277, %v1290
  %v1292 = vcombine.low %v1284, %v1291
  %v1311 = vunpack.c.l.b16 %v1235
  %v1312 = vunpack.c.l.b16 %v1236
  %v1313 = vunpack.c.l.b16 %v1237
  %v1314 = vunpack.c.l.b16 %v1238
  %v1315 = vunpack.c.l.b16 %v1239
  %v1316 = vunpack.c.l.b16 %v1240
  %v1317 = vunpack.c.l.b16 %v1241
  %v1318 = vunpack.c.l.b16 %v1242
  %v1319 = vunpack.c.l.b16 %v1243
  %v1320 = vunpack.c.l.b16 %v1244
  %v1321 = vunpack.c.l.b16 %v1245
  %v1322 = vunpack.c.l.b16 %v1246
  %v1323 = vunpack.c.l.b16 %v1247
  %v1324 = vunpack.c.l.b16 %v1248
  %v1325 = vunpack.c.l.b16 %v1249
  %v1326 = vunpack.c.l.b16 %v1250
  %v1327 = vpack.c.b16 %v1312, %v1311
  %v1328 = vpack.c.b16 %v1314, %v1313
  %v1329 = vpack.c.b16 %v1316, %v1315
  %v1330 = vpack.c.b16 %v1318, %v1317
  %v1331 = vpack.c.b16 %v1320, %v1319
  %v1332 = vpack.c.b16 %v1322, %v1321
  %v1333 = vpack.c.b16 %v1324, %v1323
  %v1334 = vpack.c.b16 %v1326, %v1325
  %1343 = vmatprep.subr.bf16.mxu0 0
  %1344 = vmatpush1.bf16.msra.mxu0 %v1327
  %1345 = vmatprep.subr.bf16.mxu0 0
  %1346 = vmatpush1.bf16.msra.mxu0 %v1328
  %1347 = vmatprep.subr.bf16.mxu0 0
  %1348 = vmatpush1.bf16.msra.mxu0 %v1329
  %1349 = vmatprep.subr.bf16.mxu0 0
  %1350 = vmatpush1.bf16.msra.mxu0 %v1330
  %1351 = vmatprep.subr.bf16.mxu0 0
  %1352 = vmatpush1.bf16.msra.mxu0 %v1331
  %1353 = vmatprep.subr.bf16.mxu0 0
  %1354 = vmatpush1.bf16.msra.mxu0 %v1332
  %1355 = vmatprep.subr.bf16.mxu0 0
  %1356 = vmatpush1.bf16.msra.mxu0 %v1333
  %1357 = vmatprep.subr.bf16.mxu0 0
  %1358 = vmatpush1.bf16.msra.mxu0 %v1334
  %1359 = vmatprep.subr.bf16.mxu0 0
  %1360 = vmatpush1.bf16.msra.mxu0 0
  %1361 = vmatprep.subr.bf16.mxu0 0
  %1362 = vmatpush1.bf16.msra.mxu0 0
  %1363 = vmatprep.subr.bf16.mxu0 0
  %1364 = vmatpush1.bf16.msra.mxu0 0
  %1365 = vmatprep.subr.bf16.mxu0 0
  %1366 = vmatpush1.bf16.msra.mxu0 0
  %1367 = vmatprep.subr.bf16.mxu0 0
  %1368 = vmatpush1.bf16.msra.mxu0 0
  %1369 = vmatprep.subr.bf16.mxu0 0
  %1370 = vmatpush1.bf16.msra.mxu0 0
  %1371 = vmatprep.subr.bf16.mxu0 0
  %1372 = vmatpush1.bf16.msra.mxu0 0
  %1373 = vmatprep.subr.bf16.mxu0 0
  %1374 = vmatpush1.bf16.msra.mxu0 0
  %1375 = vmatprep.mubr.bf16.mxu0 0
  %1376 = vmatmul.mubr.bf16.gmra.mrb[0].mxu0 %v1275
  %v1377 = vpop.f32.mrb[0].mxu0
  %v1378 = vadd.f32 0.0, %v1377
  %v1379 = vpop.f32.mrb[0].mxu0
  %v1380 = vpop.f32.mrb[0].mxu0
  %v1381 = vadd.f32 0.0, %v1380
  %v1382 = vpop.f32.mrb[0].mxu0
  %1383 = vmatprep.mubr.bf16.mxu0 0
  %1384 = vmatmul.mubr.bf16.gmra.mrb[0].mxu0 %v1292
  %v1385 = vpop.f32.mrb[0].mxu0
  %v1386 = vadd.f32 0.0, %v1385
  %v1387 = vpop.f32.mrb[0].mxu0
  %v1388 = vpop.f32.mrb[0].mxu0
  %v1389 = vadd.f32 0.0, %v1388
  %v1390 = vpop.f32.mrb[0].mxu0
  %1391 = vdwg.mxu0
  %v1392 = vadd.f32 %v1221, %v1378
  %v1393 = vadd.f32 %v1222, %v1381
  %v1394 = vadd.f32 %v1223, %v1386
  %v1395 = vadd.f32 %v1224, %v1389
  %v1396 = vld [vmem:[%s1054] sm:$0x7]
  %v1397 = vld [vmem:[%s1054 + $0x4] sm:$0x7]
  %v1398 = vld [vmem:[%s1054 + $0x8] sm:$0x7]
  %v1399 = vld [vmem:[%s1054 + $0xc] sm:$0x7]
  %v1400 = vld [vmem:[%s1054 + $0x50] sm:$0x7]
  %v1401 = vld [vmem:[%s1054 + $0x54] sm:$0x7]
  %v1402 = vld [vmem:[%s1054 + $0x58] sm:$0x7]
  %v1403 = vld [vmem:[%s1054 + $0x5c] sm:$0x7]
  %v1413 = vunpack.c.l.s4 1983009808
  %v1414 = vunpack.c.0.s8 %v1413
  %v1415 = vlaneseq
  %v1416 = vshrl.u32 %v1415, 7
  %v1417 = vsub.s32 %v1414, %v1416
  %v1418 = vrot.slane %v1396, %v1417
  %v1419 = vcombine.high %v1418, %v1418
  %v1421 = vunpack.c.l.s4 1983009808
  %v1422 = vunpack.c.0.s8 %v1421
  %v1423 = vlaneseq
  %v1424 = vshrl.u32 %v1423, 7
  %v1425 = vsub.s32 %v1422, %v1424
  %v1426 = vrot.slane %v1397, %v1425
  %v1427 = vcombine.high %v1426, %v1426
  %v1429 = vunpack.c.l.s4 1983009808
  %v1430 = vunpack.c.0.s8 %v1429
  %v1431 = vlaneseq
  %v1432 = vshrl.u32 %v1431, 7
  %v1433 = vsub.s32 %v1430, %v1432
  %v1434 = vrot.slane %v1398, %v1433
  %v1435 = vcombine.high %v1434, %v1434
  %v1437 = vunpack.c.l.s4 1983009808
  %v1438 = vunpack.c.0.s8 %v1437
  %v1439 = vlaneseq
  %v1440 = vshrl.u32 %v1439, 7
  %v1441 = vsub.s32 %v1438, %v1440
  %v1442 = vrot.slane %v1399, %v1441
  %v1443 = vcombine.high %v1442, %v1442
  %v1445 = vunpack.c.l.s4 1983009808
  %v1446 = vunpack.c.0.s8 %v1445
  %v1447 = vlaneseq
  %v1448 = vshrl.u32 %v1447, 7
  %v1449 = vsub.s32 %v1446, %v1448
  %v1450 = vrot.slane %v1400, %v1449
  %v1451 = vcombine.high %v1450, %v1450
  %v1453 = vunpack.c.l.s4 1983009808
  %v1454 = vunpack.c.0.s8 %v1453
  %v1455 = vlaneseq
  %v1456 = vshrl.u32 %v1455, 7
  %v1457 = vsub.s32 %v1454, %v1456
  %v1458 = vrot.slane %v1401, %v1457
  %v1459 = vcombine.high %v1458, %v1458
  %v1461 = vunpack.c.l.s4 1983009808
  %v1462 = vunpack.c.0.s8 %v1461
  %v1463 = vlaneseq
  %v1464 = vshrl.u32 %v1463, 7
  %v1465 = vsub.s32 %v1462, %v1464
  %v1466 = vrot.slane %v1402, %v1465
  %v1467 = vcombine.high %v1466, %v1466
  %v1469 = vunpack.c.l.s4 1983009808
  %v1470 = vunpack.c.0.s8 %v1469
  %v1471 = vlaneseq
  %v1472 = vshrl.u32 %v1471, 7
  %v1473 = vsub.s32 %v1470, %v1472
  %v1474 = vrot.slane %v1403, %v1473
  %v1475 = vcombine.high %v1474, %v1474
  %v1477 = vshrl.u32 %v1418, 16
  %v1479 = vrot.slane %v1477, 6
  %v1480 = vshll.u32 %v1418, 16
  %v1482 = vrot.slane %v1480, 7
  %v1483 = vor.u32 %v1479, %v1482
  %v1484 = vrot.slane %v1483, 2
  %v1486 = vshll.u32 %v1419, 16
  %v1488 = vrot.slane %v1486, 7
  %v1489 = vsel %vm441, %v1484, %v1488
  %v1491 = vshrl.u32 %v1426, 16
  %v1493 = vrot.slane %v1491, 6
  %v1494 = vshll.u32 %v1426, 16
  %v1496 = vrot.slane %v1494, 7
  %v1497 = vor.u32 %v1493, %v1496
  %v1498 = vrot.slane %v1497, 2
  %v1500 = vshll.u32 %v1427, 16
  %v1502 = vrot.slane %v1500, 7
  %v1503 = vsel %vm441, %v1498, %v1502
  %v1505 = vshrl.u32 %v1434, 16
  %v1507 = vrot.slane %v1505, 6
  %v1508 = vshll.u32 %v1434, 16
  %v1510 = vrot.slane %v1508, 7
  %v1511 = vor.u32 %v1507, %v1510
  %v1512 = vrot.slane %v1511, 2
  %v1514 = vshll.u32 %v1435, 16
  %v1516 = vrot.slane %v1514, 7
  %v1517 = vsel %vm441, %v1512, %v1516
  %v1519 = vshrl.u32 %v1442, 16
  %v1521 = vrot.slane %v1519, 6
  %v1522 = vshll.u32 %v1442, 16
  %v1524 = vrot.slane %v1522, 7
  %v1525 = vor.u32 %v1521, %v1524
  %v1526 = vrot.slane %v1525, 2
  %v1528 = vshll.u32 %v1443, 16
  %v1530 = vrot.slane %v1528, 7
  %v1531 = vsel %vm441, %v1526, %v1530
  %v1533 = vshrl.u32 %v1450, 16
  %v1535 = vrot.slane %v1533, 6
  %v1536 = vshll.u32 %v1450, 16
  %v1538 = vrot.slane %v1536, 7
  %v1539 = vor.u32 %v1535, %v1538
  %v1540 = vrot.slane %v1539, 2
  %v1542 = vshll.u32 %v1451, 16
  %v1544 = vrot.slane %v1542, 7
  %v1545 = vsel %vm441, %v1540, %v1544
  %v1547 = vshrl.u32 %v1458, 16
  %v1549 = vrot.slane %v1547, 6
  %v1550 = vshll.u32 %v1458, 16
  %v1552 = vrot.slane %v1550, 7
  %v1553 = vor.u32 %v1549, %v1552
  %v1554 = vrot.slane %v1553, 2
  %v1556 = vshll.u32 %v1459, 16
  %v1558 = vrot.slane %v1556, 7
  %v1559 = vsel %vm441, %v1554, %v1558
  %v1561 = vshrl.u32 %v1466, 16
  %v1563 = vrot.slane %v1561, 6
  %v1564 = vshll.u32 %v1466, 16
  %v1566 = vrot.slane %v1564, 7
  %v1567 = vor.u32 %v1563, %v1566
  %v1568 = vrot.slane %v1567, 2
  %v1570 = vshll.u32 %v1467, 16
  %v1572 = vrot.slane %v1570, 7
  %v1573 = vsel %vm441, %v1568, %v1572
  %v1575 = vshrl.u32 %v1474, 16
  %v1577 = vrot.slane %v1575, 6
  %v1578 = vshll.u32 %v1474, 16
  %v1580 = vrot.slane %v1578, 7
  %v1581 = vor.u32 %v1577, %v1580
  %v1582 = vrot.slane %v1581, 2
  %v1584 = vshll.u32 %v1475, 16
  %v1586 = vrot.slane %v1584, 7
  %v1587 = vsel %vm441, %v1582, %v1586
  %s1588 = scalar_lea.vmem %s1, 384
  %v1589 = vld [vmem:[%s1588] sm:$0xf]
  %v1590 = vld [vmem:[%s1588 + $0x4] sm:$0xf]
  %v1591 = vld [vmem:[%s1588 + $0x8] sm:$0xf]
  %v1592 = vld [vmem:[%s1588 + $0xc] sm:$0xf]
  %v1593 = vld [vmem:[%s1588 + $0x10] sm:$0xf]
  %v1594 = vld [vmem:[%s1588 + $0x14] sm:$0xf]
  %v1595 = vld [vmem:[%s1588 + $0x18] sm:$0xf]
  %v1596 = vld [vmem:[%s1588 + $0x1c] sm:$0xf]
  %v1597 = vld [vmem:[%s1588 + $0x20] sm:$0xf]
  %v1598 = vld [vmem:[%s1588 + $0x24] sm:$0xf]
  %v1599 = vld [vmem:[%s1588 + $0x28] sm:$0xf]
  %v1600 = vld [vmem:[%s1588 + $0x2c] sm:$0xf]
  %v1601 = vld [vmem:[%s1588 + $0x30] sm:$0xf]
  %v1602 = vld [vmem:[%s1588 + $0x34] sm:$0xf]
  %v1603 = vld [vmem:[%s1588 + $0x38] sm:$0xf]
  %v1604 = vld [vmem:[%s1588 + $0x3c] sm:$0xf]
  %v1605 = vcombine.low %v1489, %v1503
  %v1606 = vcombine.low %v1517, %v1531
  %v1608 = vunpack.c.l.s4 1983009808
  %v1609 = vunpack.c.0.s8 %v1608
  %v1610 = vlaneseq
  %v1611 = vshrl.u32 %v1610, 7
  %v1612 = vsub.s32 %v1609, %v1611
  %v1613 = vrot.slane %v1605, %v1612
  %v1615 = vunpack.c.l.s4 1983009808
  %v1616 = vunpack.c.0.s8 %v1615
  %v1617 = vlaneseq
  %v1618 = vshrl.u32 %v1617, 7
  %v1619 = vsub.s32 %v1616, %v1618
  %v1620 = vrot.slane %v1606, %v1619
  %v1621 = vcombine.low %v1613, %v1620
  %v1622 = vcombine.low %v1545, %v1559
  %v1623 = vcombine.low %v1573, %v1587
  %v1625 = vunpack.c.l.s4 1983009808
  %v1626 = vunpack.c.0.s8 %v1625
  %v1627 = vlaneseq
  %v1628 = vshrl.u32 %v1627, 7
  %v1629 = vsub.s32 %v1626, %v1628
  %v1630 = vrot.slane %v1622, %v1629
  %v1632 = vunpack.c.l.s4 1983009808
  %v1633 = vunpack.c.0.s8 %v1632
  %v1634 = vlaneseq
  %v1635 = vshrl.u32 %v1634, 7
  %v1636 = vsub.s32 %v1633, %v1635
  %v1637 = vrot.slane %v1623, %v1636
  %v1638 = vcombine.low %v1630, %v1637
  %v1657 = vunpack.c.l.b16 %v1589
  %v1658 = vunpack.c.l.b16 %v1590
  %v1659 = vunpack.c.l.b16 %v1591
  %v1660 = vunpack.c.l.b16 %v1592
  %v1661 = vunpack.c.l.b16 %v1593
  %v1662 = vunpack.c.l.b16 %v1594
  %v1663 = vunpack.c.l.b16 %v1595
  %v1664 = vunpack.c.l.b16 %v1596
  %v1665 = vunpack.c.l.b16 %v1597
  %v1666 = vunpack.c.l.b16 %v1598
  %v1667 = vunpack.c.l.b16 %v1599
  %v1668 = vunpack.c.l.b16 %v1600
  %v1669 = vunpack.c.l.b16 %v1601
  %v1670 = vunpack.c.l.b16 %v1602
  %v1671 = vunpack.c.l.b16 %v1603
  %v1672 = vunpack.c.l.b16 %v1604
  %v1673 = vpack.c.b16 %v1658, %v1657
  %v1674 = vpack.c.b16 %v1660, %v1659
  %v1675 = vpack.c.b16 %v1662, %v1661
  %v1676 = vpack.c.b16 %v1664, %v1663
  %v1677 = vpack.c.b16 %v1666, %v1665
  %v1678 = vpack.c.b16 %v1668, %v1667
  %v1679 = vpack.c.b16 %v1670, %v1669
  %v1680 = vpack.c.b16 %v1672, %v1671
  %1689 = vmatprep.subr.bf16.mxu0 0
  %1690 = vmatpush1.bf16.msra.mxu0 %v1673
  %1691 = vmatprep.subr.bf16.mxu0 0
  %1692 = vmatpush1.bf16.msra.mxu0 %v1674
  %1693 = vmatprep.subr.bf16.mxu0 0
  %1694 = vmatpush1.bf16.msra.mxu0 %v1675
  %1695 = vmatprep.subr.bf16.mxu0 0
  %1696 = vmatpush1.bf16.msra.mxu0 %v1676
  %1697 = vmatprep.subr.bf16.mxu0 0
  %1698 = vmatpush1.bf16.msra.mxu0 %v1677
  %1699 = vmatprep.subr.bf16.mxu0 0
  %1700 = vmatpush1.bf16.msra.mxu0 %v1678
  %1701 = vmatprep.subr.bf16.mxu0 0
  %1702 = vmatpush1.bf16.msra.mxu0 %v1679
  %1703 = vmatprep.subr.bf16.mxu0 0
  %1704 = vmatpush1.bf16.msra.mxu0 %v1680
  %1705 = vmatprep.subr.bf16.mxu0 0
  %1706 = vmatpush1.bf16.msra.mxu0 0
  %1707 = vmatprep.subr.bf16.mxu0 0
  %1708 = vmatpush1.bf16.msra.mxu0 0
  %1709 = vmatprep.subr.bf16.mxu0 0
  %1710 = vmatpush1.bf16.msra.mxu0 0
  %1711 = vmatprep.subr.bf16.mxu0 0
  %1712 = vmatpush1.bf16.msra.mxu0 0
  %1713 = vmatprep.subr.bf16.mxu0 0
  %1714 = vmatpush1.bf16.msra.mxu0 0
  %1715 = vmatprep.subr.bf16.mxu0 0
  %1716 = vmatpush1.bf16.msra.mxu0 0
  %1717 = vmatprep.subr.bf16.mxu0 0
  %1718 = vmatpush1.bf16.msra.mxu0 0
  %1719 = vmatprep.subr.bf16.mxu0 0
  %1720 = vmatpush1.bf16.msra.mxu0 0
  %1721 = vmatprep.mubr.bf16.mxu0 0
  %1722 = vmatmul.mubr.bf16.gmra.mrb[0].mxu0 %v1621
  %v1723 = vpop.f32.mrb[0].mxu0
  %v1724 = vadd.f32 0.0, %v1723
  %v1725 = vpop.f32.mrb[0].mxu0
  %v1726 = vpop.f32.mrb[0].mxu0
  %v1727 = vadd.f32 0.0, %v1726
  %v1728 = vpop.f32.mrb[0].mxu0
  %1729 = vmatprep.mubr.bf16.mxu0 0
  %1730 = vmatmul.mubr.bf16.gmra.mrb[0].mxu0 %v1638
  %v1731 = vpop.f32.mrb[0].mxu0
  %v1732 = vadd.f32 0.0, %v1731
  %v1733 = vpop.f32.mrb[0].mxu0
  %v1734 = vpop.f32.mrb[0].mxu0
  %v1735 = vadd.f32 0.0, %v1734
  %v1736 = vpop.f32.mrb[0].mxu0
  %1737 = vdwg.mxu0
  %v1738 = vadd.f32 %v1392, %v1724
  %v1739 = vadd.f32 %v1393, %v1727
  %v1740 = vadd.f32 %v1394, %v1732
  %v1741 = vadd.f32 %v1395, %v1735
  %v1742 = vld [vmem:[%s1225] sm:$0x7]
  %v1743 = vld [vmem:[%s1225 + $0x4] sm:$0x7]
  %v1744 = vld [vmem:[%s1225 + $0x8] sm:$0x7]
  %v1745 = vld [vmem:[%s1225 + $0xc] sm:$0x7]
  %v1746 = vld [vmem:[%s1225 + $0x50] sm:$0x7]
  %v1747 = vld [vmem:[%s1225 + $0x54] sm:$0x7]
  %v1748 = vld [vmem:[%s1225 + $0x58] sm:$0x7]
  %v1749 = vld [vmem:[%s1225 + $0x5c] sm:$0x7]
  %v1759 = vunpack.c.l.s4 1983009808
  %v1760 = vunpack.c.0.s8 %v1759
  %v1761 = vlaneseq
  %v1762 = vshrl.u32 %v1761, 7
  %v1763 = vsub.s32 %v1760, %v1762
  %v1764 = vrot.slane %v1742, %v1763
  %v1765 = vcombine.high %v1764, %v1764
  %v1767 = vunpack.c.l.s4 1983009808
  %v1768 = vunpack.c.0.s8 %v1767
  %v1769 = vlaneseq
  %v1770 = vshrl.u32 %v1769, 7
  %v1771 = vsub.s32 %v1768, %v1770
  %v1772 = vrot.slane %v1743, %v1771
  %v1773 = vcombine.high %v1772, %v1772
  %v1775 = vunpack.c.l.s4 1983009808
  %v1776 = vunpack.c.0.s8 %v1775
  %v1777 = vlaneseq
  %v1778 = vshrl.u32 %v1777, 7
  %v1779 = vsub.s32 %v1776, %v1778
  %v1780 = vrot.slane %v1744, %v1779
  %v1781 = vcombine.high %v1780, %v1780
  %v1783 = vunpack.c.l.s4 1983009808
  %v1784 = vunpack.c.0.s8 %v1783
  %v1785 = vlaneseq
  %v1786 = vshrl.u32 %v1785, 7
  %v1787 = vsub.s32 %v1784, %v1786
  %v1788 = vrot.slane %v1745, %v1787
  %v1789 = vcombine.high %v1788, %v1788
  %v1791 = vunpack.c.l.s4 1983009808
  %v1792 = vunpack.c.0.s8 %v1791
  %v1793 = vlaneseq
  %v1794 = vshrl.u32 %v1793, 7
  %v1795 = vsub.s32 %v1792, %v1794
  %v1796 = vrot.slane %v1746, %v1795
  %v1797 = vcombine.high %v1796, %v1796
  %v1799 = vunpack.c.l.s4 1983009808
  %v1800 = vunpack.c.0.s8 %v1799
  %v1801 = vlaneseq
  %v1802 = vshrl.u32 %v1801, 7
  %v1803 = vsub.s32 %v1800, %v1802
  %v1804 = vrot.slane %v1747, %v1803
  %v1805 = vcombine.high %v1804, %v1804
  %v1807 = vunpack.c.l.s4 1983009808
  %v1808 = vunpack.c.0.s8 %v1807
  %v1809 = vlaneseq
  %v1810 = vshrl.u32 %v1809, 7
  %v1811 = vsub.s32 %v1808, %v1810
  %v1812 = vrot.slane %v1748, %v1811
  %v1813 = vcombine.high %v1812, %v1812
  %v1815 = vunpack.c.l.s4 1983009808
  %v1816 = vunpack.c.0.s8 %v1815
  %v1817 = vlaneseq
  %v1818 = vshrl.u32 %v1817, 7
  %v1819 = vsub.s32 %v1816, %v1818
  %v1820 = vrot.slane %v1749, %v1819
  %v1821 = vcombine.high %v1820, %v1820
  %v1823 = vshrl.u32 %v1764, 16
  %v1825 = vrot.slane %v1823, 6
  %v1826 = vshll.u32 %v1764, 16
  %v1828 = vrot.slane %v1826, 7
  %v1829 = vor.u32 %v1825, %v1828
  %v1830 = vrot.slane %v1829, 2
  %v1832 = vshll.u32 %v1765, 16
  %v1834 = vrot.slane %v1832, 7
  %v1835 = vsel %vm441, %v1830, %v1834
  %v1837 = vshrl.u32 %v1772, 16
  %v1839 = vrot.slane %v1837, 6
  %v1840 = vshll.u32 %v1772, 16
  %v1842 = vrot.slane %v1840, 7
  %v1843 = vor.u32 %v1839, %v1842
  %v1844 = vrot.slane %v1843, 2
  %v1846 = vshll.u32 %v1773, 16
  %v1848 = vrot.slane %v1846, 7
  %v1849 = vsel %vm441, %v1844, %v1848
  %v1851 = vshrl.u32 %v1780, 16
  %v1853 = vrot.slane %v1851, 6
  %v1854 = vshll.u32 %v1780, 16
  %v1856 = vrot.slane %v1854, 7
  %v1857 = vor.u32 %v1853, %v1856
  %v1858 = vrot.slane %v1857, 2
  %v1860 = vshll.u32 %v1781, 16
  %v1862 = vrot.slane %v1860, 7
  %v1863 = vsel %vm441, %v1858, %v1862
  %v1865 = vshrl.u32 %v1788, 16
  %v1867 = vrot.slane %v1865, 6
  %v1868 = vshll.u32 %v1788, 16
  %v1870 = vrot.slane %v1868, 7
  %v1871 = vor.u32 %v1867, %v1870
  %v1872 = vrot.slane %v1871, 2
  %v1874 = vshll.u32 %v1789, 16
  %v1876 = vrot.slane %v1874, 7
  %v1877 = vsel %vm441, %v1872, %v1876
  %v1879 = vshrl.u32 %v1796, 16
  %v1881 = vrot.slane %v1879, 6
  %v1882 = vshll.u32 %v1796, 16
  %v1884 = vrot.slane %v1882, 7
  %v1885 = vor.u32 %v1881, %v1884
  %v1886 = vrot.slane %v1885, 2
  %v1888 = vshll.u32 %v1797, 16
  %v1890 = vrot.slane %v1888, 7
  %v1891 = vsel %vm441, %v1886, %v1890
  %v1893 = vshrl.u32 %v1804, 16
  %v1895 = vrot.slane %v1893, 6
  %v1896 = vshll.u32 %v1804, 16
  %v1898 = vrot.slane %v1896, 7
  %v1899 = vor.u32 %v1895, %v1898
  %v1900 = vrot.slane %v1899, 2
  %v1902 = vshll.u32 %v1805, 16
  %v1904 = vrot.slane %v1902, 7
  %v1905 = vsel %vm441, %v1900, %v1904
  %v1907 = vshrl.u32 %v1812, 16
  %v1909 = vrot.slane %v1907, 6
  %v1910 = vshll.u32 %v1812, 16
  %v1912 = vrot.slane %v1910, 7
  %v1913 = vor.u32 %v1909, %v1912
  %v1914 = vrot.slane %v1913, 2
  %v1916 = vshll.u32 %v1813, 16
  %v1918 = vrot.slane %v1916, 7
  %v1919 = vsel %vm441, %v1914, %v1918
  %v1921 = vshrl.u32 %v1820, 16
  %v1923 = vrot.slane %v1921, 6
  %v1924 = vshll.u32 %v1820, 16
  %v1926 = vrot.slane %v1924, 7
  %v1927 = vor.u32 %v1923, %v1926
  %v1928 = vrot.slane %v1927, 2
  %v1930 = vshll.u32 %v1821, 16
  %v1932 = vrot.slane %v1930, 7
  %v1933 = vsel %vm441, %v1928, %v1932
  %s1934 = scalar_lea.vmem %s1, 448
  %v1935 = vld [vmem:[%s1934] sm:$0xf]
  %v1936 = vld [vmem:[%s1934 + $0x4] sm:$0xf]
  %v1937 = vld [vmem:[%s1934 + $0x8] sm:$0xf]
  %v1938 = vld [vmem:[%s1934 + $0xc] sm:$0xf]
  %v1939 = vld [vmem:[%s1934 + $0x10] sm:$0xf]
  %v1940 = vld [vmem:[%s1934 + $0x14] sm:$0xf]
  %v1941 = vld [vmem:[%s1934 + $0x18] sm:$0xf]
  %v1942 = vld [vmem:[%s1934 + $0x1c] sm:$0xf]
  %v1943 = vld [vmem:[%s1934 + $0x20] sm:$0xf]
  %v1944 = vld [vmem:[%s1934 + $0x24] sm:$0xf]
  %v1945 = vld [vmem:[%s1934 + $0x28] sm:$0xf]
  %v1946 = vld [vmem:[%s1934 + $0x2c] sm:$0xf]
  %v1947 = vld [vmem:[%s1934 + $0x30] sm:$0xf]
  %v1948 = vld [vmem:[%s1934 + $0x34] sm:$0xf]
  %v1949 = vld [vmem:[%s1934 + $0x38] sm:$0xf]
  %v1950 = vld [vmem:[%s1934 + $0x3c] sm:$0xf]
  %v1951 = vcombine.low %v1835, %v1849
  %v1952 = vcombine.low %v1863, %v1877
  %v1954 = vunpack.c.l.s4 1983009808
  %v1955 = vunpack.c.0.s8 %v1954
  %v1956 = vlaneseq
  %v1957 = vshrl.u32 %v1956, 7
  %v1958 = vsub.s32 %v1955, %v1957
  %v1959 = vrot.slane %v1951, %v1958
  %v1961 = vunpack.c.l.s4 1983009808
  %v1962 = vunpack.c.0.s8 %v1961
  %v1963 = vlaneseq
  %v1964 = vshrl.u32 %v1963, 7
  %v1965 = vsub.s32 %v1962, %v1964
  %v1966 = vrot.slane %v1952, %v1965
  %v1967 = vcombine.low %v1959, %v1966
  %v1968 = vcombine.low %v1891, %v1905
  %v1969 = vcombine.low %v1919, %v1933
  %v1971 = vunpack.c.l.s4 1983009808
  %v1972 = vunpack.c.0.s8 %v1971
  %v1973 = vlaneseq
  %v1974 = vshrl.u32 %v1973, 7
  %v1975 = vsub.s32 %v1972, %v1974
  %v1976 = vrot.slane %v1968, %v1975
  %v1978 = vunpack.c.l.s4 1983009808
  %v1979 = vunpack.c.0.s8 %v1978
  %v1980 = vlaneseq
  %v1981 = vshrl.u32 %v1980, 7
  %v1982 = vsub.s32 %v1979, %v1981
  %v1983 = vrot.slane %v1969, %v1982
  %v1984 = vcombine.low %v1976, %v1983
  %v2003 = vunpack.c.l.b16 %v1935
  %v2004 = vunpack.c.l.b16 %v1936
  %v2005 = vunpack.c.l.b16 %v1937
  %v2006 = vunpack.c.l.b16 %v1938
  %v2007 = vunpack.c.l.b16 %v1939
  %v2008 = vunpack.c.l.b16 %v1940
  %v2009 = vunpack.c.l.b16 %v1941
  %v2010 = vunpack.c.l.b16 %v1942
  %v2011 = vunpack.c.l.b16 %v1943
  %v2012 = vunpack.c.l.b16 %v1944
  %v2013 = vunpack.c.l.b16 %v1945
  %v2014 = vunpack.c.l.b16 %v1946
  %v2015 = vunpack.c.l.b16 %v1947
  %v2016 = vunpack.c.l.b16 %v1948
  %v2017 = vunpack.c.l.b16 %v1949
  %v2018 = vunpack.c.l.b16 %v1950
  %v2019 = vpack.c.b16 %v2004, %v2003
  %v2020 = vpack.c.b16 %v2006, %v2005
  %v2021 = vpack.c.b16 %v2008, %v2007
  %v2022 = vpack.c.b16 %v2010, %v2009
  %v2023 = vpack.c.b16 %v2012, %v2011
  %v2024 = vpack.c.b16 %v2014, %v2013
  %v2025 = vpack.c.b16 %v2016, %v2015
  %v2026 = vpack.c.b16 %v2018, %v2017
  %2035 = vmatprep.subr.bf16.mxu0 0
  %2036 = vmatpush1.bf16.msra.mxu0 %v2019
  %2037 = vmatprep.subr.bf16.mxu0 0
  %2038 = vmatpush1.bf16.msra.mxu0 %v2020
  %2039 = vmatprep.subr.bf16.mxu0 0
  %2040 = vmatpush1.bf16.msra.mxu0 %v2021
  %2041 = vmatprep.subr.bf16.mxu0 0
  %2042 = vmatpush1.bf16.msra.mxu0 %v2022
  %2043 = vmatprep.subr.bf16.mxu0 0
  %2044 = vmatpush1.bf16.msra.mxu0 %v2023
  %2045 = vmatprep.subr.bf16.mxu0 0
  %2046 = vmatpush1.bf16.msra.mxu0 %v2024
  %2047 = vmatprep.subr.bf16.mxu0 0
  %2048 = vmatpush1.bf16.msra.mxu0 %v2025
  %2049 = vmatprep.subr.bf16.mxu0 0
  %2050 = vmatpush1.bf16.msra.mxu0 %v2026
  %2051 = vmatprep.subr.bf16.mxu0 0
  %2052 = vmatpush1.bf16.msra.mxu0 0
  %2053 = vmatprep.subr.bf16.mxu0 0
  %2054 = vmatpush1.bf16.msra.mxu0 0
  %2055 = vmatprep.subr.bf16.mxu0 0
  %2056 = vmatpush1.bf16.msra.mxu0 0
  %2057 = vmatprep.subr.bf16.mxu0 0
  %2058 = vmatpush1.bf16.msra.mxu0 0
  %2059 = vmatprep.subr.bf16.mxu0 0
  %2060 = vmatpush1.bf16.msra.mxu0 0
  %2061 = vmatprep.subr.bf16.mxu0 0
  %2062 = vmatpush1.bf16.msra.mxu0 0
  %2063 = vmatprep.subr.bf16.mxu0 0
  %2064 = vmatpush1.bf16.msra.mxu0 0
  %2065 = vmatprep.subr.bf16.mxu0 0
  %2066 = vmatpush1.bf16.msra.mxu0 0
  %2067 = vmatprep.mubr.bf16.mxu0 0
  %2068 = vmatmul.mubr.bf16.gmra.mrb[0].mxu0 %v1967
  %v2069 = vpop.f32.mrb[0].mxu0
  %v2070 = vadd.f32 0.0, %v2069
  %v2071 = vpop.f32.mrb[0].mxu0
  %v2072 = vpop.f32.mrb[0].mxu0
  %v2073 = vadd.f32 0.0, %v2072
  %v2074 = vpop.f32.mrb[0].mxu0
  %2075 = vmatprep.mubr.bf16.mxu0 0
  %2076 = vmatmul.mubr.bf16.gmra.mrb[0].mxu0 %v1984
  %v2077 = vpop.f32.mrb[0].mxu0
  %v2078 = vadd.f32 0.0, %v2077
  %v2079 = vpop.f32.mrb[0].mxu0
  %v2080 = vpop.f32.mrb[0].mxu0
  %v2081 = vadd.f32 0.0, %v2080
  %v2082 = vpop.f32.mrb[0].mxu0
  %2083 = vdwg.mxu0
  %v2084 = vadd.f32 %v1738, %v2070
  %v2085 = vadd.f32 %v1739, %v2073
  %v2086 = vadd.f32 %v1740, %v2078
  %v2087 = vadd.f32 %v1741, %v2081
  %s2088 = scalar_lea.vmem %s0, 4
  %v2089 = vld [vmem:[%s2088] sm:$0x3]
  %v2090 = vld [vmem:[%s2088 + $0x4] sm:$0x3]
  %v2091 = vld [vmem:[%s2088 + $0x8] sm:$0x3]
  %v2092 = vld [vmem:[%s2088 + $0xc] sm:$0x3]
  %v2093 = vld [vmem:[%s2088 + $0x50] sm:$0x3]
  %v2094 = vld [vmem:[%s2088 + $0x54] sm:$0x3]
  %v2095 = vld [vmem:[%s2088 + $0x58] sm:$0x3]
  %v2096 = vld [vmem:[%s2088 + $0x5c] sm:$0x3]
  %s2097 = scalar_lea.vmem %s1, 512
  %v2098 = vld [vmem:[%s2097] sm:$0xf]
  %v2099 = vld [vmem:[%s2097 + $0x4] sm:$0xf]
  %v2100 = vld [vmem:[%s2097 + $0x8] sm:$0xf]
  %v2101 = vld [vmem:[%s2097 + $0xc] sm:$0xf]
  %v2102 = vld [vmem:[%s2097 + $0x10] sm:$0xf]
  %v2103 = vld [vmem:[%s2097 + $0x14] sm:$0xf]
  %v2104 = vld [vmem:[%s2097 + $0x18] sm:$0xf]
  %v2105 = vld [vmem:[%s2097 + $0x1c] sm:$0xf]
  %v2106 = vld [vmem:[%s2097 + $0x20] sm:$0xf]
  %v2107 = vld [vmem:[%s2097 + $0x24] sm:$0xf]
  %v2108 = vld [vmem:[%s2097 + $0x28] sm:$0xf]
  %v2109 = vld [vmem:[%s2097 + $0x2c] sm:$0xf]
  %v2110 = vld [vmem:[%s2097 + $0x30] sm:$0xf]
  %v2111 = vld [vmem:[%s2097 + $0x34] sm:$0xf]
  %v2112 = vld [vmem:[%s2097 + $0x38] sm:$0xf]
  %v2113 = vld [vmem:[%s2097 + $0x3c] sm:$0xf]
  %v2122 = vcombine.low %v2089, %v2090
  %v2123 = vcombine.low %v2091, %v2092
  %v2125 = vunpack.c.l.s4 1983009808
  %v2126 = vunpack.c.0.s8 %v2125
  %v2127 = vlaneseq
  %v2128 = vshrl.u32 %v2127, 7
  %v2129 = vsub.s32 %v2126, %v2128
  %v2130 = vrot.slane %v2122, %v2129
  %v2132 = vunpack.c.l.s4 1983009808
  %v2133 = vunpack.c.0.s8 %v2132
  %v2134 = vlaneseq
  %v2135 = vshrl.u32 %v2134, 7
  %v2136 = vsub.s32 %v2133, %v2135
  %v2137 = vrot.slane %v2123, %v2136
  %v2138 = vcombine.low %v2130, %v2137
  %v2139 = vcombine.low %v2093, %v2094
  %v2140 = vcombine.low %v2095, %v2096
  %v2142 = vunpack.c.l.s4 1983009808
  %v2143 = vunpack.c.0.s8 %v2142
  %v2144 = vlaneseq
  %v2145 = vshrl.u32 %v2144, 7
  %v2146 = vsub.s32 %v2143, %v2145
  %v2147 = vrot.slane %v2139, %v2146
  %v2149 = vunpack.c.l.s4 1983009808
  %v2150 = vunpack.c.0.s8 %v2149
  %v2151 = vlaneseq
  %v2152 = vshrl.u32 %v2151, 7
  %v2153 = vsub.s32 %v2150, %v2152
  %v2154 = vrot.slane %v2140, %v2153
  %v2155 = vcombine.low %v2147, %v2154
  %v2174 = vunpack.c.l.b16 %v2098
  %v2175 = vunpack.c.l.b16 %v2099
  %v2176 = vunpack.c.l.b16 %v2100
  %v2177 = vunpack.c.l.b16 %v2101
  %v2178 = vunpack.c.l.b16 %v2102
  %v2179 = vunpack.c.l.b16 %v2103
  %v2180 = vunpack.c.l.b16 %v2104
  %v2181 = vunpack.c.l.b16 %v2105
  %v2182 = vunpack.c.l.b16 %v2106
  %v2183 = vunpack.c.l.b16 %v2107
  %v2184 = vunpack.c.l.b16 %v2108
  %v2185 = vunpack.c.l.b16 %v2109
  %v2186 = vunpack.c.l.b16 %v2110
  %v2187 = vunpack.c.l.b16 %v2111
  %v2188 = vunpack.c.l.b16 %v2112
  %v2189 = vunpack.c.l.b16 %v2113
  %v2190 = vpack.c.b16 %v2175, %v2174
  %v2191 = vpack.c.b16 %v2177, %v2176
  %v2192 = vpack.c.b16 %v2179, %v2178
  %v2193 = vpack.c.b16 %v2181, %v2180
  %v2194 = vpack.c.b16 %v2183, %v2182
  %v2195 = vpack.c.b16 %v2185, %v2184
  %v2196 = vpack.c.b16 %v2187, %v2186
  %v2197 = vpack.c.b16 %v2189, %v2188
  %2206 = vmatprep.subr.bf16.mxu0 0
  %2207 = vmatpush1.bf16.msra.mxu0 %v2190
  %2208 = vmatprep.subr.bf16.mxu0 0
  %2209 = vmatpush1.bf16.msra.mxu0 %v2191
  %2210 = vmatprep.subr.bf16.mxu0 0
  %2211 = vmatpush1.bf16.msra.mxu0 %v2192
  %2212 = vmatprep.subr.bf16.mxu0 0
  %2213 = vmatpush1.bf16.msra.mxu0 %v2193
  %2214 = vmatprep.subr.bf16.mxu0 0
  %2215 = vmatpush1.bf16.msra.mxu0 %v2194
  %2216 = vmatprep.subr.bf16.mxu0 0
  %2217 = vmatpush1.bf16.msra.mxu0 %v2195
  %2218 = vmatprep.subr.bf16.mxu0 0
  %2219 = vmatpush1.bf16.msra.mxu0 %v2196
  %2220 = vmatprep.subr.bf16.mxu0 0
  %2221 = vmatpush1.bf16.msra.mxu0 %v2197
  %2222 = vmatprep.subr.bf16.mxu0 0
  %2223 = vmatpush1.bf16.msra.mxu0 0
  %2224 = vmatprep.subr.bf16.mxu0 0
  %2225 = vmatpush1.bf16.msra.mxu0 0
  %2226 = vmatprep.subr.bf16.mxu0 0
  %2227 = vmatpush1.bf16.msra.mxu0 0
  %2228 = vmatprep.subr.bf16.mxu0 0
  %2229 = vmatpush1.bf16.msra.mxu0 0
  %2230 = vmatprep.subr.bf16.mxu0 0
  %2231 = vmatpush1.bf16.msra.mxu0 0
  %2232 = vmatprep.subr.bf16.mxu0 0
  %2233 = vmatpush1.bf16.msra.mxu0 0
  %2234 = vmatprep.subr.bf16.mxu0 0
  %2235 = vmatpush1.bf16.msra.mxu0 0
  %2236 = vmatprep.subr.bf16.mxu0 0
  %2237 = vmatpush1.bf16.msra.mxu0 0
  %2238 = vmatprep.mubr.bf16.mxu0 0
  %2239 = vmatmul.mubr.bf16.gmra.mrb[0].mxu0 %v2138
  %v2240 = vpop.f32.mrb[0].mxu0
  %v2241 = vadd.f32 0.0, %v2240
  %v2242 = vpop.f32.mrb[0].mxu0
  %v2243 = vpop.f32.mrb[0].mxu0
  %v2244 = vadd.f32 0.0, %v2243
  %v2245 = vpop.f32.mrb[0].mxu0
  %2246 = vmatprep.mubr.bf16.mxu0 0
  %2247 = vmatmul.mubr.bf16.gmra.mrb[0].mxu0 %v2155
  %v2248 = vpop.f32.mrb[0].mxu0
  %v2249 = vadd.f32 0.0, %v2248
  %v2250 = vpop.f32.mrb[0].mxu0
  %v2251 = vpop.f32.mrb[0].mxu0
  %v2252 = vadd.f32 0.0, %v2251
  %v2253 = vpop.f32.mrb[0].mxu0
  %2254 = vdwg.mxu0
  %v2255 = vadd.f32 %v2084, %v2241
  %v2256 = vadd.f32 %v2085, %v2244
  %v2257 = vadd.f32 %v2086, %v2249
  %v2258 = vadd.f32 %v2087, %v2252
  %s2259 = scalar_lea.vmem %s0, 24
  %v2260 = vld [vmem:[%s2259] sm:$0x3]
  %v2261 = vld [vmem:[%s2259 + $0x4] sm:$0x3]
  %v2262 = vld [vmem:[%s2259 + $0x8] sm:$0x3]
  %v2263 = vld [vmem:[%s2259 + $0xc] sm:$0x3]
  %v2264 = vld [vmem:[%s2259 + $0x50] sm:$0x3]
  %v2265 = vld [vmem:[%s2259 + $0x54] sm:$0x3]
  %v2266 = vld [vmem:[%s2259 + $0x58] sm:$0x3]
  %v2267 = vld [vmem:[%s2259 + $0x5c] sm:$0x3]
  %s2268 = scalar_lea.vmem %s1, 576
  %v2269 = vld [vmem:[%s2268] sm:$0xf]
  %v2270 = vld [vmem:[%s2268 + $0x4] sm:$0xf]
  %v2271 = vld [vmem:[%s2268 + $0x8] sm:$0xf]
  %v2272 = vld [vmem:[%s2268 + $0xc] sm:$0xf]
  %v2273 = vld [vmem:[%s2268 + $0x10] sm:$0xf]
  %v2274 = vld [vmem:[%s2268 + $0x14] sm:$0xf]
  %v2275 = vld [vmem:[%s2268 + $0x18] sm:$0xf]
  %v2276 = vld [vmem:[%s2268 + $0x1c] sm:$0xf]
  %v2277 = vld [vmem:[%s2268 + $0x20] sm:$0xf]
  %v2278 = vld [vmem:[%s2268 + $0x24] sm:$0xf]
  %v2279 = vld [vmem:[%s2268 + $0x28] sm:$0xf]
  %v2280 = vld [vmem:[%s2268 + $0x2c] sm:$0xf]
  %v2281 = vld [vmem:[%s2268 + $0x30] sm:$0xf]
  %v2282 = vld [vmem:[%s2268 + $0x34] sm:$0xf]
  %v2283 = vld [vmem:[%s2268 + $0x38] sm:$0xf]
  %v2284 = vld [vmem:[%s2268 + $0x3c] sm:$0xf]
  %v2293 = vcombine.low %v2260, %v2261
  %v2294 = vcombine.low %v2262, %v2263
  %v2296 = vunpack.c.l.s4 1983009808
  %v2297 = vunpack.c.0.s8 %v2296
  %v2298 = vlaneseq
  %v2299 = vshrl.u32 %v2298, 7
  %v2300 = vsub.s32 %v2297, %v2299
  %v2301 = vrot.slane %v2293, %v2300
  %v2303 = vunpack.c.l.s4 1983009808
  %v2304 = vunpack.c.0.s8 %v2303
  %v2305 = vlaneseq
  %v2306 = vshrl.u32 %v2305, 7
  %v2307 = vsub.s32 %v2304, %v2306
  %v2308 = vrot.slane %v2294, %v2307
  %v2309 = vcombine.low %v2301, %v2308
  %v2310 = vcombine.low %v2264, %v2265
  %v2311 = vcombine.low %v2266, %v2267
  %v2313 = vunpack.c.l.s4 1983009808
  %v2314 = vunpack.c.0.s8 %v2313
  %v2315 = vlaneseq
  %v2316 = vshrl.u32 %v2315, 7
  %v2317 = vsub.s32 %v2314, %v2316
  %v2318 = vrot.slane %v2310, %v2317
  %v2320 = vunpack.c.l.s4 1983009808
  %v2321 = vunpack.c.0.s8 %v2320
  %v2322 = vlaneseq
  %v2323 = vshrl.u32 %v2322, 7
  %v2324 = vsub.s32 %v2321, %v2323
  %v2325 = vrot.slane %v2311, %v2324
  %v2326 = vcombine.low %v2318, %v2325
  %v2345 = vunpack.c.l.b16 %v2269
  %v2346 = vunpack.c.l.b16 %v2270
  %v2347 = vunpack.c.l.b16 %v2271
  %v2348 = vunpack.c.l.b16 %v2272
  %v2349 = vunpack.c.l.b16 %v2273
  %v2350 = vunpack.c.l.b16 %v2274
  %v2351 = vunpack.c.l.b16 %v2275
  %v2352 = vunpack.c.l.b16 %v2276
  %v2353 = vunpack.c.l.b16 %v2277
  %v2354 = vunpack.c.l.b16 %v2278
  %v2355 = vunpack.c.l.b16 %v2279
  %v2356 = vunpack.c.l.b16 %v2280
  %v2357 = vunpack.c.l.b16 %v2281
  %v2358 = vunpack.c.l.b16 %v2282
  %v2359 = vunpack.c.l.b16 %v2283
  %v2360 = vunpack.c.l.b16 %v2284
  %v2361 = vpack.c.b16 %v2346, %v2345
  %v2362 = vpack.c.b16 %v2348, %v2347
  %v2363 = vpack.c.b16 %v2350, %v2349
  %v2364 = vpack.c.b16 %v2352, %v2351
  %v2365 = vpack.c.b16 %v2354, %v2353
  %v2366 = vpack.c.b16 %v2356, %v2355
  %v2367 = vpack.c.b16 %v2358, %v2357
  %v2368 = vpack.c.b16 %v2360, %v2359
  %2377 = vmatprep.subr.bf16.mxu0 0
  %2378 = vmatpush1.bf16.msra.mxu0 %v2361
  %2379 = vmatprep.subr.bf16.mxu0 0
  %2380 = vmatpush1.bf16.msra.mxu0 %v2362
  %2381 = vmatprep.subr.bf16.mxu0 0
  %2382 = vmatpush1.bf16.msra.mxu0 %v2363
  %2383 = vmatprep.subr.bf16.mxu0 0
  %2384 = vmatpush1.bf16.msra.mxu0 %v2364
  %2385 = vmatprep.subr.bf16.mxu0 0
  %2386 = vmatpush1.bf16.msra.mxu0 %v2365
  %2387 = vmatprep.subr.bf16.mxu0 0
  %2388 = vmatpush1.bf16.msra.mxu0 %v2366
  %2389 = vmatprep.subr.bf16.mxu0 0
  %2390 = vmatpush1.bf16.msra.mxu0 %v2367
  %2391 = vmatprep.subr.bf16.mxu0 0
  %2392 = vmatpush1.bf16.msra.mxu0 %v2368
  %2393 = vmatprep.subr.bf16.mxu0 0
  %2394 = vmatpush1.bf16.msra.mxu0 0
  %2395 = vmatprep.subr.bf16.mxu0 0
  %2396 = vmatpush1.bf16.msra.mxu0 0
  %2397 = vmatprep.subr.bf16.mxu0 0
  %2398 = vmatpush1.bf16.msra.mxu0 0
  %2399 = vmatprep.subr.bf16.mxu0 0
  %2400 = vmatpush1.bf16.msra.mxu0 0
  %2401 = vmatprep.subr.bf16.mxu0 0
  %2402 = vmatpush1.bf16.msra.mxu0 0
  %2403 = vmatprep.subr.bf16.mxu0 0
  %2404 = vmatpush1.bf16.msra.mxu0 0
  %2405 = vmatprep.subr.bf16.mxu0 0
  %2406 = vmatpush1.bf16.msra.mxu0 0
  %2407 = vmatprep.subr.bf16.mxu0 0
  %2408 = vmatpush1.bf16.msra.mxu0 0
  %2409 = vmatprep.mubr.bf16.mxu0 0
  %2410 = vmatmul.mubr.bf16.gmra.mrb[0].mxu0 %v2309
  %v2411 = vpop.f32.mrb[0].mxu0
  %v2412 = vadd.f32 0.0, %v2411
  %v2413 = vpop.f32.mrb[0].mxu0
  %v2414 = vpop.f32.mrb[0].mxu0
  %v2415 = vadd.f32 0.0, %v2414
  %v2416 = vpop.f32.mrb[0].mxu0
  %2417 = vmatprep.mubr.bf16.mxu0 0
  %2418 = vmatmul.mubr.bf16.gmra.mrb[0].mxu0 %v2326
  %v2419 = vpop.f32.mrb[0].mxu0
  %v2420 = vadd.f32 0.0, %v2419
  %v2421 = vpop.f32.mrb[0].mxu0
  %v2422 = vpop.f32.mrb[0].mxu0
  %v2423 = vadd.f32 0.0, %v2422
  %v2424 = vpop.f32.mrb[0].mxu0
  %2425 = vdwg.mxu0
  %v2426 = vadd.f32 %v2255, %v2412
  %v2427 = vadd.f32 %v2256, %v2415
  %v2428 = vadd.f32 %v2257, %v2420
  %v2429 = vadd.f32 %v2258, %v2423
  %v2430 = vld [vmem:[%s2088] sm:$0x7]
  %v2431 = vld [vmem:[%s2088 + $0x4] sm:$0x7]
  %v2432 = vld [vmem:[%s2088 + $0x8] sm:$0x7]
  %v2433 = vld [vmem:[%s2088 + $0xc] sm:$0x7]
  %v2434 = vld [vmem:[%s2088 + $0x50] sm:$0x7]
  %v2435 = vld [vmem:[%s2088 + $0x54] sm:$0x7]
  %v2436 = vld [vmem:[%s2088 + $0x58] sm:$0x7]
  %v2437 = vld [vmem:[%s2088 + $0x5c] sm:$0x7]
  %v2447 = vunpack.c.l.s4 1983009808
  %v2448 = vunpack.c.0.s8 %v2447
  %v2449 = vlaneseq
  %v2450 = vshrl.u32 %v2449, 7
  %v2451 = vsub.s32 %v2448, %v2450
  %v2452 = vrot.slane %v2430, %v2451
  %v2453 = vcombine.high %v2452, %v2452
  %v2455 = vunpack.c.l.s4 1983009808
  %v2456 = vunpack.c.0.s8 %v2455
  %v2457 = vlaneseq
  %v2458 = vshrl.u32 %v2457, 7
  %v2459 = vsub.s32 %v2456, %v2458
  %v2460 = vrot.slane %v2431, %v2459
  %v2461 = vcombine.high %v2460, %v2460
  %v2463 = vunpack.c.l.s4 1983009808
  %v2464 = vunpack.c.0.s8 %v2463
  %v2465 = vlaneseq
  %v2466 = vshrl.u32 %v2465, 7
  %v2467 = vsub.s32 %v2464, %v2466
  %v2468 = vrot.slane %v2432, %v2467
  %v2469 = vcombine.high %v2468, %v2468
  %v2471 = vunpack.c.l.s4 1983009808
  %v2472 = vunpack.c.0.s8 %v2471
  %v2473 = vlaneseq
  %v2474 = vshrl.u32 %v2473, 7
  %v2475 = vsub.s32 %v2472, %v2474
  %v2476 = vrot.slane %v2433, %v2475
  %v2477 = vcombine.high %v2476, %v2476
  %v2479 = vunpack.c.l.s4 1983009808
  %v2480 = vunpack.c.0.s8 %v2479
  %v2481 = vlaneseq
  %v2482 = vshrl.u32 %v2481, 7
  %v2483 = vsub.s32 %v2480, %v2482
  %v2484 = vrot.slane %v2434, %v2483
  %v2485 = vcombine.high %v2484, %v2484
  %v2487 = vunpack.c.l.s4 1983009808
  %v2488 = vunpack.c.0.s8 %v2487
  %v2489 = vlaneseq
  %v2490 = vshrl.u32 %v2489, 7
  %v2491 = vsub.s32 %v2488, %v2490
  %v2492 = vrot.slane %v2435, %v2491
  %v2493 = vcombine.high %v2492, %v2492
  %v2495 = vunpack.c.l.s4 1983009808
  %v2496 = vunpack.c.0.s8 %v2495
  %v2497 = vlaneseq
  %v2498 = vshrl.u32 %v2497, 7
  %v2499 = vsub.s32 %v2496, %v2498
  %v2500 = vrot.slane %v2436, %v2499
  %v2501 = vcombine.high %v2500, %v2500
  %v2503 = vunpack.c.l.s4 1983009808
  %v2504 = vunpack.c.0.s8 %v2503
  %v2505 = vlaneseq
  %v2506 = vshrl.u32 %v2505, 7
  %v2507 = vsub.s32 %v2504, %v2506
  %v2508 = vrot.slane %v2437, %v2507
  %v2509 = vcombine.high %v2508, %v2508
  %v2511 = vshrl.u32 %v2452, 16
  %v2513 = vrot.slane %v2511, 6
  %v2514 = vshll.u32 %v2452, 16
  %v2516 = vrot.slane %v2514, 7
  %v2517 = vor.u32 %v2513, %v2516
  %v2518 = vrot.slane %v2517, 2
  %v2520 = vshll.u32 %v2453, 16
  %v2522 = vrot.slane %v2520, 7
  %v2523 = vsel %vm441, %v2518, %v2522
  %v2525 = vshrl.u32 %v2460, 16
  %v2527 = vrot.slane %v2525, 6
  %v2528 = vshll.u32 %v2460, 16
  %v2530 = vrot.slane %v2528, 7
  %v2531 = vor.u32 %v2527, %v2530
  %v2532 = vrot.slane %v2531, 2
  %v2534 = vshll.u32 %v2461, 16
  %v2536 = vrot.slane %v2534, 7
  %v2537 = vsel %vm441, %v2532, %v2536
  %v2539 = vshrl.u32 %v2468, 16
  %v2541 = vrot.slane %v2539, 6
  %v2542 = vshll.u32 %v2468, 16
  %v2544 = vrot.slane %v2542, 7
  %v2545 = vor.u32 %v2541, %v2544
  %v2546 = vrot.slane %v2545, 2
  %v2548 = vshll.u32 %v2469, 16
  %v2550 = vrot.slane %v2548, 7
  %v2551 = vsel %vm441, %v2546, %v2550
  %v2553 = vshrl.u32 %v2476, 16
  %v2555 = vrot.slane %v2553, 6
  %v2556 = vshll.u32 %v2476, 16
  %v2558 = vrot.slane %v2556, 7
  %v2559 = vor.u32 %v2555, %v2558
  %v2560 = vrot.slane %v2559, 2
  %v2562 = vshll.u32 %v2477, 16
  %v2564 = vrot.slane %v2562, 7
  %v2565 = vsel %vm441, %v2560, %v2564
  %v2567 = vshrl.u32 %v2484, 16
  %v2569 = vrot.slane %v2567, 6
  %v2570 = vshll.u32 %v2484, 16
  %v2572 = vrot.slane %v2570, 7
  %v2573 = vor.u32 %v2569, %v2572
  %v2574 = vrot.slane %v2573, 2
  %v2576 = vshll.u32 %v2485, 16
  %v2578 = vrot.slane %v2576, 7
  %v2579 = vsel %vm441, %v2574, %v2578
  %v2581 = vshrl.u32 %v2492, 16
  %v2583 = vrot.slane %v2581, 6
  %v2584 = vshll.u32 %v2492, 16
  %v2586 = vrot.slane %v2584, 7
  %v2587 = vor.u32 %v2583, %v2586
  %v2588 = vrot.slane %v2587, 2
  %v2590 = vshll.u32 %v2493, 16
  %v2592 = vrot.slane %v2590, 7
  %v2593 = vsel %vm441, %v2588, %v2592
  %v2595 = vshrl.u32 %v2500, 16
  %v2597 = vrot.slane %v2595, 6
  %v2598 = vshll.u32 %v2500, 16
  %v2600 = vrot.slane %v2598, 7
  %v2601 = vor.u32 %v2597, %v2600
  %v2602 = vrot.slane %v2601, 2
  %v2604 = vshll.u32 %v2501, 16
  %v2606 = vrot.slane %v2604, 7
  %v2607 = vsel %vm441, %v2602, %v2606
  %v2609 = vshrl.u32 %v2508, 16
  %v2611 = vrot.slane %v2609, 6
  %v2612 = vshll.u32 %v2508, 16
  %v2614 = vrot.slane %v2612, 7
  %v2615 = vor.u32 %v2611, %v2614
  %v2616 = vrot.slane %v2615, 2
  %v2618 = vshll.u32 %v2509, 16
  %v2620 = vrot.slane %v2618, 7
  %v2621 = vsel %vm441, %v2616, %v2620
  %s2622 = scalar_lea.vmem %s1, 640
  %v2623 = vld [vmem:[%s2622] sm:$0xf]
  %v2624 = vld [vmem:[%s2622 + $0x4] sm:$0xf]
  %v2625 = vld [vmem:[%s2622 + $0x8] sm:$0xf]
  %v2626 = vld [vmem:[%s2622 + $0xc] sm:$0xf]
  %v2627 = vld [vmem:[%s2622 + $0x10] sm:$0xf]
  %v2628 = vld [vmem:[%s2622 + $0x14] sm:$0xf]
  %v2629 = vld [vmem:[%s2622 + $0x18] sm:$0xf]
  %v2630 = vld [vmem:[%s2622 + $0x1c] sm:$0xf]
  %v2631 = vld [vmem:[%s2622 + $0x20] sm:$0xf]
  %v2632 = vld [vmem:[%s2622 + $0x24] sm:$0xf]
  %v2633 = vld [vmem:[%s2622 + $0x28] sm:$0xf]
  %v2634 = vld [vmem:[%s2622 + $0x2c] sm:$0xf]
  %v2635 = vld [vmem:[%s2622 + $0x30] sm:$0xf]
  %v2636 = vld [vmem:[%s2622 + $0x34] sm:$0xf]
  %v2637 = vld [vmem:[%s2622 + $0x38] sm:$0xf]
  %v2638 = vld [vmem:[%s2622 + $0x3c] sm:$0xf]
  %v2639 = vcombine.low %v2523, %v2537
  %v2640 = vcombine.low %v2551, %v2565
  %v2642 = vunpack.c.l.s4 1983009808
  %v2643 = vunpack.c.0.s8 %v2642
  %v2644 = vlaneseq
  %v2645 = vshrl.u32 %v2644, 7
  %v2646 = vsub.s32 %v2643, %v2645
  %v2647 = vrot.slane %v2639, %v2646
  %v2649 = vunpack.c.l.s4 1983009808
  %v2650 = vunpack.c.0.s8 %v2649
  %v2651 = vlaneseq
  %v2652 = vshrl.u32 %v2651, 7
  %v2653 = vsub.s32 %v2650, %v2652
  %v2654 = vrot.slane %v2640, %v2653
  %v2655 = vcombine.low %v2647, %v2654
  %v2656 = vcombine.low %v2579, %v2593
  %v2657 = vcombine.low %v2607, %v2621
  %v2659 = vunpack.c.l.s4 1983009808
  %v2660 = vunpack.c.0.s8 %v2659
  %v2661 = vlaneseq
  %v2662 = vshrl.u32 %v2661, 7
  %v2663 = vsub.s32 %v2660, %v2662
  %v2664 = vrot.slane %v2656, %v2663
  %v2666 = vunpack.c.l.s4 1983009808
  %v2667 = vunpack.c.0.s8 %v2666
  %v2668 = vlaneseq
  %v2669 = vshrl.u32 %v2668, 7
  %v2670 = vsub.s32 %v2667, %v2669
  %v2671 = vrot.slane %v2657, %v2670
  %v2672 = vcombine.low %v2664, %v2671
  %v2691 = vunpack.c.l.b16 %v2623
  %v2692 = vunpack.c.l.b16 %v2624
  %v2693 = vunpack.c.l.b16 %v2625
  %v2694 = vunpack.c.l.b16 %v2626
  %v2695 = vunpack.c.l.b16 %v2627
  %v2696 = vunpack.c.l.b16 %v2628
  %v2697 = vunpack.c.l.b16 %v2629
  %v2698 = vunpack.c.l.b16 %v2630
  %v2699 = vunpack.c.l.b16 %v2631
  %v2700 = vunpack.c.l.b16 %v2632
  %v2701 = vunpack.c.l.b16 %v2633
  %v2702 = vunpack.c.l.b16 %v2634
  %v2703 = vunpack.c.l.b16 %v2635
  %v2704 = vunpack.c.l.b16 %v2636
  %v2705 = vunpack.c.l.b16 %v2637
  %v2706 = vunpack.c.l.b16 %v2638
  %v2707 = vpack.c.b16 %v2692, %v2691
  %v2708 = vpack.c.b16 %v2694, %v2693
  %v2709 = vpack.c.b16 %v2696, %v2695
  %v2710 = vpack.c.b16 %v2698, %v2697
  %v2711 = vpack.c.b16 %v2700, %v2699
  %v2712 = vpack.c.b16 %v2702, %v2701
  %v2713 = vpack.c.b16 %v2704, %v2703
  %v2714 = vpack.c.b16 %v2706, %v2705
  %2723 = vmatprep.subr.bf16.mxu0 0
  %2724 = vmatpush1.bf16.msra.mxu0 %v2707
  %2725 = vmatprep.subr.bf16.mxu0 0
  %2726 = vmatpush1.bf16.msra.mxu0 %v2708
  %2727 = vmatprep.subr.bf16.mxu0 0
  %2728 = vmatpush1.bf16.msra.mxu0 %v2709
  %2729 = vmatprep.subr.bf16.mxu0 0
  %2730 = vmatpush1.bf16.msra.mxu0 %v2710
  %2731 = vmatprep.subr.bf16.mxu0 0
  %2732 = vmatpush1.bf16.msra.mxu0 %v2711
  %2733 = vmatprep.subr.bf16.mxu0 0
  %2734 = vmatpush1.bf16.msra.mxu0 %v2712
  %2735 = vmatprep.subr.bf16.mxu0 0
  %2736 = vmatpush1.bf16.msra.mxu0 %v2713
  %2737 = vmatprep.subr.bf16.mxu0 0
  %2738 = vmatpush1.bf16.msra.mxu0 %v2714
  %2739 = vmatprep.subr.bf16.mxu0 0
  %2740 = vmatpush1.bf16.msra.mxu0 0
  %2741 = vmatprep.subr.bf16.mxu0 0
  %2742 = vmatpush1.bf16.msra.mxu0 0
  %2743 = vmatprep.subr.bf16.mxu0 0
  %2744 = vmatpush1.bf16.msra.mxu0 0
  %2745 = vmatprep.subr.bf16.mxu0 0
  %2746 = vmatpush1.bf16.msra.mxu0 0
  %2747 = vmatprep.subr.bf16.mxu0 0
  %2748 = vmatpush1.bf16.msra.mxu0 0
  %2749 = vmatprep.subr.bf16.mxu0 0
  %2750 = vmatpush1.bf16.msra.mxu0 0
  %2751 = vmatprep.subr.bf16.mxu0 0
  %2752 = vmatpush1.bf16.msra.mxu0 0
  %2753 = vmatprep.subr.bf16.mxu0 0
  %2754 = vmatpush1.bf16.msra.mxu0 0
  %2755 = vmatprep.mubr.bf16.mxu0 0
  %2756 = vmatmul.mubr.bf16.gmra.mrb[0].mxu0 %v2655
  %v2757 = vpop.f32.mrb[0].mxu0
  %v2758 = vadd.f32 0.0, %v2757
  %v2759 = vpop.f32.mrb[0].mxu0
  %v2760 = vpop.f32.mrb[0].mxu0
  %v2761 = vadd.f32 0.0, %v2760
  %v2762 = vpop.f32.mrb[0].mxu0
  %2763 = vmatprep.mubr.bf16.mxu0 0
  %2764 = vmatmul.mubr.bf16.gmra.mrb[0].mxu0 %v2672
  %v2765 = vpop.f32.mrb[0].mxu0
  %v2766 = vadd.f32 0.0, %v2765
  %v2767 = vpop.f32.mrb[0].mxu0
  %v2768 = vpop.f32.mrb[0].mxu0
  %v2769 = vadd.f32 0.0, %v2768
  %v2770 = vpop.f32.mrb[0].mxu0
  %2771 = vdwg.mxu0
  %v2772 = vadd.f32 %v2426, %v2758
  %v2773 = vadd.f32 %v2427, %v2761
  %v2774 = vadd.f32 %v2428, %v2766
  %v2775 = vadd.f32 %v2429, %v2769
  %v2776 = vld [vmem:[%s2259] sm:$0x7]
  %v2777 = vld [vmem:[%s2259 + $0x4] sm:$0x7]
  %v2778 = vld [vmem:[%s2259 + $0x8] sm:$0x7]
  %v2779 = vld [vmem:[%s2259 + $0xc] sm:$0x7]
  %v2780 = vld [vmem:[%s2259 + $0x50] sm:$0x7]
  %v2781 = vld [vmem:[%s2259 + $0x54] sm:$0x7]
  %v2782 = vld [vmem:[%s2259 + $0x58] sm:$0x7]
  %v2783 = vld [vmem:[%s2259 + $0x5c] sm:$0x7]
  %v2793 = vunpack.c.l.s4 1983009808
  %v2794 = vunpack.c.0.s8 %v2793
  %v2795 = vlaneseq
  %v2796 = vshrl.u32 %v2795, 7
  %v2797 = vsub.s32 %v2794, %v2796
  %v2798 = vrot.slane %v2776, %v2797
  %v2799 = vcombine.high %v2798, %v2798
  %v2801 = vunpack.c.l.s4 1983009808
  %v2802 = vunpack.c.0.s8 %v2801
  %v2803 = vlaneseq
  %v2804 = vshrl.u32 %v2803, 7
  %v2805 = vsub.s32 %v2802, %v2804
  %v2806 = vrot.slane %v2777, %v2805
  %v2807 = vcombine.high %v2806, %v2806
  %v2809 = vunpack.c.l.s4 1983009808
  %v2810 = vunpack.c.0.s8 %v2809
  %v2811 = vlaneseq
  %v2812 = vshrl.u32 %v2811, 7
  %v2813 = vsub.s32 %v2810, %v2812
  %v2814 = vrot.slane %v2778, %v2813
  %v2815 = vcombine.high %v2814, %v2814
  %v2817 = vunpack.c.l.s4 1983009808
  %v2818 = vunpack.c.0.s8 %v2817
  %v2819 = vlaneseq
  %v2820 = vshrl.u32 %v2819, 7
  %v2821 = vsub.s32 %v2818, %v2820
  %v2822 = vrot.slane %v2779, %v2821
  %v2823 = vcombine.high %v2822, %v2822
  %v2825 = vunpack.c.l.s4 1983009808
  %v2826 = vunpack.c.0.s8 %v2825
  %v2827 = vlaneseq
  %v2828 = vshrl.u32 %v2827, 7
  %v2829 = vsub.s32 %v2826, %v2828
  %v2830 = vrot.slane %v2780, %v2829
  %v2831 = vcombine.high %v2830, %v2830
  %v2833 = vunpack.c.l.s4 1983009808
  %v2834 = vunpack.c.0.s8 %v2833
  %v2835 = vlaneseq
  %v2836 = vshrl.u32 %v2835, 7
  %v2837 = vsub.s32 %v2834, %v2836
  %v2838 = vrot.slane %v2781, %v2837
  %v2839 = vcombine.high %v2838, %v2838
  %v2841 = vunpack.c.l.s4 1983009808
  %v2842 = vunpack.c.0.s8 %v2841
  %v2843 = vlaneseq
  %v2844 = vshrl.u32 %v2843, 7
  %v2845 = vsub.s32 %v2842, %v2844
  %v2846 = vrot.slane %v2782, %v2845
  %v2847 = vcombine.high %v2846, %v2846
  %v2849 = vunpack.c.l.s4 1983009808
  %v2850 = vunpack.c.0.s8 %v2849
  %v2851 = vlaneseq
  %v2852 = vshrl.u32 %v2851, 7
  %v2853 = vsub.s32 %v2850, %v2852
  %v2854 = vrot.slane %v2783, %v2853
  %v2855 = vcombine.high %v2854, %v2854
  %v2857 = vshrl.u32 %v2798, 16
  %v2859 = vrot.slane %v2857, 6
  %v2860 = vshll.u32 %v2798, 16
  %v2862 = vrot.slane %v2860, 7
  %v2863 = vor.u32 %v2859, %v2862
  %v2864 = vrot.slane %v2863, 2
  %v2866 = vshll.u32 %v2799, 16
  %v2868 = vrot.slane %v2866, 7
  %v2869 = vsel %vm441, %v2864, %v2868
  %v2871 = vshrl.u32 %v2806, 16
  %v2873 = vrot.slane %v2871, 6
  %v2874 = vshll.u32 %v2806, 16
  %v2876 = vrot.slane %v2874, 7
  %v2877 = vor.u32 %v2873, %v2876
  %v2878 = vrot.slane %v2877, 2
  %v2880 = vshll.u32 %v2807, 16
  %v2882 = vrot.slane %v2880, 7
  %v2883 = vsel %vm441, %v2878, %v2882
  %v2885 = vshrl.u32 %v2814, 16
  %v2887 = vrot.slane %v2885, 6
  %v2888 = vshll.u32 %v2814, 16
  %v2890 = vrot.slane %v2888, 7
  %v2891 = vor.u32 %v2887, %v2890
  %v2892 = vrot.slane %v2891, 2
  %v2894 = vshll.u32 %v2815, 16
  %v2896 = vrot.slane %v2894, 7
  %v2897 = vsel %vm441, %v2892, %v2896
  %v2899 = vshrl.u32 %v2822, 16
  %v2901 = vrot.slane %v2899, 6
  %v2902 = vshll.u32 %v2822, 16
  %v2904 = vrot.slane %v2902, 7
  %v2905 = vor.u32 %v2901, %v2904
  %v2906 = vrot.slane %v2905, 2
  %v2908 = vshll.u32 %v2823, 16
  %v2910 = vrot.slane %v2908, 7
  %v2911 = vsel %vm441, %v2906, %v2910
  %v2913 = vshrl.u32 %v2830, 16
  %v2915 = vrot.slane %v2913, 6
  %v2916 = vshll.u32 %v2830, 16
  %v2918 = vrot.slane %v2916, 7
  %v2919 = vor.u32 %v2915, %v2918
  %v2920 = vrot.slane %v2919, 2
  %v2922 = vshll.u32 %v2831, 16
  %v2924 = vrot.slane %v2922, 7
  %v2925 = vsel %vm441, %v2920, %v2924
  %v2927 = vshrl.u32 %v2838, 16
  %v2929 = vrot.slane %v2927, 6
  %v2930 = vshll.u32 %v2838, 16
  %v2932 = vrot.slane %v2930, 7
  %v2933 = vor.u32 %v2929, %v2932
  %v2934 = vrot.slane %v2933, 2
  %v2936 = vshll.u32 %v2839, 16
  %v2938 = vrot.slane %v2936, 7
  %v2939 = vsel %vm441, %v2934, %v2938
  %v2941 = vshrl.u32 %v2846, 16
  %v2943 = vrot.slane %v2941, 6
  %v2944 = vshll.u32 %v2846, 16
  %v2946 = vrot.slane %v2944, 7
  %v2947 = vor.u32 %v2943, %v2946
  %v2948 = vrot.slane %v2947, 2
  %v2950 = vshll.u32 %v2847, 16
  %v2952 = vrot.slane %v2950, 7
  %v2953 = vsel %vm441, %v2948, %v2952
  %v2955 = vshrl.u32 %v2854, 16
  %v2957 = vrot.slane %v2955, 6
  %v2958 = vshll.u32 %v2854, 16
  %v2960 = vrot.slane %v2958, 7
  %v2961 = vor.u32 %v2957, %v2960
  %v2962 = vrot.slane %v2961, 2
  %v2964 = vshll.u32 %v2855, 16
  %v2966 = vrot.slane %v2964, 7
  %v2967 = vsel %vm441, %v2962, %v2966
  %s2968 = scalar_lea.vmem %s1, 704
  %v2969 = vld [vmem:[%s2968] sm:$0xf]
  %v2970 = vld [vmem:[%s2968 + $0x4] sm:$0xf]
  %v2971 = vld [vmem:[%s2968 + $0x8] sm:$0xf]
  %v2972 = vld [vmem:[%s2968 + $0xc] sm:$0xf]
  %v2973 = vld [vmem:[%s2968 + $0x10] sm:$0xf]
  %v2974 = vld [vmem:[%s2968 + $0x14] sm:$0xf]
  %v2975 = vld [vmem:[%s2968 + $0x18] sm:$0xf]
  %v2976 = vld [vmem:[%s2968 + $0x1c] sm:$0xf]
  %v2977 = vld [vmem:[%s2968 + $0x20] sm:$0xf]
  %v2978 = vld [vmem:[%s2968 + $0x24] sm:$0xf]
  %v2979 = vld [vmem:[%s2968 + $0x28] sm:$0xf]
  %v2980 = vld [vmem:[%s2968 + $0x2c] sm:$0xf]
  %v2981 = vld [vmem:[%s2968 + $0x30] sm:$0xf]
  %v2982 = vld [vmem:[%s2968 + $0x34] sm:$0xf]
  %v2983 = vld [vmem:[%s2968 + $0x38] sm:$0xf]
  %v2984 = vld [vmem:[%s2968 + $0x3c] sm:$0xf]
  %v2985 = vcombine.low %v2869, %v2883
  %v2986 = vcombine.low %v2897, %v2911
  %v2988 = vunpack.c.l.s4 1983009808
  %v2989 = vunpack.c.0.s8 %v2988
  %v2990 = vlaneseq
  %v2991 = vshrl.u32 %v2990, 7
  %v2992 = vsub.s32 %v2989, %v2991
  %v2993 = vrot.slane %v2985, %v2992
  %v2995 = vunpack.c.l.s4 1983009808
  %v2996 = vunpack.c.0.s8 %v2995
  %v2997 = vlaneseq
  %v2998 = vshrl.u32 %v2997, 7
  %v2999 = vsub.s32 %v2996, %v2998
  %v3000 = vrot.slane %v2986, %v2999
  %v3001 = vcombine.low %v2993, %v3000
  %v3002 = vcombine.low %v2925, %v2939
  %v3003 = vcombine.low %v2953, %v2967
  %v3005 = vunpack.c.l.s4 1983009808
  %v3006 = vunpack.c.0.s8 %v3005
  %v3007 = vlaneseq
  %v3008 = vshrl.u32 %v3007, 7
  %v3009 = vsub.s32 %v3006, %v3008
  %v3010 = vrot.slane %v3002, %v3009
  %v3012 = vunpack.c.l.s4 1983009808
  %v3013 = vunpack.c.0.s8 %v3012
  %v3014 = vlaneseq
  %v3015 = vshrl.u32 %v3014, 7
  %v3016 = vsub.s32 %v3013, %v3015
  %v3017 = vrot.slane %v3003, %v3016
  %v3018 = vcombine.low %v3010, %v3017
  %v3037 = vunpack.c.l.b16 %v2969
  %v3038 = vunpack.c.l.b16 %v2970
  %v3039 = vunpack.c.l.b16 %v2971
  %v3040 = vunpack.c.l.b16 %v2972
  %v3041 = vunpack.c.l.b16 %v2973
  %v3042 = vunpack.c.l.b16 %v2974
  %v3043 = vunpack.c.l.b16 %v2975
  %v3044 = vunpack.c.l.b16 %v2976
  %v3045 = vunpack.c.l.b16 %v2977
  %v3046 = vunpack.c.l.b16 %v2978
  %v3047 = vunpack.c.l.b16 %v2979
  %v3048 = vunpack.c.l.b16 %v2980
  %v3049 = vunpack.c.l.b16 %v2981
  %v3050 = vunpack.c.l.b16 %v2982
  %v3051 = vunpack.c.l.b16 %v2983
  %v3052 = vunpack.c.l.b16 %v2984
  %v3053 = vpack.c.b16 %v3038, %v3037
  %v3054 = vpack.c.b16 %v3040, %v3039
  %v3055 = vpack.c.b16 %v3042, %v3041
  %v3056 = vpack.c.b16 %v3044, %v3043
  %v3057 = vpack.c.b16 %v3046, %v3045
  %v3058 = vpack.c.b16 %v3048, %v3047
  %v3059 = vpack.c.b16 %v3050, %v3049
  %v3060 = vpack.c.b16 %v3052, %v3051
  %3069 = vmatprep.subr.bf16.mxu0 0
  %3070 = vmatpush1.bf16.msra.mxu0 %v3053
  %3071 = vmatprep.subr.bf16.mxu0 0
  %3072 = vmatpush1.bf16.msra.mxu0 %v3054
  %3073 = vmatprep.subr.bf16.mxu0 0
  %3074 = vmatpush1.bf16.msra.mxu0 %v3055
  %3075 = vmatprep.subr.bf16.mxu0 0
  %3076 = vmatpush1.bf16.msra.mxu0 %v3056
  %3077 = vmatprep.subr.bf16.mxu0 0
  %3078 = vmatpush1.bf16.msra.mxu0 %v3057
  %3079 = vmatprep.subr.bf16.mxu0 0
  %3080 = vmatpush1.bf16.msra.mxu0 %v3058
  %3081 = vmatprep.subr.bf16.mxu0 0
  %3082 = vmatpush1.bf16.msra.mxu0 %v3059
  %3083 = vmatprep.subr.bf16.mxu0 0
  %3084 = vmatpush1.bf16.msra.mxu0 %v3060
  %3085 = vmatprep.subr.bf16.mxu0 0
  %3086 = vmatpush1.bf16.msra.mxu0 0
  %3087 = vmatprep.subr.bf16.mxu0 0
  %3088 = vmatpush1.bf16.msra.mxu0 0
  %3089 = vmatprep.subr.bf16.mxu0 0
  %3090 = vmatpush1.bf16.msra.mxu0 0
  %3091 = vmatprep.subr.bf16.mxu0 0
  %3092 = vmatpush1.bf16.msra.mxu0 0
  %3093 = vmatprep.subr.bf16.mxu0 0
  %3094 = vmatpush1.bf16.msra.mxu0 0
  %3095 = vmatprep.subr.bf16.mxu0 0
  %3096 = vmatpush1.bf16.msra.mxu0 0
  %3097 = vmatprep.subr.bf16.mxu0 0
  %3098 = vmatpush1.bf16.msra.mxu0 0
  %3099 = vmatprep.subr.bf16.mxu0 0
  %3100 = vmatpush1.bf16.msra.mxu0 0
  %3101 = vmatprep.mubr.bf16.mxu0 0
  %3102 = vmatmul.mubr.bf16.gmra.mrb[0].mxu0 %v3001
  %v3103 = vpop.f32.mrb[0].mxu0
  %v3104 = vadd.f32 0.0, %v3103
  %v3105 = vpop.f32.mrb[0].mxu0
  %v3106 = vpop.f32.mrb[0].mxu0
  %v3107 = vadd.f32 0.0, %v3106
  %v3108 = vpop.f32.mrb[0].mxu0
  %3109 = vmatprep.mubr.bf16.mxu0 0
  %3110 = vmatmul.mubr.bf16.gmra.mrb[0].mxu0 %v3018
  %v3111 = vpop.f32.mrb[0].mxu0
  %v3112 = vadd.f32 0.0, %v3111
  %v3113 = vpop.f32.mrb[0].mxu0
  %v3114 = vpop.f32.mrb[0].mxu0
  %v3115 = vadd.f32 0.0, %v3114
  %v3116 = vpop.f32.mrb[0].mxu0
  %3117 = vdwg.mxu0
  %v3118 = vadd.f32 %v2772, %v3104
  %v3119 = vadd.f32 %v2773, %v3107
  %v3120 = vadd.f32 %v2774, %v3112
  %v3121 = vadd.f32 %v2775, %v3115
  %s3122 = scalar_lea.vmem %s0, 44
  %v3123 = vld [vmem:[%s3122] sm:$0x3]
  %v3124 = vld [vmem:[%s3122 + $0x4] sm:$0x3]
  %v3125 = vld [vmem:[%s3122 + $0x8] sm:$0x3]
  %v3126 = vld [vmem:[%s3122 + $0xc] sm:$0x3]
  %v3127 = vld [vmem:[%s3122 + $0x50] sm:$0x3]
  %v3128 = vld [vmem:[%s3122 + $0x54] sm:$0x3]
  %v3129 = vld [vmem:[%s3122 + $0x58] sm:$0x3]
  %v3130 = vld [vmem:[%s3122 + $0x5c] sm:$0x3]
  %s3131 = scalar_lea.vmem %s1, 768
  %v3132 = vld [vmem:[%s3131] sm:$0xf]
  %v3133 = vld [vmem:[%s3131 + $0x4] sm:$0xf]
  %v3134 = vld [vmem:[%s3131 + $0x8] sm:$0xf]
  %v3135 = vld [vmem:[%s3131 + $0xc] sm:$0xf]
  %v3136 = vld [vmem:[%s3131 + $0x10] sm:$0xf]
  %v3137 = vld [vmem:[%s3131 + $0x14] sm:$0xf]
  %v3138 = vld [vmem:[%s3131 + $0x18] sm:$0xf]
  %v3139 = vld [vmem:[%s3131 + $0x1c] sm:$0xf]
  %v3140 = vld [vmem:[%s3131 + $0x20] sm:$0xf]
  %v3141 = vld [vmem:[%s3131 + $0x24] sm:$0xf]
  %v3142 = vld [vmem:[%s3131 + $0x28] sm:$0xf]
  %v3143 = vld [vmem:[%s3131 + $0x2c] sm:$0xf]
  %v3144 = vld [vmem:[%s3131 + $0x30] sm:$0xf]
  %v3145 = vld [vmem:[%s3131 + $0x34] sm:$0xf]
  %v3146 = vld [vmem:[%s3131 + $0x38] sm:$0xf]
  %v3147 = vld [vmem:[%s3131 + $0x3c] sm:$0xf]
  %v3156 = vcombine.low %v3123, %v3124
  %v3157 = vcombine.low %v3125, %v3126
  %v3159 = vunpack.c.l.s4 1983009808
  %v3160 = vunpack.c.0.s8 %v3159
  %v3161 = vlaneseq
  %v3162 = vshrl.u32 %v3161, 7
  %v3163 = vsub.s32 %v3160, %v3162
  %v3164 = vrot.slane %v3156, %v3163
  %v3166 = vunpack.c.l.s4 1983009808
  %v3167 = vunpack.c.0.s8 %v3166
  %v3168 = vlaneseq
  %v3169 = vshrl.u32 %v3168, 7
  %v3170 = vsub.s32 %v3167, %v3169
  %v3171 = vrot.slane %v3157, %v3170
  %v3172 = vcombine.low %v3164, %v3171
  %v3173 = vcombine.low %v3127, %v3128
  %v3174 = vcombine.low %v3129, %v3130
  %v3176 = vunpack.c.l.s4 1983009808
  %v3177 = vunpack.c.0.s8 %v3176
  %v3178 = vlaneseq
  %v3179 = vshrl.u32 %v3178, 7
  %v3180 = vsub.s32 %v3177, %v3179
  %v3181 = vrot.slane %v3173, %v3180
  %v3183 = vunpack.c.l.s4 1983009808
  %v3184 = vunpack.c.0.s8 %v3183
  %v3185 = vlaneseq
  %v3186 = vshrl.u32 %v3185, 7
  %v3187 = vsub.s32 %v3184, %v3186
  %v3188 = vrot.slane %v3174, %v3187
  %v3189 = vcombine.low %v3181, %v3188
  %v3208 = vunpack.c.l.b16 %v3132
  %v3209 = vunpack.c.l.b16 %v3133
  %v3210 = vunpack.c.l.b16 %v3134
  %v3211 = vunpack.c.l.b16 %v3135
  %v3212 = vunpack.c.l.b16 %v3136
  %v3213 = vunpack.c.l.b16 %v3137
  %v3214 = vunpack.c.l.b16 %v3138
  %v3215 = vunpack.c.l.b16 %v3139
  %v3216 = vunpack.c.l.b16 %v3140
  %v3217 = vunpack.c.l.b16 %v3141
  %v3218 = vunpack.c.l.b16 %v3142
  %v3219 = vunpack.c.l.b16 %v3143
  %v3220 = vunpack.c.l.b16 %v3144
  %v3221 = vunpack.c.l.b16 %v3145
  %v3222 = vunpack.c.l.b16 %v3146
  %v3223 = vunpack.c.l.b16 %v3147
  %v3224 = vpack.c.b16 %v3209, %v3208
  %v3225 = vpack.c.b16 %v3211, %v3210
  %v3226 = vpack.c.b16 %v3213, %v3212
  %v3227 = vpack.c.b16 %v3215, %v3214
  %v3228 = vpack.c.b16 %v3217, %v3216
  %v3229 = vpack.c.b16 %v3219, %v3218
  %v3230 = vpack.c.b16 %v3221, %v3220
  %v3231 = vpack.c.b16 %v3223, %v3222
  %3240 = vmatprep.subr.bf16.mxu0 0
  %3241 = vmatpush1.bf16.msra.mxu0 %v3224
  %3242 = vmatprep.subr.bf16.mxu0 0
  %3243 = vmatpush1.bf16.msra.mxu0 %v3225
  %3244 = vmatprep.subr.bf16.mxu0 0
  %3245 = vmatpush1.bf16.msra.mxu0 %v3226
  %3246 = vmatprep.subr.bf16.mxu0 0
  %3247 = vmatpush1.bf16.msra.mxu0 %v3227
  %3248 = vmatprep.subr.bf16.mxu0 0
  %3249 = vmatpush1.bf16.msra.mxu0 %v3228
  %3250 = vmatprep.subr.bf16.mxu0 0
  %3251 = vmatpush1.bf16.msra.mxu0 %v3229
  %3252 = vmatprep.subr.bf16.mxu0 0
  %3253 = vmatpush1.bf16.msra.mxu0 %v3230
  %3254 = vmatprep.subr.bf16.mxu0 0
  %3255 = vmatpush1.bf16.msra.mxu0 %v3231
  %3256 = vmatprep.subr.bf16.mxu0 0
  %3257 = vmatpush1.bf16.msra.mxu0 0
  %3258 = vmatprep.subr.bf16.mxu0 0
  %3259 = vmatpush1.bf16.msra.mxu0 0
  %3260 = vmatprep.subr.bf16.mxu0 0
  %3261 = vmatpush1.bf16.msra.mxu0 0
  %3262 = vmatprep.subr.bf16.mxu0 0
  %3263 = vmatpush1.bf16.msra.mxu0 0
  %3264 = vmatprep.subr.bf16.mxu0 0
  %3265 = vmatpush1.bf16.msra.mxu0 0
  %3266 = vmatprep.subr.bf16.mxu0 0
  %3267 = vmatpush1.bf16.msra.mxu0 0
  %3268 = vmatprep.subr.bf16.mxu0 0
  %3269 = vmatpush1.bf16.msra.mxu0 0
  %3270 = vmatprep.subr.bf16.mxu0 0
  %3271 = vmatpush1.bf16.msra.mxu0 0
  %3272 = vmatprep.mubr.bf16.mxu0 0
  %3273 = vmatmul.mubr.bf16.gmra.mrb[0].mxu0 %v3172
  %v3274 = vpop.f32.mrb[0].mxu0
  %v3275 = vadd.f32 0.0, %v3274
  %v3276 = vpop.f32.mrb[0].mxu0
  %v3277 = vpop.f32.mrb[0].mxu0
  %v3278 = vadd.f32 0.0, %v3277
  %v3279 = vpop.f32.mrb[0].mxu0
  %3280 = vmatprep.mubr.bf16.mxu0 0
  %3281 = vmatmul.mubr.bf16.gmra.mrb[0].mxu0 %v3189
  %v3282 = vpop.f32.mrb[0].mxu0
  %v3283 = vadd.f32 0.0, %v3282
  %v3284 = vpop.f32.mrb[0].mxu0
  %v3285 = vpop.f32.mrb[0].mxu0
  %v3286 = vadd.f32 0.0, %v3285
  %v3287 = vpop.f32.mrb[0].mxu0
  %3288 = vdwg.mxu0
  %v3289 = vadd.f32 %v3118, %v3275
  %v3290 = vadd.f32 %v3119, %v3278
  %v3291 = vadd.f32 %v3120, %v3283
  %v3292 = vadd.f32 %v3121, %v3286
  %s3293 = scalar_lea.vmem %s0, 64
  %v3294 = vld [vmem:[%s3293] sm:$0x3]
  %v3295 = vld [vmem:[%s3293 + $0x4] sm:$0x3]
  %v3296 = vld [vmem:[%s3293 + $0x8] sm:$0x3]
  %v3297 = vld [vmem:[%s3293 + $0xc] sm:$0x3]
  %v3298 = vld [vmem:[%s3293 + $0x50] sm:$0x3]
  %v3299 = vld [vmem:[%s3293 + $0x54] sm:$0x3]
  %v3300 = vld [vmem:[%s3293 + $0x58] sm:$0x3]
  %v3301 = vld [vmem:[%s3293 + $0x5c] sm:$0x3]
  %s3302 = scalar_lea.vmem %s1, 832
  %v3303 = vld [vmem:[%s3302] sm:$0xf]
  %v3304 = vld [vmem:[%s3302 + $0x4] sm:$0xf]
  %v3305 = vld [vmem:[%s3302 + $0x8] sm:$0xf]
  %v3306 = vld [vmem:[%s3302 + $0xc] sm:$0xf]
  %v3307 = vld [vmem:[%s3302 + $0x10] sm:$0xf]
  %v3308 = vld [vmem:[%s3302 + $0x14] sm:$0xf]
  %v3309 = vld [vmem:[%s3302 + $0x18] sm:$0xf]
  %v3310 = vld [vmem:[%s3302 + $0x1c] sm:$0xf]
  %v3311 = vld [vmem:[%s3302 + $0x20] sm:$0xf]
  %v3312 = vld [vmem:[%s3302 + $0x24] sm:$0xf]
  %v3313 = vld [vmem:[%s3302 + $0x28] sm:$0xf]
  %v3314 = vld [vmem:[%s3302 + $0x2c] sm:$0xf]
  %v3315 = vld [vmem:[%s3302 + $0x30] sm:$0xf]
  %v3316 = vld [vmem:[%s3302 + $0x34] sm:$0xf]
  %v3317 = vld [vmem:[%s3302 + $0x38] sm:$0xf]
  %v3318 = vld [vmem:[%s3302 + $0x3c] sm:$0xf]
  %v3327 = vcombine.low %v3294, %v3295
  %v3328 = vcombine.low %v3296, %v3297
  %v3330 = vunpack.c.l.s4 1983009808
  %v3331 = vunpack.c.0.s8 %v3330
  %v3332 = vlaneseq
  %v3333 = vshrl.u32 %v3332, 7
  %v3334 = vsub.s32 %v3331, %v3333
  %v3335 = vrot.slane %v3327, %v3334
  %v3337 = vunpack.c.l.s4 1983009808
  %v3338 = vunpack.c.0.s8 %v3337
  %v3339 = vlaneseq
  %v3340 = vshrl.u32 %v3339, 7
  %v3341 = vsub.s32 %v3338, %v3340
  %v3342 = vrot.slane %v3328, %v3341
  %v3343 = vcombine.low %v3335, %v3342
  %v3344 = vcombine.low %v3298, %v3299
  %v3345 = vcombine.low %v3300, %v3301
  %v3347 = vunpack.c.l.s4 1983009808
  %v3348 = vunpack.c.0.s8 %v3347
  %v3349 = vlaneseq
  %v3350 = vshrl.u32 %v3349, 7
  %v3351 = vsub.s32 %v3348, %v3350
  %v3352 = vrot.slane %v3344, %v3351
  %v3354 = vunpack.c.l.s4 1983009808
  %v3355 = vunpack.c.0.s8 %v3354
  %v3356 = vlaneseq
  %v3357 = vshrl.u32 %v3356, 7
  %v3358 = vsub.s32 %v3355, %v3357
  %v3359 = vrot.slane %v3345, %v3358
  %v3360 = vcombine.low %v3352, %v3359
  %v3379 = vunpack.c.l.b16 %v3303
  %v3380 = vunpack.c.l.b16 %v3304
  %v3381 = vunpack.c.l.b16 %v3305
  %v3382 = vunpack.c.l.b16 %v3306
  %v3383 = vunpack.c.l.b16 %v3307
  %v3384 = vunpack.c.l.b16 %v3308
  %v3385 = vunpack.c.l.b16 %v3309
  %v3386 = vunpack.c.l.b16 %v3310
  %v3387 = vunpack.c.l.b16 %v3311
  %v3388 = vunpack.c.l.b16 %v3312
  %v3389 = vunpack.c.l.b16 %v3313
  %v3390 = vunpack.c.l.b16 %v3314
  %v3391 = vunpack.c.l.b16 %v3315
  %v3392 = vunpack.c.l.b16 %v3316
  %v3393 = vunpack.c.l.b16 %v3317
  %v3394 = vunpack.c.l.b16 %v3318
  %v3395 = vpack.c.b16 %v3380, %v3379
  %v3396 = vpack.c.b16 %v3382, %v3381
  %v3397 = vpack.c.b16 %v3384, %v3383
  %v3398 = vpack.c.b16 %v3386, %v3385
  %v3399 = vpack.c.b16 %v3388, %v3387
  %v3400 = vpack.c.b16 %v3390, %v3389
  %v3401 = vpack.c.b16 %v3392, %v3391
  %v3402 = vpack.c.b16 %v3394, %v3393
  %3411 = vmatprep.subr.bf16.mxu0 0
  %3412 = vmatpush1.bf16.msra.mxu0 %v3395
  %3413 = vmatprep.subr.bf16.mxu0 0
  %3414 = vmatpush1.bf16.msra.mxu0 %v3396
  %3415 = vmatprep.subr.bf16.mxu0 0
  %3416 = vmatpush1.bf16.msra.mxu0 %v3397
  %3417 = vmatprep.subr.bf16.mxu0 0
  %3418 = vmatpush1.bf16.msra.mxu0 %v3398
  %3419 = vmatprep.subr.bf16.mxu0 0
  %3420 = vmatpush1.bf16.msra.mxu0 %v3399
  %3421 = vmatprep.subr.bf16.mxu0 0
  %3422 = vmatpush1.bf16.msra.mxu0 %v3400
  %3423 = vmatprep.subr.bf16.mxu0 0
  %3424 = vmatpush1.bf16.msra.mxu0 %v3401
  %3425 = vmatprep.subr.bf16.mxu0 0
  %3426 = vmatpush1.bf16.msra.mxu0 %v3402
  %3427 = vmatprep.subr.bf16.mxu0 0
  %3428 = vmatpush1.bf16.msra.mxu0 0
  %3429 = vmatprep.subr.bf16.mxu0 0
  %3430 = vmatpush1.bf16.msra.mxu0 0
  %3431 = vmatprep.subr.bf16.mxu0 0
  %3432 = vmatpush1.bf16.msra.mxu0 0
  %3433 = vmatprep.subr.bf16.mxu0 0
  %3434 = vmatpush1.bf16.msra.mxu0 0
  %3435 = vmatprep.subr.bf16.mxu0 0
  %3436 = vmatpush1.bf16.msra.mxu0 0
  %3437 = vmatprep.subr.bf16.mxu0 0
  %3438 = vmatpush1.bf16.msra.mxu0 0
  %3439 = vmatprep.subr.bf16.mxu0 0
  %3440 = vmatpush1.bf16.msra.mxu0 0
  %3441 = vmatprep.subr.bf16.mxu0 0
  %3442 = vmatpush1.bf16.msra.mxu0 0
  %3443 = vmatprep.mubr.bf16.mxu0 0
  %3444 = vmatmul.mubr.bf16.gmra.mrb[0].mxu0 %v3343
  %v3445 = vpop.f32.mrb[0].mxu0
  %v3446 = vadd.f32 0.0, %v3445
  %v3447 = vpop.f32.mrb[0].mxu0
  %v3448 = vpop.f32.mrb[0].mxu0
  %v3449 = vadd.f32 0.0, %v3448
  %v3450 = vpop.f32.mrb[0].mxu0
  %3451 = vmatprep.mubr.bf16.mxu0 0
  %3452 = vmatmul.mubr.bf16.gmra.mrb[0].mxu0 %v3360
  %v3453 = vpop.f32.mrb[0].mxu0
  %v3454 = vadd.f32 0.0, %v3453
  %v3455 = vpop.f32.mrb[0].mxu0
  %v3456 = vpop.f32.mrb[0].mxu0
  %v3457 = vadd.f32 0.0, %v3456
  %v3458 = vpop.f32.mrb[0].mxu0
  %3459 = vdwg.mxu0
  %v3460 = vadd.f32 %v3289, %v3446
  %v3461 = vadd.f32 %v3290, %v3449
  %v3462 = vadd.f32 %v3291, %v3454
  %v3463 = vadd.f32 %v3292, %v3457
  %v3464 = vld [vmem:[%s3122] sm:$0x7]
  %v3465 = vld [vmem:[%s3122 + $0x4] sm:$0x7]
  %v3466 = vld [vmem:[%s3122 + $0x8] sm:$0x7]
  %v3467 = vld [vmem:[%s3122 + $0xc] sm:$0x7]
  %v3468 = vld [vmem:[%s3122 + $0x50] sm:$0x7]
  %v3469 = vld [vmem:[%s3122 + $0x54] sm:$0x7]
  %v3470 = vld [vmem:[%s3122 + $0x58] sm:$0x7]
  %v3471 = vld [vmem:[%s3122 + $0x5c] sm:$0x7]
  %v3481 = vunpack.c.l.s4 1983009808
  %v3482 = vunpack.c.0.s8 %v3481
  %v3483 = vlaneseq
  %v3484 = vshrl.u32 %v3483, 7
  %v3485 = vsub.s32 %v3482, %v3484
  %v3486 = vrot.slane %v3464, %v3485
  %v3487 = vcombine.high %v3486, %v3486
  %v3489 = vunpack.c.l.s4 1983009808
  %v3490 = vunpack.c.0.s8 %v3489
  %v3491 = vlaneseq
  %v3492 = vshrl.u32 %v3491, 7
  %v3493 = vsub.s32 %v3490, %v3492
  %v3494 = vrot.slane %v3465, %v3493
  %v3495 = vcombine.high %v3494, %v3494
  %v3497 = vunpack.c.l.s4 1983009808
  %v3498 = vunpack.c.0.s8 %v3497
  %v3499 = vlaneseq
  %v3500 = vshrl.u32 %v3499, 7
  %v3501 = vsub.s32 %v3498, %v3500
  %v3502 = vrot.slane %v3466, %v3501
  %v3503 = vcombine.high %v3502, %v3502
  %v3505 = vunpack.c.l.s4 1983009808
  %v3506 = vunpack.c.0.s8 %v3505
  %v3507 = vlaneseq
  %v3508 = vshrl.u32 %v3507, 7
  %v3509 = vsub.s32 %v3506, %v3508
  %v3510 = vrot.slane %v3467, %v3509
  %v3511 = vcombine.high %v3510, %v3510
  %v3513 = vunpack.c.l.s4 1983009808
  %v3514 = vunpack.c.0.s8 %v3513
  %v3515 = vlaneseq
  %v3516 = vshrl.u32 %v3515, 7
  %v3517 = vsub.s32 %v3514, %v3516
  %v3518 = vrot.slane %v3468, %v3517
  %v3519 = vcombine.high %v3518, %v3518
  %v3521 = vunpack.c.l.s4 1983009808
  %v3522 = vunpack.c.0.s8 %v3521
  %v3523 = vlaneseq
  %v3524 = vshrl.u32 %v3523, 7
  %v3525 = vsub.s32 %v3522, %v3524
  %v3526 = vrot.slane %v3469, %v3525
  %v3527 = vcombine.high %v3526, %v3526
  %v3529 = vunpack.c.l.s4 1983009808
  %v3530 = vunpack.c.0.s8 %v3529
  %v3531 = vlaneseq
  %v3532 = vshrl.u32 %v3531, 7
  %v3533 = vsub.s32 %v3530, %v3532
  %v3534 = vrot.slane %v3470, %v3533
  %v3535 = vcombine.high %v3534, %v3534
  %v3537 = vunpack.c.l.s4 1983009808
  %v3538 = vunpack.c.0.s8 %v3537
  %v3539 = vlaneseq
  %v3540 = vshrl.u32 %v3539, 7
  %v3541 = vsub.s32 %v3538, %v3540
  %v3542 = vrot.slane %v3471, %v3541
  %v3543 = vcombine.high %v3542, %v3542
  %v3545 = vshrl.u32 %v3486, 16
  %v3547 = vrot.slane %v3545, 6
  %v3548 = vshll.u32 %v3486, 16
  %v3550 = vrot.slane %v3548, 7
  %v3551 = vor.u32 %v3547, %v3550
  %v3552 = vrot.slane %v3551, 2
  %v3554 = vshll.u32 %v3487, 16
  %v3556 = vrot.slane %v3554, 7
  %v3557 = vsel %vm441, %v3552, %v3556
  %v3559 = vshrl.u32 %v3494, 16
  %v3561 = vrot.slane %v3559, 6
  %v3562 = vshll.u32 %v3494, 16
  %v3564 = vrot.slane %v3562, 7
  %v3565 = vor.u32 %v3561, %v3564
  %v3566 = vrot.slane %v3565, 2
  %v3568 = vshll.u32 %v3495, 16
  %v3570 = vrot.slane %v3568, 7
  %v3571 = vsel %vm441, %v3566, %v3570
  %v3573 = vshrl.u32 %v3502, 16
  %v3575 = vrot.slane %v3573, 6
  %v3576 = vshll.u32 %v3502, 16
  %v3578 = vrot.slane %v3576, 7
  %v3579 = vor.u32 %v3575, %v3578
  %v3580 = vrot.slane %v3579, 2
  %v3582 = vshll.u32 %v3503, 16
  %v3584 = vrot.slane %v3582, 7
  %v3585 = vsel %vm441, %v3580, %v3584
  %v3587 = vshrl.u32 %v3510, 16
  %v3589 = vrot.slane %v3587, 6
  %v3590 = vshll.u32 %v3510, 16
  %v3592 = vrot.slane %v3590, 7
  %v3593 = vor.u32 %v3589, %v3592
  %v3594 = vrot.slane %v3593, 2
  %v3596 = vshll.u32 %v3511, 16
  %v3598 = vrot.slane %v3596, 7
  %v3599 = vsel %vm441, %v3594, %v3598
  %v3601 = vshrl.u32 %v3518, 16
  %v3603 = vrot.slane %v3601, 6
  %v3604 = vshll.u32 %v3518, 16
  %v3606 = vrot.slane %v3604, 7
  %v3607 = vor.u32 %v3603, %v3606
  %v3608 = vrot.slane %v3607, 2
  %v3610 = vshll.u32 %v3519, 16
  %v3612 = vrot.slane %v3610, 7
  %v3613 = vsel %vm441, %v3608, %v3612
  %v3615 = vshrl.u32 %v3526, 16
  %v3617 = vrot.slane %v3615, 6
  %v3618 = vshll.u32 %v3526, 16
  %v3620 = vrot.slane %v3618, 7
  %v3621 = vor.u32 %v3617, %v3620
  %v3622 = vrot.slane %v3621, 2
  %v3624 = vshll.u32 %v3527, 16
  %v3626 = vrot.slane %v3624, 7
  %v3627 = vsel %vm441, %v3622, %v3626
  %v3629 = vshrl.u32 %v3534, 16
  %v3631 = vrot.slane %v3629, 6
  %v3632 = vshll.u32 %v3534, 16
  %v3634 = vrot.slane %v3632, 7
  %v3635 = vor.u32 %v3631, %v3634
  %v3636 = vrot.slane %v3635, 2
  %v3638 = vshll.u32 %v3535, 16
  %v3640 = vrot.slane %v3638, 7
  %v3641 = vsel %vm441, %v3636, %v3640
  %v3643 = vshrl.u32 %v3542, 16
  %v3645 = vrot.slane %v3643, 6
  %v3646 = vshll.u32 %v3542, 16
  %v3648 = vrot.slane %v3646, 7
  %v3649 = vor.u32 %v3645, %v3648
  %v3650 = vrot.slane %v3649, 2
  %v3652 = vshll.u32 %v3543, 16
  %v3654 = vrot.slane %v3652, 7
  %v3655 = vsel %vm441, %v3650, %v3654
  %s3656 = scalar_lea.vmem %s1, 896
  %v3657 = vld [vmem:[%s3656] sm:$0xf]
  %v3658 = vld [vmem:[%s3656 + $0x4] sm:$0xf]
  %v3659 = vld [vmem:[%s3656 + $0x8] sm:$0xf]
  %v3660 = vld [vmem:[%s3656 + $0xc] sm:$0xf]
  %v3661 = vld [vmem:[%s3656 + $0x10] sm:$0xf]
  %v3662 = vld [vmem:[%s3656 + $0x14] sm:$0xf]
  %v3663 = vld [vmem:[%s3656 + $0x18] sm:$0xf]
  %v3664 = vld [vmem:[%s3656 + $0x1c] sm:$0xf]
  %v3665 = vld [vmem:[%s3656 + $0x20] sm:$0xf]
  %v3666 = vld [vmem:[%s3656 + $0x24] sm:$0xf]
  %v3667 = vld [vmem:[%s3656 + $0x28] sm:$0xf]
  %v3668 = vld [vmem:[%s3656 + $0x2c] sm:$0xf]
  %v3669 = vld [vmem:[%s3656 + $0x30] sm:$0xf]
  %v3670 = vld [vmem:[%s3656 + $0x34] sm:$0xf]
  %v3671 = vld [vmem:[%s3656 + $0x38] sm:$0xf]
  %v3672 = vld [vmem:[%s3656 + $0x3c] sm:$0xf]
  %v3673 = vcombine.low %v3557, %v3571
  %v3674 = vcombine.low %v3585, %v3599
  %v3676 = vunpack.c.l.s4 1983009808
  %v3677 = vunpack.c.0.s8 %v3676
  %v3678 = vlaneseq
  %v3679 = vshrl.u32 %v3678, 7
  %v3680 = vsub.s32 %v3677, %v3679
  %v3681 = vrot.slane %v3673, %v3680
  %v3683 = vunpack.c.l.s4 1983009808
  %v3684 = vunpack.c.0.s8 %v3683
  %v3685 = vlaneseq
  %v3686 = vshrl.u32 %v3685, 7
  %v3687 = vsub.s32 %v3684, %v3686
  %v3688 = vrot.slane %v3674, %v3687
  %v3689 = vcombine.low %v3681, %v3688
  %v3690 = vcombine.low %v3613, %v3627
  %v3691 = vcombine.low %v3641, %v3655
  %v3693 = vunpack.c.l.s4 1983009808
  %v3694 = vunpack.c.0.s8 %v3693
  %v3695 = vlaneseq
  %v3696 = vshrl.u32 %v3695, 7
  %v3697 = vsub.s32 %v3694, %v3696
  %v3698 = vrot.slane %v3690, %v3697
  %v3700 = vunpack.c.l.s4 1983009808
  %v3701 = vunpack.c.0.s8 %v3700
  %v3702 = vlaneseq
  %v3703 = vshrl.u32 %v3702, 7
  %v3704 = vsub.s32 %v3701, %v3703
  %v3705 = vrot.slane %v3691, %v3704
  %v3706 = vcombine.low %v3698, %v3705
  %v3725 = vunpack.c.l.b16 %v3657
  %v3726 = vunpack.c.l.b16 %v3658
  %v3727 = vunpack.c.l.b16 %v3659
  %v3728 = vunpack.c.l.b16 %v3660
  %v3729 = vunpack.c.l.b16 %v3661
  %v3730 = vunpack.c.l.b16 %v3662
  %v3731 = vunpack.c.l.b16 %v3663
  %v3732 = vunpack.c.l.b16 %v3664
  %v3733 = vunpack.c.l.b16 %v3665
  %v3734 = vunpack.c.l.b16 %v3666
  %v3735 = vunpack.c.l.b16 %v3667
  %v3736 = vunpack.c.l.b16 %v3668
  %v3737 = vunpack.c.l.b16 %v3669
  %v3738 = vunpack.c.l.b16 %v3670
  %v3739 = vunpack.c.l.b16 %v3671
  %v3740 = vunpack.c.l.b16 %v3672
  %v3741 = vpack.c.b16 %v3726, %v3725
  %v3742 = vpack.c.b16 %v3728, %v3727
  %v3743 = vpack.c.b16 %v3730, %v3729
  %v3744 = vpack.c.b16 %v3732, %v3731
  %v3745 = vpack.c.b16 %v3734, %v3733
  %v3746 = vpack.c.b16 %v3736, %v3735
  %v3747 = vpack.c.b16 %v3738, %v3737
  %v3748 = vpack.c.b16 %v3740, %v3739
  %3757 = vmatprep.subr.bf16.mxu0 0
  %3758 = vmatpush1.bf16.msra.mxu0 %v3741
  %3759 = vmatprep.subr.bf16.mxu0 0
  %3760 = vmatpush1.bf16.msra.mxu0 %v3742
  %3761 = vmatprep.subr.bf16.mxu0 0
  %3762 = vmatpush1.bf16.msra.mxu0 %v3743
  %3763 = vmatprep.subr.bf16.mxu0 0
  %3764 = vmatpush1.bf16.msra.mxu0 %v3744
  %3765 = vmatprep.subr.bf16.mxu0 0
  %3766 = vmatpush1.bf16.msra.mxu0 %v3745
  %3767 = vmatprep.subr.bf16.mxu0 0
  %3768 = vmatpush1.bf16.msra.mxu0 %v3746
  %3769 = vmatprep.subr.bf16.mxu0 0
  %3770 = vmatpush1.bf16.msra.mxu0 %v3747
  %3771 = vmatprep.subr.bf16.mxu0 0
  %3772 = vmatpush1.bf16.msra.mxu0 %v3748
  %3773 = vmatprep.subr.bf16.mxu0 0
  %3774 = vmatpush1.bf16.msra.mxu0 0
  %3775 = vmatprep.subr.bf16.mxu0 0
  %3776 = vmatpush1.bf16.msra.mxu0 0
  %3777 = vmatprep.subr.bf16.mxu0 0
  %3778 = vmatpush1.bf16.msra.mxu0 0
  %3779 = vmatprep.subr.bf16.mxu0 0
  %3780 = vmatpush1.bf16.msra.mxu0 0
  %3781 = vmatprep.subr.bf16.mxu0 0
  %3782 = vmatpush1.bf16.msra.mxu0 0
  %3783 = vmatprep.subr.bf16.mxu0 0
  %3784 = vmatpush1.bf16.msra.mxu0 0
  %3785 = vmatprep.subr.bf16.mxu0 0
  %3786 = vmatpush1.bf16.msra.mxu0 0
  %3787 = vmatprep.subr.bf16.mxu0 0
  %3788 = vmatpush1.bf16.msra.mxu0 0
  %3789 = vmatprep.mubr.bf16.mxu0 0
  %3790 = vmatmul.mubr.bf16.gmra.mrb[0].mxu0 %v3689
  %v3791 = vpop.f32.mrb[0].mxu0
  %v3792 = vadd.f32 0.0, %v3791
  %v3793 = vpop.f32.mrb[0].mxu0
  %v3794 = vpop.f32.mrb[0].mxu0
  %v3795 = vadd.f32 0.0, %v3794
  %v3796 = vpop.f32.mrb[0].mxu0
  %3797 = vmatprep.mubr.bf16.mxu0 0
  %3798 = vmatmul.mubr.bf16.gmra.mrb[0].mxu0 %v3706
  %v3799 = vpop.f32.mrb[0].mxu0
  %v3800 = vadd.f32 0.0, %v3799
  %v3801 = vpop.f32.mrb[0].mxu0
  %v3802 = vpop.f32.mrb[0].mxu0
  %v3803 = vadd.f32 0.0, %v3802
  %v3804 = vpop.f32.mrb[0].mxu0
  %3805 = vdwg.mxu0
  %v3806 = vadd.f32 %v3460, %v3792
  %v3807 = vadd.f32 %v3461, %v3795
  %v3808 = vadd.f32 %v3462, %v3800
  %v3809 = vadd.f32 %v3463, %v3803
  %v3810 = vld [vmem:[%s3293] sm:$0x7]
  %v3811 = vld [vmem:[%s3293 + $0x4] sm:$0x7]
  %v3812 = vld [vmem:[%s3293 + $0x8] sm:$0x7]
  %v3813 = vld [vmem:[%s3293 + $0xc] sm:$0x7]
  %v3814 = vld [vmem:[%s3293 + $0x50] sm:$0x7]
  %v3815 = vld [vmem:[%s3293 + $0x54] sm:$0x7]
  %v3816 = vld [vmem:[%s3293 + $0x58] sm:$0x7]
  %v3817 = vld [vmem:[%s3293 + $0x5c] sm:$0x7]
  %v3827 = vunpack.c.l.s4 1983009808
  %v3828 = vunpack.c.0.s8 %v3827
  %v3829 = vlaneseq
  %v3830 = vshrl.u32 %v3829, 7
  %v3831 = vsub.s32 %v3828, %v3830
  %v3832 = vrot.slane %v3810, %v3831
  %v3833 = vcombine.high %v3832, %v3832
  %v3835 = vunpack.c.l.s4 1983009808
  %v3836 = vunpack.c.0.s8 %v3835
  %v3837 = vlaneseq
  %v3838 = vshrl.u32 %v3837, 7
  %v3839 = vsub.s32 %v3836, %v3838
  %v3840 = vrot.slane %v3811, %v3839
  %v3841 = vcombine.high %v3840, %v3840
  %v3843 = vunpack.c.l.s4 1983009808
  %v3844 = vunpack.c.0.s8 %v3843
  %v3845 = vlaneseq
  %v3846 = vshrl.u32 %v3845, 7
  %v3847 = vsub.s32 %v3844, %v3846
  %v3848 = vrot.slane %v3812, %v3847
  %v3849 = vcombine.high %v3848, %v3848
  %v3851 = vunpack.c.l.s4 1983009808
  %v3852 = vunpack.c.0.s8 %v3851
  %v3853 = vlaneseq
  %v3854 = vshrl.u32 %v3853, 7
  %v3855 = vsub.s32 %v3852, %v3854
  %v3856 = vrot.slane %v3813, %v3855
  %v3857 = vcombine.high %v3856, %v3856
  %v3859 = vunpack.c.l.s4 1983009808
  %v3860 = vunpack.c.0.s8 %v3859
  %v3861 = vlaneseq
  %v3862 = vshrl.u32 %v3861, 7
  %v3863 = vsub.s32 %v3860, %v3862
  %v3864 = vrot.slane %v3814, %v3863
  %v3865 = vcombine.high %v3864, %v3864
  %v3867 = vunpack.c.l.s4 1983009808
  %v3868 = vunpack.c.0.s8 %v3867
  %v3869 = vlaneseq
  %v3870 = vshrl.u32 %v3869, 7
  %v3871 = vsub.s32 %v3868, %v3870
  %v3872 = vrot.slane %v3815, %v3871
  %v3873 = vcombine.high %v3872, %v3872
  %v3875 = vunpack.c.l.s4 1983009808
  %v3876 = vunpack.c.0.s8 %v3875
  %v3877 = vlaneseq
  %v3878 = vshrl.u32 %v3877, 7
  %v3879 = vsub.s32 %v3876, %v3878
  %v3880 = vrot.slane %v3816, %v3879
  %v3881 = vcombine.high %v3880, %v3880
  %v3883 = vunpack.c.l.s4 1983009808
  %v3884 = vunpack.c.0.s8 %v3883
  %v3885 = vlaneseq
  %v3886 = vshrl.u32 %v3885, 7
  %v3887 = vsub.s32 %v3884, %v3886
  %v3888 = vrot.slane %v3817, %v3887
  %v3889 = vcombine.high %v3888, %v3888
  %v3891 = vshrl.u32 %v3832, 16
  %v3893 = vrot.slane %v3891, 6
  %v3894 = vshll.u32 %v3832, 16
  %v3896 = vrot.slane %v3894, 7
  %v3897 = vor.u32 %v3893, %v3896
  %v3898 = vrot.slane %v3897, 2
  %v3900 = vshll.u32 %v3833, 16
  %v3902 = vrot.slane %v3900, 7
  %v3903 = vsel %vm441, %v3898, %v3902
  %v3905 = vshrl.u32 %v3840, 16
  %v3907 = vrot.slane %v3905, 6
  %v3908 = vshll.u32 %v3840, 16
  %v3910 = vrot.slane %v3908, 7
  %v3911 = vor.u32 %v3907, %v3910
  %v3912 = vrot.slane %v3911, 2
  %v3914 = vshll.u32 %v3841, 16
  %v3916 = vrot.slane %v3914, 7
  %v3917 = vsel %vm441, %v3912, %v3916
  %v3919 = vshrl.u32 %v3848, 16
  %v3921 = vrot.slane %v3919, 6
  %v3922 = vshll.u32 %v3848, 16
  %v3924 = vrot.slane %v3922, 7
  %v3925 = vor.u32 %v3921, %v3924
  %v3926 = vrot.slane %v3925, 2
  %v3928 = vshll.u32 %v3849, 16
  %v3930 = vrot.slane %v3928, 7
  %v3931 = vsel %vm441, %v3926, %v3930
  %v3933 = vshrl.u32 %v3856, 16
  %v3935 = vrot.slane %v3933, 6
  %v3936 = vshll.u32 %v3856, 16
  %v3938 = vrot.slane %v3936, 7
  %v3939 = vor.u32 %v3935, %v3938
  %v3940 = vrot.slane %v3939, 2
  %v3942 = vshll.u32 %v3857, 16
  %v3944 = vrot.slane %v3942, 7
  %v3945 = vsel %vm441, %v3940, %v3944
  %v3947 = vshrl.u32 %v3864, 16
  %v3949 = vrot.slane %v3947, 6
  %v3950 = vshll.u32 %v3864, 16
  %v3952 = vrot.slane %v3950, 7
  %v3953 = vor.u32 %v3949, %v3952
  %v3954 = vrot.slane %v3953, 2
  %v3956 = vshll.u32 %v3865, 16
  %v3958 = vrot.slane %v3956, 7
  %v3959 = vsel %vm441, %v3954, %v3958
  %v3961 = vshrl.u32 %v3872, 16
  %v3963 = vrot.slane %v3961, 6
  %v3964 = vshll.u32 %v3872, 16
  %v3966 = vrot.slane %v3964, 7
  %v3967 = vor.u32 %v3963, %v3966
  %v3968 = vrot.slane %v3967, 2
  %v3970 = vshll.u32 %v3873, 16
  %v3972 = vrot.slane %v3970, 7
  %v3973 = vsel %vm441, %v3968, %v3972
  %v3975 = vshrl.u32 %v3880, 16
  %v3977 = vrot.slane %v3975, 6
  %v3978 = vshll.u32 %v3880, 16
  %v3980 = vrot.slane %v3978, 7
  %v3981 = vor.u32 %v3977, %v3980
  %v3982 = vrot.slane %v3981, 2
  %v3984 = vshll.u32 %v3881, 16
  %v3986 = vrot.slane %v3984, 7
  %v3987 = vsel %vm441, %v3982, %v3986
  %v3989 = vshrl.u32 %v3888, 16
  %v3991 = vrot.slane %v3989, 6
  %v3992 = vshll.u32 %v3888, 16
  %v3994 = vrot.slane %v3992, 7
  %v3995 = vor.u32 %v3991, %v3994
  %v3996 = vrot.slane %v3995, 2
  %v3998 = vshll.u32 %v3889, 16
  %v4000 = vrot.slane %v3998, 7
  %v4001 = vsel %vm441, %v3996, %v4000
  %s4002 = scalar_lea.vmem %s1, 960
  %v4003 = vld [vmem:[%s4002] sm:$0xf]
  %v4004 = vld [vmem:[%s4002 + $0x4] sm:$0xf]
  %v4005 = vld [vmem:[%s4002 + $0x8] sm:$0xf]
  %v4006 = vld [vmem:[%s4002 + $0xc] sm:$0xf]
  %v4007 = vld [vmem:[%s4002 + $0x10] sm:$0xf]
  %v4008 = vld [vmem:[%s4002 + $0x14] sm:$0xf]
  %v4009 = vld [vmem:[%s4002 + $0x18] sm:$0xf]
  %v4010 = vld [vmem:[%s4002 + $0x1c] sm:$0xf]
  %v4011 = vld [vmem:[%s4002 + $0x20] sm:$0xf]
  %v4012 = vld [vmem:[%s4002 + $0x24] sm:$0xf]
  %v4013 = vld [vmem:[%s4002 + $0x28] sm:$0xf]
  %v4014 = vld [vmem:[%s4002 + $0x2c] sm:$0xf]
  %v4015 = vld [vmem:[%s4002 + $0x30] sm:$0xf]
  %v4016 = vld [vmem:[%s4002 + $0x34] sm:$0xf]
  %v4017 = vld [vmem:[%s4002 + $0x38] sm:$0xf]
  %v4018 = vld [vmem:[%s4002 + $0x3c] sm:$0xf]
  %v4019 = vcombine.low %v3903, %v3917
  %v4020 = vcombine.low %v3931, %v3945
  %v4022 = vunpack.c.l.s4 1983009808
  %v4023 = vunpack.c.0.s8 %v4022
  %v4024 = vlaneseq
  %v4025 = vshrl.u32 %v4024, 7
  %v4026 = vsub.s32 %v4023, %v4025
  %v4027 = vrot.slane %v4019, %v4026
  %v4029 = vunpack.c.l.s4 1983009808
  %v4030 = vunpack.c.0.s8 %v4029
  %v4031 = vlaneseq
  %v4032 = vshrl.u32 %v4031, 7
  %v4033 = vsub.s32 %v4030, %v4032
  %v4034 = vrot.slane %v4020, %v4033
  %v4035 = vcombine.low %v4027, %v4034
  %v4036 = vcombine.low %v3959, %v3973
  %v4037 = vcombine.low %v3987, %v4001
  %v4039 = vunpack.c.l.s4 1983009808
  %v4040 = vunpack.c.0.s8 %v4039
  %v4041 = vlaneseq
  %v4042 = vshrl.u32 %v4041, 7
  %v4043 = vsub.s32 %v4040, %v4042
  %v4044 = vrot.slane %v4036, %v4043
  %v4046 = vunpack.c.l.s4 1983009808
  %v4047 = vunpack.c.0.s8 %v4046
  %v4048 = vlaneseq
  %v4049 = vshrl.u32 %v4048, 7
  %v4050 = vsub.s32 %v4047, %v4049
  %v4051 = vrot.slane %v4037, %v4050
  %v4052 = vcombine.low %v4044, %v4051
  %v4071 = vunpack.c.l.b16 %v4003
  %v4072 = vunpack.c.l.b16 %v4004
  %v4073 = vunpack.c.l.b16 %v4005
  %v4074 = vunpack.c.l.b16 %v4006
  %v4075 = vunpack.c.l.b16 %v4007
  %v4076 = vunpack.c.l.b16 %v4008
  %v4077 = vunpack.c.l.b16 %v4009
  %v4078 = vunpack.c.l.b16 %v4010
  %v4079 = vunpack.c.l.b16 %v4011
  %v4080 = vunpack.c.l.b16 %v4012
  %v4081 = vunpack.c.l.b16 %v4013
  %v4082 = vunpack.c.l.b16 %v4014
  %v4083 = vunpack.c.l.b16 %v4015
  %v4084 = vunpack.c.l.b16 %v4016
  %v4085 = vunpack.c.l.b16 %v4017
  %v4086 = vunpack.c.l.b16 %v4018
  %v4087 = vpack.c.b16 %v4072, %v4071
  %v4088 = vpack.c.b16 %v4074, %v4073
  %v4089 = vpack.c.b16 %v4076, %v4075
  %v4090 = vpack.c.b16 %v4078, %v4077
  %v4091 = vpack.c.b16 %v4080, %v4079
  %v4092 = vpack.c.b16 %v4082, %v4081
  %v4093 = vpack.c.b16 %v4084, %v4083
  %v4094 = vpack.c.b16 %v4086, %v4085
  %4103 = vmatprep.subr.bf16.mxu0 0
  %4104 = vmatpush1.bf16.msra.mxu0 %v4087
  %4105 = vmatprep.subr.bf16.mxu0 0
  %4106 = vmatpush1.bf16.msra.mxu0 %v4088
  %4107 = vmatprep.subr.bf16.mxu0 0
  %4108 = vmatpush1.bf16.msra.mxu0 %v4089
  %4109 = vmatprep.subr.bf16.mxu0 0
  %4110 = vmatpush1.bf16.msra.mxu0 %v4090
  %4111 = vmatprep.subr.bf16.mxu0 0
  %4112 = vmatpush1.bf16.msra.mxu0 %v4091
  %4113 = vmatprep.subr.bf16.mxu0 0
  %4114 = vmatpush1.bf16.msra.mxu0 %v4092
  %4115 = vmatprep.subr.bf16.mxu0 0
  %4116 = vmatpush1.bf16.msra.mxu0 %v4093
  %4117 = vmatprep.subr.bf16.mxu0 0
  %4118 = vmatpush1.bf16.msra.mxu0 %v4094
  %4119 = vmatprep.subr.bf16.mxu0 0
  %4120 = vmatpush1.bf16.msra.mxu0 0
  %4121 = vmatprep.subr.bf16.mxu0 0
  %4122 = vmatpush1.bf16.msra.mxu0 0
  %4123 = vmatprep.subr.bf16.mxu0 0
  %4124 = vmatpush1.bf16.msra.mxu0 0
  %4125 = vmatprep.subr.bf16.mxu0 0
  %4126 = vmatpush1.bf16.msra.mxu0 0
  %4127 = vmatprep.subr.bf16.mxu0 0
  %4128 = vmatpush1.bf16.msra.mxu0 0
  %4129 = vmatprep.subr.bf16.mxu0 0
  %4130 = vmatpush1.bf16.msra.mxu0 0
  %4131 = vmatprep.subr.bf16.mxu0 0
  %4132 = vmatpush1.bf16.msra.mxu0 0
  %4133 = vmatprep.subr.bf16.mxu0 0
  %4134 = vmatpush1.bf16.msra.mxu0 0
  %4135 = vmatprep.mubr.bf16.mxu0 0
  %4136 = vmatmul.mubr.bf16.gmra.mrb[0].mxu0 %v4035
  %v4137 = vpop.f32.mrb[0].mxu0
  %v4138 = vadd.f32 0.0, %v4137
  %v4139 = vpop.f32.mrb[0].mxu0
  %v4140 = vpop.f32.mrb[0].mxu0
  %v4141 = vadd.f32 0.0, %v4140
  %v4142 = vpop.f32.mrb[0].mxu0
  %4143 = vmatprep.mubr.bf16.mxu0 0
  %4144 = vmatmul.mubr.bf16.gmra.mrb[0].mxu0 %v4052
  %v4145 = vpop.f32.mrb[0].mxu0
  %v4146 = vadd.f32 0.0, %v4145
  %v4147 = vpop.f32.mrb[0].mxu0
  %v4148 = vpop.f32.mrb[0].mxu0
  %v4149 = vadd.f32 0.0, %v4148
  %v4150 = vpop.f32.mrb[0].mxu0
  %4151 = vdwg.mxu0
  %v4152 = vadd.f32 %v3806, %v4138
  %v4153 = vadd.f32 %v3807, %v4141
  %v4154 = vadd.f32 %v3808, %v4146
  %v4155 = vadd.f32 %v3809, %v4149
  %v4156 = vld [vmem:[%s2] sm:$0x1]
  %v4158 = vlaneseq
  %v4159 = vshrl.u32 %v4158, 7
  %v4160 = vsub.s32 0, %v4159
  %v4161 = vrot.slane %v4156, %v4160
  %v4163 = vadd.f32 %v4152, %v4161
  %v4164 = vadd.f32 %v4153, %v4161
  %v4165 = vadd.f32 %v4154, %v4161
  %v4166 = vadd.f32 %v4155, %v4161
  %vm4167 = vcmp.ge.f32.partialorder %v4163, 0.0
  %vm4168 = vcmp.ge.f32.partialorder %v4164, 0.0
  %vm4169 = vcmp.ge.f32.partialorder %v4165, 0.0
  %vm4170 = vcmp.ge.f32.partialorder %v4166, 0.0
  %v4171 = vmul.f32 %v4163, 0.2
  %v4172 = vmul.f32 %v4164, 0.2
  %v4173 = vmul.f32 %v4165, 0.2
  %v4174 = vmul.f32 %v4166, 0.2
  %v4175 = vsel %vm4167, %v4163, %v4171
  %v4176 = vsel %vm4168, %v4164, %v4172
  %v4177 = vsel %vm4169, %v4165, %v4173
  %v4178 = vsel %vm4170, %v4166, %v4174
  %v4179 = vld [vmem:[%s3] sm:$0xff]
  %v4180 = vld [vmem:[%s3 + $0x8] sm:$0xff]
  %v4181 = vmul.f32 %v4175, %v4179
  %v4182 = vmul.f32 %v4176, %v4180
  %v4183 = vmul.f32 %v4177, %v4179
  %v4184 = vmul.f32 %v4178, %v4180
  %4185 = vadd.xlane.f32.xlu0 %v4181
  %v4186 = vpop.xlane.xlu0 %4185
  %4187 = vadd.xlane.f32.xlu0 %v4182
  %v4188 = vpop.xlane.xlu0 %4187
  %4189 = vadd.xlane.f32.xlu0 %v4183
  %v4190 = vpop.xlane.xlu0 %4189
  %4191 = vadd.xlane.f32.xlu0 %v4184
  %v4192 = vpop.xlane.xlu0 %4191
  %v4197 = vlaneseq
  %v4198 = vand.u32 %v4197, 127
  %v4199 = vlaneseq
  %v4200 = vshrl.u32 %v4199, 7
  %v4201 = vsub.s32 %v4198, %v4200
  %v4202 = vrot.slane %v4186, %v4201
  %v4203 = vadd.s32 %v4198, 4294967288
  %v4204 = vlaneseq
  %v4205 = vshrl.u32 %v4204, 7
  %v4206 = vsub.s32 %v4203, %v4205
  %v4207 = vrot.slane %v4188, %v4206
  %vm4208 = vcmask 130112
  %v4209 = vsel %vm4208, %v4207, %v4202
  %v4210 = vlaneseq
  %v4211 = vshrl.u32 %v4210, 7
  %v4212 = vsub.s32 %v4198, %v4211
  %v4213 = vrot.slane %v4190, %v4212
  %v4214 = vlaneseq
  %v4215 = vshrl.u32 %v4214, 7
  %v4216 = vsub.s32 %v4203, %v4215
  %v4217 = vrot.slane %v4192, %v4216
  %v4218 = vsel %vm4208, %v4217, %v4213
  %vm4219 = vcmask 1041409
  %v4220 = vsel %vm4219, %v4218, %v4209
  %vm4222 = vcmask 123904
  %v4223 = vsel %vm4222, %v4220, 0.0
  %4224 = vadd.xlane.f32.xlu0 %v4223
  %v4225 = vpop.xlane.xlu0 %4224
  %v4226 = vld [vmem:[#allocation2] sm:$0x1]
  %v4228 = vlaneseq
  %v4229 = vshrl.u32 %v4228, 7
  %v4230 = vsub.s32 0, %v4229
  %v4231 = vrot.slane %v4226, %v4230
  %v4233 = vadd.f32 %v4225, %v4231
  %v4234 = vsub.f32 0.0, %v4233
  %v4235 = vmul.f32 %v4234, 1.442695
  %v4236 = vpow.pop %v4235
  %v4237 = vadd.f32 %v4236, 1.0
  %v4238 = vrcp.pop %v4237
  %vm4239 = vcmask 1024
  %4240 = vst.msk [vmem:[%s5] sm:$0x3] %vm4239, %v4238
  // Predicated region
  $region22: #{discriminator_forward.3} parent=0 // pred_check
    _
  $region23: #{discriminator_forward.3} parent=0 // pred_check_branch
    %4242 = sbr.rel (0) target = $region25
  $region24: #{discriminator_forward.3} parent=0 // pred_region
    _
  $region25: #{discriminator_forward.3} parent=0 // pred_fallthru
    _
  // Predicated region
  $region26: #{discriminator_forward.3} parent=0 // pred_check
    _
  $region27: #{discriminator_forward.3} parent=0 // pred_check_branch
    %4244 = sbr.rel (0) target = $region29
  $region28: #{discriminator_forward.3} parent=0 // pred_region
    _
  $region29: #{discriminator_forward.3} parent=0 // pred_fallthru
    _

// kernel: discriminator_forward.2
$region0: #{discriminator_forward.2}
  #allocation0 [shape = 'u32[]', space=smem, size = 0x4, offset = 0x4, fixed_abs, tag = 'smem constant byte address 0x4 - core index']
  #allocation1 [shape = 'u32[144,128]{1,0:T(1,128)}', space=vmem, size = 0x12000, scoped, tag = 'internal scratch']
  #allocation2 [shape = 'bf16[2,4,9,9,128]{4,3,2,1,0:T(8,128)(2,1)}', space=vmem, size = 0x48000, scoped, tag = 'scratch operand']
  %s0 = inlined_call_operand.vmem [shape: bf16[2,256,16], index: 0, kind: input, shape index: {}]
  %s1 = inlined_call_operand.vmem [shape: bf16[16,128], index: 1, kind: input, shape index: {}]
  %s2 = inlined_call_operand.vmem [shape: f32[1,128], index: 2, kind: input, shape index: {}]
  %s3 = inlined_call_operand.vmem [shape: bf16[16,128,128], index: 3, kind: input, shape index: {}]
  %s4 = inlined_call_operand.vmem [shape: f32[1,128], index: 4, kind: input, shape index: {}]
  %s5 = inlined_call_operand.vmem [shape: bf16[2,64,128], index: 5, kind: output, shape index: {}]
  %s6 = sld [smem:[#allocation0]]
  $region30: #{discriminator_forward.2} parent=0
    _
  %s8 = ssub.s32 1, %s6
  %s9 = scalar_select 0, %s8, %s6
  // Predicated region
  $region2: #{discriminator_forward.2} parent=0 // pred_check
    _
  $region3: #{discriminator_forward.2} parent=0 // pred_check_branch
    %11 = sbr.rel (0) target = $region5
  $region4: #{discriminator_forward.2} parent=0 // pred_region
    _
  $region5: #{discriminator_forward.2} parent=0 // pred_fallthru
    _
  // Predicated region
  $region6: #{discriminator_forward.2} parent=0 // pred_check
    _
  $region7: #{discriminator_forward.2} parent=0 // pred_check_branch
    %13 = sbr.rel (0) target = $region9
  $region8: #{discriminator_forward.2} parent=0 // pred_region
    _
  $region9: #{discriminator_forward.2} parent=0 // pred_fallthru
    _
  // Predicated region
  $region10: #{discriminator_forward.2} parent=0 // pred_check
    _
  $region11: #{discriminator_forward.2} parent=0 // pred_check_branch
    %15 = sbr.rel (0) target = $region13
  $region12: #{discriminator_forward.2} parent=0 // pred_region
    _
  $region13: #{discriminator_forward.2} parent=0 // pred_fallthru
    _
  // Predicated region
  $region14: #{discriminator_forward.2} parent=0 // pred_check
    _
  $region15: #{discriminator_forward.2} parent=0 // pred_check_branch
    %17 = sbr.rel (0) target = $region17
  $region16: #{discriminator_forward.2} parent=0 // pred_region
    _
  $region17: #{discriminator_forward.2} parent=0 // pred_fallthru
    _
  // Predicated region
  $region18: #{discriminator_forward.2} parent=0 // pred_check
    _
  $region19: #{discriminator_forward.2} parent=0 // pred_check_branch
    %19 = sbr.rel (0) target = $region21
  $region20: #{discriminator_forward.2} parent=0 // pred_region
    _
  $region21: #{discriminator_forward.2} parent=0 // pred_fallthru
    _
  %v21 = vld [vmem:[%s0] sm:$0xf]
  %v22 = vld [vmem:[%s0 + $0x4] sm:$0xf]
  %v23 = vld [vmem:[%s0 + $0x8] sm:$0xf]
  %v24 = vld [vmem:[%s0 + $0xc] sm:$0xf]
  %v25 = vld [vmem:[%s0 + $0x10] sm:$0xf]
  %v26 = vld [vmem:[%s0 + $0x14] sm:$0xf]
  %v27 = vld [vmem:[%s0 + $0x18] sm:$0xf]
  %v28 = vld [vmem:[%s0 + $0x1c] sm:$0xf]
  %v29 = vld [vmem:[%s0 + $0x20] sm:$0xf]
  %v30 = vld [vmem:[%s0 + $0x24] sm:$0xf]
  %v31 = vld [vmem:[%s0 + $0x28] sm:$0xf]
  %v32 = vld [vmem:[%s0 + $0x2c] sm:$0xf]
  %v33 = vld [vmem:[%s0 + $0x30] sm:$0xf]
  %v34 = vld [vmem:[%s0 + $0x34] sm:$0xf]
  %v35 = vld [vmem:[%s0 + $0x38] sm:$0xf]
  %v36 = vld [vmem:[%s0 + $0x3c] sm:$0xf]
  %v37 = vld [vmem:[%s0 + $0x40] sm:$0xf]
  %v38 = vld [vmem:[%s0 + $0x44] sm:$0xf]
  %v39 = vld [vmem:[%s0 + $0x48] sm:$0xf]
  %v40 = vld [vmem:[%s0 + $0x4c] sm:$0xf]
  %v41 = vld [vmem:[%s0 + $0x50] sm:$0xf]
  %v42 = vld [vmem:[%s0 + $0x54] sm:$0xf]
  %v43 = vld [vmem:[%s0 + $0x58] sm:$0xf]
  %v44 = vld [vmem:[%s0 + $0x5c] sm:$0xf]
  %v45 = vld [vmem:[%s0 + $0x60] sm:$0xf]
  %v46 = vld [vmem:[%s0 + $0x64] sm:$0xf]
  %v47 = vld [vmem:[%s0 + $0x68] sm:$0xf]
  %v48 = vld [vmem:[%s0 + $0x6c] sm:$0xf]
  %v49 = vld [vmem:[%s0 + $0x70] sm:$0xf]
  %v50 = vld [vmem:[%s0 + $0x74] sm:$0xf]
  %v51 = vld [vmem:[%s0 + $0x78] sm:$0xf]
  %v52 = vld [vmem:[%s0 + $0x7c] sm:$0xf]
  %v53 = vld [vmem:[%s0 + $0x80] sm:$0xf]
  %v54 = vld [vmem:[%s0 + $0x84] sm:$0xf]
  %v55 = vld [vmem:[%s0 + $0x88] sm:$0xf]
  %v56 = vld [vmem:[%s0 + $0x8c] sm:$0xf]
  %v57 = vld [vmem:[%s0 + $0x90] sm:$0xf]
  %v58 = vld [vmem:[%s0 + $0x94] sm:$0xf]
  %v59 = vld [vmem:[%s0 + $0x98] sm:$0xf]
  %v60 = vld [vmem:[%s0 + $0x9c] sm:$0xf]
  %v61 = vld [vmem:[%s0 + $0xa0] sm:$0xf]
  %v62 = vld [vmem:[%s0 + $0xa4] sm:$0xf]
  %v63 = vld [vmem:[%s0 + $0xa8] sm:$0xf]
  %v64 = vld [vmem:[%s0 + $0xac] sm:$0xf]
  %v65 = vld [vmem:[%s0 + $0xb0] sm:$0xf]
  %v66 = vld [vmem:[%s0 + $0xb4] sm:$0xf]
  %v67 = vld [vmem:[%s0 + $0xb8] sm:$0xf]
  %v68 = vld [vmem:[%s0 + $0xbc] sm:$0xf]
  %v69 = vld [vmem:[%s0 + $0xc0] sm:$0xf]
  %v70 = vld [vmem:[%s0 + $0xc4] sm:$0xf]
  %v71 = vld [vmem:[%s0 + $0xc8] sm:$0xf]
  %v72 = vld [vmem:[%s0 + $0xcc] sm:$0xf]
  %v73 = vld [vmem:[%s0 + $0xd0] sm:$0xf]
  %v74 = vld [vmem:[%s0 + $0xd4] sm:$0xf]
  %v75 = vld [vmem:[%s0 + $0xd8] sm:$0xf]
  %v76 = vld [vmem:[%s0 + $0xdc] sm:$0xf]
  %v77 = vld [vmem:[%s0 + $0xe0] sm:$0xf]
  %v78 = vld [vmem:[%s0 + $0xe4] sm:$0xf]
  %v79 = vld [vmem:[%s0 + $0xe8] sm:$0xf]
  %v80 = vld [vmem:[%s0 + $0xec] sm:$0xf]
  %v81 = vld [vmem:[%s0 + $0xf0] sm:$0xf]
  %v82 = vld [vmem:[%s0 + $0xf4] sm:$0xf]
  %v83 = vld [vmem:[%s0 + $0xf8] sm:$0xf]
  %v84 = vld [vmem:[%s0 + $0xfc] sm:$0xf]
  %v85 = vld [vmem:[%s1] sm:$0xf]
  %v86 = vld [vmem:[%s1 + $0x4] sm:$0xf]
  %v87 = vld [vmem:[%s2] sm:$0x1]
  %v89 = vlaneseq
  %v90 = vshrl.u32 %v89, 7
  %v91 = vsub.s32 0, %v90
  %v92 = vrot.slane %v87, %v91
  %v158 = vunpack.c.l.b16 %v21
  %v159 = vunpack.c.l.b16 %v22
  %v160 = vunpack.c.l.b16 %v23
  %v161 = vunpack.c.l.b16 %v24
  %v162 = vunpack.c.l.b16 %v25
  %v163 = vunpack.c.l.b16 %v26
  %v164 = vunpack.c.l.b16 %v27
  %v165 = vunpack.c.l.b16 %v28
  %v166 = vunpack.c.l.b16 %v29
  %v167 = vunpack.c.l.b16 %v30
  %v168 = vunpack.c.l.b16 %v31
  %v169 = vunpack.c.l.b16 %v32
  %v170 = vunpack.c.l.b16 %v33
  %v171 = vunpack.c.l.b16 %v34
  %v172 = vunpack.c.l.b16 %v35
  %v173 = vunpack.c.l.b16 %v36
  %v174 = vunpack.c.l.b16 %v37
  %v175 = vunpack.c.l.b16 %v38
  %v176 = vunpack.c.l.b16 %v39
  %v177 = vunpack.c.l.b16 %v40
  %v178 = vunpack.c.l.b16 %v41
  %v179 = vunpack.c.l.b16 %v42
  %v180 = vunpack.c.l.b16 %v43
  %v181 = vunpack.c.l.b16 %v44
  %v182 = vunpack.c.l.b16 %v45
  %v183 = vunpack.c.l.b16 %v46
  %v184 = vunpack.c.l.b16 %v47
  %v185 = vunpack.c.l.b16 %v48
  %v186 = vunpack.c.l.b16 %v49
  %v187 = vunpack.c.l.b16 %v50
  %v188 = vunpack.c.l.b16 %v51
  %v189 = vunpack.c.l.b16 %v52
  %v190 = vunpack.c.l.b16 %v53
  %v191 = vunpack.c.l.b16 %v54
  %v192 = vunpack.c.l.b16 %v55
  %v193 = vunpack.c.l.b16 %v56
  %v194 = vunpack.c.l.b16 %v57
  %v195 = vunpack.c.l.b16 %v58
  %v196 = vunpack.c.l.b16 %v59
  %v197 = vunpack.c.l.b16 %v60
  %v198 = vunpack.c.l.b16 %v61
  %v199 = vunpack.c.l.b16 %v62
  %v200 = vunpack.c.l.b16 %v63
  %v201 = vunpack.c.l.b16 %v64
  %v202 = vunpack.c.l.b16 %v65
  %v203 = vunpack.c.l.b16 %v66
  %v204 = vunpack.c.l.b16 %v67
  %v205 = vunpack.c.l.b16 %v68
  %v206 = vunpack.c.l.b16 %v69
  %v207 = vunpack.c.l.b16 %v70
  %v208 = vunpack.c.l.b16 %v71
  %v209 = vunpack.c.l.b16 %v72
  %v210 = vunpack.c.l.b16 %v73
  %v211 = vunpack.c.l.b16 %v74
  %v212 = vunpack.c.l.b16 %v75
  %v213 = vunpack.c.l.b16 %v76
  %v214 = vunpack.c.l.b16 %v77
  %v215 = vunpack.c.l.b16 %v78
  %v216 = vunpack.c.l.b16 %v79
  %v217 = vunpack.c.l.b16 %v80
  %v218 = vunpack.c.l.b16 %v81
  %v219 = vunpack.c.l.b16 %v82
  %v220 = vunpack.c.l.b16 %v83
  %v221 = vunpack.c.l.b16 %v84
  %v222 = vpack.c.b16 %v159, %v158
  %v223 = vpack.c.b16 %v161, %v160
  %v224 = vpack.c.b16 %v163, %v162
  %v225 = vpack.c.b16 %v165, %v164
  %v226 = vpack.c.b16 %v167, %v166
  %v227 = vpack.c.b16 %v169, %v168
  %v228 = vpack.c.b16 %v171, %v170
  %v229 = vpack.c.b16 %v173, %v172
  %v230 = vpack.c.b16 %v175, %v174
  %v231 = vpack.c.b16 %v177, %v176
  %v232 = vpack.c.b16 %v179, %v178
  %v233 = vpack.c.b16 %v181, %v180
  %v234 = vpack.c.b16 %v183, %v182
  %v235 = vpack.c.b16 %v185, %v184
  %v236 = vpack.c.b16 %v187, %v186
  %v237 = vpack.c.b16 %v189, %v188
  %v238 = vpack.c.b16 %v191, %v190
  %v239 = vpack.c.b16 %v193, %v192
  %v240 = vpack.c.b16 %v195, %v194
  %v241 = vpack.c.b16 %v197, %v196
  %v242 = vpack.c.b16 %v199, %v198
  %v243 = vpack.c.b16 %v201, %v200
  %v244 = vpack.c.b16 %v203, %v202
  %v245 = vpack.c.b16 %v205, %v204
  %v246 = vpack.c.b16 %v207, %v206
  %v247 = vpack.c.b16 %v209, %v208
  %v248 = vpack.c.b16 %v211, %v210
  %v249 = vpack.c.b16 %v213, %v212
  %v250 = vpack.c.b16 %v215, %v214
  %v251 = vpack.c.b16 %v217, %v216
  %v252 = vpack.c.b16 %v219, %v218
  %v253 = vpack.c.b16 %v221, %v220
  %v256 = vunpack.c.l.b16 %v85
  %v257 = vunpack.c.l.b16 %v86
  %v258 = vpack.c.b16 %v257, %v256
  %vm260 = vcmask 130048
  %v262 = vsel %vm260, %v222, 0
  %v265 = vsel %vm260, %v223, 0
  %v268 = vsel %vm260, %v224, 0
  %v271 = vsel %vm260, %v225, 0
  %v274 = vsel %vm260, %v226, 0
  %v277 = vsel %vm260, %v227, 0
  %v280 = vsel %vm260, %v228, 0
  %v283 = vsel %vm260, %v229, 0
  %v286 = vsel %vm260, %v230, 0
  %v289 = vsel %vm260, %v231, 0
  %v292 = vsel %vm260, %v232, 0
  %v295 = vsel %vm260, %v233, 0
  %v298 = vsel %vm260, %v234, 0
  %v301 = vsel %vm260, %v235, 0
  %v304 = vsel %vm260, %v236, 0
  %v307 = vsel %vm260, %v237, 0
  %v310 = vsel %vm260, %v238, 0
  %v313 = vsel %vm260, %v239, 0
  %v316 = vsel %vm260, %v240, 0
  %v319 = vsel %vm260, %v241, 0
  %v322 = vsel %vm260, %v242, 0
  %v325 = vsel %vm260, %v243, 0
  %v328 = vsel %vm260, %v244, 0
  %v331 = vsel %vm260, %v245, 0
  %v334 = vsel %vm260, %v246, 0
  %v337 = vsel %vm260, %v247, 0
  %v340 = vsel %vm260, %v248, 0
  %v343 = vsel %vm260, %v249, 0
  %v346 = vsel %vm260, %v250, 0
  %v349 = vsel %vm260, %v251, 0
  %v352 = vsel %vm260, %v252, 0
  %v355 = vsel %vm260, %v253, 0
  %357 = vmatprep.subr.bf16.mxu0 0
  %358 = vmatpush1.bf16.msra.mxu0 %v258
  %359 = vmatprep.subr.bf16.mxu0 0
  %360 = vmatpush1.bf16.msra.mxu0 0
  %361 = vmatprep.subr.bf16.mxu0 0
  %362 = vmatpush1.bf16.msra.mxu0 0
  %363 = vmatprep.subr.bf16.mxu0 0
  %364 = vmatpush1.bf16.msra.mxu0 0
  %365 = vmatprep.subr.bf16.mxu0 0
  %366 = vmatpush1.bf16.msra.mxu0 0
  %367 = vmatprep.subr.bf16.mxu0 0
  %368 = vmatpush1.bf16.msra.mxu0 0
  %369 = vmatprep.subr.bf16.mxu0 0
  %370 = vmatpush1.bf16.msra.mxu0 0
  %371 = vmatprep.subr.bf16.mxu0 0
  %372 = vmatpush1.bf16.msra.mxu0 0
  %373 = vmatprep.subr.bf16.mxu0 0
  %374 = vmatpush1.bf16.msra.mxu0 0
  %375 = vmatprep.subr.bf16.mxu0 0
  %376 = vmatpush1.bf16.msra.mxu0 0
  %377 = vmatprep.subr.bf16.mxu0 0
  %378 = vmatpush1.bf16.msra.mxu0 0
  %379 = vmatprep.subr.bf16.mxu0 0
  %380 = vmatpush1.bf16.msra.mxu0 0
  %381 = vmatprep.subr.bf16.mxu0 0
  %382 = vmatpush1.bf16.msra.mxu0 0
  %383 = vmatprep.subr.bf16.mxu0 0
  %384 = vmatpush1.bf16.msra.mxu0 0
  %385 = vmatprep.subr.bf16.mxu0 0
  %386 = vmatpush1.bf16.msra.mxu0 0
  %387 = vmatprep.subr.bf16.mxu0 0
  %388 = vmatpush1.bf16.msra.mxu0 0
  %389 = vmatprep.mubr.bf16.mxu0 0
  %390 = vmatmul.mubr.bf16.gmra.mrb[0].mxu0 %v262
  %v391 = vpop.f32.mrb[0].mxu0
  %v392 = vadd.f32 %v92, %v391
  %v393 = vpop.f32.mrb[0].mxu0
  %v394 = vpop.f32.mrb[0].mxu0
  %v395 = vadd.f32 %v92, %v394
  %v396 = vpop.f32.mrb[0].mxu0
  %397 = vmatprep.mubr.bf16.mxu0 0
  %398 = vmatmul.mubr.bf16.gmra.mrb[0].mxu0 %v265
  %v399 = vpop.f32.mrb[0].mxu0
  %v400 = vadd.f32 %v92, %v399
  %v401 = vpop.f32.mrb[0].mxu0
  %v402 = vpop.f32.mrb[0].mxu0
  %v403 = vadd.f32 %v92, %v402
  %v404 = vpop.f32.mrb[0].mxu0
  %405 = vmatprep.mubr.bf16.mxu0 0
  %406 = vmatmul.mubr.bf16.gmra.mrb[0].mxu0 %v268
  %v407 = vpop.f32.mrb[0].mxu0
  %v408 = vadd.f32 %v92, %v407
  %v409 = vpop.f32.mrb[0].mxu0
  %v410 = vpop.f32.mrb[0].mxu0
  %v411 = vadd.f32 %v92, %v410
  %v412 = vpop.f32.mrb[0].mxu0
  %413 = vmatprep.mubr.bf16.mxu0 0
  %414 = vmatmul.mubr.bf16.gmra.mrb[0].mxu0 %v271
  %v415 = vpop.f32.mrb[0].mxu0
  %v416 = vadd.f32 %v92, %v415
  %v417 = vpop.f32.mrb[0].mxu0
  %v418 = vpop.f32.mrb[0].mxu0
  %v419 = vadd.f32 %v92, %v418
  %v420 = vpop.f32.mrb[0].mxu0
  %421 = vmatprep.mubr.bf16.mxu0 0
  %422 = vmatmul.mubr.bf16.gmra.mrb[0].mxu0 %v274
  %v423 = vpop.f32.mrb[0].mxu0
  %v424 = vadd.f32 %v92, %v423
  %v425 = vpop.f32.mrb[0].mxu0
  %v426 = vpop.f32.mrb[0].mxu0
  %v427 = vadd.f32 %v92, %v426
  %v428 = vpop.f32.mrb[0].mxu0
  %429 = vmatprep.mubr.bf16.mxu0 0
  %430 = vmatmul.mubr.bf16.gmra.mrb[0].mxu0 %v277
  %v431 = vpop.f32.mrb[0].mxu0
  %v432 = vadd.f32 %v92, %v431
  %v433 = vpop.f32.mrb[0].mxu0
  %v434 = vpop.f32.mrb[0].mxu0
  %v435 = vadd.f32 %v92, %v434
  %v436 = vpop.f32.mrb[0].mxu0
  %437 = vmatprep.mubr.bf16.mxu0 0
  %438 = vmatmul.mubr.bf16.gmra.mrb[0].mxu0 %v280
  %v439 = vpop.f32.mrb[0].mxu0
  %v440 = vadd.f32 %v92, %v439
  %v441 = vpop.f32.mrb[0].mxu0
  %v442 = vpop.f32.mrb[0].mxu0
  %v443 = vadd.f32 %v92, %v442
  %v444 = vpop.f32.mrb[0].mxu0
  %445 = vmatprep.mubr.bf16.mxu0 0
  %446 = vmatmul.mubr.bf16.gmra.mrb[0].mxu0 %v283
  %v447 = vpop.f32.mrb[0].mxu0
  %v448 = vadd.f32 %v92, %v447
  %v449 = vpop.f32.mrb[0].mxu0
  %v450 = vpop.f32.mrb[0].mxu0
  %v451 = vadd.f32 %v92, %v450
  %v452 = vpop.f32.mrb[0].mxu0
  %453 = vmatprep.mubr.bf16.mxu0 0
  %454 = vmatmul.mubr.bf16.gmra.mrb[0].mxu0 %v286
  %v455 = vpop.f32.mrb[0].mxu0
  %v456 = vadd.f32 %v92, %v455
  %v457 = vpop.f32.mrb[0].mxu0
  %v458 = vpop.f32.mrb[0].mxu0
  %v459 = vadd.f32 %v92, %v458
  %v460 = vpop.f32.mrb[0].mxu0
  %461 = vmatprep.mubr.bf16.mxu0 0
  %462 = vmatmul.mubr.bf16.gmra.mrb[0].mxu0 %v289
  %v463 = vpop.f32.mrb[0].mxu0
  %v464 = vadd.f32 %v92, %v463
  %v465 = vpop.f32.mrb[0].mxu0
  %v466 = vpop.f32.mrb[0].mxu0
  %v467 = vadd.f32 %v92, %v466
  %v468 = vpop.f32.mrb[0].mxu0
  %469 = vmatprep.mubr.bf16.mxu0 0
  %470 = vmatmul.mubr.bf16.gmra.mrb[0].mxu0 %v292
  %v471 = vpop.f32.mrb[0].mxu0
  %v472 = vadd.f32 %v92, %v471
  %v473 = vpop.f32.mrb[0].mxu0
  %v474 = vpop.f32.mrb[0].mxu0
  %v475 = vadd.f32 %v92, %v474
  %v476 = vpop.f32.mrb[0].mxu0
  %477 = vmatprep.mubr.bf16.mxu0 0
  %478 = vmatmul.mubr.bf16.gmra.mrb[0].mxu0 %v295
  %v479 = vpop.f32.mrb[0].mxu0
  %v480 = vadd.f32 %v92, %v479
  %v481 = vpop.f32.mrb[0].mxu0
  %v482 = vpop.f32.mrb[0].mxu0
  %v483 = vadd.f32 %v92, %v482
  %v484 = vpop.f32.mrb[0].mxu0
  %485 = vmatprep.mubr.bf16.mxu0 0
  %486 = vmatmul.mubr.bf16.gmra.mrb[0].mxu0 %v298
  %v487 = vpop.f32.mrb[0].mxu0
  %v488 = vadd.f32 %v92, %v487
  %v489 = vpop.f32.mrb[0].mxu0
  %v490 = vpop.f32.mrb[0].mxu0
  %v491 = vadd.f32 %v92, %v490
  %v492 = vpop.f32.mrb[0].mxu0
  %493 = vmatprep.mubr.bf16.mxu0 0
  %494 = vmatmul.mubr.bf16.gmra.mrb[0].mxu0 %v301
  %v495 = vpop.f32.mrb[0].mxu0
  %v496 = vadd.f32 %v92, %v495
  %v497 = vpop.f32.mrb[0].mxu0
  %v498 = vpop.f32.mrb[0].mxu0
  %v499 = vadd.f32 %v92, %v498
  %v500 = vpop.f32.mrb[0].mxu0
  %501 = vmatprep.mubr.bf16.mxu0 0
  %502 = vmatmul.mubr.bf16.gmra.mrb[0].mxu0 %v304
  %v503 = vpop.f32.mrb[0].mxu0
  %v504 = vadd.f32 %v92, %v503
  %v505 = vpop.f32.mrb[0].mxu0
  %v506 = vpop.f32.mrb[0].mxu0
  %v507 = vadd.f32 %v92, %v506
  %v508 = vpop.f32.mrb[0].mxu0
  %509 = vmatprep.mubr.bf16.mxu0 0
  %510 = vmatmul.mubr.bf16.gmra.mrb[0].mxu0 %v307
  %v511 = vpop.f32.mrb[0].mxu0
  %v512 = vadd.f32 %v92, %v511
  %v513 = vpop.f32.mrb[0].mxu0
  %v514 = vpop.f32.mrb[0].mxu0
  %v515 = vadd.f32 %v92, %v514
  %v516 = vpop.f32.mrb[0].mxu0
  %517 = vmatprep.mubr.bf16.mxu0 0
  %518 = vmatmul.mubr.bf16.gmra.mrb[0].mxu0 %v310
  %v519 = vpop.f32.mrb[0].mxu0
  %v520 = vadd.f32 %v92, %v519
  %v521 = vpop.f32.mrb[0].mxu0
  %v522 = vpop.f32.mrb[0].mxu0
  %v523 = vadd.f32 %v92, %v522
  %v524 = vpop.f32.mrb[0].mxu0
  %525 = vmatprep.mubr.bf16.mxu0 0
  %526 = vmatmul.mubr.bf16.gmra.mrb[0].mxu0 %v313
  %v527 = vpop.f32.mrb[0].mxu0
  %v528 = vadd.f32 %v92, %v527
  %v529 = vpop.f32.mrb[0].mxu0
  %v530 = vpop.f32.mrb[0].mxu0
  %v531 = vadd.f32 %v92, %v530
  %v532 = vpop.f32.mrb[0].mxu0
  %533 = vmatprep.mubr.bf16.mxu0 0
  %534 = vmatmul.mubr.bf16.gmra.mrb[0].mxu0 %v316
  %v535 = vpop.f32.mrb[0].mxu0
  %v536 = vadd.f32 %v92, %v535
  %v537 = vpop.f32.mrb[0].mxu0
  %v538 = vpop.f32.mrb[0].mxu0
  %v539 = vadd.f32 %v92, %v538
  %v540 = vpop.f32.mrb[0].mxu0
  %541 = vmatprep.mubr.bf16.mxu0 0
  %542 = vmatmul.mubr.bf16.gmra.mrb[0].mxu0 %v319
  %v543 = vpop.f32.mrb[0].mxu0
  %v544 = vadd.f32 %v92, %v543
  %v545 = vpop.f32.mrb[0].mxu0
  %v546 = vpop.f32.mrb[0].mxu0
  %v547 = vadd.f32 %v92, %v546
  %v548 = vpop.f32.mrb[0].mxu0
  %549 = vmatprep.mubr.bf16.mxu0 0
  %550 = vmatmul.mubr.bf16.gmra.mrb[0].mxu0 %v322
  %v551 = vpop.f32.mrb[0].mxu0
  %v552 = vadd.f32 %v92, %v551
  %v553 = vpop.f32.mrb[0].mxu0
  %v554 = vpop.f32.mrb[0].mxu0
  %v555 = vadd.f32 %v92, %v554
  %v556 = vpop.f32.mrb[0].mxu0
  %557 = vmatprep.mubr.bf16.mxu0 0
  %558 = vmatmul.mubr.bf16.gmra.mrb[0].mxu0 %v325
  %v559 = vpop.f32.mrb[0].mxu0
  %v560 = vadd.f32 %v92, %v559
  %v561 = vpop.f32.mrb[0].mxu0
  %v562 = vpop.f32.mrb[0].mxu0
  %v563 = vadd.f32 %v92, %v562
  %v564 = vpop.f32.mrb[0].mxu0
  %565 = vmatprep.mubr.bf16.mxu0 0
  %566 = vmatmul.mubr.bf16.gmra.mrb[0].mxu0 %v328
  %v567 = vpop.f32.mrb[0].mxu0
  %v568 = vadd.f32 %v92, %v567
  %v569 = vpop.f32.mrb[0].mxu0
  %v570 = vpop.f32.mrb[0].mxu0
  %v571 = vadd.f32 %v92, %v570
  %v572 = vpop.f32.mrb[0].mxu0
  %573 = vmatprep.mubr.bf16.mxu0 0
  %574 = vmatmul.mubr.bf16.gmra.mrb[0].mxu0 %v331
  %v575 = vpop.f32.mrb[0].mxu0
  %v576 = vadd.f32 %v92, %v575
  %v577 = vpop.f32.mrb[0].mxu0
  %v578 = vpop.f32.mrb[0].mxu0
  %v579 = vadd.f32 %v92, %v578
  %v580 = vpop.f32.mrb[0].mxu0
  %581 = vmatprep.mubr.bf16.mxu0 0
  %582 = vmatmul.mubr.bf16.gmra.mrb[0].mxu0 %v334
  %v583 = vpop.f32.mrb[0].mxu0
  %v584 = vadd.f32 %v92, %v583
  %v585 = vpop.f32.mrb[0].mxu0
  %v586 = vpop.f32.mrb[0].mxu0
  %v587 = vadd.f32 %v92, %v586
  %v588 = vpop.f32.mrb[0].mxu0
  %589 = vmatprep.mubr.bf16.mxu0 0
  %590 = vmatmul.mubr.bf16.gmra.mrb[0].mxu0 %v337
  %v591 = vpop.f32.mrb[0].mxu0
  %v592 = vadd.f32 %v92, %v591
  %v593 = vpop.f32.mrb[0].mxu0
  %v594 = vpop.f32.mrb[0].mxu0
  %v595 = vadd.f32 %v92, %v594
  %v596 = vpop.f32.mrb[0].mxu0
  %597 = vmatprep.mubr.bf16.mxu0 0
  %598 = vmatmul.mubr.bf16.gmra.mrb[0].mxu0 %v340
  %v599 = vpop.f32.mrb[0].mxu0
  %v600 = vadd.f32 %v92, %v599
  %v601 = vpop.f32.mrb[0].mxu0
  %v602 = vpop.f32.mrb[0].mxu0
  %v603 = vadd.f32 %v92, %v602
  %v604 = vpop.f32.mrb[0].mxu0
  %605 = vmatprep.mubr.bf16.mxu0 0
  %606 = vmatmul.mubr.bf16.gmra.mrb[0].mxu0 %v343
  %v607 = vpop.f32.mrb[0].mxu0
  %v608 = vadd.f32 %v92, %v607
  %v609 = vpop.f32.mrb[0].mxu0
  %v610 = vpop.f32.mrb[0].mxu0
  %v611 = vadd.f32 %v92, %v610
  %v612 = vpop.f32.mrb[0].mxu0
  %613 = vmatprep.mubr.bf16.mxu0 0
  %614 = vmatmul.mubr.bf16.gmra.mrb[0].mxu0 %v346
  %v615 = vpop.f32.mrb[0].mxu0
  %v616 = vadd.f32 %v92, %v615
  %v617 = vpop.f32.mrb[0].mxu0
  %v618 = vpop.f32.mrb[0].mxu0
  %v619 = vadd.f32 %v92, %v618
  %v620 = vpop.f32.mrb[0].mxu0
  %621 = vmatprep.mubr.bf16.mxu0 0
  %622 = vmatmul.mubr.bf16.gmra.mrb[0].mxu0 %v349
  %v623 = vpop.f32.mrb[0].mxu0
  %v624 = vadd.f32 %v92, %v623
  %v625 = vpop.f32.mrb[0].mxu0
  %v626 = vpop.f32.mrb[0].mxu0
  %v627 = vadd.f32 %v92, %v626
  %v628 = vpop.f32.mrb[0].mxu0
  %629 = vmatprep.mubr.bf16.mxu0 0
  %630 = vmatmul.mubr.bf16.gmra.mrb[0].mxu0 %v352
  %v631 = vpop.f32.mrb[0].mxu0
  %v632 = vadd.f32 %v92, %v631
  %v633 = vpop.f32.mrb[0].mxu0
  %v634 = vpop.f32.mrb[0].mxu0
  %v635 = vadd.f32 %v92, %v634
  %v636 = vpop.f32.mrb[0].mxu0
  %637 = vmatprep.mubr.bf16.mxu0 0
  %638 = vmatmul.mubr.bf16.gmra.mrb[0].mxu0 %v355
  %v639 = vpop.f32.mrb[0].mxu0
  %v640 = vadd.f32 %v92, %v639
  %v641 = vpop.f32.mrb[0].mxu0
  %v642 = vpop.f32.mrb[0].mxu0
  %v643 = vadd.f32 %v92, %v642
  %v644 = vpop.f32.mrb[0].mxu0
  %645 = vdwg.mxu0
  %vm646 = vcmp.ge.f32.partialorder %v392, 0.0
  %vm647 = vcmp.ge.f32.partialorder %v395, 0.0
  %vm648 = vcmp.ge.f32.partialorder %v400, 0.0
  %vm649 = vcmp.ge.f32.partialorder %v403, 0.0
  %vm650 = vcmp.ge.f32.partialorder %v408, 0.0
  %vm651 = vcmp.ge.f32.partialorder %v411, 0.0
  %vm652 = vcmp.ge.f32.partialorder %v416, 0.0
  %vm653 = vcmp.ge.f32.partialorder %v419, 0.0
  %vm654 = vcmp.ge.f32.partialorder %v424, 0.0
  %vm655 = vcmp.ge.f32.partialorder %v427, 0.0
  %vm656 = vcmp.ge.f32.partialorder %v432, 0.0
  %vm657 = vcmp.ge.f32.partialorder %v435, 0.0
  %vm658 = vcmp.ge.f32.partialorder %v440, 0.0
  %vm659 = vcmp.ge.f32.partialorder %v443, 0.0
  %vm660 = vcmp.ge.f32.partialorder %v448, 0.0
  %vm661 = vcmp.ge.f32.partialorder %v451, 0.0
  %vm662 = vcmp.ge.f32.partialorder %v456, 0.0
  %vm663 = vcmp.ge.f32.partialorder %v459, 0.0
  %vm664 = vcmp.ge.f32.partialorder %v464, 0.0
  %vm665 = vcmp.ge.f32.partialorder %v467, 0.0
  %vm666 = vcmp.ge.f32.partialorder %v472, 0.0
  %vm667 = vcmp.ge.f32.partialorder %v475, 0.0
  %vm668 = vcmp.ge.f32.partialorder %v480, 0.0
  %vm669 = vcmp.ge.f32.partialorder %v483, 0.0
  %vm670 = vcmp.ge.f32.partialorder %v488, 0.0
  %vm671 = vcmp.ge.f32.partialorder %v491, 0.0
  %vm672 = vcmp.ge.f32.partialorder %v496, 0.0
  %vm673 = vcmp.ge.f32.partialorder %v499, 0.0
  %vm674 = vcmp.ge.f32.partialorder %v504, 0.0
  %vm675 = vcmp.ge.f32.partialorder %v507, 0.0
  %vm676 = vcmp.ge.f32.partialorder %v512, 0.0
  %vm677 = vcmp.ge.f32.partialorder %v515, 0.0
  %vm678 = vcmp.ge.f32.partialorder %v520, 0.0
  %vm679 = vcmp.ge.f32.partialorder %v523, 0.0
  %vm680 = vcmp.ge.f32.partialorder %v528, 0.0
  %vm681 = vcmp.ge.f32.partialorder %v531, 0.0
  %vm682 = vcmp.ge.f32.partialorder %v536, 0.0
  %vm683 = vcmp.ge.f32.partialorder %v539, 0.0
  %vm684 = vcmp.ge.f32.partialorder %v544, 0.0
  %vm685 = vcmp.ge.f32.partialorder %v547, 0.0
  %vm686 = vcmp.ge.f32.partialorder %v552, 0.0
  %vm687 = vcmp.ge.f32.partialorder %v555, 0.0
  %vm688 = vcmp.ge.f32.partialorder %v560, 0.0
  %vm689 = vcmp.ge.f32.partialorder %v563, 0.0
  %vm690 = vcmp.ge.f32.partialorder %v568, 0.0
  %vm691 = vcmp.ge.f32.partialorder %v571, 0.0
  %vm692 = vcmp.ge.f32.partialorder %v576, 0.0
  %vm693 = vcmp.ge.f32.partialorder %v579, 0.0
  %vm694 = vcmp.ge.f32.partialorder %v584, 0.0
  %vm695 = vcmp.ge.f32.partialorder %v587, 0.0
  %vm696 = vcmp.ge.f32.partialorder %v592, 0.0
  %vm697 = vcmp.ge.f32.partialorder %v595, 0.0
  %vm698 = vcmp.ge.f32.partialorder %v600, 0.0
  %vm699 = vcmp.ge.f32.partialorder %v603, 0.0
  %vm700 = vcmp.ge.f32.partialorder %v608, 0.0
  %vm701 = vcmp.ge.f32.partialorder %v611, 0.0
  %vm702 = vcmp.ge.f32.partialorder %v616, 0.0
  %vm703 = vcmp.ge.f32.partialorder %v619, 0.0
  %vm704 = vcmp.ge.f32.partialorder %v624, 0.0
  %vm705 = vcmp.ge.f32.partialorder %v627, 0.0
  %vm706 = vcmp.ge.f32.partialorder %v632, 0.0
  %vm707 = vcmp.ge.f32.partialorder %v635, 0.0
  %vm708 = vcmp.ge.f32.partialorder %v640, 0.0
  %vm709 = vcmp.ge.f32.partialorder %v643, 0.0
  %v710 = vmul.f32 %v392, 0.2
  %v711 = vmul.f32 %v395, 0.2
  %v712 = vmul.f32 %v400, 0.2
  %v713 = vmul.f32 %v403, 0.2
  %v714 = vmul.f32 %v408, 0.2
  %v715 = vmul.f32 %v411, 0.2
  %v716 = vmul.f32 %v416, 0.2
  %v717 = vmul.f32 %v419, 0.2
  %v718 = vmul.f32 %v424, 0.2
  %v719 = vmul.f32 %v427, 0.2
  %v720 = vmul.f32 %v432, 0.2
  %v721 = vmul.f32 %v435, 0.2
  %v722 = vmul.f32 %v440, 0.2
  %v723 = vmul.f32 %v443, 0.2
  %v724 = vmul.f32 %v448, 0.2
  %v725 = vmul.f32 %v451, 0.2
  %v726 = vmul.f32 %v456, 0.2
  %v727 = vmul.f32 %v459, 0.2
  %v728 = vmul.f32 %v464, 0.2
  %v729 = vmul.f32 %v467, 0.2
  %v730 = vmul.f32 %v472, 0.2
  %v731 = vmul.f32 %v475, 0.2
  %v732 = vmul.f32 %v480, 0.2
  %v733 = vmul.f32 %v483, 0.2
  %v734 = vmul.f32 %v488, 0.2
  %v735 = vmul.f32 %v491, 0.2
  %v736 = vmul.f32 %v496, 0.2
  %v737 = vmul.f32 %v499, 0.2
  %v738 = vmul.f32 %v504, 0.2
  %v739 = vmul.f32 %v507, 0.2
  %v740 = vmul.f32 %v512, 0.2
  %v741 = vmul.f32 %v515, 0.2
  %v742 = vmul.f32 %v520, 0.2
  %v743 = vmul.f32 %v523, 0.2
  %v744 = vmul.f32 %v528, 0.2
  %v745 = vmul.f32 %v531, 0.2
  %v746 = vmul.f32 %v536, 0.2
  %v747 = vmul.f32 %v539, 0.2
  %v748 = vmul.f32 %v544, 0.2
  %v749 = vmul.f32 %v547, 0.2
  %v750 = vmul.f32 %v552, 0.2
  %v751 = vmul.f32 %v555, 0.2
  %v752 = vmul.f32 %v560, 0.2
  %v753 = vmul.f32 %v563, 0.2
  %v754 = vmul.f32 %v568, 0.2
  %v755 = vmul.f32 %v571, 0.2
  %v756 = vmul.f32 %v576, 0.2
  %v757 = vmul.f32 %v579, 0.2
  %v758 = vmul.f32 %v584, 0.2
  %v759 = vmul.f32 %v587, 0.2
  %v760 = vmul.f32 %v592, 0.2
  %v761 = vmul.f32 %v595, 0.2
  %v762 = vmul.f32 %v600, 0.2
  %v763 = vmul.f32 %v603, 0.2
  %v764 = vmul.f32 %v608, 0.2
  %v765 = vmul.f32 %v611, 0.2
  %v766 = vmul.f32 %v616, 0.2
  %v767 = vmul.f32 %v619, 0.2
  %v768 = vmul.f32 %v624, 0.2
  %v769 = vmul.f32 %v627, 0.2
  %v770 = vmul.f32 %v632, 0.2
  %v771 = vmul.f32 %v635, 0.2
  %v772 = vmul.f32 %v640, 0.2
  %v773 = vmul.f32 %v643, 0.2
  %v774 = vsel %vm646, %v392, %v710
  %v775 = vsel %vm647, %v395, %v711
  %v776 = vsel %vm648, %v400, %v712
  %v777 = vsel %vm649, %v403, %v713
  %v778 = vsel %vm650, %v408, %v714
  %v779 = vsel %vm651, %v411, %v715
  %v780 = vsel %vm652, %v416, %v716
  %v781 = vsel %vm653, %v419, %v717
  %v782 = vsel %vm654, %v424, %v718
  %v783 = vsel %vm655, %v427, %v719
  %v784 = vsel %vm656, %v432, %v720
  %v785 = vsel %vm657, %v435, %v721
  %v786 = vsel %vm658, %v440, %v722
  %v787 = vsel %vm659, %v443, %v723
  %v788 = vsel %vm660, %v448, %v724
  %v789 = vsel %vm661, %v451, %v725
  %v790 = vsel %vm662, %v456, %v726
  %v791 = vsel %vm663, %v459, %v727
  %v792 = vsel %vm664, %v464, %v728
  %v793 = vsel %vm665, %v467, %v729
  %v794 = vsel %vm666, %v472, %v730
  %v795 = vsel %vm667, %v475, %v731
  %v796 = vsel %vm668, %v480, %v732
  %v797 = vsel %vm669, %v483, %v733
  %v798 = vsel %vm670, %v488, %v734
  %v799 = vsel %vm671, %v491, %v735
  %v800 = vsel %vm672, %v496, %v736
  %v801 = vsel %vm673, %v499, %v737
  %v802 = vsel %vm674, %v504, %v738
  %v803 = vsel %vm675, %v507, %v739
  %v804 = vsel %vm676, %v512, %v740
  %v805 = vsel %vm677, %v515, %v741
  %v806 = vsel %vm678, %v520, %v742
  %v807 = vsel %vm679, %v523, %v743
  %v808 = vsel %vm680, %v528, %v744
  %v809 = vsel %vm681, %v531, %v745
  %v810 = vsel %vm682, %v536, %v746
  %v811 = vsel %vm683, %v539, %v747
  %v812 = vsel %vm684, %v544, %v748
  %v813 = vsel %vm685, %v547, %v749
  %v814 = vsel %vm686, %v552, %v750
  %v815 = vsel %vm687, %v555, %v751
  %v816 = vsel %vm688, %v560, %v752
  %v817 = vsel %vm689, %v563, %v753
  %v818 = vsel %vm690, %v568, %v754
  %v819 = vsel %vm691, %v571, %v755
  %v820 = vsel %vm692, %v576, %v756
  %v821 = vsel %vm693, %v579, %v757
  %v822 = vsel %vm694, %v584, %v758
  %v823 = vsel %vm695, %v587, %v759
  %v824 = vsel %vm696, %v592, %v760
  %v825 = vsel %vm697, %v595, %v761
  %v826 = vsel %vm698, %v600, %v762
  %v827 = vsel %vm699, %v603, %v763
  %v828 = vsel %vm700, %v608, %v764
  %v829 = vsel %vm701, %v611, %v765
  %v830 = vsel %vm702, %v616, %v766
  %v831 = vsel %vm703, %v619, %v767
  %v832 = vsel %vm704, %v624, %v768
  %v833 = vsel %vm705, %v627, %v769
  %v834 = vsel %vm706, %v632, %v770
  %v835 = vsel %vm707, %v635, %v771
  %v836 = vsel %vm708, %v640, %v772
  %v837 = vsel %vm709, %v643, %v773
  %v838 = vpack.c.bf16 %v775, %v774
  %v839 = vpack.c.bf16 %v777, %v776
  %v840 = vpack.c.bf16 %v779, %v778
  %v841 = vpack.c.bf16 %v781, %v780
  %v842 = vpack.c.bf16 %v783, %v782
  %v843 = vpack.c.bf16 %v785, %v784
  %v844 = vpack.c.bf16 %v787, %v786
  %v845 = vpack.c.bf16 %v789, %v788
  %v846 = vpack.c.bf16 %v791, %v790
  %v847 = vpack.c.bf16 %v793, %v792
  %v848 = vpack.c.bf16 %v795, %v794
  %v849 = vpack.c.bf16 %v797, %v796
  %v850 = vpack.c.bf16 %v799, %v798
  %v851 = vpack.c.bf16 %v801, %v800
  %v852 = vpack.c.bf16 %v803, %v802
  %v853 = vpack.c.bf16 %v805, %v804
  %v854 = vpack.c.bf16 %v807, %v806
  %v855 = vpack.c.bf16 %v809, %v808
  %v856 = vpack.c.bf16 %v811, %v810
  %v857 = vpack.c.bf16 %v813, %v812
  %v858 = vpack.c.bf16 %v815, %v814
  %v859 = vpack.c.bf16 %v817, %v816
  %v860 = vpack.c.bf16 %v819, %v818
  %v861 = vpack.c.bf16 %v821, %v820
  %v862 = vpack.c.bf16 %v823, %v822
  %v863 = vpack.c.bf16 %v825, %v824
  %v864 = vpack.c.bf16 %v827, %v826
  %v865 = vpack.c.bf16 %v829, %v828
  %v866 = vpack.c.bf16 %v831, %v830
  %v867 = vpack.c.bf16 %v833, %v832
  %v868 = vpack.c.bf16 %v835, %v834
  %v869 = vpack.c.bf16 %v837, %v836
  %v902 = vunpack.c.l.b16 %v838
  %v903 = vunpack.c.h.b16 %v838
  %v904 = vunpack.c.l.b16 %v839
  %v905 = vunpack.c.h.b16 %v839
  %v906 = vunpack.c.l.b16 %v840
  %v907 = vunpack.c.h.b16 %v840
  %v908 = vunpack.c.l.b16 %v841
  %v909 = vunpack.c.h.b16 %v841
  %v910 = vunpack.c.l.b16 %v842
  %v911 = vunpack.c.h.b16 %v842
  %v912 = vunpack.c.l.b16 %v843
  %v913 = vunpack.c.h.b16 %v843
  %v914 = vunpack.c.l.b16 %v844
  %v915 = vunpack.c.h.b16 %v844
  %v916 = vunpack.c.l.b16 %v845
  %v917 = vunpack.c.h.b16 %v845
  %v918 = vunpack.c.l.b16 %v846
  %v919 = vunpack.c.h.b16 %v846
  %v920 = vunpack.c.l.b16 %v847
  %v921 = vunpack.c.h.b16 %v847
  %v922 = vunpack.c.l.b16 %v848
  %v923 = vunpack.c.h.b16 %v848
  %v924 = vunpack.c.l.b16 %v849
  %v925 = vunpack.c.h.b16 %v849
  %v926 = vunpack.c.l.b16 %v850
  %v927 = vunpack.c.h.b16 %v850
  %v928 = vunpack.c.l.b16 %v851
  %v929 = vunpack.c.h.b16 %v851
  %v930 = vunpack.c.l.b16 %v852
  %v931 = vunpack.c.h.b16 %v852
  %v932 = vunpack.c.l.b16 %v853
  %v933 = vunpack.c.h.b16 %v853
  %v934 = vunpack.c.l.b16 %v854
  %v935 = vunpack.c.h.b16 %v854
  %v936 = vunpack.c.l.b16 %v855
  %v937 = vunpack.c.h.b16 %v855
  %v938 = vunpack.c.l.b16 %v856
  %v939 = vunpack.c.h.b16 %v856
  %v940 = vunpack.c.l.b16 %v857
  %v941 = vunpack.c.h.b16 %v857
  %v942 = vunpack.c.l.b16 %v858
  %v943 = vunpack.c.h.b16 %v858
  %v944 = vunpack.c.l.b16 %v859
  %v945 = vunpack.c.h.b16 %v859
  %v946 = vunpack.c.l.b16 %v860
  %v947 = vunpack.c.h.b16 %v860
  %v948 = vunpack.c.l.b16 %v861
  %v949 = vunpack.c.h.b16 %v861
  %v950 = vunpack.c.l.b16 %v862
  %v951 = vunpack.c.h.b16 %v862
  %v952 = vunpack.c.l.b16 %v863
  %v953 = vunpack.c.h.b16 %v863
  %v954 = vunpack.c.l.b16 %v864
  %v955 = vunpack.c.h.b16 %v864
  %v956 = vunpack.c.l.b16 %v865
  %v957 = vunpack.c.h.b16 %v865
  %v958 = vunpack.c.l.b16 %v866
  %v959 = vunpack.c.h.b16 %v866
  %v960 = vunpack.c.l.b16 %v867
  %v961 = vunpack.c.h.b16 %v867
  %v962 = vunpack.c.l.b16 %v868
  %v963 = vunpack.c.h.b16 %v868
  %v964 = vunpack.c.l.b16 %v869
  %v965 = vunpack.c.h.b16 %v869
  %v966 = vpack.c.b16 %v902, %v902
  %v967 = vpack.c.b16 %v903, %v903
  %v968 = vpack.c.b16 %v904, %v904
  %v969 = vpack.c.b16 %v905, %v905
  %v970 = vpack.c.b16 %v906, %v906
  %v971 = vpack.c.b16 %v907, %v907
  %v972 = vpack.c.b16 %v908, %v908
  %v973 = vpack.c.b16 %v909, %v909
  %v974 = vpack.c.b16 %v910, %v910
  %v975 = vpack.c.b16 %v911, %v911
  %v976 = vpack.c.b16 %v912, %v912
  %v977 = vpack.c.b16 %v913, %v913
  %v978 = vpack.c.b16 %v914, %v914
  %v979 = vpack.c.b16 %v915, %v915
  %v980 = vpack.c.b16 %v916, %v916
  %v981 = vpack.c.b16 %v917, %v917
  %v982 = vpack.c.b16 %v918, %v918
  %v983 = vpack.c.b16 %v919, %v919
  %v984 = vpack.c.b16 %v920, %v920
  %v985 = vpack.c.b16 %v921, %v921
  %v986 = vpack.c.b16 %v922, %v922
  %v987 = vpack.c.b16 %v923, %v923
  %v988 = vpack.c.b16 %v924, %v924
  %v989 = vpack.c.b16 %v925, %v925
  %v990 = vpack.c.b16 %v926, %v926
  %v991 = vpack.c.b16 %v927, %v927
  %v992 = vpack.c.b16 %v928, %v928
  %v993 = vpack.c.b16 %v929, %v929
  %v994 = vpack.c.b16 %v930, %v930
  %v995 = vpack.c.b16 %v931, %v931
  %v996 = vpack.c.b16 %v932, %v932
  %v997 = vpack.c.b16 %v933, %v933
  %v998 = vpack.c.b16 %v934, %v934
  %v999 = vpack.c.b16 %v935, %v935
  %v1000 = vpack.c.b16 %v936, %v936
  %v1001 = vpack.c.b16 %v937, %v937
  %v1002 = vpack.c.b16 %v938, %v938
  %v1003 = vpack.c.b16 %v939, %v939
  %v1004 = vpack.c.b16 %v940, %v940
  %v1005 = vpack.c.b16 %v941, %v941
  %v1006 = vpack.c.b16 %v942, %v942
  %v1007 = vpack.c.b16 %v943, %v943
  %v1008 = vpack.c.b16 %v944, %v944
  %v1009 = vpack.c.b16 %v945, %v945
  %v1010 = vpack.c.b16 %v946, %v946
  %v1011 = vpack.c.b16 %v947, %v947
  %v1012 = vpack.c.b16 %v948, %v948
  %v1013 = vpack.c.b16 %v949, %v949
  %v1014 = vpack.c.b16 %v950, %v950
  %v1015 = vpack.c.b16 %v951, %v951
  %v1016 = vpack.c.b16 %v952, %v952
  %v1017 = vpack.c.b16 %v953, %v953
  %v1018 = vpack.c.b16 %v954, %v954
  %v1019 = vpack.c.b16 %v955, %v955
  %v1020 = vpack.c.b16 %v956, %v956
  %v1021 = vpack.c.b16 %v957, %v957
  %v1022 = vpack.c.b16 %v958, %v958
  %v1023 = vpack.c.b16 %v959, %v959
  %v1024 = vpack.c.b16 %v960, %v960
  %v1025 = vpack.c.b16 %v961, %v961
  %v1026 = vpack.c.b16 %v962, %v962
  %v1027 = vpack.c.b16 %v963, %v963
  %v1028 = vpack.c.b16 %v964, %v964
  %v1029 = vpack.c.b16 %v965, %v965
  %1062 = vst [vmem:[#allocation2] sm:$0xf] 0
  %vm1063 = vcmask 1040384
  %vm1064 = vsmask.f32 256
  %vm1065 = vmand %vm1063, %vm1064
  %v1066 = vld [vmem:[#allocation2 + $0x4] sm:$0x1]
  %v1067 = vsel %vm1065, 0, %v1066
  %1068 = vst [vmem:[#allocation2 + $0x4] sm:$0x1] %v1067
  %1069 = vst [vmem:[#allocation2 + $0x8] sm:$0xf] 0
  %v1070 = vld [vmem:[#allocation2 + $0xc] sm:$0x1]
  %v1071 = vsel %vm1065, 0, %v1070
  %1072 = vst [vmem:[#allocation2 + $0xc] sm:$0x1] %v1071
  %1073 = vst [vmem:[#allocation2 + $0x10] sm:$0xf] 0
  %v1074 = vld [vmem:[#allocation2 + $0x14] sm:$0x1]
  %v1075 = vsel %vm1065, 0, %v1074
  %1076 = vst [vmem:[#allocation2 + $0x14] sm:$0x1] %v1075
  %1077 = vst [vmem:[#allocation2 + $0x18] sm:$0xf] 0
  %v1078 = vld [vmem:[#allocation2 + $0x1c] sm:$0x1]
  %v1079 = vsel %vm1065, 0, %v1078
  %1080 = vst [vmem:[#allocation2 + $0x1c] sm:$0x1] %v1079
  %1081 = vst [vmem:[#allocation2 + $0x20] sm:$0xf] 0
  %v1082 = vld [vmem:[#allocation2 + $0x24] sm:$0x1]
  %v1083 = vsel %vm1065, 0, %v1082
  %1084 = vst [vmem:[#allocation2 + $0x24] sm:$0x1] %v1083
  %1085 = vst [vmem:[#allocation2 + $0x28] sm:$0xf] 0
  %v1086 = vld [vmem:[#allocation2 + $0x2c] sm:$0x1]
  %v1087 = vsel %vm1065, 0, %v1086
  %1088 = vst [vmem:[#allocation2 + $0x2c] sm:$0x1] %v1087
  %1089 = vst [vmem:[#allocation2 + $0x30] sm:$0xf] 0
  %v1090 = vld [vmem:[#allocation2 + $0x34] sm:$0x1]
  %v1091 = vsel %vm1065, 0, %v1090
  %1092 = vst [vmem:[#allocation2 + $0x34] sm:$0x1] %v1091
  %1093 = vst [vmem:[#allocation2 + $0x38] sm:$0xf] 0
  %v1094 = vld [vmem:[#allocation2 + $0x3c] sm:$0x1]
  %v1095 = vsel %vm1065, 0, %v1094
  %1096 = vst [vmem:[#allocation2 + $0x3c] sm:$0x1] %v1095
  %1097 = vst [vmem:[#allocation2 + $0x40] sm:$0xf] 0
  %v1098 = vld [vmem:[#allocation2 + $0x44] sm:$0x1]
  %v1099 = vsel %vm1065, 0, %v1098
  %1100 = vst [vmem:[#allocation2 + $0x44] sm:$0x1] %v1099
  %1101 = vst [vmem:[#allocation2 + $0x48] sm:$0xf] 0
  %v1102 = vld [vmem:[#allocation2 + $0x4c] sm:$0x1]
  %v1103 = vsel %vm1065, 0, %v1102
  %1104 = vst [vmem:[#allocation2 + $0x4c] sm:$0x1] %v1103
  %1105 = vst [vmem:[#allocation2 + $0x50] sm:$0xf] 0
  %v1106 = vld [vmem:[#allocation2 + $0x54] sm:$0x1]
  %v1107 = vsel %vm1065, 0, %v1106
  %1108 = vst [vmem:[#allocation2 + $0x54] sm:$0x1] %v1107
  %1109 = vst [vmem:[#allocation2 + $0x58] sm:$0xf] 0
  %v1110 = vld [vmem:[#allocation2 + $0x5c] sm:$0x1]
  %v1111 = vsel %vm1065, 0, %v1110
  %1112 = vst [vmem:[#allocation2 + $0x5c] sm:$0x1] %v1111
  %1113 = vst [vmem:[#allocation2 + $0x60] sm:$0xf] 0
  %v1114 = vld [vmem:[#allocation2 + $0x64] sm:$0x1]
  %v1115 = vsel %vm1065, 0, %v1114
  %1116 = vst [vmem:[#allocation2 + $0x64] sm:$0x1] %v1115
  %1117 = vst [vmem:[#allocation2 + $0x68] sm:$0xf] 0
  %v1118 = vld [vmem:[#allocation2 + $0x6c] sm:$0x1]
  %v1119 = vsel %vm1065, 0, %v1118
  %1120 = vst [vmem:[#allocation2 + $0x6c] sm:$0x1] %v1119
  %1121 = vst [vmem:[#allocation2 + $0x70] sm:$0xf] 0
  %v1122 = vld [vmem:[#allocation2 + $0x74] sm:$0x1]
  %v1123 = vsel %vm1065, 0, %v1122
  %1124 = vst [vmem:[#allocation2 + $0x74] sm:$0x1] %v1123
  %1125 = vst [vmem:[#allocation2 + $0x78] sm:$0xf] 0
  %v1126 = vld [vmem:[#allocation2 + $0x7c] sm:$0x1]
  %v1127 = vsel %vm1065, 0, %v1126
  %1128 = vst [vmem:[#allocation2 + $0x7c] sm:$0x1] %v1127
  %1129 = vst [vmem:[#allocation2 + $0x80] sm:$0xf] 0
  %v1130 = vld [vmem:[#allocation2 + $0x84] sm:$0x1]
  %v1131 = vsel %vm1065, 0, %v1130
  %1132 = vst [vmem:[#allocation2 + $0x84] sm:$0x1] %v1131
  %1133 = vst [vmem:[#allocation2 + $0x88] sm:$0xf] 0
  %v1134 = vld [vmem:[#allocation2 + $0x8c] sm:$0x1]
  %v1135 = vsel %vm1065, 0, %v1134
  %1136 = vst [vmem:[#allocation2 + $0x8c] sm:$0x1] %v1135
  %1137 = vst [vmem:[#allocation2 + $0x90] sm:$0xf] 0
  %v1138 = vld [vmem:[#allocation2 + $0x94] sm:$0x1]
  %v1139 = vsel %vm1065, 0, %v1138
  %1140 = vst [vmem:[#allocation2 + $0x94] sm:$0x1] %v1139
  %1141 = vst [vmem:[#allocation2 + $0x98] sm:$0xf] 0
  %v1142 = vld [vmem:[#allocation2 + $0x9c] sm:$0x1]
  %v1143 = vsel %vm1065, 0, %v1142
  %1144 = vst [vmem:[#allocation2 + $0x9c] sm:$0x1] %v1143
  %1145 = vst [vmem:[#allocation2 + $0xa0] sm:$0xf] 0
  %v1146 = vld [vmem:[#allocation2 + $0xa4] sm:$0x1]
  %v1147 = vsel %vm1065, 0, %v1146
  %1148 = vst [vmem:[#allocation2 + $0xa4] sm:$0x1] %v1147
  %1149 = vst [vmem:[#allocation2 + $0xa8] sm:$0xf] 0
  %v1150 = vld [vmem:[#allocation2 + $0xac] sm:$0x1]
  %v1151 = vsel %vm1065, 0, %v1150
  %1152 = vst [vmem:[#allocation2 + $0xac] sm:$0x1] %v1151
  %1153 = vst [vmem:[#allocation2 + $0xb0] sm:$0xf] 0
  %v1154 = vld [vmem:[#allocation2 + $0xb4] sm:$0x1]
  %v1155 = vsel %vm1065, 0, %v1154
  %1156 = vst [vmem:[#allocation2 + $0xb4] sm:$0x1] %v1155
  %1157 = vst [vmem:[#allocation2 + $0xb8] sm:$0xf] 0
  %v1158 = vld [vmem:[#allocation2 + $0xbc] sm:$0x1]
  %v1159 = vsel %vm1065, 0, %v1158
  %1160 = vst [vmem:[#allocation2 + $0xbc] sm:$0x1] %v1159
  %1161 = vst [vmem:[#allocation2 + $0xc0] sm:$0xf] 0
  %v1162 = vld [vmem:[#allocation2 + $0xc4] sm:$0x1]
  %v1163 = vsel %vm1065, 0, %v1162
  %1164 = vst [vmem:[#allocation2 + $0xc4] sm:$0x1] %v1163
  %1165 = vst [vmem:[#allocation2 + $0xc8] sm:$0xf] 0
  %v1166 = vld [vmem:[#allocation2 + $0xcc] sm:$0x1]
  %v1167 = vsel %vm1065, 0, %v1166
  %1168 = vst [vmem:[#allocation2 + $0xcc] sm:$0x1] %v1167
  %1169 = vst [vmem:[#allocation2 + $0xd0] sm:$0xf] 0
  %v1170 = vld [vmem:[#allocation2 + $0xd4] sm:$0x1]
  %v1171 = vsel %vm1065, 0, %v1170
  %1172 = vst [vmem:[#allocation2 + $0xd4] sm:$0x1] %v1171
  %1173 = vst [vmem:[#allocation2 + $0xd8] sm:$0xf] 0
  %v1174 = vld [vmem:[#allocation2 + $0xdc] sm:$0x1]
  %v1175 = vsel %vm1065, 0, %v1174
  %1176 = vst [vmem:[#allocation2 + $0xdc] sm:$0x1] %v1175
  %1177 = vst [vmem:[#allocation2 + $0xe0] sm:$0xf] 0
  %v1178 = vld [vmem:[#allocation2 + $0xe4] sm:$0x1]
  %v1179 = vsel %vm1065, 0, %v1178
  %1180 = vst [vmem:[#allocation2 + $0xe4] sm:$0x1] %v1179
  %1181 = vst [vmem:[#allocation2 + $0xe8] sm:$0xf] 0
  %v1182 = vld [vmem:[#allocation2 + $0xec] sm:$0x1]
  %v1183 = vsel %vm1065, 0, %v1182
  %1184 = vst [vmem:[#allocation2 + $0xec] sm:$0x1] %v1183
  %1185 = vst [vmem:[#allocation2 + $0xf0] sm:$0xf] 0
  %v1186 = vld [vmem:[#allocation2 + $0xf4] sm:$0x1]
  %v1187 = vsel %vm1065, 0, %v1186
  %1188 = vst [vmem:[#allocation2 + $0xf4] sm:$0x1] %v1187
  %1189 = vst [vmem:[#allocation2 + $0xf8] sm:$0xf] 0
  %v1190 = vld [vmem:[#allocation2 + $0xfc] sm:$0x1]
  %v1191 = vsel %vm1065, 0, %v1190
  %1192 = vst [vmem:[#allocation2 + $0xfc] sm:$0x1] %v1191
  %1193 = vst [vmem:[#allocation2 + $0x100] sm:$0xf] 0
  %v1194 = vld [vmem:[#allocation2 + $0x104] sm:$0x1]
  %v1195 = vsel %vm1065, 0, %v1194
  %1196 = vst [vmem:[#allocation2 + $0x104] sm:$0x1] %v1195
  %1197 = vst [vmem:[#allocation2 + $0x108] sm:$0xf] 0
  %v1198 = vld [vmem:[#allocation2 + $0x10c] sm:$0x1]
  %v1199 = vsel %vm1065, 0, %v1198
  %1200 = vst [vmem:[#allocation2 + $0x10c] sm:$0x1] %v1199
  %1201 = vst [vmem:[#allocation2 + $0x110] sm:$0xf] 0
  %v1202 = vld [vmem:[#allocation2 + $0x114] sm:$0x1]
  %v1203 = vsel %vm1065, 0, %v1202
  %1204 = vst [vmem:[#allocation2 + $0x114] sm:$0x1] %v1203
  %1205 = vst [vmem:[#allocation2 + $0x118] sm:$0xf] 0
  %v1206 = vld [vmem:[#allocation2 + $0x11c] sm:$0x1]
  %v1207 = vsel %vm1065, 0, %v1206
  %1208 = vst [vmem:[#allocation2 + $0x11c] sm:$0x1] %v1207
  %1209 = vst [vmem:[#allocation2 + $0x120] sm:$0xf] 0
  %v1210 = vld [vmem:[#allocation2 + $0x124] sm:$0x1]
  %v1211 = vsel %vm1065, 0, %v1210
  %1212 = vst [vmem:[#allocation2 + $0x124] sm:$0x1] %v1211
  %1213 = vst [vmem:[#allocation2 + $0x128] sm:$0xf] 0
  %v1214 = vld [vmem:[#allocation2 + $0x12c] sm:$0x1]
  %v1215 = vsel %vm1065, 0, %v1214
  %1216 = vst [vmem:[#allocation2 + $0x12c] sm:$0x1] %v1215
  %1217 = vst [vmem:[#allocation2 + $0x130] sm:$0xf] 0
  %v1218 = vld [vmem:[#allocation2 + $0x134] sm:$0x1]
  %v1219 = vsel %vm1065, 0, %v1218
  %1220 = vst [vmem:[#allocation2 + $0x134] sm:$0x1] %v1219
  %1221 = vst [vmem:[#allocation2 + $0x138] sm:$0xf] 0
  %v1222 = vld [vmem:[#allocation2 + $0x13c] sm:$0x1]
  %v1223 = vsel %vm1065, 0, %v1222
  %1224 = vst [vmem:[#allocation2 + $0x13c] sm:$0x1] %v1223
  %1225 = vst [vmem:[#allocation2 + $0x140] sm:$0xf] 0
  %v1226 = vld [vmem:[#allocation2 + $0x144] sm:$0x1]
  %v1227 = vsel %vm1065, 0, %v1226
  %1228 = vst [vmem:[#allocation2 + $0x144] sm:$0x1] %v1227
  %1229 = vst [vmem:[#allocation2 + $0x148] sm:$0xf] 0
  %v1230 = vld [vmem:[#allocation2 + $0x14c] sm:$0x1]
  %v1231 = vsel %vm1065, 0, %v1230
  %1232 = vst [vmem:[#allocation2 + $0x14c] sm:$0x1] %v1231
  %1233 = vst [vmem:[#allocation2 + $0x150] sm:$0xf] 0
  %v1234 = vld [vmem:[#allocation2 + $0x154] sm:$0x1]
  %v1235 = vsel %vm1065, 0, %v1234
  %1236 = vst [vmem:[#allocation2 + $0x154] sm:$0x1] %v1235
  %1237 = vst [vmem:[#allocation2 + $0x158] sm:$0xf] 0
  %v1238 = vld [vmem:[#allocation2 + $0x15c] sm:$0x1]
  %v1239 = vsel %vm1065, 0, %v1238
  %1240 = vst [vmem:[#allocation2 + $0x15c] sm:$0x1] %v1239
  %1241 = vst [vmem:[#allocation2 + $0x160] sm:$0xf] 0
  %v1242 = vld [vmem:[#allocation2 + $0x164] sm:$0x1]
  %v1243 = vsel %vm1065, 0, %v1242
  %1244 = vst [vmem:[#allocation2 + $0x164] sm:$0x1] %v1243
  %1245 = vst [vmem:[#allocation2 + $0x168] sm:$0xf] 0
  %v1246 = vld [vmem:[#allocation2 + $0x16c] sm:$0x1]
  %v1247 = vsel %vm1065, 0, %v1246
  %1248 = vst [vmem:[#allocation2 + $0x16c] sm:$0x1] %v1247
  %1249 = vst [vmem:[#allocation2 + $0x170] sm:$0xf] 0
  %v1250 = vld [vmem:[#allocation2 + $0x174] sm:$0x1]
  %v1251 = vsel %vm1065, 0, %v1250
  %1252 = vst [vmem:[#allocation2 + $0x174] sm:$0x1] %v1251
  %1253 = vst [vmem:[#allocation2 + $0x178] sm:$0xf] 0
  %v1254 = vld [vmem:[#allocation2 + $0x17c] sm:$0x1]
  %v1255 = vsel %vm1065, 0, %v1254
  %1256 = vst [vmem:[#allocation2 + $0x17c] sm:$0x1] %v1255
  %1257 = vst [vmem:[#allocation2 + $0x180] sm:$0xf] 0
  %v1258 = vld [vmem:[#allocation2 + $0x184] sm:$0x1]
  %v1259 = vsel %vm1065, 0, %v1258
  %1260 = vst [vmem:[#allocation2 + $0x184] sm:$0x1] %v1259
  %1261 = vst [vmem:[#allocation2 + $0x188] sm:$0xf] 0
  %v1262 = vld [vmem:[#allocation2 + $0x18c] sm:$0x1]
  %v1263 = vsel %vm1065, 0, %v1262
  %1264 = vst [vmem:[#allocation2 + $0x18c] sm:$0x1] %v1263
  %1265 = vst [vmem:[#allocation2 + $0x190] sm:$0xf] 0
  %v1266 = vld [vmem:[#allocation2 + $0x194] sm:$0x1]
  %v1267 = vsel %vm1065, 0, %v1266
  %1268 = vst [vmem:[#allocation2 + $0x194] sm:$0x1] %v1267
  %1269 = vst [vmem:[#allocation2 + $0x198] sm:$0xf] 0
  %v1270 = vld [vmem:[#allocation2 + $0x19c] sm:$0x1]
  %v1271 = vsel %vm1065, 0, %v1270
  %1272 = vst [vmem:[#allocation2 + $0x19c] sm:$0x1] %v1271
  %1273 = vst [vmem:[#allocation2 + $0x1a0] sm:$0xf] 0
  %v1274 = vld [vmem:[#allocation2 + $0x1a4] sm:$0x1]
  %v1275 = vsel %vm1065, 0, %v1274
  %1276 = vst [vmem:[#allocation2 + $0x1a4] sm:$0x1] %v1275
  %1277 = vst [vmem:[#allocation2 + $0x1a8] sm:$0xf] 0
  %v1278 = vld [vmem:[#allocation2 + $0x1ac] sm:$0x1]
  %v1279 = vsel %vm1065, 0, %v1278
  %1280 = vst [vmem:[#allocation2 + $0x1ac] sm:$0x1] %v1279
  %1281 = vst [vmem:[#allocation2 + $0x1b0] sm:$0xf] 0
  %v1282 = vld [vmem:[#allocation2 + $0x1b4] sm:$0x1]
  %v1283 = vsel %vm1065, 0, %v1282
  %1284 = vst [vmem:[#allocation2 + $0x1b4] sm:$0x1] %v1283
  %1285 = vst [vmem:[#allocation2 + $0x1b8] sm:$0xf] 0
  %v1286 = vld [vmem:[#allocation2 + $0x1bc] sm:$0x1]
  %v1287 = vsel %vm1065, 0, %v1286
  %1288 = vst [vmem:[#allocation2 + $0x1bc] sm:$0x1] %v1287
  %1289 = vst [vmem:[#allocation2 + $0x1c0] sm:$0xf] 0
  %v1290 = vld [vmem:[#allocation2 + $0x1c4] sm:$0x1]
  %v1291 = vsel %vm1065, 0, %v1290
  %1292 = vst [vmem:[#allocation2 + $0x1c4] sm:$0x1] %v1291
  %1293 = vst [vmem:[#allocation2 + $0x1c8] sm:$0xf] 0
  %v1294 = vld [vmem:[#allocation2 + $0x1cc] sm:$0x1]
  %v1295 = vsel %vm1065, 0, %v1294
  %1296 = vst [vmem:[#allocation2 + $0x1cc] sm:$0x1] %v1295
  %1297 = vst [vmem:[#allocation2 + $0x1d0] sm:$0xf] 0
  %v1298 = vld [vmem:[#allocation2 + $0x1d4] sm:$0x1]
  %v1299 = vsel %vm1065, 0, %v1298
  %1300 = vst [vmem:[#allocation2 + $0x1d4] sm:$0x1] %v1299
  %1301 = vst [vmem:[#allocation2 + $0x1d8] sm:$0xf] 0
  %v1302 = vld [vmem:[#allocation2 + $0x1dc] sm:$0x1]
  %v1303 = vsel %vm1065, 0, %v1302
  %1304 = vst [vmem:[#allocation2 + $0x1dc] sm:$0x1] %v1303
  %1305 = vst [vmem:[#allocation2 + $0x1e0] sm:$0xf] 0
  %v1306 = vld [vmem:[#allocation2 + $0x1e4] sm:$0x1]
  %v1307 = vsel %vm1065, 0, %v1306
  %1308 = vst [vmem:[#allocation2 + $0x1e4] sm:$0x1] %v1307
  %1309 = vst [vmem:[#allocation2 + $0x1e8] sm:$0xf] 0
  %v1310 = vld [vmem:[#allocation2 + $0x1ec] sm:$0x1]
  %v1311 = vsel %vm1065, 0, %v1310
  %1312 = vst [vmem:[#allocation2 + $0x1ec] sm:$0x1] %v1311
  %1313 = vst [vmem:[#allocation2 + $0x1f0] sm:$0xf] 0
  %v1314 = vld [vmem:[#allocation2 + $0x1f4] sm:$0x1]
  %v1315 = vsel %vm1065, 0, %v1314
  %1316 = vst [vmem:[#allocation2 + $0x1f4] sm:$0x1] %v1315
  %1317 = vst [vmem:[#allocation2 + $0x1f8] sm:$0xf] 0
  %v1318 = vld [vmem:[#allocation2 + $0x1fc] sm:$0x1]
  %v1319 = vsel %vm1065, 0, %v1318
  %1320 = vst [vmem:[#allocation2 + $0x1fc] sm:$0x1] %v1319
  %1321 = vst [vmem:[#allocation2 + $0x200] sm:$0xf] 0
  %v1322 = vld [vmem:[#allocation2 + $0x204] sm:$0x1]
  %v1323 = vsel %vm1065, 0, %v1322
  %1324 = vst [vmem:[#allocation2 + $0x204] sm:$0x1] %v1323
  %1325 = vst [vmem:[#allocation2 + $0x208] sm:$0xf] 0
  %v1326 = vld [vmem:[#allocation2 + $0x20c] sm:$0x1]
  %v1327 = vsel %vm1065, 0, %v1326
  %1328 = vst [vmem:[#allocation2 + $0x20c] sm:$0x1] %v1327
  %1329 = vst [vmem:[#allocation2 + $0x210] sm:$0xf] 0
  %v1330 = vld [vmem:[#allocation2 + $0x214] sm:$0x1]
  %v1331 = vsel %vm1065, 0, %v1330
  %1332 = vst [vmem:[#allocation2 + $0x214] sm:$0x1] %v1331
  %1333 = vst [vmem:[#allocation2 + $0x218] sm:$0xf] 0
  %v1334 = vld [vmem:[#allocation2 + $0x21c] sm:$0x1]
  %v1335 = vsel %vm1065, 0, %v1334
  %1336 = vst [vmem:[#allocation2 + $0x21c] sm:$0x1] %v1335
  %1337 = vst [vmem:[#allocation2 + $0x220] sm:$0xf] 0
  %v1338 = vld [vmem:[#allocation2 + $0x224] sm:$0x1]
  %v1339 = vsel %vm1065, 0, %v1338
  %1340 = vst [vmem:[#allocation2 + $0x224] sm:$0x1] %v1339
  %1341 = vst [vmem:[#allocation2 + $0x228] sm:$0xf] 0
  %v1342 = vld [vmem:[#allocation2 + $0x22c] sm:$0x1]
  %v1343 = vsel %vm1065, 0, %v1342
  %1344 = vst [vmem:[#allocation2 + $0x22c] sm:$0x1] %v1343
  %1345 = vst [vmem:[#allocation2 + $0x230] sm:$0xf] 0
  %v1346 = vld [vmem:[#allocation2 + $0x234] sm:$0x1]
  %v1347 = vsel %vm1065, 0, %v1346
  %1348 = vst [vmem:[#allocation2 + $0x234] sm:$0x1] %v1347
  %1349 = vst [vmem:[#allocation2 + $0x238] sm:$0xf] 0
  %v1350 = vld [vmem:[#allocation2 + $0x23c] sm:$0x1]
  %v1351 = vsel %vm1065, 0, %v1350
  %1352 = vst [vmem:[#allocation2 + $0x23c] sm:$0x1] %v1351
  %v1354 = vshrl.u32 %v966, 16
  %v1356 = vrot.slane %v1354, 7
  %v1357 = vshll.u32 %v966, 16
  %v1359 = vor.u32 %v1356, %v1357
  %v1360 = vrot.slane %v1356, 4
  %v1362 = vshrl.u32 %v967, 16
  %v1364 = vrot.slane %v1362, 7
  %v1365 = vshll.u32 %v967, 16
  %v1367 = vor.u32 %v1364, %v1365
  %v1368 = vrot.slane %v1364, 4
  %v1370 = vshrl.u32 %v968, 16
  %v1372 = vrot.slane %v1370, 7
  %v1373 = vshll.u32 %v968, 16
  %v1375 = vor.u32 %v1372, %v1373
  %v1376 = vrot.slane %v1372, 4
  %v1378 = vshrl.u32 %v969, 16
  %v1380 = vrot.slane %v1378, 7
  %v1381 = vshll.u32 %v969, 16
  %v1383 = vor.u32 %v1380, %v1381
  %v1384 = vrot.slane %v1380, 4
  %v1386 = vshrl.u32 %v970, 16
  %v1388 = vrot.slane %v1386, 7
  %v1389 = vshll.u32 %v970, 16
  %v1391 = vor.u32 %v1388, %v1389
  %v1392 = vrot.slane %v1388, 4
  %v1394 = vshrl.u32 %v971, 16
  %v1396 = vrot.slane %v1394, 7
  %v1397 = vshll.u32 %v971, 16
  %v1399 = vor.u32 %v1396, %v1397
  %v1400 = vrot.slane %v1396, 4
  %v1402 = vshrl.u32 %v972, 16
  %v1404 = vrot.slane %v1402, 7
  %v1405 = vshll.u32 %v972, 16
  %v1407 = vor.u32 %v1404, %v1405
  %v1408 = vrot.slane %v1404, 4
  %v1410 = vshrl.u32 %v973, 16
  %v1412 = vrot.slane %v1410, 7
  %v1413 = vshll.u32 %v973, 16
  %v1415 = vor.u32 %v1412, %v1413
  %v1416 = vrot.slane %v1412, 4
  %v1418 = vshrl.u32 %v998, 16
  %v1420 = vrot.slane %v1418, 7
  %v1421 = vshll.u32 %v998, 16
  %v1423 = vor.u32 %v1420, %v1421
  %v1424 = vrot.slane %v1420, 4
  %v1426 = vshrl.u32 %v999, 16
  %v1428 = vrot.slane %v1426, 7
  %v1429 = vshll.u32 %v999, 16
  %v1431 = vor.u32 %v1428, %v1429
  %v1432 = vrot.slane %v1428, 4
  %v1434 = vshrl.u32 %v1000, 16
  %v1436 = vrot.slane %v1434, 7
  %v1437 = vshll.u32 %v1000, 16
  %v1439 = vor.u32 %v1436, %v1437
  %v1440 = vrot.slane %v1436, 4
  %v1442 = vshrl.u32 %v1001, 16
  %v1444 = vrot.slane %v1442, 7
  %v1445 = vshll.u32 %v1001, 16
  %v1447 = vor.u32 %v1444, %v1445
  %v1448 = vrot.slane %v1444, 4
  %v1450 = vshrl.u32 %v1002, 16
  %v1452 = vrot.slane %v1450, 7
  %v1453 = vshll.u32 %v1002, 16
  %v1455 = vor.u32 %v1452, %v1453
  %v1456 = vrot.slane %v1452, 4
  %v1458 = vshrl.u32 %v1003, 16
  %v1460 = vrot.slane %v1458, 7
  %v1461 = vshll.u32 %v1003, 16
  %v1463 = vor.u32 %v1460, %v1461
  %v1464 = vrot.slane %v1460, 4
  %v1466 = vshrl.u32 %v1004, 16
  %v1468 = vrot.slane %v1466, 7
  %v1469 = vshll.u32 %v1004, 16
  %v1471 = vor.u32 %v1468, %v1469
  %v1472 = vrot.slane %v1468, 4
  %v1474 = vshrl.u32 %v1005, 16
  %v1476 = vrot.slane %v1474, 7
  %v1477 = vshll.u32 %v1005, 16
  %v1479 = vor.u32 %v1476, %v1477
  %v1480 = vrot.slane %v1476, 4
  %s1513 = scalar_lea.vmem [#allocation2], 8
  %vm1514 = vcmask 1043456
  %vm1515 = vsmask.f32 7938
  %vm1516 = vmand %vm1514, %vm1515
  %v1517 = vld [vmem:[%s1513] sm:$0xf]
  %v1518 = vsel %vm1516, %v1359, %v1517
  %1519 = vst [vmem:[%s1513] sm:$0xf] %v1518
  %v1520 = vld [vmem:[%s1513 + $0x4] sm:$0x1]
  %v1521 = vsel %vm1065, %v1360, %v1520
  %1522 = vst [vmem:[%s1513 + $0x4] sm:$0x1] %v1521
  %v1523 = vld [vmem:[%s1513 + $0x8] sm:$0xf]
  %v1524 = vsel %vm1516, %v1367, %v1523
  %1525 = vst [vmem:[%s1513 + $0x8] sm:$0xf] %v1524
  %v1526 = vld [vmem:[%s1513 + $0xc] sm:$0x1]
  %v1527 = vsel %vm1065, %v1368, %v1526
  %1528 = vst [vmem:[%s1513 + $0xc] sm:$0x1] %v1527
  %v1529 = vld [vmem:[%s1513 + $0x10] sm:$0xf]
  %v1530 = vsel %vm1516, %v1375, %v1529
  %1531 = vst [vmem:[%s1513 + $0x10] sm:$0xf] %v1530
  %v1532 = vld [vmem:[%s1513 + $0x14] sm:$0x1]
  %v1533 = vsel %vm1065, %v1376, %v1532
  %1534 = vst [vmem:[%s1513 + $0x14] sm:$0x1] %v1533
  %v1535 = vld [vmem:[%s1513 + $0x18] sm:$0xf]
  %v1536 = vsel %vm1516, %v1383, %v1535
  %1537 = vst [vmem:[%s1513 + $0x18] sm:$0xf] %v1536
  %v1538 = vld [vmem:[%s1513 + $0x1c] sm:$0x1]
  %v1539 = vsel %vm1065, %v1384, %v1538
  %1540 = vst [vmem:[%s1513 + $0x1c] sm:$0x1] %v1539
  %v1541 = vld [vmem:[%s1513 + $0x20] sm:$0xf]
  %v1542 = vsel %vm1516, %v1391, %v1541
  %1543 = vst [vmem:[%s1513 + $0x20] sm:$0xf] %v1542
  %v1544 = vld [vmem:[%s1513 + $0x24] sm:$0x1]
  %v1545 = vsel %vm1065, %v1392, %v1544
  %1546 = vst [vmem:[%s1513 + $0x24] sm:$0x1] %v1545
  %v1547 = vld [vmem:[%s1513 + $0x28] sm:$0xf]
  %v1548 = vsel %vm1516, %v1399, %v1547
  %1549 = vst [vmem:[%s1513 + $0x28] sm:$0xf] %v1548
  %v1550 = vld [vmem:[%s1513 + $0x2c] sm:$0x1]
  %v1551 = vsel %vm1065, %v1400, %v1550
  %1552 = vst [vmem:[%s1513 + $0x2c] sm:$0x1] %v1551
  %v1553 = vld [vmem:[%s1513 + $0x30] sm:$0xf]
  %v1554 = vsel %vm1516, %v1407, %v1553
  %1555 = vst [vmem:[%s1513 + $0x30] sm:$0xf] %v1554
  %v1556 = vld [vmem:[%s1513 + $0x34] sm:$0x1]
  %v1557 = vsel %vm1065, %v1408, %v1556
  %1558 = vst [vmem:[%s1513 + $0x34] sm:$0x1] %v1557
  %v1559 = vld [vmem:[%s1513 + $0x38] sm:$0xf]
  %v1560 = vsel %vm1516, %v1415, %v1559
  %1561 = vst [vmem:[%s1513 + $0x38] sm:$0xf] %v1560
  %v1562 = vld [vmem:[%s1513 + $0x3c] sm:$0x1]
  %v1563 = vsel %vm1065, %v1416, %v1562
  %1564 = vst [vmem:[%s1513 + $0x3c] sm:$0x1] %v1563
  %v1565 = vld [vmem:[%s1513 + $0x120] sm:$0xf]
  %v1566 = vsel %vm1516, %v1423, %v1565
  %1567 = vst [vmem:[%s1513 + $0x120] sm:$0xf] %v1566
  %v1568 = vld [vmem:[%s1513 + $0x124] sm:$0x1]
  %v1569 = vsel %vm1065, %v1424, %v1568
  %1570 = vst [vmem:[%s1513 + $0x124] sm:$0x1] %v1569
  %v1571 = vld [vmem:[%s1513 + $0x128] sm:$0xf]
  %v1572 = vsel %vm1516, %v1431, %v1571
  %1573 = vst [vmem:[%s1513 + $0x128] sm:$0xf] %v1572
  %v1574 = vld [vmem:[%s1513 + $0x12c] sm:$0x1]
  %v1575 = vsel %vm1065, %v1432, %v1574
  %1576 = vst [vmem:[%s1513 + $0x12c] sm:$0x1] %v1575
  %v1577 = vld [vmem:[%s1513 + $0x130] sm:$0xf]
  %v1578 = vsel %vm1516, %v1439, %v1577
  %1579 = vst [vmem:[%s1513 + $0x130] sm:$0xf] %v1578
  %v1580 = vld [vmem:[%s1513 + $0x134] sm:$0x1]
  %v1581 = vsel %vm1065, %v1440, %v1580
  %1582 = vst [vmem:[%s1513 + $0x134] sm:$0x1] %v1581
  %v1583 = vld [vmem:[%s1513 + $0x138] sm:$0xf]
  %v1584 = vsel %vm1516, %v1447, %v1583
  %1585 = vst [vmem:[%s1513 + $0x138] sm:$0xf] %v1584
  %v1586 = vld [vmem:[%s1513 + $0x13c] sm:$0x1]
  %v1587 = vsel %vm1065, %v1448, %v1586
  %1588 = vst [vmem:[%s1513 + $0x13c] sm:$0x1] %v1587
  %v1589 = vld [vmem:[%s1513 + $0x140] sm:$0xf]
  %v1590 = vsel %vm1516, %v1455, %v1589
  %1591 = vst [vmem:[%s1513 + $0x140] sm:$0xf] %v1590
  %v1592 = vld [vmem:[%s1513 + $0x144] sm:$0x1]
  %v1593 = vsel %vm1065, %v1456, %v1592
  %1594 = vst [vmem:[%s1513 + $0x144] sm:$0x1] %v1593
  %v1595 = vld [vmem:[%s1513 + $0x148] sm:$0xf]
  %v1596 = vsel %vm1516, %v1463, %v1595
  %1597 = vst [vmem:[%s1513 + $0x148] sm:$0xf] %v1596
  %v1598 = vld [vmem:[%s1513 + $0x14c] sm:$0x1]
  %v1599 = vsel %vm1065, %v1464, %v1598
  %1600 = vst [vmem:[%s1513 + $0x14c] sm:$0x1] %v1599
  %v1601 = vld [vmem:[%s1513 + $0x150] sm:$0xf]
  %v1602 = vsel %vm1516, %v1471, %v1601
  %1603 = vst [vmem:[%s1513 + $0x150] sm:$0xf] %v1602
  %v1604 = vld [vmem:[%s1513 + $0x154] sm:$0x1]
  %v1605 = vsel %vm1065, %v1472, %v1604
  %1606 = vst [vmem:[%s1513 + $0x154] sm:$0x1] %v1605
  %v1607 = vld [vmem:[%s1513 + $0x158] sm:$0xf]
  %v1608 = vsel %vm1516, %v1479, %v1607
  %1609 = vst [vmem:[%s1513 + $0x158] sm:$0xf] %v1608
  %v1610 = vld [vmem:[%s1513 + $0x15c] sm:$0x1]
  %v1611 = vsel %vm1065, %v1480, %v1610
  %1612 = vst [vmem:[%s1513 + $0x15c] sm:$0x1] %v1611
  %s1613 = scalar_lea.vmem [#allocation2], 80
  %1614 = vst [vmem:[%s1613] sm:$0xf] %v974
  %1615 = vst [vmem:[%s1613 + $0x8] sm:$0xf] %v975
  %1616 = vst [vmem:[%s1613 + $0x10] sm:$0xf] %v976
  %1617 = vst [vmem:[%s1613 + $0x18] sm:$0xf] %v977
  %1618 = vst [vmem:[%s1613 + $0x20] sm:$0xf] %v978
  %1619 = vst [vmem:[%s1613 + $0x28] sm:$0xf] %v979
  %1620 = vst [vmem:[%s1613 + $0x30] sm:$0xf] %v980
  %1621 = vst [vmem:[%s1613 + $0x38] sm:$0xf] %v981
  %1622 = vst [vmem:[%s1613 + $0x120] sm:$0xf] %v1006
  %1623 = vst [vmem:[%s1613 + $0x128] sm:$0xf] %v1007
  %1624 = vst [vmem:[%s1613 + $0x130] sm:$0xf] %v1008
  %1625 = vst [vmem:[%s1613 + $0x138] sm:$0xf] %v1009
  %1626 = vst [vmem:[%s1613 + $0x140] sm:$0xf] %v1010
  %1627 = vst [vmem:[%s1613 + $0x148] sm:$0xf] %v1011
  %1628 = vst [vmem:[%s1613 + $0x150] sm:$0xf] %v1012
  %1629 = vst [vmem:[%s1613 + $0x158] sm:$0xf] %v1013
  %v1631 = vshrl.u32 %v982, 16
  %v1633 = vrot.slane %v1631, 7
  %v1634 = vshll.u32 %v982, 16
  %v1636 = vor.u32 %v1633, %v1634
  %v1637 = vrot.slane %v1633, 4
  %v1639 = vshrl.u32 %v983, 16
  %v1641 = vrot.slane %v1639, 7
  %v1642 = vshll.u32 %v983, 16
  %v1644 = vor.u32 %v1641, %v1642
  %v1645 = vrot.slane %v1641, 4
  %v1647 = vshrl.u32 %v984, 16
  %v1649 = vrot.slane %v1647, 7
  %v1650 = vshll.u32 %v984, 16
  %v1652 = vor.u32 %v1649, %v1650
  %v1653 = vrot.slane %v1649, 4
  %v1655 = vshrl.u32 %v985, 16
  %v1657 = vrot.slane %v1655, 7
  %v1658 = vshll.u32 %v985, 16
  %v1660 = vor.u32 %v1657, %v1658
  %v1661 = vrot.slane %v1657, 4
  %v1663 = vshrl.u32 %v986, 16
  %v1665 = vrot.slane %v1663, 7
  %v1666 = vshll.u32 %v986, 16
  %v1668 = vor.u32 %v1665, %v1666
  %v1669 = vrot.slane %v1665, 4
  %v1671 = vshrl.u32 %v987, 16
  %v1673 = vrot.slane %v1671, 7
  %v1674 = vshll.u32 %v987, 16
  %v1676 = vor.u32 %v1673, %v1674
  %v1677 = vrot.slane %v1673, 4
  %v1679 = vshrl.u32 %v988, 16
  %v1681 = vrot.slane %v1679, 7
  %v1682 = vshll.u32 %v988, 16
  %v1684 = vor.u32 %v1681, %v1682
  %v1685 = vrot.slane %v1681, 4
  %v1687 = vshrl.u32 %v989, 16
  %v1689 = vrot.slane %v1687, 7
  %v1690 = vshll.u32 %v989, 16
  %v1692 = vor.u32 %v1689, %v1690
  %v1693 = vrot.slane %v1689, 4
  %v1695 = vshrl.u32 %v1014, 16
  %v1697 = vrot.slane %v1695, 7
  %v1698 = vshll.u32 %v1014, 16
  %v1700 = vor.u32 %v1697, %v1698
  %v1701 = vrot.slane %v1697, 4
  %v1703 = vshrl.u32 %v1015, 16
  %v1705 = vrot.slane %v1703, 7
  %v1706 = vshll.u32 %v1015, 16
  %v1708 = vor.u32 %v1705, %v1706
  %v1709 = vrot.slane %v1705, 4
  %v1711 = vshrl.u32 %v1016, 16
  %v1713 = vrot.slane %v1711, 7
  %v1714 = vshll.u32 %v1016, 16
  %v1716 = vor.u32 %v1713, %v1714
  %v1717 = vrot.slane %v1713, 4
  %v1719 = vshrl.u32 %v1017, 16
  %v1721 = vrot.slane %v1719, 7
  %v1722 = vshll.u32 %v1017, 16
  %v1724 = vor.u32 %v1721, %v1722
  %v1725 = vrot.slane %v1721, 4
  %v1727 = vshrl.u32 %v1018, 16
  %v1729 = vrot.slane %v1727, 7
  %v1730 = vshll.u32 %v1018, 16
  %v1732 = vor.u32 %v1729, %v1730
  %v1733 = vrot.slane %v1729, 4
  %v1735 = vshrl.u32 %v1019, 16
  %v1737 = vrot.slane %v1735, 7
  %v1738 = vshll.u32 %v1019, 16
  %v1740 = vor.u32 %v1737, %v1738
  %v1741 = vrot.slane %v1737, 4
  %v1743 = vshrl.u32 %v1020, 16
  %v1745 = vrot.slane %v1743, 7
  %v1746 = vshll.u32 %v1020, 16
  %v1748 = vor.u32 %v1745, %v1746
  %v1749 = vrot.slane %v1745, 4
  %v1751 = vshrl.u32 %v1021, 16
  %v1753 = vrot.slane %v1751, 7
  %v1754 = vshll.u32 %v1021, 16
  %v1756 = vor.u32 %v1753, %v1754
  %v1757 = vrot.slane %v1753, 4
  %s1790 = scalar_lea.vmem [#allocation2], 144
  %v1791 = vld [vmem:[%s1790] sm:$0xf]
  %v1792 = vsel %vm1516, %v1636, %v1791
  %1793 = vst [vmem:[%s1790] sm:$0xf] %v1792
  %v1794 = vld [vmem:[%s1790 + $0x4] sm:$0x1]
  %v1795 = vsel %vm1065, %v1637, %v1794
  %1796 = vst [vmem:[%s1790 + $0x4] sm:$0x1] %v1795
  %v1797 = vld [vmem:[%s1790 + $0x8] sm:$0xf]
  %v1798 = vsel %vm1516, %v1644, %v1797
  %1799 = vst [vmem:[%s1790 + $0x8] sm:$0xf] %v1798
  %v1800 = vld [vmem:[%s1790 + $0xc] sm:$0x1]
  %v1801 = vsel %vm1065, %v1645, %v1800
  %1802 = vst [vmem:[%s1790 + $0xc] sm:$0x1] %v1801
  %v1803 = vld [vmem:[%s1790 + $0x10] sm:$0xf]
  %v1804 = vsel %vm1516, %v1652, %v1803
  %1805 = vst [vmem:[%s1790 + $0x10] sm:$0xf] %v1804
  %v1806 = vld [vmem:[%s1790 + $0x14] sm:$0x1]
  %v1807 = vsel %vm1065, %v1653, %v1806
  %1808 = vst [vmem:[%s1790 + $0x14] sm:$0x1] %v1807
  %v1809 = vld [vmem:[%s1790 + $0x18] sm:$0xf]
  %v1810 = vsel %vm1516, %v1660, %v1809
  %1811 = vst [vmem:[%s1790 + $0x18] sm:$0xf] %v1810
  %v1812 = vld [vmem:[%s1790 + $0x1c] sm:$0x1]
  %v1813 = vsel %vm1065, %v1661, %v1812
  %1814 = vst [vmem:[%s1790 + $0x1c] sm:$0x1] %v1813
  %v1815 = vld [vmem:[%s1790 + $0x20] sm:$0xf]
  %v1816 = vsel %vm1516, %v1668, %v1815
  %1817 = vst [vmem:[%s1790 + $0x20] sm:$0xf] %v1816
  %v1818 = vld [vmem:[%s1790 + $0x24] sm:$0x1]
  %v1819 = vsel %vm1065, %v1669, %v1818
  %1820 = vst [vmem:[%s1790 + $0x24] sm:$0x1] %v1819
  %v1821 = vld [vmem:[%s1790 + $0x28] sm:$0xf]
  %v1822 = vsel %vm1516, %v1676, %v1821
  %1823 = vst [vmem:[%s1790 + $0x28] sm:$0xf] %v1822
  %v1824 = vld [vmem:[%s1790 + $0x2c] sm:$0x1]
  %v1825 = vsel %vm1065, %v1677, %v1824
  %1826 = vst [vmem:[%s1790 + $0x2c] sm:$0x1] %v1825
  %v1827 = vld [vmem:[%s1790 + $0x30] sm:$0xf]
  %v1828 = vsel %vm1516, %v1684, %v1827
  %1829 = vst [vmem:[%s1790 + $0x30] sm:$0xf] %v1828
  %v1830 = vld [vmem:[%s1790 + $0x34] sm:$0x1]
  %v1831 = vsel %vm1065, %v1685, %v1830
  %1832 = vst [vmem:[%s1790 + $0x34] sm:$0x1] %v1831
  %v1833 = vld [vmem:[%s1790 + $0x38] sm:$0xf]
  %v1834 = vsel %vm1516, %v1692, %v1833
  %1835 = vst [vmem:[%s1790 + $0x38] sm:$0xf] %v1834
  %v1836 = vld [vmem:[%s1790 + $0x3c] sm:$0x1]
  %v1837 = vsel %vm1065, %v1693, %v1836
  %1838 = vst [vmem:[%s1790 + $0x3c] sm:$0x1] %v1837
  %v1839 = vld [vmem:[%s1790 + $0x120] sm:$0xf]
  %v1840 = vsel %vm1516, %v1700, %v1839
  %1841 = vst [vmem:[%s1790 + $0x120] sm:$0xf] %v1840
  %v1842 = vld [vmem:[%s1790 + $0x124] sm:$0x1]
  %v1843 = vsel %vm1065, %v1701, %v1842
  %1844 = vst [vmem:[%s1790 + $0x124] sm:$0x1] %v1843
  %v1845 = vld [vmem:[%s1790 + $0x128] sm:$0xf]
  %v1846 = vsel %vm1516, %v1708, %v1845
  %1847 = vst [vmem:[%s1790 + $0x128] sm:$0xf] %v1846
  %v1848 = vld [vmem:[%s1790 + $0x12c] sm:$0x1]
  %v1849 = vsel %vm1065, %v1709, %v1848
  %1850 = vst [vmem:[%s1790 + $0x12c] sm:$0x1] %v1849
  %v1851 = vld [vmem:[%s1790 + $0x130] sm:$0xf]
  %v1852 = vsel %vm1516, %v1716, %v1851
  %1853 = vst [vmem:[%s1790 + $0x130] sm:$0xf] %v1852
  %v1854 = vld [vmem:[%s1790 + $0x134] sm:$0x1]
  %v1855 = vsel %vm1065, %v1717, %v1854
  %1856 = vst [vmem:[%s1790 + $0x134] sm:$0x1] %v1855
  %v1857 = vld [vmem:[%s1790 + $0x138] sm:$0xf]
  %v1858 = vsel %vm1516, %v1724, %v1857
  %1859 = vst [vmem:[%s1790 + $0x138] sm:$0xf] %v1858
  %v1860 = vld [vmem:[%s1790 + $0x13c] sm:$0x1]
  %v1861 = vsel %vm1065, %v1725, %v1860
  %1862 = vst [vmem:[%s1790 + $0x13c] sm:$0x1] %v1861
  %v1863 = vld [vmem:[%s1790 + $0x140] sm:$0xf]
  %v1864 = vsel %vm1516, %v1732, %v1863
  %1865 = vst [vmem:[%s1790 + $0x140] sm:$0xf] %v1864
  %v1866 = vld [vmem:[%s1790 + $0x144] sm:$0x1]
  %v1867 = vsel %vm1065, %v1733, %v1866
  %1868 = vst [vmem:[%s1790 + $0x144] sm:$0x1] %v1867
  %v1869 = vld [vmem:[%s1790 + $0x148] sm:$0xf]
  %v1870 = vsel %vm1516, %v1740, %v1869
  %1871 = vst [vmem:[%s1790 + $0x148] sm:$0xf] %v1870
  %v1872 = vld [vmem:[%s1790 + $0x14c] sm:$0x1]
  %v1873 = vsel %vm1065, %v1741, %v1872
  %1874 = vst [vmem:[%s1790 + $0x14c] sm:$0x1] %v1873
  %v1875 = vld [vmem:[%s1790 + $0x150] sm:$0xf]
  %v1876 = vsel %vm1516, %v1748, %v1875
  %1877 = vst [vmem:[%s1790 + $0x150] sm:$0xf] %v1876
  %v1878 = vld [vmem:[%s1790 + $0x154] sm:$0x1]
  %v1879 = vsel %vm1065, %v1749, %v1878
  %1880 = vst [vmem:[%s1790 + $0x154] sm:$0x1] %v1879
  %v1881 = vld [vmem:[%s1790 + $0x158] sm:$0xf]
  %v1882 = vsel %vm1516, %v1756, %v1881
  %1883 = vst [vmem:[%s1790 + $0x158] sm:$0xf] %v1882
  %v1884 = vld [vmem:[%s1790 + $0x15c] sm:$0x1]
  %v1885 = vsel %vm1065, %v1757, %v1884
  %1886 = vst [vmem:[%s1790 + $0x15c] sm:$0x1] %v1885
  %s1887 = scalar_lea.vmem [#allocation2], 216
  %1888 = vst [vmem:[%s1887] sm:$0xf] %v990
  %1889 = vst [vmem:[%s1887 + $0x8] sm:$0xf] %v991
  %1890 = vst [vmem:[%s1887 + $0x10] sm:$0xf] %v992
  %1891 = vst [vmem:[%s1887 + $0x18] sm:$0xf] %v993
  %1892 = vst [vmem:[%s1887 + $0x20] sm:$0xf] %v994
  %1893 = vst [vmem:[%s1887 + $0x28] sm:$0xf] %v995
  %1894 = vst [vmem:[%s1887 + $0x30] sm:$0xf] %v996
  %1895 = vst [vmem:[%s1887 + $0x38] sm:$0xf] %v997
  %1896 = vst [vmem:[%s1887 + $0x120] sm:$0xf] %v1022
  %1897 = vst [vmem:[%s1887 + $0x128] sm:$0xf] %v1023
  %1898 = vst [vmem:[%s1887 + $0x130] sm:$0xf] %v1024
  %1899 = vst [vmem:[%s1887 + $0x138] sm:$0xf] %v1025
  %1900 = vst [vmem:[%s1887 + $0x140] sm:$0xf] %v1026
  %1901 = vst [vmem:[%s1887 + $0x148] sm:$0xf] %v1027
  %1902 = vst [vmem:[%s1887 + $0x150] sm:$0xf] %v1028
  %1903 = vst [vmem:[%s1887 + $0x158] sm:$0xf] %v1029
  %v1904 = vld [vmem:[#allocation2] sm:$0xf]
  %v1905 = vld [vmem:[#allocation2 + $0x8] sm:$0xf]
  %v1906 = vld [vmem:[#allocation2 + $0x10] sm:$0xf]
  %v1907 = vld [vmem:[#allocation2 + $0x18] sm:$0xf]
  %v1908 = vld [vmem:[#allocation2 + $0x20] sm:$0xf]
  %v1909 = vld [vmem:[#allocation2 + $0x28] sm:$0xf]
  %v1910 = vld [vmem:[#allocation2 + $0x30] sm:$0xf]
  %v1911 = vld [vmem:[#allocation2 + $0x38] sm:$0xf]
  %v1912 = vld [vmem:[#allocation2 + $0x120] sm:$0xf]
  %v1913 = vld [vmem:[#allocation2 + $0x128] sm:$0xf]
  %v1914 = vld [vmem:[#allocation2 + $0x130] sm:$0xf]
  %v1915 = vld [vmem:[#allocation2 + $0x138] sm:$0xf]
  %v1916 = vld [vmem:[#allocation2 + $0x140] sm:$0xf]
  %v1917 = vld [vmem:[#allocation2 + $0x148] sm:$0xf]
  %v1918 = vld [vmem:[#allocation2 + $0x150] sm:$0xf]
  %v1919 = vld [vmem:[#allocation2 + $0x158] sm:$0xf]
  %v1920 = vld [vmem:[%s3] sm:$0xf]
  %v1921 = vld [vmem:[%s3 + $0x4] sm:$0xf]
  %v1922 = vld [vmem:[%s3 + $0x8] sm:$0xf]
  %v1923 = vld [vmem:[%s3 + $0xc] sm:$0xf]
  %v1924 = vld [vmem:[%s3 + $0x10] sm:$0xf]
  %v1925 = vld [vmem:[%s3 + $0x14] sm:$0xf]
  %v1926 = vld [vmem:[%s3 + $0x18] sm:$0xf]
  %v1927 = vld [vmem:[%s3 + $0x1c] sm:$0xf]
  %v1928 = vld [vmem:[%s3 + $0x20] sm:$0xf]
  %v1929 = vld [vmem:[%s3 + $0x24] sm:$0xf]
  %v1930 = vld [vmem:[%s3 + $0x28] sm:$0xf]
  %v1931 = vld [vmem:[%s3 + $0x2c] sm:$0xf]
  %v1932 = vld [vmem:[%s3 + $0x30] sm:$0xf]
  %v1933 = vld [vmem:[%s3 + $0x34] sm:$0xf]
  %v1934 = vld [vmem:[%s3 + $0x38] sm:$0xf]
  %v1935 = vld [vmem:[%s3 + $0x3c] sm:$0xf]
  %s1936 = scalar_lea.vmem [#allocation2], 72
  %v1937 = vld [vmem:[%s1936] sm:$0xf]
  %v1938 = vld [vmem:[%s1936 + $0x8] sm:$0xf]
  %v1939 = vld [vmem:[%s1936 + $0x10] sm:$0xf]
  %v1940 = vld [vmem:[%s1936 + $0x18] sm:$0xf]
  %v1941 = vld [vmem:[%s1936 + $0x20] sm:$0xf]
  %v1942 = vld [vmem:[%s1936 + $0x28] sm:$0xf]
  %v1943 = vld [vmem:[%s1936 + $0x30] sm:$0xf]
  %v1944 = vld [vmem:[%s1936 + $0x38] sm:$0xf]
  %v1945 = vld [vmem:[%s1936 + $0x120] sm:$0xf]
  %v1946 = vld [vmem:[%s1936 + $0x128] sm:$0xf]
  %v1947 = vld [vmem:[%s1936 + $0x130] sm:$0xf]
  %v1948 = vld [vmem:[%s1936 + $0x138] sm:$0xf]
  %v1949 = vld [vmem:[%s1936 + $0x140] sm:$0xf]
  %v1950 = vld [vmem:[%s1936 + $0x148] sm:$0xf]
  %v1951 = vld [vmem:[%s1936 + $0x150] sm:$0xf]
  %v1952 = vld [vmem:[%s1936 + $0x158] sm:$0xf]
  %s1953 = scalar_lea.vmem %s3, 64
  %v1954 = vld [vmem:[%s1953] sm:$0xf]
  %v1955 = vld [vmem:[%s1953 + $0x4] sm:$0xf]
  %v1956 = vld [vmem:[%s1953 + $0x8] sm:$0xf]
  %v1957 = vld [vmem:[%s1953 + $0xc] sm:$0xf]
  %v1958 = vld [vmem:[%s1953 + $0x10] sm:$0xf]
  %v1959 = vld [vmem:[%s1953 + $0x14] sm:$0xf]
  %v1960 = vld [vmem:[%s1953 + $0x18] sm:$0xf]
  %v1961 = vld [vmem:[%s1953 + $0x1c] sm:$0xf]
  %v1962 = vld [vmem:[%s1953 + $0x20] sm:$0xf]
  %v1963 = vld [vmem:[%s1953 + $0x24] sm:$0xf]
  %v1964 = vld [vmem:[%s1953 + $0x28] sm:$0xf]
  %v1965 = vld [vmem:[%s1953 + $0x2c] sm:$0xf]
  %v1966 = vld [vmem:[%s1953 + $0x30] sm:$0xf]
  %v1967 = vld [vmem:[%s1953 + $0x34] sm:$0xf]
  %v1968 = vld [vmem:[%s1953 + $0x38] sm:$0xf]
  %v1969 = vld [vmem:[%s1953 + $0x3c] sm:$0xf]
  %v1986 = vunpack.c.l.b16 %v1937
  %v1987 = vunpack.c.l.b16 %v1938
  %v1988 = vunpack.c.l.b16 %v1939
  %v1989 = vunpack.c.l.b16 %v1940
  %v1990 = vunpack.c.l.b16 %v1941
  %v1991 = vunpack.c.l.b16 %v1942
  %v1992 = vunpack.c.l.b16 %v1943
  %v1993 = vunpack.c.l.b16 %v1944
  %v1994 = vunpack.c.l.b16 %v1945
  %v1995 = vunpack.c.l.b16 %v1946
  %v1996 = vunpack.c.l.b16 %v1947
  %v1997 = vunpack.c.l.b16 %v1948
  %v1998 = vunpack.c.l.b16 %v1949
  %v1999 = vunpack.c.l.b16 %v1950
  %v2000 = vunpack.c.l.b16 %v1951
  %v2001 = vunpack.c.l.b16 %v1952
  %v2002 = vpack.c.b16 %v1987, %v1986
  %v2003 = vpack.c.b16 %v1989, %v1988
  %v2004 = vpack.c.b16 %v1991, %v1990
  %v2005 = vpack.c.b16 %v1993, %v1992
  %v2006 = vpack.c.b16 %v1995, %v1994
  %v2007 = vpack.c.b16 %v1997, %v1996
  %v2008 = vpack.c.b16 %v1999, %v1998
  %v2009 = vpack.c.b16 %v2001, %v2000
  %v2034 = vunpack.c.l.b16 %v1954
  %v2035 = vunpack.c.l.b16 %v1955
  %v2036 = vunpack.c.l.b16 %v1956
  %v2037 = vunpack.c.l.b16 %v1957
  %v2038 = vunpack.c.l.b16 %v1958
  %v2039 = vunpack.c.l.b16 %v1959
  %v2040 = vunpack.c.l.b16 %v1960
  %v2041 = vunpack.c.l.b16 %v1961
  %v2042 = vunpack.c.l.b16 %v1962
  %v2043 = vunpack.c.l.b16 %v1963
  %v2044 = vunpack.c.l.b16 %v1964
  %v2045 = vunpack.c.l.b16 %v1965
  %v2046 = vunpack.c.l.b16 %v1966
  %v2047 = vunpack.c.l.b16 %v1967
  %v2048 = vunpack.c.l.b16 %v1968
  %v2049 = vunpack.c.l.b16 %v1969
  %v2050 = vpack.c.b16 %v2035, %v2034
  %v2051 = vpack.c.b16 %v2037, %v2036
  %v2052 = vpack.c.b16 %v2039, %v2038
  %v2053 = vpack.c.b16 %v2041, %v2040
  %v2054 = vpack.c.b16 %v2043, %v2042
  %v2055 = vpack.c.b16 %v2045, %v2044
  %v2056 = vpack.c.b16 %v2047, %v2046
  %v2057 = vpack.c.b16 %v2049, %v2048
  %2066 = vmatprep.subr.bf16.mxu0 0
  %2067 = vmatpush1.bf16.msra.mxu0 %v2050
  %2068 = vmatprep.subr.bf16.mxu0 0
  %2069 = vmatpush1.bf16.msra.mxu0 %v2051
  %2070 = vmatprep.subr.bf16.mxu0 0
  %2071 = vmatpush1.bf16.msra.mxu0 %v2052
  %2072 = vmatprep.subr.bf16.mxu0 0
  %2073 = vmatpush1.bf16.msra.mxu0 %v2053
  %2074 = vmatprep.subr.bf16.mxu0 0
  %2075 = vmatpush1.bf16.msra.mxu0 %v2054
  %2076 = vmatprep.subr.bf16.mxu0 0
  %2077 = vmatpush1.bf16.msra.mxu0 %v2055
  %2078 = vmatprep.subr.bf16.mxu0 0
  %2079 = vmatpush1.bf16.msra.mxu0 %v2056
  %2080 = vmatprep.subr.bf16.mxu0 0
  %2081 = vmatpush1.bf16.msra.mxu0 %v2057
  %2082 = vmatprep.subr.bf16.mxu0 0
  %2083 = vmatpush1.bf16.msra.mxu0 0
  %2084 = vmatprep.subr.bf16.mxu0 0
  %2085 = vmatpush1.bf16.msra.mxu0 0
  %2086 = vmatprep.subr.bf16.mxu0 0
  %2087 = vmatpush1.bf16.msra.mxu0 0
  %2088 = vmatprep.subr.bf16.mxu0 0
  %2089 = vmatpush1.bf16.msra.mxu0 0
  %2090 = vmatprep.subr.bf16.mxu0 0
  %2091 = vmatpush1.bf16.msra.mxu0 0
  %2092 = vmatprep.subr.bf16.mxu0 0
  %2093 = vmatpush1.bf16.msra.mxu0 0
  %2094 = vmatprep.subr.bf16.mxu0 0
  %2095 = vmatpush1.bf16.msra.mxu0 0
  %2096 = vmatprep.subr.bf16.mxu0 0
  %2097 = vmatpush1.bf16.msra.mxu0 0
  %2098 = vmatprep.mubr.bf16.mxu0 0
  %2099 = vmatmul.mubr.bf16.gmra.mrb[0].mxu0 %v2002
  %v2100 = vpop.f32.mrb[0].mxu0
  %v2101 = vadd.f32 0.0, %v2100
  %v2102 = vpop.f32.mrb[0].mxu0
  %v2103 = vpop.f32.mrb[0].mxu0
  %v2104 = vadd.f32 0.0, %v2103
  %v2105 = vpop.f32.mrb[0].mxu0
  %2106 = vmatprep.mubr.bf16.mxu0 0
  %2107 = vmatmul.mubr.bf16.gmra.mrb[0].mxu0 %v2003
  %v2108 = vpop.f32.mrb[0].mxu0
  %v2109 = vadd.f32 0.0, %v2108
  %v2110 = vpop.f32.mrb[0].mxu0
  %v2111 = vpop.f32.mrb[0].mxu0
  %v2112 = vadd.f32 0.0, %v2111
  %v2113 = vpop.f32.mrb[0].mxu0
  %2114 = vmatprep.mubr.bf16.mxu0 0
  %2115 = vmatmul.mubr.bf16.gmra.mrb[0].mxu0 %v2004
  %v2116 = vpop.f32.mrb[0].mxu0
  %v2117 = vadd.f32 0.0, %v2116
  %v2118 = vpop.f32.mrb[0].mxu0
  %v2119 = vpop.f32.mrb[0].mxu0
  %v2120 = vadd.f32 0.0, %v2119
  %v2121 = vpop.f32.mrb[0].mxu0
  %2122 = vmatprep.mubr.bf16.mxu0 0
  %2123 = vmatmul.mubr.bf16.gmra.mrb[0].mxu0 %v2005
  %v2124 = vpop.f32.mrb[0].mxu0
  %v2125 = vadd.f32 0.0, %v2124
  %v2126 = vpop.f32.mrb[0].mxu0
  %v2127 = vpop.f32.mrb[0].mxu0
  %v2128 = vadd.f32 0.0, %v2127
  %v2129 = vpop.f32.mrb[0].mxu0
  %2130 = vmatprep.mubr.bf16.mxu0 0
  %2131 = vmatmul.mubr.bf16.gmra.mrb[0].mxu0 %v2006
  %v2132 = vpop.f32.mrb[0].mxu0
  %v2133 = vadd.f32 0.0, %v2132
  %v2134 = vpop.f32.mrb[0].mxu0
  %v2135 = vpop.f32.mrb[0].mxu0
  %v2136 = vadd.f32 0.0, %v2135
  %v2137 = vpop.f32.mrb[0].mxu0
  %2138 = vmatprep.mubr.bf16.mxu0 0
  %2139 = vmatmul.mubr.bf16.gmra.mrb[0].mxu0 %v2007
  %v2140 = vpop.f32.mrb[0].mxu0
  %v2141 = vadd.f32 0.0, %v2140
  %v2142 = vpop.f32.mrb[0].mxu0
  %v2143 = vpop.f32.mrb[0].mxu0
  %v2144 = vadd.f32 0.0, %v2143
  %v2145 = vpop.f32.mrb[0].mxu0
  %2146 = vmatprep.mubr.bf16.mxu0 0
  %2147 = vmatmul.mubr.bf16.gmra.mrb[0].mxu0 %v2008
  %v2148 = vpop.f32.mrb[0].mxu0
  %v2149 = vadd.f32 0.0, %v2148
  %v2150 = vpop.f32.mrb[0].mxu0
  %v2151 = vpop.f32.mrb[0].mxu0
  %v2152 = vadd.f32 0.0, %v2151
  %v2153 = vpop.f32.mrb[0].mxu0
  %2154 = vmatprep.mubr.bf16.mxu0 0
  %2155 = vmatmul.mubr.bf16.gmra.mrb[0].mxu0 %v2009
  %v2156 = vpop.f32.mrb[0].mxu0
  %v2157 = vadd.f32 0.0, %v2156
  %v2158 = vpop.f32.mrb[0].mxu0
  %v2159 = vpop.f32.mrb[0].mxu0
  %v2160 = vadd.f32 0.0, %v2159
  %v2161 = vpop.f32.mrb[0].mxu0
  %2162 = vdwg.mxu0
  %v2179 = vunpack.c.l.b16 %v1904
  %v2180 = vunpack.c.l.b16 %v1905
  %v2181 = vunpack.c.l.b16 %v1906
  %v2182 = vunpack.c.l.b16 %v1907
  %v2183 = vunpack.c.l.b16 %v1908
  %v2184 = vunpack.c.l.b16 %v1909
  %v2185 = vunpack.c.l.b16 %v1910
  %v2186 = vunpack.c.l.b16 %v1911
  %v2187 = vunpack.c.l.b16 %v1912
  %v2188 = vunpack.c.l.b16 %v1913
  %v2189 = vunpack.c.l.b16 %v1914
  %v2190 = vunpack.c.l.b16 %v1915
  %v2191 = vunpack.c.l.b16 %v1916
  %v2192 = vunpack.c.l.b16 %v1917
  %v2193 = vunpack.c.l.b16 %v1918
  %v2194 = vunpack.c.l.b16 %v1919
  %v2195 = vpack.c.b16 %v2180, %v2179
  %v2196 = vpack.c.b16 %v2182, %v2181
  %v2197 = vpack.c.b16 %v2184, %v2183
  %v2198 = vpack.c.b16 %v2186, %v2185
  %v2199 = vpack.c.b16 %v2188, %v2187
  %v2200 = vpack.c.b16 %v2190, %v2189
  %v2201 = vpack.c.b16 %v2192, %v2191
  %v2202 = vpack.c.b16 %v2194, %v2193
  %v2227 = vunpack.c.l.b16 %v1920
  %v2228 = vunpack.c.l.b16 %v1921
  %v2229 = vunpack.c.l.b16 %v1922
  %v2230 = vunpack.c.l.b16 %v1923
  %v2231 = vunpack.c.l.b16 %v1924
  %v2232 = vunpack.c.l.b16 %v1925
  %v2233 = vunpack.c.l.b16 %v1926
  %v2234 = vunpack.c.l.b16 %v1927
  %v2235 = vunpack.c.l.b16 %v1928
  %v2236 = vunpack.c.l.b16 %v1929
  %v2237 = vunpack.c.l.b16 %v1930
  %v2238 = vunpack.c.l.b16 %v1931
  %v2239 = vunpack.c.l.b16 %v1932
  %v2240 = vunpack.c.l.b16 %v1933
  %v2241 = vunpack.c.l.b16 %v1934
  %v2242 = vunpack.c.l.b16 %v1935
  %v2243 = vpack.c.b16 %v2228, %v2227
  %v2244 = vpack.c.b16 %v2230, %v2229
  %v2245 = vpack.c.b16 %v2232, %v2231
  %v2246 = vpack.c.b16 %v2234, %v2233
  %v2247 = vpack.c.b16 %v2236, %v2235
  %v2248 = vpack.c.b16 %v2238, %v2237
  %v2249 = vpack.c.b16 %v2240, %v2239
  %v2250 = vpack.c.b16 %v2242, %v2241
  %2259 = vmatprep.subr.bf16.mxu0 0
  %2260 = vmatpush1.bf16.msra.mxu0 %v2243
  %2261 = vmatprep.subr.bf16.mxu0 0
  %2262 = vmatpush1.bf16.msra.mxu0 %v2244
  %2263 = vmatprep.subr.bf16.mxu0 0
  %2264 = vmatpush1.bf16.msra.mxu0 %v2245
  %2265 = vmatprep.subr.bf16.mxu0 0
  %2266 = vmatpush1.bf16.msra.mxu0 %v2246
  %2267 = vmatprep.subr.bf16.mxu0 0
  %2268 = vmatpush1.bf16.msra.mxu0 %v2247
  %2269 = vmatprep.subr.bf16.mxu0 0
  %2270 = vmatpush1.bf16.msra.mxu0 %v2248
  %2271 = vmatprep.subr.bf16.mxu0 0
  %2272 = vmatpush1.bf16.msra.mxu0 %v2249
  %2273 = vmatprep.subr.bf16.mxu0 0
  %2274 = vmatpush1.bf16.msra.mxu0 %v2250
  %2275 = vmatprep.subr.bf16.mxu0 0
  %2276 = vmatpush1.bf16.msra.mxu0 0
  %2277 = vmatprep.subr.bf16.mxu0 0
  %2278 = vmatpush1.bf16.msra.mxu0 0
  %2279 = vmatprep.subr.bf16.mxu0 0
  %2280 = vmatpush1.bf16.msra.mxu0 0
  %2281 = vmatprep.subr.bf16.mxu0 0
  %2282 = vmatpush1.bf16.msra.mxu0 0
  %2283 = vmatprep.subr.bf16.mxu0 0
  %2284 = vmatpush1.bf16.msra.mxu0 0
  %2285 = vmatprep.subr.bf16.mxu0 0
  %2286 = vmatpush1.bf16.msra.mxu0 0
  %2287 = vmatprep.subr.bf16.mxu0 0
  %2288 = vmatpush1.bf16.msra.mxu0 0
  %2289 = vmatprep.subr.bf16.mxu0 0
  %2290 = vmatpush1.bf16.msra.mxu0 0
  %2291 = vmatprep.mubr.bf16.mxu0 0
  %2292 = vmatmul.mubr.bf16.gmra.mrb[0].mxu0 %v2195
  %v2293 = vpop.f32.mrb[0].mxu0
  %v2294 = vadd.f32 %v2101, %v2293
  %v2295 = vpop.f32.mrb[0].mxu0
  %v2296 = vpop.f32.mrb[0].mxu0
  %v2297 = vadd.f32 %v2104, %v2296
  %v2298 = vpop.f32.mrb[0].mxu0
  %2299 = vmatprep.mubr.bf16.mxu0 0
  %2300 = vmatmul.mubr.bf16.gmra.mrb[0].mxu0 %v2196
  %v2301 = vpop.f32.mrb[0].mxu0
  %v2302 = vadd.f32 %v2109, %v2301
  %v2303 = vpop.f32.mrb[0].mxu0
  %v2304 = vpop.f32.mrb[0].mxu0
  %v2305 = vadd.f32 %v2112, %v2304
  %v2306 = vpop.f32.mrb[0].mxu0
  %2307 = vmatprep.mubr.bf16.mxu0 0
  %2308 = vmatmul.mubr.bf16.gmra.mrb[0].mxu0 %v2197
  %v2309 = vpop.f32.mrb[0].mxu0
  %v2310 = vadd.f32 %v2117, %v2309
  %v2311 = vpop.f32.mrb[0].mxu0
  %v2312 = vpop.f32.mrb[0].mxu0
  %v2313 = vadd.f32 %v2120, %v2312
  %v2314 = vpop.f32.mrb[0].mxu0
  %2315 = vmatprep.mubr.bf16.mxu0 0
  %2316 = vmatmul.mubr.bf16.gmra.mrb[0].mxu0 %v2198
  %v2317 = vpop.f32.mrb[0].mxu0
  %v2318 = vadd.f32 %v2125, %v2317
  %v2319 = vpop.f32.mrb[0].mxu0
  %v2320 = vpop.f32.mrb[0].mxu0
  %v2321 = vadd.f32 %v2128, %v2320
  %v2322 = vpop.f32.mrb[0].mxu0
  %2323 = vmatprep.mubr.bf16.mxu0 0
  %2324 = vmatmul.mubr.bf16.gmra.mrb[0].mxu0 %v2199
  %v2325 = vpop.f32.mrb[0].mxu0
  %v2326 = vadd.f32 %v2133, %v2325
  %v2327 = vpop.f32.mrb[0].mxu0
  %v2328 = vpop.f32.mrb[0].mxu0
  %v2329 = vadd.f32 %v2136, %v2328
  %v2330 = vpop.f32.mrb[0].mxu0
  %2331 = vmatprep.mubr.bf16.mxu0 0
  %2332 = vmatmul.mubr.bf16.gmra.mrb[0].mxu0 %v2200
  %v2333 = vpop.f32.mrb[0].mxu0
  %v2334 = vadd.f32 %v2141, %v2333
  %v2335 = vpop.f32.mrb[0].mxu0
  %v2336 = vpop.f32.mrb[0].mxu0
  %v2337 = vadd.f32 %v2144, %v2336
  %v2338 = vpop.f32.mrb[0].mxu0
  %2339 = vmatprep.mubr.bf16.mxu0 0
  %2340 = vmatmul.mubr.bf16.gmra.mrb[0].mxu0 %v2201
  %v2341 = vpop.f32.mrb[0].mxu0
  %v2342 = vadd.f32 %v2149, %v2341
  %v2343 = vpop.f32.mrb[0].mxu0
  %v2344 = vpop.f32.mrb[0].mxu0
  %v2345 = vadd.f32 %v2152, %v2344
  %v2346 = vpop.f32.mrb[0].mxu0
  %2347 = vmatprep.mubr.bf16.mxu0 0
  %2348 = vmatmul.mubr.bf16.gmra.mrb[0].mxu0 %v2202
  %v2349 = vpop.f32.mrb[0].mxu0
  %v2350 = vadd.f32 %v2157, %v2349
  %v2351 = vpop.f32.mrb[0].mxu0
  %v2352 = vpop.f32.mrb[0].mxu0
  %v2353 = vadd.f32 %v2160, %v2352
  %v2354 = vpop.f32.mrb[0].mxu0
  %2355 = vdwg.mxu0
  %v2356 = vld [vmem:[#allocation2] sm:$0xf]
  %v2357 = vld [vmem:[#allocation2 + $0x4] sm:$0x1]
  %v2358 = vld [vmem:[#allocation2 + $0x8] sm:$0xf]
  %v2359 = vld [vmem:[#allocation2 + $0xc] sm:$0x1]
  %v2360 = vld [vmem:[#allocation2 + $0x10] sm:$0xf]
  %v2361 = vld [vmem:[#allocation2 + $0x14] sm:$0x1]
  %v2362 = vld [vmem:[#allocation2 + $0x18] sm:$0xf]
  %v2363 = vld [vmem:[#allocation2 + $0x1c] sm:$0x1]
  %v2364 = vld [vmem:[#allocation2 + $0x20] sm:$0xf]
  %v2365 = vld [vmem:[#allocation2 + $0x24] sm:$0x1]
  %v2366 = vld [vmem:[#allocation2 + $0x28] sm:$0xf]
  %v2367 = vld [vmem:[#allocation2 + $0x2c] sm:$0x1]
  %v2368 = vld [vmem:[#allocation2 + $0x30] sm:$0xf]
  %v2369 = vld [vmem:[#allocation2 + $0x34] sm:$0x1]
  %v2370 = vld [vmem:[#allocation2 + $0x38] sm:$0xf]
  %v2371 = vld [vmem:[#allocation2 + $0x3c] sm:$0x1]
  %v2372 = vld [vmem:[#allocation2 + $0x120] sm:$0xf]
  %v2373 = vld [vmem:[#allocation2 + $0x124] sm:$0x1]
  %v2374 = vld [vmem:[#allocation2 + $0x128] sm:$0xf]
  %v2375 = vld [vmem:[#allocation2 + $0x12c] sm:$0x1]
  %v2376 = vld [vmem:[#allocation2 + $0x130] sm:$0xf]
  %v2377 = vld [vmem:[#allocation2 + $0x134] sm:$0x1]
  %v2378 = vld [vmem:[#allocation2 + $0x138] sm:$0xf]
  %v2379 = vld [vmem:[#allocation2 + $0x13c] sm:$0x1]
  %v2380 = vld [vmem:[#allocation2 + $0x140] sm:$0xf]
  %v2381 = vld [vmem:[#allocation2 + $0x144] sm:$0x1]
  %v2382 = vld [vmem:[#allocation2 + $0x148] sm:$0xf]
  %v2383 = vld [vmem:[#allocation2 + $0x14c] sm:$0x1]
  %v2384 = vld [vmem:[#allocation2 + $0x150] sm:$0xf]
  %v2385 = vld [vmem:[#allocation2 + $0x154] sm:$0x1]
  %v2386 = vld [vmem:[#allocation2 + $0x158] sm:$0xf]
  %v2387 = vld [vmem:[#allocation2 + $0x15c] sm:$0x1]
  %vm2388 = vsmask.f32 3328
  %vm2389 = vsmask.f32 7440
  %vm2390 = vmor %vm2388, %vm2389
  %v2392 = vshrl.u32 %v2356, 16
  %v2394 = vrot.slane %v2392, 4
  %v2395 = vshll.u32 %v2356, 16
  %v2397 = vrot.slane %v2395, 5
  %v2398 = vor.u32 %v2394, %v2397
  %v2399 = vrot.slane %v2398, 4
  %v2401 = vshll.u32 %v2357, 16
  %v2403 = vrot.slane %v2401, 5
  %v2404 = vsel %vm2390, %v2399, %v2403
  %v2406 = vshrl.u32 %v2358, 16
  %v2408 = vrot.slane %v2406, 4
  %v2409 = vshll.u32 %v2358, 16
  %v2411 = vrot.slane %v2409, 5
  %v2412 = vor.u32 %v2408, %v2411
  %v2413 = vrot.slane %v2412, 4
  %v2415 = vshll.u32 %v2359, 16
  %v2417 = vrot.slane %v2415, 5
  %v2418 = vsel %vm2390, %v2413, %v2417
  %v2420 = vshrl.u32 %v2360, 16
  %v2422 = vrot.slane %v2420, 4
  %v2423 = vshll.u32 %v2360, 16
  %v2425 = vrot.slane %v2423, 5
  %v2426 = vor.u32 %v2422, %v2425
  %v2427 = vrot.slane %v2426, 4
  %v2429 = vshll.u32 %v2361, 16
  %v2431 = vrot.slane %v2429, 5
  %v2432 = vsel %vm2390, %v2427, %v2431
  %v2434 = vshrl.u32 %v2362, 16
  %v2436 = vrot.slane %v2434, 4
  %v2437 = vshll.u32 %v2362, 16
  %v2439 = vrot.slane %v2437, 5
  %v2440 = vor.u32 %v2436, %v2439
  %v2441 = vrot.slane %v2440, 4
  %v2443 = vshll.u32 %v2363, 16
  %v2445 = vrot.slane %v2443, 5
  %v2446 = vsel %vm2390, %v2441, %v2445
  %v2448 = vshrl.u32 %v2364, 16
  %v2450 = vrot.slane %v2448, 4
  %v2451 = vshll.u32 %v2364, 16
  %v2453 = vrot.slane %v2451, 5
  %v2454 = vor.u32 %v2450, %v2453
  %v2455 = vrot.slane %v2454, 4
  %v2457 = vshll.u32 %v2365, 16
  %v2459 = vrot.slane %v2457, 5
  %v2460 = vsel %vm2390, %v2455, %v2459
  %v2462 = vshrl.u32 %v2366, 16
  %v2464 = vrot.slane %v2462, 4
  %v2465 = vshll.u32 %v2366, 16
  %v2467 = vrot.slane %v2465, 5
  %v2468 = vor.u32 %v2464, %v2467
  %v2469 = vrot.slane %v2468, 4
  %v2471 = vshll.u32 %v2367, 16
  %v2473 = vrot.slane %v2471, 5
  %v2474 = vsel %vm2390, %v2469, %v2473
  %v2476 = vshrl.u32 %v2368, 16
  %v2478 = vrot.slane %v2476, 4
  %v2479 = vshll.u32 %v2368, 16
  %v2481 = vrot.slane %v2479, 5
  %v2482 = vor.u32 %v2478, %v2481
  %v2483 = vrot.slane %v2482, 4
  %v2485 = vshll.u32 %v2369, 16
  %v2487 = vrot.slane %v2485, 5
  %v2488 = vsel %vm2390, %v2483, %v2487
  %v2490 = vshrl.u32 %v2370, 16
  %v2492 = vrot.slane %v2490, 4
  %v2493 = vshll.u32 %v2370, 16
  %v2495 = vrot.slane %v2493, 5
  %v2496 = vor.u32 %v2492, %v2495
  %v2497 = vrot.slane %v2496, 4
  %v2499 = vshll.u32 %v2371, 16
  %v2501 = vrot.slane %v2499, 5
  %v2502 = vsel %vm2390, %v2497, %v2501
  %v2504 = vshrl.u32 %v2372, 16
  %v2506 = vrot.slane %v2504, 4
  %v2507 = vshll.u32 %v2372, 16
  %v2509 = vrot.slane %v2507, 5
  %v2510 = vor.u32 %v2506, %v2509
  %v2511 = vrot.slane %v2510, 4
  %v2513 = vshll.u32 %v2373, 16
  %v2515 = vrot.slane %v2513, 5
  %v2516 = vsel %vm2390, %v2511, %v2515
  %v2518 = vshrl.u32 %v2374, 16
  %v2520 = vrot.slane %v2518, 4
  %v2521 = vshll.u32 %v2374, 16
  %v2523 = vrot.slane %v2521, 5
  %v2524 = vor.u32 %v2520, %v2523
  %v2525 = vrot.slane %v2524, 4
  %v2527 = vshll.u32 %v2375, 16
  %v2529 = vrot.slane %v2527, 5
  %v2530 = vsel %vm2390, %v2525, %v2529
  %v2532 = vshrl.u32 %v2376, 16
  %v2534 = vrot.slane %v2532, 4
  %v2535 = vshll.u32 %v2376, 16
  %v2537 = vrot.slane %v2535, 5
  %v2538 = vor.u32 %v2534, %v2537
  %v2539 = vrot.slane %v2538, 4
  %v2541 = vshll.u32 %v2377, 16
  %v2543 = vrot.slane %v2541, 5
  %v2544 = vsel %vm2390, %v2539, %v2543
  %v2546 = vshrl.u32 %v2378, 16
  %v2548 = vrot.slane %v2546, 4
  %v2549 = vshll.u32 %v2378, 16
  %v2551 = vrot.slane %v2549, 5
  %v2552 = vor.u32 %v2548, %v2551
  %v2553 = vrot.slane %v2552, 4
  %v2555 = vshll.u32 %v2379, 16
  %v2557 = vrot.slane %v2555, 5
  %v2558 = vsel %vm2390, %v2553, %v2557
  %v2560 = vshrl.u32 %v2380, 16
  %v2562 = vrot.slane %v2560, 4
  %v2563 = vshll.u32 %v2380, 16
  %v2565 = vrot.slane %v2563, 5
  %v2566 = vor.u32 %v2562, %v2565
  %v2567 = vrot.slane %v2566, 4
  %v2569 = vshll.u32 %v2381, 16
  %v2571 = vrot.slane %v2569, 5
  %v2572 = vsel %vm2390, %v2567, %v2571
  %v2574 = vshrl.u32 %v2382, 16
  %v2576 = vrot.slane %v2574, 4
  %v2577 = vshll.u32 %v2382, 16
  %v2579 = vrot.slane %v2577, 5
  %v2580 = vor.u32 %v2576, %v2579
  %v2581 = vrot.slane %v2580, 4
  %v2583 = vshll.u32 %v2383, 16
  %v2585 = vrot.slane %v2583, 5
  %v2586 = vsel %vm2390, %v2581, %v2585
  %v2588 = vshrl.u32 %v2384, 16
  %v2590 = vrot.slane %v2588, 4
  %v2591 = vshll.u32 %v2384, 16
  %v2593 = vrot.slane %v2591, 5
  %v2594 = vor.u32 %v2590, %v2593
  %v2595 = vrot.slane %v2594, 4
  %v2597 = vshll.u32 %v2385, 16
  %v2599 = vrot.slane %v2597, 5
  %v2600 = vsel %vm2390, %v2595, %v2599
  %v2602 = vshrl.u32 %v2386, 16
  %v2604 = vrot.slane %v2602, 4
  %v2605 = vshll.u32 %v2386, 16
  %v2607 = vrot.slane %v2605, 5
  %v2608 = vor.u32 %v2604, %v2607
  %v2609 = vrot.slane %v2608, 4
  %v2611 = vshll.u32 %v2387, 16
  %v2613 = vrot.slane %v2611, 5
  %v2614 = vsel %vm2390, %v2609, %v2613
  %s2615 = scalar_lea.vmem %s3, 128
  %v2616 = vld [vmem:[%s2615] sm:$0xf]
  %v2617 = vld [vmem:[%s2615 + $0x4] sm:$0xf]
  %v2618 = vld [vmem:[%s2615 + $0x8] sm:$0xf]
  %v2619 = vld [vmem:[%s2615 + $0xc] sm:$0xf]
  %v2620 = vld [vmem:[%s2615 + $0x10] sm:$0xf]
  %v2621 = vld [vmem:[%s2615 + $0x14] sm:$0xf]
  %v2622 = vld [vmem:[%s2615 + $0x18] sm:$0xf]
  %v2623 = vld [vmem:[%s2615 + $0x1c] sm:$0xf]
  %v2624 = vld [vmem:[%s2615 + $0x20] sm:$0xf]
  %v2625 = vld [vmem:[%s2615 + $0x24] sm:$0xf]
  %v2626 = vld [vmem:[%s2615 + $0x28] sm:$0xf]
  %v2627 = vld [vmem:[%s2615 + $0x2c] sm:$0xf]
  %v2628 = vld [vmem:[%s2615 + $0x30] sm:$0xf]
  %v2629 = vld [vmem:[%s2615 + $0x34] sm:$0xf]
  %v2630 = vld [vmem:[%s2615 + $0x38] sm:$0xf]
  %v2631 = vld [vmem:[%s2615 + $0x3c] sm:$0xf]
  %v2632 = vunpack.c.l.b16 %v2404
  %v2633 = vunpack.c.l.b16 %v2418
  %v2634 = vunpack.c.l.b16 %v2432
  %v2635 = vunpack.c.l.b16 %v2446
  %v2636 = vunpack.c.l.b16 %v2460
  %v2637 = vunpack.c.l.b16 %v2474
  %v2638 = vunpack.c.l.b16 %v2488
  %v2639 = vunpack.c.l.b16 %v2502
  %v2640 = vunpack.c.l.b16 %v2516
  %v2641 = vunpack.c.l.b16 %v2530
  %v2642 = vunpack.c.l.b16 %v2544
  %v2643 = vunpack.c.l.b16 %v2558
  %v2644 = vunpack.c.l.b16 %v2572
  %v2645 = vunpack.c.l.b16 %v2586
  %v2646 = vunpack.c.l.b16 %v2600
  %v2647 = vunpack.c.l.b16 %v2614
  %v2648 = vpack.c.b16 %v2633, %v2632
  %v2649 = vpack.c.b16 %v2635, %v2634
  %v2650 = vpack.c.b16 %v2637, %v2636
  %v2651 = vpack.c.b16 %v2639, %v2638
  %v2652 = vpack.c.b16 %v2641, %v2640
  %v2653 = vpack.c.b16 %v2643, %v2642
  %v2654 = vpack.c.b16 %v2645, %v2644
  %v2655 = vpack.c.b16 %v2647, %v2646
  %v2680 = vunpack.c.l.b16 %v2616
  %v2681 = vunpack.c.l.b16 %v2617
  %v2682 = vunpack.c.l.b16 %v2618
  %v2683 = vunpack.c.l.b16 %v2619
  %v2684 = vunpack.c.l.b16 %v2620
  %v2685 = vunpack.c.l.b16 %v2621
  %v2686 = vunpack.c.l.b16 %v2622
  %v2687 = vunpack.c.l.b16 %v2623
  %v2688 = vunpack.c.l.b16 %v2624
  %v2689 = vunpack.c.l.b16 %v2625
  %v2690 = vunpack.c.l.b16 %v2626
  %v2691 = vunpack.c.l.b16 %v2627
  %v2692 = vunpack.c.l.b16 %v2628
  %v2693 = vunpack.c.l.b16 %v2629
  %v2694 = vunpack.c.l.b16 %v2630
  %v2695 = vunpack.c.l.b16 %v2631
  %v2696 = vpack.c.b16 %v2681, %v2680
  %v2697 = vpack.c.b16 %v2683, %v2682
  %v2698 = vpack.c.b16 %v2685, %v2684
  %v2699 = vpack.c.b16 %v2687, %v2686
  %v2700 = vpack.c.b16 %v2689, %v2688
  %v2701 = vpack.c.b16 %v2691, %v2690
  %v2702 = vpack.c.b16 %v2693, %v2692
  %v2703 = vpack.c.b16 %v2695, %v2694
  %2712 = vmatprep.subr.bf16.mxu0 0
  %2713 = vmatpush1.bf16.msra.mxu0 %v2696
  %2714 = vmatprep.subr.bf16.mxu0 0
  %2715 = vmatpush1.bf16.msra.mxu0 %v2697
  %2716 = vmatprep.subr.bf16.mxu0 0
  %2717 = vmatpush1.bf16.msra.mxu0 %v2698
  %2718 = vmatprep.subr.bf16.mxu0 0
  %2719 = vmatpush1.bf16.msra.mxu0 %v2699
  %2720 = vmatprep.subr.bf16.mxu0 0
  %2721 = vmatpush1.bf16.msra.mxu0 %v2700
  %2722 = vmatprep.subr.bf16.mxu0 0
  %2723 = vmatpush1.bf16.msra.mxu0 %v2701
  %2724 = vmatprep.subr.bf16.mxu0 0
  %2725 = vmatpush1.bf16.msra.mxu0 %v2702
  %2726 = vmatprep.subr.bf16.mxu0 0
  %2727 = vmatpush1.bf16.msra.mxu0 %v2703
  %2728 = vmatprep.subr.bf16.mxu0 0
  %2729 = vmatpush1.bf16.msra.mxu0 0
  %2730 = vmatprep.subr.bf16.mxu0 0
  %2731 = vmatpush1.bf16.msra.mxu0 0
  %2732 = vmatprep.subr.bf16.mxu0 0
  %2733 = vmatpush1.bf16.msra.mxu0 0
  %2734 = vmatprep.subr.bf16.mxu0 0
  %2735 = vmatpush1.bf16.msra.mxu0 0
  %2736 = vmatprep.subr.bf16.mxu0 0
  %2737 = vmatpush1.bf16.msra.mxu0 0
  %2738 = vmatprep.subr.bf16.mxu0 0
  %2739 = vmatpush1.bf16.msra.mxu0 0
  %2740 = vmatprep.subr.bf16.mxu0 0
  %2741 = vmatpush1.bf16.msra.mxu0 0
  %2742 = vmatprep.subr.bf16.mxu0 0
  %2743 = vmatpush1.bf16.msra.mxu0 0
  %2744 = vmatprep.mubr.bf16.mxu0 0
  %2745 = vmatmul.mubr.bf16.gmra.mrb[0].mxu0 %v2648
  %v2746 = vpop.f32.mrb[0].mxu0
  %v2747 = vadd.f32 0.0, %v2746
  %v2748 = vpop.f32.mrb[0].mxu0
  %v2749 = vpop.f32.mrb[0].mxu0
  %v2750 = vadd.f32 0.0, %v2749
  %v2751 = vpop.f32.mrb[0].mxu0
  %2752 = vmatprep.mubr.bf16.mxu0 0
  %2753 = vmatmul.mubr.bf16.gmra.mrb[0].mxu0 %v2649
  %v2754 = vpop.f32.mrb[0].mxu0
  %v2755 = vadd.f32 0.0, %v2754
  %v2756 = vpop.f32.mrb[0].mxu0
  %v2757 = vpop.f32.mrb[0].mxu0
  %v2758 = vadd.f32 0.0, %v2757
  %v2759 = vpop.f32.mrb[0].mxu0
  %2760 = vmatprep.mubr.bf16.mxu0 0
  %2761 = vmatmul.mubr.bf16.gmra.mrb[0].mxu0 %v2650
  %v2762 = vpop.f32.mrb[0].mxu0
  %v2763 = vadd.f32 0.0, %v2762
  %v2764 = vpop.f32.mrb[0].mxu0
  %v2765 = vpop.f32.mrb[0].mxu0
  %v2766 = vadd.f32 0.0, %v2765
  %v2767 = vpop.f32.mrb[0].mxu0
  %2768 = vmatprep.mubr.bf16.mxu0 0
  %2769 = vmatmul.mubr.bf16.gmra.mrb[0].mxu0 %v2651
  %v2770 = vpop.f32.mrb[0].mxu0
  %v2771 = vadd.f32 0.0, %v2770
  %v2772 = vpop.f32.mrb[0].mxu0
  %v2773 = vpop.f32.mrb[0].mxu0
  %v2774 = vadd.f32 0.0, %v2773
  %v2775 = vpop.f32.mrb[0].mxu0
  %2776 = vmatprep.mubr.bf16.mxu0 0
  %2777 = vmatmul.mubr.bf16.gmra.mrb[0].mxu0 %v2652
  %v2778 = vpop.f32.mrb[0].mxu0
  %v2779 = vadd.f32 0.0, %v2778
  %v2780 = vpop.f32.mrb[0].mxu0
  %v2781 = vpop.f32.mrb[0].mxu0
  %v2782 = vadd.f32 0.0, %v2781
  %v2783 = vpop.f32.mrb[0].mxu0
  %2784 = vmatprep.mubr.bf16.mxu0 0
  %2785 = vmatmul.mubr.bf16.gmra.mrb[0].mxu0 %v2653
  %v2786 = vpop.f32.mrb[0].mxu0
  %v2787 = vadd.f32 0.0, %v2786
  %v2788 = vpop.f32.mrb[0].mxu0
  %v2789 = vpop.f32.mrb[0].mxu0
  %v2790 = vadd.f32 0.0, %v2789
  %v2791 = vpop.f32.mrb[0].mxu0
  %2792 = vmatprep.mubr.bf16.mxu0 0
  %2793 = vmatmul.mubr.bf16.gmra.mrb[0].mxu0 %v2654
  %v2794 = vpop.f32.mrb[0].mxu0
  %v2795 = vadd.f32 0.0, %v2794
  %v2796 = vpop.f32.mrb[0].mxu0
  %v2797 = vpop.f32.mrb[0].mxu0
  %v2798 = vadd.f32 0.0, %v2797
  %v2799 = vpop.f32.mrb[0].mxu0
  %2800 = vmatprep.mubr.bf16.mxu0 0
  %2801 = vmatmul.mubr.bf16.gmra.mrb[0].mxu0 %v2655
  %v2802 = vpop.f32.mrb[0].mxu0
  %v2803 = vadd.f32 0.0, %v2802
  %v2804 = vpop.f32.mrb[0].mxu0
  %v2805 = vpop.f32.mrb[0].mxu0
  %v2806 = vadd.f32 0.0, %v2805
  %v2807 = vpop.f32.mrb[0].mxu0
  %2808 = vdwg.mxu0
  %v2809 = vadd.f32 %v2294, %v2747
  %v2810 = vadd.f32 %v2297, %v2750
  %v2811 = vadd.f32 %v2302, %v2755
  %v2812 = vadd.f32 %v2305, %v2758
  %v2813 = vadd.f32 %v2310, %v2763
  %v2814 = vadd.f32 %v2313, %v2766
  %v2815 = vadd.f32 %v2318, %v2771
  %v2816 = vadd.f32 %v2321, %v2774
  %v2817 = vadd.f32 %v2326, %v2779
  %v2818 = vadd.f32 %v2329, %v2782
  %v2819 = vadd.f32 %v2334, %v2787
  %v2820 = vadd.f32 %v2337, %v2790
  %v2821 = vadd.f32 %v2342, %v2795
  %v2822 = vadd.f32 %v2345, %v2798
  %v2823 = vadd.f32 %v2350, %v2803
  %v2824 = vadd.f32 %v2353, %v2806
  %v2825 = vld [vmem:[%s1936] sm:$0xf]
  %v2826 = vld [vmem:[%s1936 + $0x4] sm:$0x1]
  %v2827 = vld [vmem:[%s1936 + $0x8] sm:$0xf]
  %v2828 = vld [vmem:[%s1936 + $0xc] sm:$0x1]
  %v2829 = vld [vmem:[%s1936 + $0x10] sm:$0xf]
  %v2830 = vld [vmem:[%s1936 + $0x14] sm:$0x1]
  %v2831 = vld [vmem:[%s1936 + $0x18] sm:$0xf]
  %v2832 = vld [vmem:[%s1936 + $0x1c] sm:$0x1]
  %v2833 = vld [vmem:[%s1936 + $0x20] sm:$0xf]
  %v2834 = vld [vmem:[%s1936 + $0x24] sm:$0x1]
  %v2835 = vld [vmem:[%s1936 + $0x28] sm:$0xf]
  %v2836 = vld [vmem:[%s1936 + $0x2c] sm:$0x1]
  %v2837 = vld [vmem:[%s1936 + $0x30] sm:$0xf]
  %v2838 = vld [vmem:[%s1936 + $0x34] sm:$0x1]
  %v2839 = vld [vmem:[%s1936 + $0x38] sm:$0xf]
  %v2840 = vld [vmem:[%s1936 + $0x3c] sm:$0x1]
  %v2841 = vld [vmem:[%s1936 + $0x120] sm:$0xf]
  %v2842 = vld [vmem:[%s1936 + $0x124] sm:$0x1]
  %v2843 = vld [vmem:[%s1936 + $0x128] sm:$0xf]
  %v2844 = vld [vmem:[%s1936 + $0x12c] sm:$0x1]
  %v2845 = vld [vmem:[%s1936 + $0x130] sm:$0xf]
  %v2846 = vld [vmem:[%s1936 + $0x134] sm:$0x1]
  %v2847 = vld [vmem:[%s1936 + $0x138] sm:$0xf]
  %v2848 = vld [vmem:[%s1936 + $0x13c] sm:$0x1]
  %v2849 = vld [vmem:[%s1936 + $0x140] sm:$0xf]
  %v2850 = vld [vmem:[%s1936 + $0x144] sm:$0x1]
  %v2851 = vld [vmem:[%s1936 + $0x148] sm:$0xf]
  %v2852 = vld [vmem:[%s1936 + $0x14c] sm:$0x1]
  %v2853 = vld [vmem:[%s1936 + $0x150] sm:$0xf]
  %v2854 = vld [vmem:[%s1936 + $0x154] sm:$0x1]
  %v2855 = vld [vmem:[%s1936 + $0x158] sm:$0xf]
  %v2856 = vld [vmem:[%s1936 + $0x15c] sm:$0x1]
  %v2858 = vshrl.u32 %v2825, 16
  %v2860 = vrot.slane %v2858, 4
  %v2861 = vshll.u32 %v2825, 16
  %v2863 = vrot.slane %v2861, 5
  %v2864 = vor.u32 %v2860, %v2863
  %v2865 = vrot.slane %v2864, 4
  %v2867 = vshll.u32 %v2826, 16
  %v2869 = vrot.slane %v2867, 5
  %v2870 = vsel %vm2390, %v2865, %v2869
  %v2872 = vshrl.u32 %v2827, 16
  %v2874 = vrot.slane %v2872, 4
  %v2875 = vshll.u32 %v2827, 16
  %v2877 = vrot.slane %v2875, 5
  %v2878 = vor.u32 %v2874, %v2877
  %v2879 = vrot.slane %v2878, 4
  %v2881 = vshll.u32 %v2828, 16
  %v2883 = vrot.slane %v2881, 5
  %v2884 = vsel %vm2390, %v2879, %v2883
  %v2886 = vshrl.u32 %v2829, 16
  %v2888 = vrot.slane %v2886, 4
  %v2889 = vshll.u32 %v2829, 16
  %v2891 = vrot.slane %v2889, 5
  %v2892 = vor.u32 %v2888, %v2891
  %v2893 = vrot.slane %v2892, 4
  %v2895 = vshll.u32 %v2830, 16
  %v2897 = vrot.slane %v2895, 5
  %v2898 = vsel %vm2390, %v2893, %v2897
  %v2900 = vshrl.u32 %v2831, 16
  %v2902 = vrot.slane %v2900, 4
  %v2903 = vshll.u32 %v2831, 16
  %v2905 = vrot.slane %v2903, 5
  %v2906 = vor.u32 %v2902, %v2905
  %v2907 = vrot.slane %v2906, 4
  %v2909 = vshll.u32 %v2832, 16
  %v2911 = vrot.slane %v2909, 5
  %v2912 = vsel %vm2390, %v2907, %v2911
  %v2914 = vshrl.u32 %v2833, 16
  %v2916 = vrot.slane %v2914, 4
  %v2917 = vshll.u32 %v2833, 16
  %v2919 = vrot.slane %v2917, 5
  %v2920 = vor.u32 %v2916, %v2919
  %v2921 = vrot.slane %v2920, 4
  %v2923 = vshll.u32 %v2834, 16
  %v2925 = vrot.slane %v2923, 5
  %v2926 = vsel %vm2390, %v2921, %v2925
  %v2928 = vshrl.u32 %v2835, 16
  %v2930 = vrot.slane %v2928, 4
  %v2931 = vshll.u32 %v2835, 16
  %v2933 = vrot.slane %v2931, 5
  %v2934 = vor.u32 %v2930, %v2933
  %v2935 = vrot.slane %v2934, 4
  %v2937 = vshll.u32 %v2836, 16
  %v2939 = vrot.slane %v2937, 5
  %v2940 = vsel %vm2390, %v2935, %v2939
  %v2942 = vshrl.u32 %v2837, 16
  %v2944 = vrot.slane %v2942, 4
  %v2945 = vshll.u32 %v2837, 16
  %v2947 = vrot.slane %v2945, 5
  %v2948 = vor.u32 %v2944, %v2947
  %v2949 = vrot.slane %v2948, 4
  %v2951 = vshll.u32 %v2838, 16
  %v2953 = vrot.slane %v2951, 5
  %v2954 = vsel %vm2390, %v2949, %v2953
  %v2956 = vshrl.u32 %v2839, 16
  %v2958 = vrot.slane %v2956, 4
  %v2959 = vshll.u32 %v2839, 16
  %v2961 = vrot.slane %v2959, 5
  %v2962 = vor.u32 %v2958, %v2961
  %v2963 = vrot.slane %v2962, 4
  %v2965 = vshll.u32 %v2840, 16
  %v2967 = vrot.slane %v2965, 5
  %v2968 = vsel %vm2390, %v2963, %v2967
  %v2970 = vshrl.u32 %v2841, 16
  %v2972 = vrot.slane %v2970, 4
  %v2973 = vshll.u32 %v2841, 16
  %v2975 = vrot.slane %v2973, 5
  %v2976 = vor.u32 %v2972, %v2975
  %v2977 = vrot.slane %v2976, 4
  %v2979 = vshll.u32 %v2842, 16
  %v2981 = vrot.slane %v2979, 5
  %v2982 = vsel %vm2390, %v2977, %v2981
  %v2984 = vshrl.u32 %v2843, 16
  %v2986 = vrot.slane %v2984, 4
  %v2987 = vshll.u32 %v2843, 16
  %v2989 = vrot.slane %v2987, 5
  %v2990 = vor.u32 %v2986, %v2989
  %v2991 = vrot.slane %v2990, 4
  %v2993 = vshll.u32 %v2844, 16
  %v2995 = vrot.slane %v2993, 5
  %v2996 = vsel %vm2390, %v2991, %v2995
  %v2998 = vshrl.u32 %v2845, 16
  %v3000 = vrot.slane %v2998, 4
  %v3001 = vshll.u32 %v2845, 16
  %v3003 = vrot.slane %v3001, 5
  %v3004 = vor.u32 %v3000, %v3003
  %v3005 = vrot.slane %v3004, 4
  %v3007 = vshll.u32 %v2846, 16
  %v3009 = vrot.slane %v3007, 5
  %v3010 = vsel %vm2390, %v3005, %v3009
  %v3012 = vshrl.u32 %v2847, 16
  %v3014 = vrot.slane %v3012, 4
  %v3015 = vshll.u32 %v2847, 16
  %v3017 = vrot.slane %v3015, 5
  %v3018 = vor.u32 %v3014, %v3017
  %v3019 = vrot.slane %v3018, 4
  %v3021 = vshll.u32 %v2848, 16
  %v3023 = vrot.slane %v3021, 5
  %v3024 = vsel %vm2390, %v3019, %v3023
  %v3026 = vshrl.u32 %v2849, 16
  %v3028 = vrot.slane %v3026, 4
  %v3029 = vshll.u32 %v2849, 16
  %v3031 = vrot.slane %v3029, 5
  %v3032 = vor.u32 %v3028, %v3031
  %v3033 = vrot.slane %v3032, 4
  %v3035 = vshll.u32 %v2850, 16
  %v3037 = vrot.slane %v3035, 5
  %v3038 = vsel %vm2390, %v3033, %v3037
  %v3040 = vshrl.u32 %v2851, 16
  %v3042 = vrot.slane %v3040, 4
  %v3043 = vshll.u32 %v2851, 16
  %v3045 = vrot.slane %v3043, 5
  %v3046 = vor.u32 %v3042, %v3045
  %v3047 = vrot.slane %v3046, 4
  %v3049 = vshll.u32 %v2852, 16
  %v3051 = vrot.slane %v3049, 5
  %v3052 = vsel %vm2390, %v3047, %v3051
  %v3054 = vshrl.u32 %v2853, 16
  %v3056 = vrot.slane %v3054, 4
  %v3057 = vshll.u32 %v2853, 16
  %v3059 = vrot.slane %v3057, 5
  %v3060 = vor.u32 %v3056, %v3059
  %v3061 = vrot.slane %v3060, 4
  %v3063 = vshll.u32 %v2854, 16
  %v3065 = vrot.slane %v3063, 5
  %v3066 = vsel %vm2390, %v3061, %v3065
  %v3068 = vshrl.u32 %v2855, 16
  %v3070 = vrot.slane %v3068, 4
  %v3071 = vshll.u32 %v2855, 16
  %v3073 = vrot.slane %v3071, 5
  %v3074 = vor.u32 %v3070, %v3073
  %v3075 = vrot.slane %v3074, 4
  %v3077 = vshll.u32 %v2856, 16
  %v3079 = vrot.slane %v3077, 5
  %v3080 = vsel %vm2390, %v3075, %v3079
  %s3081 = scalar_lea.vmem %s3, 192
  %v3082 = vld [vmem:[%s3081] sm:$0xf]
  %v3083 = vld [vmem:[%s3081 + $0x4] sm:$0xf]
  %v3084 = vld [vmem:[%s3081 + $0x8] sm:$0xf]
  %v3085 = vld [vmem:[%s3081 + $0xc] sm:$0xf]
  %v3086 = vld [vmem:[%s3081 + $0x10] sm:$0xf]
  %v3087 = vld [vmem:[%s3081 + $0x14] sm:$0xf]
  %v3088 = vld [vmem:[%s3081 + $0x18] sm:$0xf]
  %v3089 = vld [vmem:[%s3081 + $0x1c] sm:$0xf]
  %v3090 = vld [vmem:[%s3081 + $0x20] sm:$0xf]
  %v3091 = vld [vmem:[%s3081 + $0x24] sm:$0xf]
  %v3092 = vld [vmem:[%s3081 + $0x28] sm:$0xf]
  %v3093 = vld [vmem:[%s3081 + $0x2c] sm:$0xf]
  %v3094 = vld [vmem:[%s3081 + $0x30] sm:$0xf]
  %v3095 = vld [vmem:[%s3081 + $0x34] sm:$0xf]
  %v3096 = vld [vmem:[%s3081 + $0x38] sm:$0xf]
  %v3097 = vld [vmem:[%s3081 + $0x3c] sm:$0xf]
  %v3098 = vunpack.c.l.b16 %v2870
  %v3099 = vunpack.c.l.b16 %v2884
  %v3100 = vunpack.c.l.b16 %v2898
  %v3101 = vunpack.c.l.b16 %v2912
  %v3102 = vunpack.c.l.b16 %v2926
  %v3103 = vunpack.c.l.b16 %v2940
  %v3104 = vunpack.c.l.b16 %v2954
  %v3105 = vunpack.c.l.b16 %v2968
  %v3106 = vunpack.c.l.b16 %v2982
  %v3107 = vunpack.c.l.b16 %v2996
  %v3108 = vunpack.c.l.b16 %v3010
  %v3109 = vunpack.c.l.b16 %v3024
  %v3110 = vunpack.c.l.b16 %v3038
  %v3111 = vunpack.c.l.b16 %v3052
  %v3112 = vunpack.c.l.b16 %v3066
  %v3113 = vunpack.c.l.b16 %v3080
  %v3114 = vpack.c.b16 %v3099, %v3098
  %v3115 = vpack.c.b16 %v3101, %v3100
  %v3116 = vpack.c.b16 %v3103, %v3102
  %v3117 = vpack.c.b16 %v3105, %v3104
  %v3118 = vpack.c.b16 %v3107, %v3106
  %v3119 = vpack.c.b16 %v3109, %v3108
  %v3120 = vpack.c.b16 %v3111, %v3110
  %v3121 = vpack.c.b16 %v3113, %v3112
  %v3146 = vunpack.c.l.b16 %v3082
  %v3147 = vunpack.c.l.b16 %v3083
  %v3148 = vunpack.c.l.b16 %v3084
  %v3149 = vunpack.c.l.b16 %v3085
  %v3150 = vunpack.c.l.b16 %v3086
  %v3151 = vunpack.c.l.b16 %v3087
  %v3152 = vunpack.c.l.b16 %v3088
  %v3153 = vunpack.c.l.b16 %v3089
  %v3154 = vunpack.c.l.b16 %v3090
  %v3155 = vunpack.c.l.b16 %v3091
  %v3156 = vunpack.c.l.b16 %v3092
  %v3157 = vunpack.c.l.b16 %v3093
  %v3158 = vunpack.c.l.b16 %v3094
  %v3159 = vunpack.c.l.b16 %v3095
  %v3160 = vunpack.c.l.b16 %v3096
  %v3161 = vunpack.c.l.b16 %v3097
  %v3162 = vpack.c.b16 %v3147, %v3146
  %v3163 = vpack.c.b16 %v3149, %v3148
  %v3164 = vpack.c.b16 %v3151, %v3150
  %v3165 = vpack.c.b16 %v3153, %v3152
  %v3166 = vpack.c.b16 %v3155, %v3154
  %v3167 = vpack.c.b16 %v3157, %v3156
  %v3168 = vpack.c.b16 %v3159, %v3158
  %v3169 = vpack.c.b16 %v3161, %v3160
  %3178 = vmatprep.subr.bf16.mxu0 0
  %3179 = vmatpush1.bf16.msra.mxu0 %v3162
  %3180 = vmatprep.subr.bf16.mxu0 0
  %3181 = vmatpush1.bf16.msra.mxu0 %v3163
  %3182 = vmatprep.subr.bf16.mxu0 0
  %3183 = vmatpush1.bf16.msra.mxu0 %v3164
  %3184 = vmatprep.subr.bf16.mxu0 0
  %3185 = vmatpush1.bf16.msra.mxu0 %v3165
  %3186 = vmatprep.subr.bf16.mxu0 0
  %3187 = vmatpush1.bf16.msra.mxu0 %v3166
  %3188 = vmatprep.subr.bf16.mxu0 0
  %3189 = vmatpush1.bf16.msra.mxu0 %v3167
  %3190 = vmatprep.subr.bf16.mxu0 0
  %3191 = vmatpush1.bf16.msra.mxu0 %v3168
  %3192 = vmatprep.subr.bf16.mxu0 0
  %3193 = vmatpush1.bf16.msra.mxu0 %v3169
  %3194 = vmatprep.subr.bf16.mxu0 0
  %3195 = vmatpush1.bf16.msra.mxu0 0
  %3196 = vmatprep.subr.bf16.mxu0 0
  %3197 = vmatpush1.bf16.msra.mxu0 0
  %3198 = vmatprep.subr.bf16.mxu0 0
  %3199 = vmatpush1.bf16.msra.mxu0 0
  %3200 = vmatprep.subr.bf16.mxu0 0
  %3201 = vmatpush1.bf16.msra.mxu0 0
  %3202 = vmatprep.subr.bf16.mxu0 0
  %3203 = vmatpush1.bf16.msra.mxu0 0
  %3204 = vmatprep.subr.bf16.mxu0 0
  %3205 = vmatpush1.bf16.msra.mxu0 0
  %3206 = vmatprep.subr.bf16.mxu0 0
  %3207 = vmatpush1.bf16.msra.mxu0 0
  %3208 = vmatprep.subr.bf16.mxu0 0
  %3209 = vmatpush1.bf16.msra.mxu0 0
  %3210 = vmatprep.mubr.bf16.mxu0 0
  %3211 = vmatmul.mubr.bf16.gmra.mrb[0].mxu0 %v3114
  %v3212 = vpop.f32.mrb[0].mxu0
  %v3213 = vadd.f32 0.0, %v3212
  %v3214 = vpop.f32.mrb[0].mxu0
  %v3215 = vpop.f32.mrb[0].mxu0
  %v3216 = vadd.f32 0.0, %v3215
  %v3217 = vpop.f32.mrb[0].mxu0
  %3218 = vmatprep.mubr.bf16.mxu0 0
  %3219 = vmatmul.mubr.bf16.gmra.mrb[0].mxu0 %v3115
  %v3220 = vpop.f32.mrb[0].mxu0
  %v3221 = vadd.f32 0.0, %v3220
  %v3222 = vpop.f32.mrb[0].mxu0
  %v3223 = vpop.f32.mrb[0].mxu0
  %v3224 = vadd.f32 0.0, %v3223
  %v3225 = vpop.f32.mrb[0].mxu0
  %3226 = vmatprep.mubr.bf16.mxu0 0
  %3227 = vmatmul.mubr.bf16.gmra.mrb[0].mxu0 %v3116
  %v3228 = vpop.f32.mrb[0].mxu0
  %v3229 = vadd.f32 0.0, %v3228
  %v3230 = vpop.f32.mrb[0].mxu0
  %v3231 = vpop.f32.mrb[0].mxu0
  %v3232 = vadd.f32 0.0, %v3231
  %v3233 = vpop.f32.mrb[0].mxu0
  %3234 = vmatprep.mubr.bf16.mxu0 0
  %3235 = vmatmul.mubr.bf16.gmra.mrb[0].mxu0 %v3117
  %v3236 = vpop.f32.mrb[0].mxu0
  %v3237 = vadd.f32 0.0, %v3236
  %v3238 = vpop.f32.mrb[0].mxu0
  %v3239 = vpop.f32.mrb[0].mxu0
  %v3240 = vadd.f32 0.0, %v3239
  %v3241 = vpop.f32.mrb[0].mxu0
  %3242 = vmatprep.mubr.bf16.mxu0 0
  %3243 = vmatmul.mubr.bf16.gmra.mrb[0].mxu0 %v3118
  %v3244 = vpop.f32.mrb[0].mxu0
  %v3245 = vadd.f32 0.0, %v3244
  %v3246 = vpop.f32.mrb[0].mxu0
  %v3247 = vpop.f32.mrb[0].mxu0
  %v3248 = vadd.f32 0.0, %v3247
  %v3249 = vpop.f32.mrb[0].mxu0
  %3250 = vmatprep.mubr.bf16.mxu0 0
  %3251 = vmatmul.mubr.bf16.gmra.mrb[0].mxu0 %v3119
  %v3252 = vpop.f32.mrb[0].mxu0
  %v3253 = vadd.f32 0.0, %v3252
  %v3254 = vpop.f32.mrb[0].mxu0
  %v3255 = vpop.f32.mrb[0].mxu0
  %v3256 = vadd.f32 0.0, %v3255
  %v3257 = vpop.f32.mrb[0].mxu0
  %3258 = vmatprep.mubr.bf16.mxu0 0
  %3259 = vmatmul.mubr.bf16.gmra.mrb[0].mxu0 %v3120
  %v3260 = vpop.f32.mrb[0].mxu0
  %v3261 = vadd.f32 0.0, %v3260
  %v3262 = vpop.f32.mrb[0].mxu0
  %v3263 = vpop.f32.mrb[0].mxu0
  %v3264 = vadd.f32 0.0, %v3263
  %v3265 = vpop.f32.mrb[0].mxu0
  %3266 = vmatprep.mubr.bf16.mxu0 0
  %3267 = vmatmul.mubr.bf16.gmra.mrb[0].mxu0 %v3121
  %v3268 = vpop.f32.mrb[0].mxu0
  %v3269 = vadd.f32 0.0, %v3268
  %v3270 = vpop.f32.mrb[0].mxu0
  %v3271 = vpop.f32.mrb[0].mxu0
  %v3272 = vadd.f32 0.0, %v3271
  %v3273 = vpop.f32.mrb[0].mxu0
  %3274 = vdwg.mxu0
  %v3275 = vadd.f32 %v2809, %v3213
  %v3276 = vadd.f32 %v2810, %v3216
  %v3277 = vadd.f32 %v2811, %v3221
  %v3278 = vadd.f32 %v2812, %v3224
  %v3279 = vadd.f32 %v2813, %v3229
  %v3280 = vadd.f32 %v2814, %v3232
  %v3281 = vadd.f32 %v2815, %v3237
  %v3282 = vadd.f32 %v2816, %v3240
  %v3283 = vadd.f32 %v2817, %v3245
  %v3284 = vadd.f32 %v2818, %v3248
  %v3285 = vadd.f32 %v2819, %v3253
  %v3286 = vadd.f32 %v2820, %v3256
  %v3287 = vadd.f32 %v2821, %v3261
  %v3288 = vadd.f32 %v2822, %v3264
  %v3289 = vadd.f32 %v2823, %v3269
  %v3290 = vadd.f32 %v2824, %v3272
  %v3291 = vld [vmem:[%s1790] sm:$0xf]
  %v3292 = vld [vmem:[%s1790 + $0x8] sm:$0xf]
  %v3293 = vld [vmem:[%s1790 + $0x10] sm:$0xf]
  %v3294 = vld [vmem:[%s1790 + $0x18] sm:$0xf]
  %v3295 = vld [vmem:[%s1790 + $0x20] sm:$0xf]
  %v3296 = vld [vmem:[%s1790 + $0x28] sm:$0xf]
  %v3297 = vld [vmem:[%s1790 + $0x30] sm:$0xf]
  %v3298 = vld [vmem:[%s1790 + $0x38] sm:$0xf]
  %v3299 = vld [vmem:[%s1790 + $0x120] sm:$0xf]
  %v3300 = vld [vmem:[%s1790 + $0x128] sm:$0xf]
  %v3301 = vld [vmem:[%s1790 + $0x130] sm:$0xf]
  %v3302 = vld [vmem:[%s1790 + $0x138] sm:$0xf]
  %v3303 = vld [vmem:[%s1790 + $0x140] sm:$0xf]
  %v3304 = vld [vmem:[%s1790 + $0x148] sm:$0xf]
  %v3305 = vld [vmem:[%s1790 + $0x150] sm:$0xf]
  %v3306 = vld [vmem:[%s1790 + $0x158] sm:$0xf]
  %s3307 = scalar_lea.vmem %s3, 256
  %v3308 = vld [vmem:[%s3307] sm:$0xf]
  %v3309 = vld [vmem:[%s3307 + $0x4] sm:$0xf]
  %v3310 = vld [vmem:[%s3307 + $0x8] sm:$0xf]
  %v3311 = vld [vmem:[%s3307 + $0xc] sm:$0xf]
  %v3312 = vld [vmem:[%s3307 + $0x10] sm:$0xf]
  %v3313 = vld [vmem:[%s3307 + $0x14] sm:$0xf]
  %v3314 = vld [vmem:[%s3307 + $0x18] sm:$0xf]
  %v3315 = vld [vmem:[%s3307 + $0x1c] sm:$0xf]
  %v3316 = vld [vmem:[%s3307 + $0x20] sm:$0xf]
  %v3317 = vld [vmem:[%s3307 + $0x24] sm:$0xf]
  %v3318 = vld [vmem:[%s3307 + $0x28] sm:$0xf]
  %v3319 = vld [vmem:[%s3307 + $0x2c] sm:$0xf]
  %v3320 = vld [vmem:[%s3307 + $0x30] sm:$0xf]
  %v3321 = vld [vmem:[%s3307 + $0x34] sm:$0xf]
  %v3322 = vld [vmem:[%s3307 + $0x38] sm:$0xf]
  %v3323 = vld [vmem:[%s3307 + $0x3c] sm:$0xf]
  %v3340 = vunpack.c.l.b16 %v3291
  %v3341 = vunpack.c.l.b16 %v3292
  %v3342 = vunpack.c.l.b16 %v3293
  %v3343 = vunpack.c.l.b16 %v3294
  %v3344 = vunpack.c.l.b16 %v3295
  %v3345 = vunpack.c.l.b16 %v3296
  %v3346 = vunpack.c.l.b16 %v3297
  %v3347 = vunpack.c.l.b16 %v3298
  %v3348 = vunpack.c.l.b16 %v3299
  %v3349 = vunpack.c.l.b16 %v3300
  %v3350 = vunpack.c.l.b16 %v3301
  %v3351 = vunpack.c.l.b16 %v3302
  %v3352 = vunpack.c.l.b16 %v3303
  %v3353 = vunpack.c.l.b16 %v3304
  %v3354 = vunpack.c.l.b16 %v3305
  %v3355 = vunpack.c.l.b16 %v3306
  %v3356 = vpack.c.b16 %v3341, %v3340
  %v3357 = vpack.c.b16 %v3343, %v3342
  %v3358 = vpack.c.b16 %v3345, %v3344
  %v3359 = vpack.c.b16 %v3347, %v3346
  %v3360 = vpack.c.b16 %v3349, %v3348
  %v3361 = vpack.c.b16 %v3351, %v3350
  %v3362 = vpack.c.b16 %v3353, %v3352
  %v3363 = vpack.c.b16 %v3355, %v3354
  %v3388 = vunpack.c.l.b16 %v3308
  %v3389 = vunpack.c.l.b16 %v3309
  %v3390 = vunpack.c.l.b16 %v3310
  %v3391 = vunpack.c.l.b16 %v3311
  %v3392 = vunpack.c.l.b16 %v3312
  %v3393 = vunpack.c.l.b16 %v3313
  %v3394 = vunpack.c.l.b16 %v3314
  %v3395 = vunpack.c.l.b16 %v3315
  %v3396 = vunpack.c.l.b16 %v3316
  %v3397 = vunpack.c.l.b16 %v3317
  %v3398 = vunpack.c.l.b16 %v3318
  %v3399 = vunpack.c.l.b16 %v3319
  %v3400 = vunpack.c.l.b16 %v3320
  %v3401 = vunpack.c.l.b16 %v3321
  %v3402 = vunpack.c.l.b16 %v3322
  %v3403 = vunpack.c.l.b16 %v3323
  %v3404 = vpack.c.b16 %v3389, %v3388
  %v3405 = vpack.c.b16 %v3391, %v3390
  %v3406 = vpack.c.b16 %v3393, %v3392
  %v3407 = vpack.c.b16 %v3395, %v3394
  %v3408 = vpack.c.b16 %v3397, %v3396
  %v3409 = vpack.c.b16 %v3399, %v3398
  %v3410 = vpack.c.b16 %v3401, %v3400
  %v3411 = vpack.c.b16 %v3403, %v3402
  %3420 = vmatprep.subr.bf16.mxu0 0
  %3421 = vmatpush1.bf16.msra.mxu0 %v3404
  %3422 = vmatprep.subr.bf16.mxu0 0
  %3423 = vmatpush1.bf16.msra.mxu0 %v3405
  %3424 = vmatprep.subr.bf16.mxu0 0
  %3425 = vmatpush1.bf16.msra.mxu0 %v3406
  %3426 = vmatprep.subr.bf16.mxu0 0
  %3427 = vmatpush1.bf16.msra.mxu0 %v3407
  %3428 = vmatprep.subr.bf16.mxu0 0
  %3429 = vmatpush1.bf16.msra.mxu0 %v3408
  %3430 = vmatprep.subr.bf16.mxu0 0
  %3431 = vmatpush1.bf16.msra.mxu0 %v3409
  %3432 = vmatprep.subr.bf16.mxu0 0
  %3433 = vmatpush1.bf16.msra.mxu0 %v3410
  %3434 = vmatprep.subr.bf16.mxu0 0
  %3435 = vmatpush1.bf16.msra.mxu0 %v3411
  %3436 = vmatprep.subr.bf16.mxu0 0
  %3437 = vmatpush1.bf16.msra.mxu0 0
  %3438 = vmatprep.subr.bf16.mxu0 0
  %3439 = vmatpush1.bf16.msra.mxu0 0
  %3440 = vmatprep.subr.bf16.mxu0 0
  %3441 = vmatpush1.bf16.msra.mxu0 0
  %3442 = vmatprep.subr.bf16.mxu0 0
  %3443 = vmatpush1.bf16.msra.mxu0 0
  %3444 = vmatprep.subr.bf16.mxu0 0
  %3445 = vmatpush1.bf16.msra.mxu0 0
  %3446 = vmatprep.subr.bf16.mxu0 0
  %3447 = vmatpush1.bf16.msra.mxu0 0
  %3448 = vmatprep.subr.bf16.mxu0 0
  %3449 = vmatpush1.bf16.msra.mxu0 0
  %3450 = vmatprep.subr.bf16.mxu0 0
  %3451 = vmatpush1.bf16.msra.mxu0 0
  %3452 = vmatprep.mubr.bf16.mxu0 0
  %3453 = vmatmul.mubr.bf16.gmra.mrb[0].mxu0 %v3356
  %v3454 = vpop.f32.mrb[0].mxu0
  %v3455 = vadd.f32 0.0, %v3454
  %v3456 = vpop.f32.mrb[0].mxu0
  %v3457 = vpop.f32.mrb[0].mxu0
  %v3458 = vadd.f32 0.0, %v3457
  %v3459 = vpop.f32.mrb[0].mxu0
  %3460 = vmatprep.mubr.bf16.mxu0 0
  %3461 = vmatmul.mubr.bf16.gmra.mrb[0].mxu0 %v3357
  %v3462 = vpop.f32.mrb[0].mxu0
  %v3463 = vadd.f32 0.0, %v3462
  %v3464 = vpop.f32.mrb[0].mxu0
  %v3465 = vpop.f32.mrb[0].mxu0
  %v3466 = vadd.f32 0.0, %v3465
  %v3467 = vpop.f32.mrb[0].mxu0
  %3468 = vmatprep.mubr.bf16.mxu0 0
  %3469 = vmatmul.mubr.bf16.gmra.mrb[0].mxu0 %v3358
  %v3470 = vpop.f32.mrb[0].mxu0
  %v3471 = vadd.f32 0.0, %v3470
  %v3472 = vpop.f32.mrb[0].mxu0
  %v3473 = vpop.f32.mrb[0].mxu0
  %v3474 = vadd.f32 0.0, %v3473
  %v3475 = vpop.f32.mrb[0].mxu0
  %3476 = vmatprep.mubr.bf16.mxu0 0
  %3477 = vmatmul.mubr.bf16.gmra.mrb[0].mxu0 %v3359
  %v3478 = vpop.f32.mrb[0].mxu0
  %v3479 = vadd.f32 0.0, %v3478
  %v3480 = vpop.f32.mrb[0].mxu0
  %v3481 = vpop.f32.mrb[0].mxu0
  %v3482 = vadd.f32 0.0, %v3481
  %v3483 = vpop.f32.mrb[0].mxu0
  %3484 = vmatprep.mubr.bf16.mxu0 0
  %3485 = vmatmul.mubr.bf16.gmra.mrb[0].mxu0 %v3360
  %v3486 = vpop.f32.mrb[0].mxu0
  %v3487 = vadd.f32 0.0, %v3486
  %v3488 = vpop.f32.mrb[0].mxu0
  %v3489 = vpop.f32.mrb[0].mxu0
  %v3490 = vadd.f32 0.0, %v3489
  %v3491 = vpop.f32.mrb[0].mxu0
  %3492 = vmatprep.mubr.bf16.mxu0 0
  %3493 = vmatmul.mubr.bf16.gmra.mrb[0].mxu0 %v3361
  %v3494 = vpop.f32.mrb[0].mxu0
  %v3495 = vadd.f32 0.0, %v3494
  %v3496 = vpop.f32.mrb[0].mxu0
  %v3497 = vpop.f32.mrb[0].mxu0
  %v3498 = vadd.f32 0.0, %v3497
  %v3499 = vpop.f32.mrb[0].mxu0
  %3500 = vmatprep.mubr.bf16.mxu0 0
  %3501 = vmatmul.mubr.bf16.gmra.mrb[0].mxu0 %v3362
  %v3502 = vpop.f32.mrb[0].mxu0
  %v3503 = vadd.f32 0.0, %v3502
  %v3504 = vpop.f32.mrb[0].mxu0
  %v3505 = vpop.f32.mrb[0].mxu0
  %v3506 = vadd.f32 0.0, %v3505
  %v3507 = vpop.f32.mrb[0].mxu0
  %3508 = vmatprep.mubr.bf16.mxu0 0
  %3509 = vmatmul.mubr.bf16.gmra.mrb[0].mxu0 %v3363
  %v3510 = vpop.f32.mrb[0].mxu0
  %v3511 = vadd.f32 0.0, %v3510
  %v3512 = vpop.f32.mrb[0].mxu0
  %v3513 = vpop.f32.mrb[0].mxu0
  %v3514 = vadd.f32 0.0, %v3513
  %v3515 = vpop.f32.mrb[0].mxu0
  %3516 = vdwg.mxu0
  %v3517 = vadd.f32 %v3275, %v3455
  %v3518 = vadd.f32 %v3276, %v3458
  %v3519 = vadd.f32 %v3277, %v3463
  %v3520 = vadd.f32 %v3278, %v3466
  %v3521 = vadd.f32 %v3279, %v3471
  %v3522 = vadd.f32 %v3280, %v3474
  %v3523 = vadd.f32 %v3281, %v3479
  %v3524 = vadd.f32 %v3282, %v3482
  %v3525 = vadd.f32 %v3283, %v3487
  %v3526 = vadd.f32 %v3284, %v3490
  %v3527 = vadd.f32 %v3285, %v3495
  %v3528 = vadd.f32 %v3286, %v3498
  %v3529 = vadd.f32 %v3287, %v3503
  %v3530 = vadd.f32 %v3288, %v3506
  %v3531 = vadd.f32 %v3289, %v3511
  %v3532 = vadd.f32 %v3290, %v3514
  %v3533 = vld [vmem:[%s1887] sm:$0xf]
  %v3534 = vld [vmem:[%s1887 + $0x8] sm:$0xf]
  %v3535 = vld [vmem:[%s1887 + $0x10] sm:$0xf]
  %v3536 = vld [vmem:[%s1887 + $0x18] sm:$0xf]
  %v3537 = vld [vmem:[%s1887 + $0x20] sm:$0xf]
  %v3538 = vld [vmem:[%s1887 + $0x28] sm:$0xf]
  %v3539 = vld [vmem:[%s1887 + $0x30] sm:$0xf]
  %v3540 = vld [vmem:[%s1887 + $0x38] sm:$0xf]
  %v3541 = vld [vmem:[%s1887 + $0x120] sm:$0xf]
  %v3542 = vld [vmem:[%s1887 + $0x128] sm:$0xf]
  %v3543 = vld [vmem:[%s1887 + $0x130] sm:$0xf]
  %v3544 = vld [vmem:[%s1887 + $0x138] sm:$0xf]
  %v3545 = vld [vmem:[%s1887 + $0x140] sm:$0xf]
  %v3546 = vld [vmem:[%s1887 + $0x148] sm:$0xf]
  %v3547 = vld [vmem:[%s1887 + $0x150] sm:$0xf]
  %v3548 = vld [vmem:[%s1887 + $0x158] sm:$0xf]
  %s3549 = scalar_lea.vmem %s3, 320
  %v3550 = vld [vmem:[%s3549] sm:$0xf]
  %v3551 = vld [vmem:[%s3549 + $0x4] sm:$0xf]
  %v3552 = vld [vmem:[%s3549 + $0x8] sm:$0xf]
  %v3553 = vld [vmem:[%s3549 + $0xc] sm:$0xf]
  %v3554 = vld [vmem:[%s3549 + $0x10] sm:$0xf]
  %v3555 = vld [vmem:[%s3549 + $0x14] sm:$0xf]
  %v3556 = vld [vmem:[%s3549 + $0x18] sm:$0xf]
  %v3557 = vld [vmem:[%s3549 + $0x1c] sm:$0xf]
  %v3558 = vld [vmem:[%s3549 + $0x20] sm:$0xf]
  %v3559 = vld [vmem:[%s3549 + $0x24] sm:$0xf]
  %v3560 = vld [vmem:[%s3549 + $0x28] sm:$0xf]
  %v3561 = vld [vmem:[%s3549 + $0x2c] sm:$0xf]
  %v3562 = vld [vmem:[%s3549 + $0x30] sm:$0xf]
  %v3563 = vld [vmem:[%s3549 + $0x34] sm:$0xf]
  %v3564 = vld [vmem:[%s3549 + $0x38] sm:$0xf]
  %v3565 = vld [vmem:[%s3549 + $0x3c] sm:$0xf]
  %v3582 = vunpack.c.l.b16 %v3533
  %v3583 = vunpack.c.l.b16 %v3534
  %v3584 = vunpack.c.l.b16 %v3535
  %v3585 = vunpack.c.l.b16 %v3536
  %v3586 = vunpack.c.l.b16 %v3537
  %v3587 = vunpack.c.l.b16 %v3538
  %v3588 = vunpack.c.l.b16 %v3539
  %v3589 = vunpack.c.l.b16 %v3540
  %v3590 = vunpack.c.l.b16 %v3541
  %v3591 = vunpack.c.l.b16 %v3542
  %v3592 = vunpack.c.l.b16 %v3543
  %v3593 = vunpack.c.l.b16 %v3544
  %v3594 = vunpack.c.l.b16 %v3545
  %v3595 = vunpack.c.l.b16 %v3546
  %v3596 = vunpack.c.l.b16 %v3547
  %v3597 = vunpack.c.l.b16 %v3548
  %v3598 = vpack.c.b16 %v3583, %v3582
  %v3599 = vpack.c.b16 %v3585, %v3584
  %v3600 = vpack.c.b16 %v3587, %v3586
  %v3601 = vpack.c.b16 %v3589, %v3588
  %v3602 = vpack.c.b16 %v3591, %v3590
  %v3603 = vpack.c.b16 %v3593, %v3592
  %v3604 = vpack.c.b16 %v3595, %v3594
  %v3605 = vpack.c.b16 %v3597, %v3596
  %v3630 = vunpack.c.l.b16 %v3550
  %v3631 = vunpack.c.l.b16 %v3551
  %v3632 = vunpack.c.l.b16 %v3552
  %v3633 = vunpack.c.l.b16 %v3553
  %v3634 = vunpack.c.l.b16 %v3554
  %v3635 = vunpack.c.l.b16 %v3555
  %v3636 = vunpack.c.l.b16 %v3556
  %v3637 = vunpack.c.l.b16 %v3557
  %v3638 = vunpack.c.l.b16 %v3558
  %v3639 = vunpack.c.l.b16 %v3559
  %v3640 = vunpack.c.l.b16 %v3560
  %v3641 = vunpack.c.l.b16 %v3561
  %v3642 = vunpack.c.l.b16 %v3562
  %v3643 = vunpack.c.l.b16 %v3563
  %v3644 = vunpack.c.l.b16 %v3564
  %v3645 = vunpack.c.l.b16 %v3565
  %v3646 = vpack.c.b16 %v3631, %v3630
  %v3647 = vpack.c.b16 %v3633, %v3632
  %v3648 = vpack.c.b16 %v3635, %v3634
  %v3649 = vpack.c.b16 %v3637, %v3636
  %v3650 = vpack.c.b16 %v3639, %v3638
  %v3651 = vpack.c.b16 %v3641, %v3640
  %v3652 = vpack.c.b16 %v3643, %v3642
  %v3653 = vpack.c.b16 %v3645, %v3644
  %3662 = vmatprep.subr.bf16.mxu0 0
  %3663 = vmatpush1.bf16.msra.mxu0 %v3646
  %3664 = vmatprep.subr.bf16.mxu0 0
  %3665 = vmatpush1.bf16.msra.mxu0 %v3647
  %3666 = vmatprep.subr.bf16.mxu0 0
  %3667 = vmatpush1.bf16.msra.mxu0 %v3648
  %3668 = vmatprep.subr.bf16.mxu0 0
  %3669 = vmatpush1.bf16.msra.mxu0 %v3649
  %3670 = vmatprep.subr.bf16.mxu0 0
  %3671 = vmatpush1.bf16.msra.mxu0 %v3650
  %3672 = vmatprep.subr.bf16.mxu0 0
  %3673 = vmatpush1.bf16.msra.mxu0 %v3651
  %3674 = vmatprep.subr.bf16.mxu0 0
  %3675 = vmatpush1.bf16.msra.mxu0 %v3652
  %3676 = vmatprep.subr.bf16.mxu0 0
  %3677 = vmatpush1.bf16.msra.mxu0 %v3653
  %3678 = vmatprep.subr.bf16.mxu0 0
  %3679 = vmatpush1.bf16.msra.mxu0 0
  %3680 = vmatprep.subr.bf16.mxu0 0
  %3681 = vmatpush1.bf16.msra.mxu0 0
  %3682 = vmatprep.subr.bf16.mxu0 0
  %3683 = vmatpush1.bf16.msra.mxu0 0
  %3684 = vmatprep.subr.bf16.mxu0 0
  %3685 = vmatpush1.bf16.msra.mxu0 0
  %3686 = vmatprep.subr.bf16.mxu0 0
  %3687 = vmatpush1.bf16.msra.mxu0 0
  %3688 = vmatprep.subr.bf16.mxu0 0
  %3689 = vmatpush1.bf16.msra.mxu0 0
  %3690 = vmatprep.subr.bf16.mxu0 0
  %3691 = vmatpush1.bf16.msra.mxu0 0
  %3692 = vmatprep.subr.bf16.mxu0 0
  %3693 = vmatpush1.bf16.msra.mxu0 0
  %3694 = vmatprep.mubr.bf16.mxu0 0
  %3695 = vmatmul.mubr.bf16.gmra.mrb[0].mxu0 %v3598
  %v3696 = vpop.f32.mrb[0].mxu0
  %v3697 = vadd.f32 0.0, %v3696
  %v3698 = vpop.f32.mrb[0].mxu0
  %v3699 = vpop.f32.mrb[0].mxu0
  %v3700 = vadd.f32 0.0, %v3699
  %v3701 = vpop.f32.mrb[0].mxu0
  %3702 = vmatprep.mubr.bf16.mxu0 0
  %3703 = vmatmul.mubr.bf16.gmra.mrb[0].mxu0 %v3599
  %v3704 = vpop.f32.mrb[0].mxu0
  %v3705 = vadd.f32 0.0, %v3704
  %v3706 = vpop.f32.mrb[0].mxu0
  %v3707 = vpop.f32.mrb[0].mxu0
  %v3708 = vadd.f32 0.0, %v3707
  %v3709 = vpop.f32.mrb[0].mxu0
  %3710 = vmatprep.mubr.bf16.mxu0 0
  %3711 = vmatmul.mubr.bf16.gmra.mrb[0].mxu0 %v3600
  %v3712 = vpop.f32.mrb[0].mxu0
  %v3713 = vadd.f32 0.0, %v3712
  %v3714 = vpop.f32.mrb[0].mxu0
  %v3715 = vpop.f32.mrb[0].mxu0
  %v3716 = vadd.f32 0.0, %v3715
  %v3717 = vpop.f32.mrb[0].mxu0
  %3718 = vmatprep.mubr.bf16.mxu0 0
  %3719 = vmatmul.mubr.bf16.gmra.mrb[0].mxu0 %v3601
  %v3720 = vpop.f32.mrb[0].mxu0
  %v3721 = vadd.f32 0.0, %v3720
  %v3722 = vpop.f32.mrb[0].mxu0
  %v3723 = vpop.f32.mrb[0].mxu0
  %v3724 = vadd.f32 0.0, %v3723
  %v3725 = vpop.f32.mrb[0].mxu0
  %3726 = vmatprep.mubr.bf16.mxu0 0
  %3727 = vmatmul.mubr.bf16.gmra.mrb[0].mxu0 %v3602
  %v3728 = vpop.f32.mrb[0].mxu0
  %v3729 = vadd.f32 0.0, %v3728
  %v3730 = vpop.f32.mrb[0].mxu0
  %v3731 = vpop.f32.mrb[0].mxu0
  %v3732 = vadd.f32 0.0, %v3731
  %v3733 = vpop.f32.mrb[0].mxu0
  %3734 = vmatprep.mubr.bf16.mxu0 0
  %3735 = vmatmul.mubr.bf16.gmra.mrb[0].mxu0 %v3603
  %v3736 = vpop.f32.mrb[0].mxu0
  %v3737 = vadd.f32 0.0, %v3736
  %v3738 = vpop.f32.mrb[0].mxu0
  %v3739 = vpop.f32.mrb[0].mxu0
  %v3740 = vadd.f32 0.0, %v3739
  %v3741 = vpop.f32.mrb[0].mxu0
  %3742 = vmatprep.mubr.bf16.mxu0 0
  %3743 = vmatmul.mubr.bf16.gmra.mrb[0].mxu0 %v3604
  %v3744 = vpop.f32.mrb[0].mxu0
  %v3745 = vadd.f32 0.0, %v3744
  %v3746 = vpop.f32.mrb[0].mxu0
  %v3747 = vpop.f32.mrb[0].mxu0
  %v3748 = vadd.f32 0.0, %v3747
  %v3749 = vpop.f32.mrb[0].mxu0
  %3750 = vmatprep.mubr.bf16.mxu0 0
  %3751 = vmatmul.mubr.bf16.gmra.mrb[0].mxu0 %v3605
  %v3752 = vpop.f32.mrb[0].mxu0
  %v3753 = vadd.f32 0.0, %v3752
  %v3754 = vpop.f32.mrb[0].mxu0
  %v3755 = vpop.f32.mrb[0].mxu0
  %v3756 = vadd.f32 0.0, %v3755
  %v3757 = vpop.f32.mrb[0].mxu0
  %3758 = vdwg.mxu0
  %v3759 = vadd.f32 %v3517, %v3697
  %v3760 = vadd.f32 %v3518, %v3700
  %v3761 = vadd.f32 %v3519, %v3705
  %v3762 = vadd.f32 %v3520, %v3708
  %v3763 = vadd.f32 %v3521, %v3713
  %v3764 = vadd.f32 %v3522, %v3716
  %v3765 = vadd.f32 %v3523, %v3721
  %v3766 = vadd.f32 %v3524, %v3724
  %v3767 = vadd.f32 %v3525, %v3729
  %v3768 = vadd.f32 %v3526, %v3732
  %v3769 = vadd.f32 %v3527, %v3737
  %v3770 = vadd.f32 %v3528, %v3740
  %v3771 = vadd.f32 %v3529, %v3745
  %v3772 = vadd.f32 %v3530, %v3748
  %v3773 = vadd.f32 %v3531, %v3753
  %v3774 = vadd.f32 %v3532, %v3756
  %v3775 = vld [vmem:[%s1790] sm:$0xf]
  %v3776 = vld [vmem:[%s1790 + $0x4] sm:$0x1]
  %v3777 = vld [vmem:[%s1790 + $0x8] sm:$0xf]
  %v3778 = vld [vmem:[%s1790 + $0xc] sm:$0x1]
  %v3779 = vld [vmem:[%s1790 + $0x10] sm:$0xf]
  %v3780 = vld [vmem:[%s1790 + $0x14] sm:$0x1]
  %v3781 = vld [vmem:[%s1790 + $0x18] sm:$0xf]
  %v3782 = vld [vmem:[%s1790 + $0x1c] sm:$0x1]
  %v3783 = vld [vmem:[%s1790 + $0x20] sm:$0xf]
  %v3784 = vld [vmem:[%s1790 + $0x24] sm:$0x1]
  %v3785 = vld [vmem:[%s1790 + $0x28] sm:$0xf]
  %v3786 = vld [vmem:[%s1790 + $0x2c] sm:$0x1]
  %v3787 = vld [vmem:[%s1790 + $0x30] sm:$0xf]
  %v3788 = vld [vmem:[%s1790 + $0x34] sm:$0x1]
  %v3789 = vld [vmem:[%s1790 + $0x38] sm:$0xf]
  %v3790 = vld [vmem:[%s1790 + $0x3c] sm:$0x1]
  %v3791 = vld [vmem:[%s1790 + $0x120] sm:$0xf]
  %v3792 = vld [vmem:[%s1790 + $0x124] sm:$0x1]
  %v3793 = vld [vmem:[%s1790 + $0x128] sm:$0xf]
  %v3794 = vld [vmem:[%s1790 + $0x12c] sm:$0x1]
  %v3795 = vld [vmem:[%s1790 + $0x130] sm:$0xf]
  %v3796 = vld [vmem:[%s1790 + $0x134] sm:$0x1]
  %v3797 = vld [vmem:[%s1790 + $0x138] sm:$0xf]
  %v3798 = vld [vmem:[%s1790 + $0x13c] sm:$0x1]
  %v3799 = vld [vmem:[%s1790 + $0x140] sm:$0xf]
  %v3800 = vld [vmem:[%s1790 + $0x144] sm:$0x1]
  %v3801 = vld [vmem:[%s1790 + $0x148] sm:$0xf]
  %v3802 = vld [vmem:[%s1790 + $0x14c] sm:$0x1]
  %v3803 = vld [vmem:[%s1790 + $0x150] sm:$0xf]
  %v3804 = vld [vmem:[%s1790 + $0x154] sm:$0x1]
  %v3805 = vld [vmem:[%s1790 + $0x158] sm:$0xf]
  %v3806 = vld [vmem:[%s1790 + $0x15c] sm:$0x1]
  %v3808 = vshrl.u32 %v3775, 16
  %v3810 = vrot.slane %v3808, 4
  %v3811 = vshll.u32 %v3775, 16
  %v3813 = vrot.slane %v3811, 5
  %v3814 = vor.u32 %v3810, %v3813
  %v3815 = vrot.slane %v3814, 4
  %v3817 = vshll.u32 %v3776, 16
  %v3819 = vrot.slane %v3817, 5
  %v3820 = vsel %vm2390, %v3815, %v3819
  %v3822 = vshrl.u32 %v3777, 16
  %v3824 = vrot.slane %v3822, 4
  %v3825 = vshll.u32 %v3777, 16
  %v3827 = vrot.slane %v3825, 5
  %v3828 = vor.u32 %v3824, %v3827
  %v3829 = vrot.slane %v3828, 4
  %v3831 = vshll.u32 %v3778, 16
  %v3833 = vrot.slane %v3831, 5
  %v3834 = vsel %vm2390, %v3829, %v3833
  %v3836 = vshrl.u32 %v3779, 16
  %v3838 = vrot.slane %v3836, 4
  %v3839 = vshll.u32 %v3779, 16
  %v3841 = vrot.slane %v3839, 5
  %v3842 = vor.u32 %v3838, %v3841
  %v3843 = vrot.slane %v3842, 4
  %v3845 = vshll.u32 %v3780, 16
  %v3847 = vrot.slane %v3845, 5
  %v3848 = vsel %vm2390, %v3843, %v3847
  %v3850 = vshrl.u32 %v3781, 16
  %v3852 = vrot.slane %v3850, 4
  %v3853 = vshll.u32 %v3781, 16
  %v3855 = vrot.slane %v3853, 5
  %v3856 = vor.u32 %v3852, %v3855
  %v3857 = vrot.slane %v3856, 4
  %v3859 = vshll.u32 %v3782, 16
  %v3861 = vrot.slane %v3859, 5
  %v3862 = vsel %vm2390, %v3857, %v3861
  %v3864 = vshrl.u32 %v3783, 16
  %v3866 = vrot.slane %v3864, 4
  %v3867 = vshll.u32 %v3783, 16
  %v3869 = vrot.slane %v3867, 5
  %v3870 = vor.u32 %v3866, %v3869
  %v3871 = vrot.slane %v3870, 4
  %v3873 = vshll.u32 %v3784, 16
  %v3875 = vrot.slane %v3873, 5
  %v3876 = vsel %vm2390, %v3871, %v3875
  %v3878 = vshrl.u32 %v3785, 16
  %v3880 = vrot.slane %v3878, 4
  %v3881 = vshll.u32 %v3785, 16
  %v3883 = vrot.slane %v3881, 5
  %v3884 = vor.u32 %v3880, %v3883
  %v3885 = vrot.slane %v3884, 4
  %v3887 = vshll.u32 %v3786, 16
  %v3889 = vrot.slane %v3887, 5
  %v3890 = vsel %vm2390, %v3885, %v3889
  %v3892 = vshrl.u32 %v3787, 16
  %v3894 = vrot.slane %v3892, 4
  %v3895 = vshll.u32 %v3787, 16
  %v3897 = vrot.slane %v3895, 5
  %v3898 = vor.u32 %v3894, %v3897
  %v3899 = vrot.slane %v3898, 4
  %v3901 = vshll.u32 %v3788, 16
  %v3903 = vrot.slane %v3901, 5
  %v3904 = vsel %vm2390, %v3899, %v3903
  %v3906 = vshrl.u32 %v3789, 16
  %v3908 = vrot.slane %v3906, 4
  %v3909 = vshll.u32 %v3789, 16
  %v3911 = vrot.slane %v3909, 5
  %v3912 = vor.u32 %v3908, %v3911
  %v3913 = vrot.slane %v3912, 4
  %v3915 = vshll.u32 %v3790, 16
  %v3917 = vrot.slane %v3915, 5
  %v3918 = vsel %vm2390, %v3913, %v3917
  %v3920 = vshrl.u32 %v3791, 16
  %v3922 = vrot.slane %v3920, 4
  %v3923 = vshll.u32 %v3791, 16
  %v3925 = vrot.slane %v3923, 5
  %v3926 = vor.u32 %v3922, %v3925
  %v3927 = vrot.slane %v3926, 4
  %v3929 = vshll.u32 %v3792, 16
  %v3931 = vrot.slane %v3929, 5
  %v3932 = vsel %vm2390, %v3927, %v3931
  %v3934 = vshrl.u32 %v3793, 16
  %v3936 = vrot.slane %v3934, 4
  %v3937 = vshll.u32 %v3793, 16
  %v3939 = vrot.slane %v3937, 5
  %v3940 = vor.u32 %v3936, %v3939
  %v3941 = vrot.slane %v3940, 4
  %v3943 = vshll.u32 %v3794, 16
  %v3945 = vrot.slane %v3943, 5
  %v3946 = vsel %vm2390, %v3941, %v3945
  %v3948 = vshrl.u32 %v3795, 16
  %v3950 = vrot.slane %v3948, 4
  %v3951 = vshll.u32 %v3795, 16
  %v3953 = vrot.slane %v3951, 5
  %v3954 = vor.u32 %v3950, %v3953
  %v3955 = vrot.slane %v3954, 4
  %v3957 = vshll.u32 %v3796, 16
  %v3959 = vrot.slane %v3957, 5
  %v3960 = vsel %vm2390, %v3955, %v3959
  %v3962 = vshrl.u32 %v3797, 16
  %v3964 = vrot.slane %v3962, 4
  %v3965 = vshll.u32 %v3797, 16
  %v3967 = vrot.slane %v3965, 5
  %v3968 = vor.u32 %v3964, %v3967
  %v3969 = vrot.slane %v3968, 4
  %v3971 = vshll.u32 %v3798, 16
  %v3973 = vrot.slane %v3971, 5
  %v3974 = vsel %vm2390, %v3969, %v3973
  %v3976 = vshrl.u32 %v3799, 16
  %v3978 = vrot.slane %v3976, 4
  %v3979 = vshll.u32 %v3799, 16
  %v3981 = vrot.slane %v3979, 5
  %v3982 = vor.u32 %v3978, %v3981
  %v3983 = vrot.slane %v3982, 4
  %v3985 = vshll.u32 %v3800, 16
  %v3987 = vrot.slane %v3985, 5
  %v3988 = vsel %vm2390, %v3983, %v3987
  %v3990 = vshrl.u32 %v3801, 16
  %v3992 = vrot.slane %v3990, 4
  %v3993 = vshll.u32 %v3801, 16
  %v3995 = vrot.slane %v3993, 5
  %v3996 = vor.u32 %v3992, %v3995
  %v3997 = vrot.slane %v3996, 4
  %v3999 = vshll.u32 %v3802, 16
  %v4001 = vrot.slane %v3999, 5
  %v4002 = vsel %vm2390, %v3997, %v4001
  %v4004 = vshrl.u32 %v3803, 16
  %v4006 = vrot.slane %v4004, 4
  %v4007 = vshll.u32 %v3803, 16
  %v4009 = vrot.slane %v4007, 5
  %v4010 = vor.u32 %v4006, %v4009
  %v4011 = vrot.slane %v4010, 4
  %v4013 = vshll.u32 %v3804, 16
  %v4015 = vrot.slane %v4013, 5
  %v4016 = vsel %vm2390, %v4011, %v4015
  %v4018 = vshrl.u32 %v3805, 16
  %v4020 = vrot.slane %v4018, 4
  %v4021 = vshll.u32 %v3805, 16
  %v4023 = vrot.slane %v4021, 5
  %v4024 = vor.u32 %v4020, %v4023
  %v4025 = vrot.slane %v4024, 4
  %v4027 = vshll.u32 %v3806, 16
  %v4029 = vrot.slane %v4027, 5
  %v4030 = vsel %vm2390, %v4025, %v4029
  %s4031 = scalar_lea.vmem %s3, 384
  %v4032 = vld [vmem:[%s4031] sm:$0xf]
  %v4033 = vld [vmem:[%s4031 + $0x4] sm:$0xf]
  %v4034 = vld [vmem:[%s4031 + $0x8] sm:$0xf]
  %v4035 = vld [vmem:[%s4031 + $0xc] sm:$0xf]
  %v4036 = vld [vmem:[%s4031 + $0x10] sm:$0xf]
  %v4037 = vld [vmem:[%s4031 + $0x14] sm:$0xf]
  %v4038 = vld [vmem:[%s4031 + $0x18] sm:$0xf]
  %v4039 = vld [vmem:[%s4031 + $0x1c] sm:$0xf]
  %v4040 = vld [vmem:[%s4031 + $0x20] sm:$0xf]
  %v4041 = vld [vmem:[%s4031 + $0x24] sm:$0xf]
  %v4042 = vld [vmem:[%s4031 + $0x28] sm:$0xf]
  %v4043 = vld [vmem:[%s4031 + $0x2c] sm:$0xf]
  %v4044 = vld [vmem:[%s4031 + $0x30] sm:$0xf]
  %v4045 = vld [vmem:[%s4031 + $0x34] sm:$0xf]
  %v4046 = vld [vmem:[%s4031 + $0x38] sm:$0xf]
  %v4047 = vld [vmem:[%s4031 + $0x3c] sm:$0xf]
  %v4048 = vunpack.c.l.b16 %v3820
  %v4049 = vunpack.c.l.b16 %v3834
  %v4050 = vunpack.c.l.b16 %v3848
  %v4051 = vunpack.c.l.b16 %v3862
  %v4052 = vunpack.c.l.b16 %v3876
  %v4053 = vunpack.c.l.b16 %v3890
  %v4054 = vunpack.c.l.b16 %v3904
  %v4055 = vunpack.c.l.b16 %v3918
  %v4056 = vunpack.c.l.b16 %v3932
  %v4057 = vunpack.c.l.b16 %v3946
  %v4058 = vunpack.c.l.b16 %v3960
  %v4059 = vunpack.c.l.b16 %v3974
  %v4060 = vunpack.c.l.b16 %v3988
  %v4061 = vunpack.c.l.b16 %v4002
  %v4062 = vunpack.c.l.b16 %v4016
  %v4063 = vunpack.c.l.b16 %v4030
  %v4064 = vpack.c.b16 %v4049, %v4048
  %v4065 = vpack.c.b16 %v4051, %v4050
  %v4066 = vpack.c.b16 %v4053, %v4052
  %v4067 = vpack.c.b16 %v4055, %v4054
  %v4068 = vpack.c.b16 %v4057, %v4056
  %v4069 = vpack.c.b16 %v4059, %v4058
  %v4070 = vpack.c.b16 %v4061, %v4060
  %v4071 = vpack.c.b16 %v4063, %v4062
  %v4096 = vunpack.c.l.b16 %v4032
  %v4097 = vunpack.c.l.b16 %v4033
  %v4098 = vunpack.c.l.b16 %v4034
  %v4099 = vunpack.c.l.b16 %v4035
  %v4100 = vunpack.c.l.b16 %v4036
  %v4101 = vunpack.c.l.b16 %v4037
  %v4102 = vunpack.c.l.b16 %v4038
  %v4103 = vunpack.c.l.b16 %v4039
  %v4104 = vunpack.c.l.b16 %v4040
  %v4105 = vunpack.c.l.b16 %v4041
  %v4106 = vunpack.c.l.b16 %v4042
  %v4107 = vunpack.c.l.b16 %v4043
  %v4108 = vunpack.c.l.b16 %v4044
  %v4109 = vunpack.c.l.b16 %v4045
  %v4110 = vunpack.c.l.b16 %v4046
  %v4111 = vunpack.c.l.b16 %v4047
  %v4112 = vpack.c.b16 %v4097, %v4096
  %v4113 = vpack.c.b16 %v4099, %v4098
  %v4114 = vpack.c.b16 %v4101, %v4100
  %v4115 = vpack.c.b16 %v4103, %v4102
  %v4116 = vpack.c.b16 %v4105, %v4104
  %v4117 = vpack.c.b16 %v4107, %v4106
  %v4118 = vpack.c.b16 %v4109, %v4108
  %v4119 = vpack.c.b16 %v4111, %v4110
  %4128 = vmatprep.subr.bf16.mxu0 0
  %4129 = vmatpush1.bf16.msra.mxu0 %v4112
  %4130 = vmatprep.subr.bf16.mxu0 0
  %4131 = vmatpush1.bf16.msra.mxu0 %v4113
  %4132 = vmatprep.subr.bf16.mxu0 0
  %4133 = vmatpush1.bf16.msra.mxu0 %v4114
  %4134 = vmatprep.subr.bf16.mxu0 0
  %4135 = vmatpush1.bf16.msra.mxu0 %v4115
  %4136 = vmatprep.subr.bf16.mxu0 0
  %4137 = vmatpush1.bf16.msra.mxu0 %v4116
  %4138 = vmatprep.subr.bf16.mxu0 0
  %4139 = vmatpush1.bf16.msra.mxu0 %v4117
  %4140 = vmatprep.subr.bf16.mxu0 0
  %4141 = vmatpush1.bf16.msra.mxu0 %v4118
  %4142 = vmatprep.subr.bf16.mxu0 0
  %4143 = vmatpush1.bf16.msra.mxu0 %v4119
  %4144 = vmatprep.subr.bf16.mxu0 0
  %4145 = vmatpush1.bf16.msra.mxu0 0
  %4146 = vmatprep.subr.bf16.mxu0 0
  %4147 = vmatpush1.bf16.msra.mxu0 0
  %4148 = vmatprep.subr.bf16.mxu0 0
  %4149 = vmatpush1.bf16.msra.mxu0 0
  %4150 = vmatprep.subr.bf16.mxu0 0
  %4151 = vmatpush1.bf16.msra.mxu0 0
  %4152 = vmatprep.subr.bf16.mxu0 0
  %4153 = vmatpush1.bf16.msra.mxu0 0
  %4154 = vmatprep.subr.bf16.mxu0 0
  %4155 = vmatpush1.bf16.msra.mxu0 0
  %4156 = vmatprep.subr.bf16.mxu0 0
  %4157 = vmatpush1.bf16.msra.mxu0 0
  %4158 = vmatprep.subr.bf16.mxu0 0
  %4159 = vmatpush1.bf16.msra.mxu0 0
  %4160 = vmatprep.mubr.bf16.mxu0 0
  %4161 = vmatmul.mubr.bf16.gmra.mrb[0].mxu0 %v4064
  %v4162 = vpop.f32.mrb[0].mxu0
  %v4163 = vadd.f32 0.0, %v4162
  %v4164 = vpop.f32.mrb[0].mxu0
  %v4165 = vpop.f32.mrb[0].mxu0
  %v4166 = vadd.f32 0.0, %v4165
  %v4167 = vpop.f32.mrb[0].mxu0
  %4168 = vmatprep.mubr.bf16.mxu0 0
  %4169 = vmatmul.mubr.bf16.gmra.mrb[0].mxu0 %v4065
  %v4170 = vpop.f32.mrb[0].mxu0
  %v4171 = vadd.f32 0.0, %v4170
  %v4172 = vpop.f32.mrb[0].mxu0
  %v4173 = vpop.f32.mrb[0].mxu0
  %v4174 = vadd.f32 0.0, %v4173
  %v4175 = vpop.f32.mrb[0].mxu0
  %4176 = vmatprep.mubr.bf16.mxu0 0
  %4177 = vmatmul.mubr.bf16.gmra.mrb[0].mxu0 %v4066
  %v4178 = vpop.f32.mrb[0].mxu0
  %v4179 = vadd.f32 0.0, %v4178
  %v4180 = vpop.f32.mrb[0].mxu0
  %v4181 = vpop.f32.mrb[0].mxu0
  %v4182 = vadd.f32 0.0, %v4181
  %v4183 = vpop.f32.mrb[0].mxu0
  %4184 = vmatprep.mubr.bf16.mxu0 0
  %4185 = vmatmul.mubr.bf16.gmra.mrb[0].mxu0 %v4067
  %v4186 = vpop.f32.mrb[0].mxu0
  %v4187 = vadd.f32 0.0, %v4186
  %v4188 = vpop.f32.mrb[0].mxu0
  %v4189 = vpop.f32.mrb[0].mxu0
  %v4190 = vadd.f32 0.0, %v4189
  %v4191 = vpop.f32.mrb[0].mxu0
  %4192 = vmatprep.mubr.bf16.mxu0 0
  %4193 = vmatmul.mubr.bf16.gmra.mrb[0].mxu0 %v4068
  %v4194 = vpop.f32.mrb[0].mxu0
  %v4195 = vadd.f32 0.0, %v4194
  %v4196 = vpop.f32.mrb[0].mxu0
  %v4197 = vpop.f32.mrb[0].mxu0
  %v4198 = vadd.f32 0.0, %v4197
  %v4199 = vpop.f32.mrb[0].mxu0
  %4200 = vmatprep.mubr.bf16.mxu0 0
  %4201 = vmatmul.mubr.bf16.gmra.mrb[0].mxu0 %v4069
  %v4202 = vpop.f32.mrb[0].mxu0
  %v4203 = vadd.f32 0.0, %v4202
  %v4204 = vpop.f32.mrb[0].mxu0
  %v4205 = vpop.f32.mrb[0].mxu0
  %v4206 = vadd.f32 0.0, %v4205
  %v4207 = vpop.f32.mrb[0].mxu0
  %4208 = vmatprep.mubr.bf16.mxu0 0
  %4209 = vmatmul.mubr.bf16.gmra.mrb[0].mxu0 %v4070
  %v4210 = vpop.f32.mrb[0].mxu0
  %v4211 = vadd.f32 0.0, %v4210
  %v4212 = vpop.f32.mrb[0].mxu0
  %v4213 = vpop.f32.mrb[0].mxu0
  %v4214 = vadd.f32 0.0, %v4213
  %v4215 = vpop.f32.mrb[0].mxu0
  %4216 = vmatprep.mubr.bf16.mxu0 0
  %4217 = vmatmul.mubr.bf16.gmra.mrb[0].mxu0 %v4071
  %v4218 = vpop.f32.mrb[0].mxu0
  %v4219 = vadd.f32 0.0, %v4218
  %v4220 = vpop.f32.mrb[0].mxu0
  %v4221 = vpop.f32.mrb[0].mxu0
  %v4222 = vadd.f32 0.0, %v4221
  %v4223 = vpop.f32.mrb[0].mxu0
  %4224 = vdwg.mxu0
  %v4225 = vadd.f32 %v3759, %v4163
  %v4226 = vadd.f32 %v3760, %v4166
  %v4227 = vadd.f32 %v3761, %v4171
  %v4228 = vadd.f32 %v3762, %v4174
  %v4229 = vadd.f32 %v3763, %v4179
  %v4230 = vadd.f32 %v3764, %v4182
  %v4231 = vadd.f32 %v3765, %v4187
  %v4232 = vadd.f32 %v3766, %v4190
  %v4233 = vadd.f32 %v3767, %v4195
  %v4234 = vadd.f32 %v3768, %v4198
  %v4235 = vadd.f32 %v3769, %v4203
  %v4236 = vadd.f32 %v3770, %v4206
  %v4237 = vadd.f32 %v3771, %v4211
  %v4238 = vadd.f32 %v3772, %v4214
  %v4239 = vadd.f32 %v3773, %v4219
  %v4240 = vadd.f32 %v3774, %v4222
  %v4241 = vld [vmem:[%s1887] sm:$0xf]
  %v4242 = vld [vmem:[%s1887 + $0x4] sm:$0x1]
  %v4243 = vld [vmem:[%s1887 + $0x8] sm:$0xf]
  %v4244 = vld [vmem:[%s1887 + $0xc] sm:$0x1]
  %v4245 = vld [vmem:[%s1887 + $0x10] sm:$0xf]
  %v4246 = vld [vmem:[%s1887 + $0x14] sm:$0x1]
  %v4247 = vld [vmem:[%s1887 + $0x18] sm:$0xf]
  %v4248 = vld [vmem:[%s1887 + $0x1c] sm:$0x1]
  %v4249 = vld [vmem:[%s1887 + $0x20] sm:$0xf]
  %v4250 = vld [vmem:[%s1887 + $0x24] sm:$0x1]
  %v4251 = vld [vmem:[%s1887 + $0x28] sm:$0xf]
  %v4252 = vld [vmem:[%s1887 + $0x2c] sm:$0x1]
  %v4253 = vld [vmem:[%s1887 + $0x30] sm:$0xf]
  %v4254 = vld [vmem:[%s1887 + $0x34] sm:$0x1]
  %v4255 = vld [vmem:[%s1887 + $0x38] sm:$0xf]
  %v4256 = vld [vmem:[%s1887 + $0x3c] sm:$0x1]
  %v4257 = vld [vmem:[%s1887 + $0x120] sm:$0xf]
  %v4258 = vld [vmem:[%s1887 + $0x124] sm:$0x1]
  %v4259 = vld [vmem:[%s1887 + $0x128] sm:$0xf]
  %v4260 = vld [vmem:[%s1887 + $0x12c] sm:$0x1]
  %v4261 = vld [vmem:[%s1887 + $0x130] sm:$0xf]
  %v4262 = vld [vmem:[%s1887 + $0x134] sm:$0x1]
  %v4263 = vld [vmem:[%s1887 + $0x138] sm:$0xf]
  %v4264 = vld [vmem:[%s1887 + $0x13c] sm:$0x1]
  %v4265 = vld [vmem:[%s1887 + $0x140] sm:$0xf]
  %v4266 = vld [vmem:[%s1887 + $0x144] sm:$0x1]
  %v4267 = vld [vmem:[%s1887 + $0x148] sm:$0xf]
  %v4268 = vld [vmem:[%s1887 + $0x14c] sm:$0x1]
  %v4269 = vld [vmem:[%s1887 + $0x150] sm:$0xf]
  %v4270 = vld [vmem:[%s1887 + $0x154] sm:$0x1]
  %v4271 = vld [vmem:[%s1887 + $0x158] sm:$0xf]
  %v4272 = vld [vmem:[%s1887 + $0x15c] sm:$0x1]
  %v4274 = vshrl.u32 %v4241, 16
  %v4276 = vrot.slane %v4274, 4
  %v4277 = vshll.u32 %v4241, 16
  %v4279 = vrot.slane %v4277, 5
  %v4280 = vor.u32 %v4276, %v4279
  %v4281 = vrot.slane %v4280, 4
  %v4283 = vshll.u32 %v4242, 16
  %v4285 = vrot.slane %v4283, 5
  %v4286 = vsel %vm2390, %v4281, %v4285
  %v4288 = vshrl.u32 %v4243, 16
  %v4290 = vrot.slane %v4288, 4
  %v4291 = vshll.u32 %v4243, 16
  %v4293 = vrot.slane %v4291, 5
  %v4294 = vor.u32 %v4290, %v4293
  %v4295 = vrot.slane %v4294, 4
  %v4297 = vshll.u32 %v4244, 16
  %v4299 = vrot.slane %v4297, 5
  %v4300 = vsel %vm2390, %v4295, %v4299
  %v4302 = vshrl.u32 %v4245, 16
  %v4304 = vrot.slane %v4302, 4
  %v4305 = vshll.u32 %v4245, 16
  %v4307 = vrot.slane %v4305, 5
  %v4308 = vor.u32 %v4304, %v4307
  %v4309 = vrot.slane %v4308, 4
  %v4311 = vshll.u32 %v4246, 16
  %v4313 = vrot.slane %v4311, 5
  %v4314 = vsel %vm2390, %v4309, %v4313
  %v4316 = vshrl.u32 %v4247, 16
  %v4318 = vrot.slane %v4316, 4
  %v4319 = vshll.u32 %v4247, 16
  %v4321 = vrot.slane %v4319, 5
  %v4322 = vor.u32 %v4318, %v4321
  %v4323 = vrot.slane %v4322, 4
  %v4325 = vshll.u32 %v4248, 16
  %v4327 = vrot.slane %v4325, 5
  %v4328 = vsel %vm2390, %v4323, %v4327
  %v4330 = vshrl.u32 %v4249, 16
  %v4332 = vrot.slane %v4330, 4
  %v4333 = vshll.u32 %v4249, 16
  %v4335 = vrot.slane %v4333, 5
  %v4336 = vor.u32 %v4332, %v4335
  %v4337 = vrot.slane %v4336, 4
  %v4339 = vshll.u32 %v4250, 16
  %v4341 = vrot.slane %v4339, 5
  %v4342 = vsel %vm2390, %v4337, %v4341
  %v4344 = vshrl.u32 %v4251, 16
  %v4346 = vrot.slane %v4344, 4
  %v4347 = vshll.u32 %v4251, 16
  %v4349 = vrot.slane %v4347, 5
  %v4350 = vor.u32 %v4346, %v4349
  %v4351 = vrot.slane %v4350, 4
  %v4353 = vshll.u32 %v4252, 16
  %v4355 = vrot.slane %v4353, 5
  %v4356 = vsel %vm2390, %v4351, %v4355
  %v4358 = vshrl.u32 %v4253, 16
  %v4360 = vrot.slane %v4358, 4
  %v4361 = vshll.u32 %v4253, 16
  %v4363 = vrot.slane %v4361, 5
  %v4364 = vor.u32 %v4360, %v4363
  %v4365 = vrot.slane %v4364, 4
  %v4367 = vshll.u32 %v4254, 16
  %v4369 = vrot.slane %v4367, 5
  %v4370 = vsel %vm2390, %v4365, %v4369
  %v4372 = vshrl.u32 %v4255, 16
  %v4374 = vrot.slane %v4372, 4
  %v4375 = vshll.u32 %v4255, 16
  %v4377 = vrot.slane %v4375, 5
  %v4378 = vor.u32 %v4374, %v4377
  %v4379 = vrot.slane %v4378, 4
  %v4381 = vshll.u32 %v4256, 16
  %v4383 = vrot.slane %v4381, 5
  %v4384 = vsel %vm2390, %v4379, %v4383
  %v4386 = vshrl.u32 %v4257, 16
  %v4388 = vrot.slane %v4386, 4
  %v4389 = vshll.u32 %v4257, 16
  %v4391 = vrot.slane %v4389, 5
  %v4392 = vor.u32 %v4388, %v4391
  %v4393 = vrot.slane %v4392, 4
  %v4395 = vshll.u32 %v4258, 16
  %v4397 = vrot.slane %v4395, 5
  %v4398 = vsel %vm2390, %v4393, %v4397
  %v4400 = vshrl.u32 %v4259, 16
  %v4402 = vrot.slane %v4400, 4
  %v4403 = vshll.u32 %v4259, 16
  %v4405 = vrot.slane %v4403, 5
  %v4406 = vor.u32 %v4402, %v4405
  %v4407 = vrot.slane %v4406, 4
  %v4409 = vshll.u32 %v4260, 16
  %v4411 = vrot.slane %v4409, 5
  %v4412 = vsel %vm2390, %v4407, %v4411
  %v4414 = vshrl.u32 %v4261, 16
  %v4416 = vrot.slane %v4414, 4
  %v4417 = vshll.u32 %v4261, 16
  %v4419 = vrot.slane %v4417, 5
  %v4420 = vor.u32 %v4416, %v4419
  %v4421 = vrot.slane %v4420, 4
  %v4423 = vshll.u32 %v4262, 16
  %v4425 = vrot.slane %v4423, 5
  %v4426 = vsel %vm2390, %v4421, %v4425
  %v4428 = vshrl.u32 %v4263, 16
  %v4430 = vrot.slane %v4428, 4
  %v4431 = vshll.u32 %v4263, 16
  %v4433 = vrot.slane %v4431, 5
  %v4434 = vor.u32 %v4430, %v4433
  %v4435 = vrot.slane %v4434, 4
  %v4437 = vshll.u32 %v4264, 16
  %v4439 = vrot.slane %v4437, 5
  %v4440 = vsel %vm2390, %v4435, %v4439
  %v4442 = vshrl.u32 %v4265, 16
  %v4444 = vrot.slane %v4442, 4
  %v4445 = vshll.u32 %v4265, 16
  %v4447 = vrot.slane %v4445, 5
  %v4448 = vor.u32 %v4444, %v4447
  %v4449 = vrot.slane %v4448, 4
  %v4451 = vshll.u32 %v4266, 16
  %v4453 = vrot.slane %v4451, 5
  %v4454 = vsel %vm2390, %v4449, %v4453
  %v4456 = vshrl.u32 %v4267, 16
  %v4458 = vrot.slane %v4456, 4
  %v4459 = vshll.u32 %v4267, 16
  %v4461 = vrot.slane %v4459, 5
  %v4462 = vor.u32 %v4458, %v4461
  %v4463 = vrot.slane %v4462, 4
  %v4465 = vshll.u32 %v4268, 16
  %v4467 = vrot.slane %v4465, 5
  %v4468 = vsel %vm2390, %v4463, %v4467
  %v4470 = vshrl.u32 %v4269, 16
  %v4472 = vrot.slane %v4470, 4
  %v4473 = vshll.u32 %v4269, 16
  %v4475 = vrot.slane %v4473, 5
  %v4476 = vor.u32 %v4472, %v4475
  %v4477 = vrot.slane %v4476, 4
  %v4479 = vshll.u32 %v4270, 16
  %v4481 = vrot.slane %v4479, 5
  %v4482 = vsel %vm2390, %v4477, %v4481
  %v4484 = vshrl.u32 %v4271, 16
  %v4486 = vrot.slane %v4484, 4
  %v4487 = vshll.u32 %v4271, 16
  %v4489 = vrot.slane %v4487, 5
  %v4490 = vor.u32 %v4486, %v4489
  %v4491 = vrot.slane %v4490, 4
  %v4493 = vshll.u32 %v4272, 16
  %v4495 = vrot.slane %v4493, 5
  %v4496 = vsel %vm2390, %v4491, %v4495
  %s4497 = scalar_lea.vmem %s3, 448
  %v4498 = vld [vmem:[%s4497] sm:$0xf]
  %v4499 = vld [vmem:[%s4497 + $0x4] sm:$0xf]
  %v4500 = vld [vmem:[%s4497 + $0x8] sm:$0xf]
  %v4501 = vld [vmem:[%s4497 + $0xc] sm:$0xf]
  %v4502 = vld [vmem:[%s4497 + $0x10] sm:$0xf]
  %v4503 = vld [vmem:[%s4497 + $0x14] sm:$0xf]
  %v4504 = vld [vmem:[%s4497 + $0x18] sm:$0xf]
  %v4505 = vld [vmem:[%s4497 + $0x1c] sm:$0xf]
  %v4506 = vld [vmem:[%s4497 + $0x20] sm:$0xf]
  %v4507 = vld [vmem:[%s4497 + $0x24] sm:$0xf]
  %v4508 = vld [vmem:[%s4497 + $0x28] sm:$0xf]
  %v4509 = vld [vmem:[%s4497 + $0x2c] sm:$0xf]
  %v4510 = vld [vmem:[%s4497 + $0x30] sm:$0xf]
  %v4511 = vld [vmem:[%s4497 + $0x34] sm:$0xf]
  %v4512 = vld [vmem:[%s4497 + $0x38] sm:$0xf]
  %v4513 = vld [vmem:[%s4497 + $0x3c] sm:$0xf]
  %v4514 = vunpack.c.l.b16 %v4286
  %v4515 = vunpack.c.l.b16 %v4300
  %v4516 = vunpack.c.l.b16 %v4314
  %v4517 = vunpack.c.l.b16 %v4328
  %v4518 = vunpack.c.l.b16 %v4342
  %v4519 = vunpack.c.l.b16 %v4356
  %v4520 = vunpack.c.l.b16 %v4370
  %v4521 = vunpack.c.l.b16 %v4384
  %v4522 = vunpack.c.l.b16 %v4398
  %v4523 = vunpack.c.l.b16 %v4412
  %v4524 = vunpack.c.l.b16 %v4426
  %v4525 = vunpack.c.l.b16 %v4440
  %v4526 = vunpack.c.l.b16 %v4454
  %v4527 = vunpack.c.l.b16 %v4468
  %v4528 = vunpack.c.l.b16 %v4482
  %v4529 = vunpack.c.l.b16 %v4496
  %v4530 = vpack.c.b16 %v4515, %v4514
  %v4531 = vpack.c.b16 %v4517, %v4516
  %v4532 = vpack.c.b16 %v4519, %v4518
  %v4533 = vpack.c.b16 %v4521, %v4520
  %v4534 = vpack.c.b16 %v4523, %v4522
  %v4535 = vpack.c.b16 %v4525, %v4524
  %v4536 = vpack.c.b16 %v4527, %v4526
  %v4537 = vpack.c.b16 %v4529, %v4528
  %v4562 = vunpack.c.l.b16 %v4498
  %v4563 = vunpack.c.l.b16 %v4499
  %v4564 = vunpack.c.l.b16 %v4500
  %v4565 = vunpack.c.l.b16 %v4501
  %v4566 = vunpack.c.l.b16 %v4502
  %v4567 = vunpack.c.l.b16 %v4503
  %v4568 = vunpack.c.l.b16 %v4504
  %v4569 = vunpack.c.l.b16 %v4505
  %v4570 = vunpack.c.l.b16 %v4506
  %v4571 = vunpack.c.l.b16 %v4507
  %v4572 = vunpack.c.l.b16 %v4508
  %v4573 = vunpack.c.l.b16 %v4509
  %v4574 = vunpack.c.l.b16 %v4510
  %v4575 = vunpack.c.l.b16 %v4511
  %v4576 = vunpack.c.l.b16 %v4512
  %v4577 = vunpack.c.l.b16 %v4513
  %v4578 = vpack.c.b16 %v4563, %v4562
  %v4579 = vpack.c.b16 %v4565, %v4564
  %v4580 = vpack.c.b16 %v4567, %v4566
  %v4581 = vpack.c.b16 %v4569, %v4568
  %v4582 = vpack.c.b16 %v4571, %v4570
  %v4583 = vpack.c.b16 %v4573, %v4572
  %v4584 = vpack.c.b16 %v4575, %v4574
  %v4585 = vpack.c.b16 %v4577, %v4576
  %4594 = vmatprep.subr.bf16.mxu0 0
  %4595 = vmatpush1.bf16.msra.mxu0 %v4578
  %4596 = vmatprep.subr.bf16.mxu0 0
  %4597 = vmatpush1.bf16.msra.mxu0 %v4579
  %4598 = vmatprep.subr.bf16.mxu0 0
  %4599 = vmatpush1.bf16.msra.mxu0 %v4580
  %4600 = vmatprep.subr.bf16.mxu0 0
  %4601 = vmatpush1.bf16.msra.mxu0 %v4581
  %4602 = vmatprep.subr.bf16.mxu0 0
  %4603 = vmatpush1.bf16.msra.mxu0 %v4582
  %4604 = vmatprep.subr.bf16.mxu0 0
  %4605 = vmatpush1.bf16.msra.mxu0 %v4583
  %4606 = vmatprep.subr.bf16.mxu0 0
  %4607 = vmatpush1.bf16.msra.mxu0 %v4584
  %4608 = vmatprep.subr.bf16.mxu0 0
  %4609 = vmatpush1.bf16.msra.mxu0 %v4585
  %4610 = vmatprep.subr.bf16.mxu0 0
  %4611 = vmatpush1.bf16.msra.mxu0 0
  %4612 = vmatprep.subr.bf16.mxu0 0
  %4613 = vmatpush1.bf16.msra.mxu0 0
  %4614 = vmatprep.subr.bf16.mxu0 0
  %4615 = vmatpush1.bf16.msra.mxu0 0
  %4616 = vmatprep.subr.bf16.mxu0 0
  %4617 = vmatpush1.bf16.msra.mxu0 0
  %4618 = vmatprep.subr.bf16.mxu0 0
  %4619 = vmatpush1.bf16.msra.mxu0 0
  %4620 = vmatprep.subr.bf16.mxu0 0
  %4621 = vmatpush1.bf16.msra.mxu0 0
  %4622 = vmatprep.subr.bf16.mxu0 0
  %4623 = vmatpush1.bf16.msra.mxu0 0
  %4624 = vmatprep.subr.bf16.mxu0 0
  %4625 = vmatpush1.bf16.msra.mxu0 0
  %4626 = vmatprep.mubr.bf16.mxu0 0
  %4627 = vmatmul.mubr.bf16.gmra.mrb[0].mxu0 %v4530
  %v4628 = vpop.f32.mrb[0].mxu0
  %v4629 = vadd.f32 0.0, %v4628
  %v4630 = vpop.f32.mrb[0].mxu0
  %v4631 = vpop.f32.mrb[0].mxu0
  %v4632 = vadd.f32 0.0, %v4631
  %v4633 = vpop.f32.mrb[0].mxu0
  %4634 = vmatprep.mubr.bf16.mxu0 0
  %4635 = vmatmul.mubr.bf16.gmra.mrb[0].mxu0 %v4531
  %v4636 = vpop.f32.mrb[0].mxu0
  %v4637 = vadd.f32 0.0, %v4636
  %v4638 = vpop.f32.mrb[0].mxu0
  %v4639 = vpop.f32.mrb[0].mxu0
  %v4640 = vadd.f32 0.0, %v4639
  %v4641 = vpop.f32.mrb[0].mxu0
  %4642 = vmatprep.mubr.bf16.mxu0 0
  %4643 = vmatmul.mubr.bf16.gmra.mrb[0].mxu0 %v4532
  %v4644 = vpop.f32.mrb[0].mxu0
  %v4645 = vadd.f32 0.0, %v4644
  %v4646 = vpop.f32.mrb[0].mxu0
  %v4647 = vpop.f32.mrb[0].mxu0
  %v4648 = vadd.f32 0.0, %v4647
  %v4649 = vpop.f32.mrb[0].mxu0
  %4650 = vmatprep.mubr.bf16.mxu0 0
  %4651 = vmatmul.mubr.bf16.gmra.mrb[0].mxu0 %v4533
  %v4652 = vpop.f32.mrb[0].mxu0
  %v4653 = vadd.f32 0.0, %v4652
  %v4654 = vpop.f32.mrb[0].mxu0
  %v4655 = vpop.f32.mrb[0].mxu0
  %v4656 = vadd.f32 0.0, %v4655
  %v4657 = vpop.f32.mrb[0].mxu0
  %4658 = vmatprep.mubr.bf16.mxu0 0
  %4659 = vmatmul.mubr.bf16.gmra.mrb[0].mxu0 %v4534
  %v4660 = vpop.f32.mrb[0].mxu0
  %v4661 = vadd.f32 0.0, %v4660
  %v4662 = vpop.f32.mrb[0].mxu0
  %v4663 = vpop.f32.mrb[0].mxu0
  %v4664 = vadd.f32 0.0, %v4663
  %v4665 = vpop.f32.mrb[0].mxu0
  %4666 = vmatprep.mubr.bf16.mxu0 0
  %4667 = vmatmul.mubr.bf16.gmra.mrb[0].mxu0 %v4535
  %v4668 = vpop.f32.mrb[0].mxu0
  %v4669 = vadd.f32 0.0, %v4668
  %v4670 = vpop.f32.mrb[0].mxu0
  %v4671 = vpop.f32.mrb[0].mxu0
  %v4672 = vadd.f32 0.0, %v4671
  %v4673 = vpop.f32.mrb[0].mxu0
  %4674 = vmatprep.mubr.bf16.mxu0 0
  %4675 = vmatmul.mubr.bf16.gmra.mrb[0].mxu0 %v4536
  %v4676 = vpop.f32.mrb[0].mxu0
  %v4677 = vadd.f32 0.0, %v4676
  %v4678 = vpop.f32.mrb[0].mxu0
  %v4679 = vpop.f32.mrb[0].mxu0
  %v4680 = vadd.f32 0.0, %v4679
  %v4681 = vpop.f32.mrb[0].mxu0
  %4682 = vmatprep.mubr.bf16.mxu0 0
  %4683 = vmatmul.mubr.bf16.gmra.mrb[0].mxu0 %v4537
  %v4684 = vpop.f32.mrb[0].mxu0
  %v4685 = vadd.f32 0.0, %v4684
  %v4686 = vpop.f32.mrb[0].mxu0
  %v4687 = vpop.f32.mrb[0].mxu0
  %v4688 = vadd.f32 0.0, %v4687
  %v4689 = vpop.f32.mrb[0].mxu0
  %4690 = vdwg.mxu0
  %v4691 = vadd.f32 %v4225, %v4629
  %v4692 = vadd.f32 %v4226, %v4632
  %v4693 = vadd.f32 %v4227, %v4637
  %v4694 = vadd.f32 %v4228, %v4640
  %v4695 = vadd.f32 %v4229, %v4645
  %v4696 = vadd.f32 %v4230, %v4648
  %v4697 = vadd.f32 %v4231, %v4653
  %v4698 = vadd.f32 %v4232, %v4656
  %v4699 = vadd.f32 %v4233, %v4661
  %v4700 = vadd.f32 %v4234, %v4664
  %v4701 = vadd.f32 %v4235, %v4669
  %v4702 = vadd.f32 %v4236, %v4672
  %v4703 = vadd.f32 %v4237, %v4677
  %v4704 = vadd.f32 %v4238, %v4680
  %v4705 = vadd.f32 %v4239, %v4685
  %v4706 = vadd.f32 %v4240, %v4688
  %v4707 = vld [vmem:[%s1513] sm:$0xf]
  %v4708 = vld [vmem:[%s1513 + $0x8] sm:$0xf]
  %v4709 = vld [vmem:[%s1513 + $0x10] sm:$0xf]
  %v4710 = vld [vmem:[%s1513 + $0x18] sm:$0xf]
  %v4711 = vld [vmem:[%s1513 + $0x20] sm:$0xf]
  %v4712 = vld [vmem:[%s1513 + $0x28] sm:$0xf]
  %v4713 = vld [vmem:[%s1513 + $0x30] sm:$0xf]
  %v4714 = vld [vmem:[%s1513 + $0x38] sm:$0xf]
  %v4715 = vld [vmem:[%s1513 + $0x120] sm:$0xf]
  %v4716 = vld [vmem:[%s1513 + $0x128] sm:$0xf]
  %v4717 = vld [vmem:[%s1513 + $0x130] sm:$0xf]
  %v4718 = vld [vmem:[%s1513 + $0x138] sm:$0xf]
  %v4719 = vld [vmem:[%s1513 + $0x140] sm:$0xf]
  %v4720 = vld [vmem:[%s1513 + $0x148] sm:$0xf]
  %v4721 = vld [vmem:[%s1513 + $0x150] sm:$0xf]
  %v4722 = vld [vmem:[%s1513 + $0x158] sm:$0xf]
  %s4723 = scalar_lea.vmem %s3, 512
  %v4724 = vld [vmem:[%s4723] sm:$0xf]
  %v4725 = vld [vmem:[%s4723 + $0x4] sm:$0xf]
  %v4726 = vld [vmem:[%s4723 + $0x8] sm:$0xf]
  %v4727 = vld [vmem:[%s4723 + $0xc] sm:$0xf]
  %v4728 = vld [vmem:[%s4723 + $0x10] sm:$0xf]
  %v4729 = vld [vmem:[%s4723 + $0x14] sm:$0xf]
  %v4730 = vld [vmem:[%s4723 + $0x18] sm:$0xf]
  %v4731 = vld [vmem:[%s4723 + $0x1c] sm:$0xf]
  %v4732 = vld [vmem:[%s4723 + $0x20] sm:$0xf]
  %v4733 = vld [vmem:[%s4723 + $0x24] sm:$0xf]
  %v4734 = vld [vmem:[%s4723 + $0x28] sm:$0xf]
  %v4735 = vld [vmem:[%s4723 + $0x2c] sm:$0xf]
  %v4736 = vld [vmem:[%s4723 + $0x30] sm:$0xf]
  %v4737 = vld [vmem:[%s4723 + $0x34] sm:$0xf]
  %v4738 = vld [vmem:[%s4723 + $0x38] sm:$0xf]
  %v4739 = vld [vmem:[%s4723 + $0x3c] sm:$0xf]
  %v4756 = vunpack.c.l.b16 %v4707
  %v4757 = vunpack.c.l.b16 %v4708
  %v4758 = vunpack.c.l.b16 %v4709
  %v4759 = vunpack.c.l.b16 %v4710
  %v4760 = vunpack.c.l.b16 %v4711
  %v4761 = vunpack.c.l.b16 %v4712
  %v4762 = vunpack.c.l.b16 %v4713
  %v4763 = vunpack.c.l.b16 %v4714
  %v4764 = vunpack.c.l.b16 %v4715
  %v4765 = vunpack.c.l.b16 %v4716
  %v4766 = vunpack.c.l.b16 %v4717
  %v4767 = vunpack.c.l.b16 %v4718
  %v4768 = vunpack.c.l.b16 %v4719
  %v4769 = vunpack.c.l.b16 %v4720
  %v4770 = vunpack.c.l.b16 %v4721
  %v4771 = vunpack.c.l.b16 %v4722
  %v4772 = vpack.c.b16 %v4757, %v4756
  %v4773 = vpack.c.b16 %v4759, %v4758
  %v4774 = vpack.c.b16 %v4761, %v4760
  %v4775 = vpack.c.b16 %v4763, %v4762
  %v4776 = vpack.c.b16 %v4765, %v4764
  %v4777 = vpack.c.b16 %v4767, %v4766
  %v4778 = vpack.c.b16 %v4769, %v4768
  %v4779 = vpack.c.b16 %v4771, %v4770
  %v4804 = vunpack.c.l.b16 %v4724
  %v4805 = vunpack.c.l.b16 %v4725
  %v4806 = vunpack.c.l.b16 %v4726
  %v4807 = vunpack.c.l.b16 %v4727
  %v4808 = vunpack.c.l.b16 %v4728
  %v4809 = vunpack.c.l.b16 %v4729
  %v4810 = vunpack.c.l.b16 %v4730
  %v4811 = vunpack.c.l.b16 %v4731
  %v4812 = vunpack.c.l.b16 %v4732
  %v4813 = vunpack.c.l.b16 %v4733
  %v4814 = vunpack.c.l.b16 %v4734
  %v4815 = vunpack.c.l.b16 %v4735
  %v4816 = vunpack.c.l.b16 %v4736
  %v4817 = vunpack.c.l.b16 %v4737
  %v4818 = vunpack.c.l.b16 %v4738
  %v4819 = vunpack.c.l.b16 %v4739
  %v4820 = vpack.c.b16 %v4805, %v4804
  %v4821 = vpack.c.b16 %v4807, %v4806
  %v4822 = vpack.c.b16 %v4809, %v4808
  %v4823 = vpack.c.b16 %v4811, %v4810
  %v4824 = vpack.c.b16 %v4813, %v4812
  %v4825 = vpack.c.b16 %v4815, %v4814
  %v4826 = vpack.c.b16 %v4817, %v4816
  %v4827 = vpack.c.b16 %v4819, %v4818
  %4836 = vmatprep.subr.bf16.mxu0 0
  %4837 = vmatpush1.bf16.msra.mxu0 %v4820
  %4838 = vmatprep.subr.bf16.mxu0 0
  %4839 = vmatpush1.bf16.msra.mxu0 %v4821
  %4840 = vmatprep.subr.bf16.mxu0 0
  %4841 = vmatpush1.bf16.msra.mxu0 %v4822
  %4842 = vmatprep.subr.bf16.mxu0 0
  %4843 = vmatpush1.bf16.msra.mxu0 %v4823
  %4844 = vmatprep.subr.bf16.mxu0 0
  %4845 = vmatpush1.bf16.msra.mxu0 %v4824
  %4846 = vmatprep.subr.bf16.mxu0 0
  %4847 = vmatpush1.bf16.msra.mxu0 %v4825
  %4848 = vmatprep.subr.bf16.mxu0 0
  %4849 = vmatpush1.bf16.msra.mxu0 %v4826
  %4850 = vmatprep.subr.bf16.mxu0 0
  %4851 = vmatpush1.bf16.msra.mxu0 %v4827
  %4852 = vmatprep.subr.bf16.mxu0 0
  %4853 = vmatpush1.bf16.msra.mxu0 0
  %4854 = vmatprep.subr.bf16.mxu0 0
  %4855 = vmatpush1.bf16.msra.mxu0 0
  %4856 = vmatprep.subr.bf16.mxu0 0
  %4857 = vmatpush1.bf16.msra.mxu0 0
  %4858 = vmatprep.subr.bf16.mxu0 0
  %4859 = vmatpush1.bf16.msra.mxu0 0
  %4860 = vmatprep.subr.bf16.mxu0 0
  %4861 = vmatpush1.bf16.msra.mxu0 0
  %4862 = vmatprep.subr.bf16.mxu0 0
  %4863 = vmatpush1.bf16.msra.mxu0 0
  %4864 = vmatprep.subr.bf16.mxu0 0
  %4865 = vmatpush1.bf16.msra.mxu0 0
  %4866 = vmatprep.subr.bf16.mxu0 0
  %4867 = vmatpush1.bf16.msra.mxu0 0
  %4868 = vmatprep.mubr.bf16.mxu0 0
  %4869 = vmatmul.mubr.bf16.gmra.mrb[0].mxu0 %v4772
  %v4870 = vpop.f32.mrb[0].mxu0
  %v4871 = vadd.f32 0.0, %v4870
  %v4872 = vpop.f32.mrb[0].mxu0
  %v4873 = vpop.f32.mrb[0].mxu0
  %v4874 = vadd.f32 0.0, %v4873
  %v4875 = vpop.f32.mrb[0].mxu0
  %4876 = vmatprep.mubr.bf16.mxu0 0
  %4877 = vmatmul.mubr.bf16.gmra.mrb[0].mxu0 %v4773
  %v4878 = vpop.f32.mrb[0].mxu0
  %v4879 = vadd.f32 0.0, %v4878
  %v4880 = vpop.f32.mrb[0].mxu0
  %v4881 = vpop.f32.mrb[0].mxu0
  %v4882 = vadd.f32 0.0, %v4881
  %v4883 = vpop.f32.mrb[0].mxu0
  %4884 = vmatprep.mubr.bf16.mxu0 0
  %4885 = vmatmul.mubr.bf16.gmra.mrb[0].mxu0 %v4774
  %v4886 = vpop.f32.mrb[0].mxu0
  %v4887 = vadd.f32 0.0, %v4886
  %v4888 = vpop.f32.mrb[0].mxu0
  %v4889 = vpop.f32.mrb[0].mxu0
  %v4890 = vadd.f32 0.0, %v4889
  %v4891 = vpop.f32.mrb[0].mxu0
  %4892 = vmatprep.mubr.bf16.mxu0 0
  %4893 = vmatmul.mubr.bf16.gmra.mrb[0].mxu0 %v4775
  %v4894 = vpop.f32.mrb[0].mxu0
  %v4895 = vadd.f32 0.0, %v4894
  %v4896 = vpop.f32.mrb[0].mxu0
  %v4897 = vpop.f32.mrb[0].mxu0
  %v4898 = vadd.f32 0.0, %v4897
  %v4899 = vpop.f32.mrb[0].mxu0
  %4900 = vmatprep.mubr.bf16.mxu0 0
  %4901 = vmatmul.mubr.bf16.gmra.mrb[0].mxu0 %v4776
  %v4902 = vpop.f32.mrb[0].mxu0
  %v4903 = vadd.f32 0.0, %v4902
  %v4904 = vpop.f32.mrb[0].mxu0
  %v4905 = vpop.f32.mrb[0].mxu0
  %v4906 = vadd.f32 0.0, %v4905
  %v4907 = vpop.f32.mrb[0].mxu0
  %4908 = vmatprep.mubr.bf16.mxu0 0
  %4909 = vmatmul.mubr.bf16.gmra.mrb[0].mxu0 %v4777
  %v4910 = vpop.f32.mrb[0].mxu0
  %v4911 = vadd.f32 0.0, %v4910
  %v4912 = vpop.f32.mrb[0].mxu0
  %v4913 = vpop.f32.mrb[0].mxu0
  %v4914 = vadd.f32 0.0, %v4913
  %v4915 = vpop.f32.mrb[0].mxu0
  %4916 = vmatprep.mubr.bf16.mxu0 0
  %4917 = vmatmul.mubr.bf16.gmra.mrb[0].mxu0 %v4778
  %v4918 = vpop.f32.mrb[0].mxu0
  %v4919 = vadd.f32 0.0, %v4918
  %v4920 = vpop.f32.mrb[0].mxu0
  %v4921 = vpop.f32.mrb[0].mxu0
  %v4922 = vadd.f32 0.0, %v4921
  %v4923 = vpop.f32.mrb[0].mxu0
  %4924 = vmatprep.mubr.bf16.mxu0 0
  %4925 = vmatmul.mubr.bf16.gmra.mrb[0].mxu0 %v4779
  %v4926 = vpop.f32.mrb[0].mxu0
  %v4927 = vadd.f32 0.0, %v4926
  %v4928 = vpop.f32.mrb[0].mxu0
  %v4929 = vpop.f32.mrb[0].mxu0
  %v4930 = vadd.f32 0.0, %v4929
  %v4931 = vpop.f32.mrb[0].mxu0
  %4932 = vdwg.mxu0
  %v4933 = vadd.f32 %v4691, %v4871
  %v4934 = vadd.f32 %v4692, %v4874
  %v4935 = vadd.f32 %v4693, %v4879
  %v4936 = vadd.f32 %v4694, %v4882
  %v4937 = vadd.f32 %v4695, %v4887
  %v4938 = vadd.f32 %v4696, %v4890
  %v4939 = vadd.f32 %v4697, %v4895
  %v4940 = vadd.f32 %v4698, %v4898
  %v4941 = vadd.f32 %v4699, %v4903
  %v4942 = vadd.f32 %v4700, %v4906
  %v4943 = vadd.f32 %v4701, %v4911
  %v4944 = vadd.f32 %v4702, %v4914
  %v4945 = vadd.f32 %v4703, %v4919
  %v4946 = vadd.f32 %v4704, %v4922
  %v4947 = vadd.f32 %v4705, %v4927
  %v4948 = vadd.f32 %v4706, %v4930
  %v4949 = vld [vmem:[%s1613] sm:$0xf]
  %v4950 = vld [vmem:[%s1613 + $0x8] sm:$0xf]
  %v4951 = vld [vmem:[%s1613 + $0x10] sm:$0xf]
  %v4952 = vld [vmem:[%s1613 + $0x18] sm:$0xf]
  %v4953 = vld [vmem:[%s1613 + $0x20] sm:$0xf]
  %v4954 = vld [vmem:[%s1613 + $0x28] sm:$0xf]
  %v4955 = vld [vmem:[%s1613 + $0x30] sm:$0xf]
  %v4956 = vld [vmem:[%s1613 + $0x38] sm:$0xf]
  %v4957 = vld [vmem:[%s1613 + $0x120] sm:$0xf]
  %v4958 = vld [vmem:[%s1613 + $0x128] sm:$0xf]
  %v4959 = vld [vmem:[%s1613 + $0x130] sm:$0xf]
  %v4960 = vld [vmem:[%s1613 + $0x138] sm:$0xf]
  %v4961 = vld [vmem:[%s1613 + $0x140] sm:$0xf]
  %v4962 = vld [vmem:[%s1613 + $0x148] sm:$0xf]
  %v4963 = vld [vmem:[%s1613 + $0x150] sm:$0xf]
  %v4964 = vld [vmem:[%s1613 + $0x158] sm:$0xf]
  %s4965 = scalar_lea.vmem %s3, 576
  %v4966 = vld [vmem:[%s4965] sm:$0xf]
  %v4967 = vld [vmem:[%s4965 + $0x4] sm:$0xf]
  %v4968 = vld [vmem:[%s4965 + $0x8] sm:$0xf]
  %v4969 = vld [vmem:[%s4965 + $0xc] sm:$0xf]
  %v4970 = vld [vmem:[%s4965 + $0x10] sm:$0xf]
  %v4971 = vld [vmem:[%s4965 + $0x14] sm:$0xf]
  %v4972 = vld [vmem:[%s4965 + $0x18] sm:$0xf]
  %v4973 = vld [vmem:[%s4965 + $0x1c] sm:$0xf]
  %v4974 = vld [vmem:[%s4965 + $0x20] sm:$0xf]
  %v4975 = vld [vmem:[%s4965 + $0x24] sm:$0xf]
  %v4976 = vld [vmem:[%s4965 + $0x28] sm:$0xf]
  %v4977 = vld [vmem:[%s4965 + $0x2c] sm:$0xf]
  %v4978 = vld [vmem:[%s4965 + $0x30] sm:$0xf]
  %v4979 = vld [vmem:[%s4965 + $0x34] sm:$0xf]
  %v4980 = vld [vmem:[%s4965 + $0x38] sm:$0xf]
  %v4981 = vld [vmem:[%s4965 + $0x3c] sm:$0xf]
  %v4998 = vunpack.c.l.b16 %v4949
  %v4999 = vunpack.c.l.b16 %v4950
  %v5000 = vunpack.c.l.b16 %v4951
  %v5001 = vunpack.c.l.b16 %v4952
  %v5002 = vunpack.c.l.b16 %v4953
  %v5003 = vunpack.c.l.b16 %v4954
  %v5004 = vunpack.c.l.b16 %v4955
  %v5005 = vunpack.c.l.b16 %v4956
  %v5006 = vunpack.c.l.b16 %v4957
  %v5007 = vunpack.c.l.b16 %v4958
  %v5008 = vunpack.c.l.b16 %v4959
  %v5009 = vunpack.c.l.b16 %v4960
  %v5010 = vunpack.c.l.b16 %v4961
  %v5011 = vunpack.c.l.b16 %v4962
  %v5012 = vunpack.c.l.b16 %v4963
  %v5013 = vunpack.c.l.b16 %v4964
  %v5014 = vpack.c.b16 %v4999, %v4998
  %v5015 = vpack.c.b16 %v5001, %v5000
  %v5016 = vpack.c.b16 %v5003, %v5002
  %v5017 = vpack.c.b16 %v5005, %v5004
  %v5018 = vpack.c.b16 %v5007, %v5006
  %v5019 = vpack.c.b16 %v5009, %v5008
  %v5020 = vpack.c.b16 %v5011, %v5010
  %v5021 = vpack.c.b16 %v5013, %v5012
  %v5046 = vunpack.c.l.b16 %v4966
  %v5047 = vunpack.c.l.b16 %v4967
  %v5048 = vunpack.c.l.b16 %v4968
  %v5049 = vunpack.c.l.b16 %v4969
  %v5050 = vunpack.c.l.b16 %v4970
  %v5051 = vunpack.c.l.b16 %v4971
  %v5052 = vunpack.c.l.b16 %v4972
  %v5053 = vunpack.c.l.b16 %v4973
  %v5054 = vunpack.c.l.b16 %v4974
  %v5055 = vunpack.c.l.b16 %v4975
  %v5056 = vunpack.c.l.b16 %v4976
  %v5057 = vunpack.c.l.b16 %v4977
  %v5058 = vunpack.c.l.b16 %v4978
  %v5059 = vunpack.c.l.b16 %v4979
  %v5060 = vunpack.c.l.b16 %v4980
  %v5061 = vunpack.c.l.b16 %v4981
  %v5062 = vpack.c.b16 %v5047, %v5046
  %v5063 = vpack.c.b16 %v5049, %v5048
  %v5064 = vpack.c.b16 %v5051, %v5050
  %v5065 = vpack.c.b16 %v5053, %v5052
  %v5066 = vpack.c.b16 %v5055, %v5054
  %v5067 = vpack.c.b16 %v5057, %v5056
  %v5068 = vpack.c.b16 %v5059, %v5058
  %v5069 = vpack.c.b16 %v5061, %v5060
  %5078 = vmatprep.subr.bf16.mxu0 0
  %5079 = vmatpush1.bf16.msra.mxu0 %v5062
  %5080 = vmatprep.subr.bf16.mxu0 0
  %5081 = vmatpush1.bf16.msra.mxu0 %v5063
  %5082 = vmatprep.subr.bf16.mxu0 0
  %5083 = vmatpush1.bf16.msra.mxu0 %v5064
  %5084 = vmatprep.subr.bf16.mxu0 0
  %5085 = vmatpush1.bf16.msra.mxu0 %v5065
  %5086 = vmatprep.subr.bf16.mxu0 0
  %5087 = vmatpush1.bf16.msra.mxu0 %v5066
  %5088 = vmatprep.subr.bf16.mxu0 0
  %5089 = vmatpush1.bf16.msra.mxu0 %v5067
  %5090 = vmatprep.subr.bf16.mxu0 0
  %5091 = vmatpush1.bf16.msra.mxu0 %v5068
  %5092 = vmatprep.subr.bf16.mxu0 0
  %5093 = vmatpush1.bf16.msra.mxu0 %v5069
  %5094 = vmatprep.subr.bf16.mxu0 0
  %5095 = vmatpush1.bf16.msra.mxu0 0
  %5096 = vmatprep.subr.bf16.mxu0 0
  %5097 = vmatpush1.bf16.msra.mxu0 0
  %5098 = vmatprep.subr.bf16.mxu0 0
  %5099 = vmatpush1.bf16.msra.mxu0 0
  %5100 = vmatprep.subr.bf16.mxu0 0
  %5101 = vmatpush1.bf16.msra.mxu0 0
  %5102 = vmatprep.subr.bf16.mxu0 0
  %5103 = vmatpush1.bf16.msra.mxu0 0
  %5104 = vmatprep.subr.bf16.mxu0 0
  %5105 = vmatpush1.bf16.msra.mxu0 0
  %5106 = vmatprep.subr.bf16.mxu0 0
  %5107 = vmatpush1.bf16.msra.mxu0 0
  %5108 = vmatprep.subr.bf16.mxu0 0
  %5109 = vmatpush1.bf16.msra.mxu0 0
  %5110 = vmatprep.mubr.bf16.mxu0 0
  %5111 = vmatmul.mubr.bf16.gmra.mrb[0].mxu0 %v5014
  %v5112 = vpop.f32.mrb[0].mxu0
  %v5113 = vadd.f32 0.0, %v5112
  %v5114 = vpop.f32.mrb[0].mxu0
  %v5115 = vpop.f32.mrb[0].mxu0
  %v5116 = vadd.f32 0.0, %v5115
  %v5117 = vpop.f32.mrb[0].mxu0
  %5118 = vmatprep.mubr.bf16.mxu0 0
  %5119 = vmatmul.mubr.bf16.gmra.mrb[0].mxu0 %v5015
  %v5120 = vpop.f32.mrb[0].mxu0
  %v5121 = vadd.f32 0.0, %v5120
  %v5122 = vpop.f32.mrb[0].mxu0
  %v5123 = vpop.f32.mrb[0].mxu0
  %v5124 = vadd.f32 0.0, %v5123
  %v5125 = vpop.f32.mrb[0].mxu0
  %5126 = vmatprep.mubr.bf16.mxu0 0
  %5127 = vmatmul.mubr.bf16.gmra.mrb[0].mxu0 %v5016
  %v5128 = vpop.f32.mrb[0].mxu0
  %v5129 = vadd.f32 0.0, %v5128
  %v5130 = vpop.f32.mrb[0].mxu0
  %v5131 = vpop.f32.mrb[0].mxu0
  %v5132 = vadd.f32 0.0, %v5131
  %v5133 = vpop.f32.mrb[0].mxu0
  %5134 = vmatprep.mubr.bf16.mxu0 0
  %5135 = vmatmul.mubr.bf16.gmra.mrb[0].mxu0 %v5017
  %v5136 = vpop.f32.mrb[0].mxu0
  %v5137 = vadd.f32 0.0, %v5136
  %v5138 = vpop.f32.mrb[0].mxu0
  %v5139 = vpop.f32.mrb[0].mxu0
  %v5140 = vadd.f32 0.0, %v5139
  %v5141 = vpop.f32.mrb[0].mxu0
  %5142 = vmatprep.mubr.bf16.mxu0 0
  %5143 = vmatmul.mubr.bf16.gmra.mrb[0].mxu0 %v5018
  %v5144 = vpop.f32.mrb[0].mxu0
  %v5145 = vadd.f32 0.0, %v5144
  %v5146 = vpop.f32.mrb[0].mxu0
  %v5147 = vpop.f32.mrb[0].mxu0
  %v5148 = vadd.f32 0.0, %v5147
  %v5149 = vpop.f32.mrb[0].mxu0
  %5150 = vmatprep.mubr.bf16.mxu0 0
  %5151 = vmatmul.mubr.bf16.gmra.mrb[0].mxu0 %v5019
  %v5152 = vpop.f32.mrb[0].mxu0
  %v5153 = vadd.f32 0.0, %v5152
  %v5154 = vpop.f32.mrb[0].mxu0
  %v5155 = vpop.f32.mrb[0].mxu0
  %v5156 = vadd.f32 0.0, %v5155
  %v5157 = vpop.f32.mrb[0].mxu0
  %5158 = vmatprep.mubr.bf16.mxu0 0
  %5159 = vmatmul.mubr.bf16.gmra.mrb[0].mxu0 %v5020
  %v5160 = vpop.f32.mrb[0].mxu0
  %v5161 = vadd.f32 0.0, %v5160
  %v5162 = vpop.f32.mrb[0].mxu0
  %v5163 = vpop.f32.mrb[0].mxu0
  %v5164 = vadd.f32 0.0, %v5163
  %v5165 = vpop.f32.mrb[0].mxu0
  %5166 = vmatprep.mubr.bf16.mxu0 0
  %5167 = vmatmul.mubr.bf16.gmra.mrb[0].mxu0 %v5021
  %v5168 = vpop.f32.mrb[0].mxu0
  %v5169 = vadd.f32 0.0, %v5168
  %v5170 = vpop.f32.mrb[0].mxu0
  %v5171 = vpop.f32.mrb[0].mxu0
  %v5172 = vadd.f32 0.0, %v5171
  %v5173 = vpop.f32.mrb[0].mxu0
  %5174 = vdwg.mxu0
  %v5175 = vadd.f32 %v4933, %v5113
  %v5176 = vadd.f32 %v4934, %v5116
  %v5177 = vadd.f32 %v4935, %v5121
  %v5178 = vadd.f32 %v4936, %v5124
  %v5179 = vadd.f32 %v4937, %v5129
  %v5180 = vadd.f32 %v4938, %v5132
  %v5181 = vadd.f32 %v4939, %v5137
  %v5182 = vadd.f32 %v4940, %v5140
  %v5183 = vadd.f32 %v4941, %v5145
  %v5184 = vadd.f32 %v4942, %v5148
  %v5185 = vadd.f32 %v4943, %v5153
  %v5186 = vadd.f32 %v4944, %v5156
  %v5187 = vadd.f32 %v4945, %v5161
  %v5188 = vadd.f32 %v4946, %v5164
  %v5189 = vadd.f32 %v4947, %v5169
  %v5190 = vadd.f32 %v4948, %v5172
  %v5191 = vld [vmem:[%s1513] sm:$0xf]
  %v5192 = vld [vmem:[%s1513 + $0x4] sm:$0x1]
  %v5193 = vld [vmem:[%s1513 + $0x8] sm:$0xf]
  %v5194 = vld [vmem:[%s1513 + $0xc] sm:$0x1]
  %v5195 = vld [vmem:[%s1513 + $0x10] sm:$0xf]
  %v5196 = vld [vmem:[%s1513 + $0x14] sm:$0x1]
  %v5197 = vld [vmem:[%s1513 + $0x18] sm:$0xf]
  %v5198 = vld [vmem:[%s1513 + $0x1c] sm:$0x1]
  %v5199 = vld [vmem:[%s1513 + $0x20] sm:$0xf]
  %v5200 = vld [vmem:[%s1513 + $0x24] sm:$0x1]
  %v5201 = vld [vmem:[%s1513 + $0x28] sm:$0xf]
  %v5202 = vld [vmem:[%s1513 + $0x2c] sm:$0x1]
  %v5203 = vld [vmem:[%s1513 + $0x30] sm:$0xf]
  %v5204 = vld [vmem:[%s1513 + $0x34] sm:$0x1]
  %v5205 = vld [vmem:[%s1513 + $0x38] sm:$0xf]
  %v5206 = vld [vmem:[%s1513 + $0x3c] sm:$0x1]
  %v5207 = vld [vmem:[%s1513 + $0x120] sm:$0xf]
  %v5208 = vld [vmem:[%s1513 + $0x124] sm:$0x1]
  %v5209 = vld [vmem:[%s1513 + $0x128] sm:$0xf]
  %v5210 = vld [vmem:[%s1513 + $0x12c] sm:$0x1]
  %v5211 = vld [vmem:[%s1513 + $0x130] sm:$0xf]
  %v5212 = vld [vmem:[%s1513 + $0x134] sm:$0x1]
  %v5213 = vld [vmem:[%s1513 + $0x138] sm:$0xf]
  %v5214 = vld [vmem:[%s1513 + $0x13c] sm:$0x1]
  %v5215 = vld [vmem:[%s1513 + $0x140] sm:$0xf]
  %v5216 = vld [vmem:[%s1513 + $0x144] sm:$0x1]
  %v5217 = vld [vmem:[%s1513 + $0x148] sm:$0xf]
  %v5218 = vld [vmem:[%s1513 + $0x14c] sm:$0x1]
  %v5219 = vld [vmem:[%s1513 + $0x150] sm:$0xf]
  %v5220 = vld [vmem:[%s1513 + $0x154] sm:$0x1]
  %v5221 = vld [vmem:[%s1513 + $0x158] sm:$0xf]
  %v5222 = vld [vmem:[%s1513 + $0x15c] sm:$0x1]
  %v5224 = vshrl.u32 %v5191, 16
  %v5226 = vrot.slane %v5224, 4
  %v5227 = vshll.u32 %v5191, 16
  %v5229 = vrot.slane %v5227, 5
  %v5230 = vor.u32 %v5226, %v5229
  %v5231 = vrot.slane %v5230, 4
  %v5233 = vshll.u32 %v5192, 16
  %v5235 = vrot.slane %v5233, 5
  %v5236 = vsel %vm2390, %v5231, %v5235
  %v5238 = vshrl.u32 %v5193, 16
  %v5240 = vrot.slane %v5238, 4
  %v5241 = vshll.u32 %v5193, 16
  %v5243 = vrot.slane %v5241, 5
  %v5244 = vor.u32 %v5240, %v5243
  %v5245 = vrot.slane %v5244, 4
  %v5247 = vshll.u32 %v5194, 16
  %v5249 = vrot.slane %v5247, 5
  %v5250 = vsel %vm2390, %v5245, %v5249
  %v5252 = vshrl.u32 %v5195, 16
  %v5254 = vrot.slane %v5252, 4
  %v5255 = vshll.u32 %v5195, 16
  %v5257 = vrot.slane %v5255, 5
  %v5258 = vor.u32 %v5254, %v5257
  %v5259 = vrot.slane %v5258, 4
  %v5261 = vshll.u32 %v5196, 16
  %v5263 = vrot.slane %v5261, 5
  %v5264 = vsel %vm2390, %v5259, %v5263
  %v5266 = vshrl.u32 %v5197, 16
  %v5268 = vrot.slane %v5266, 4
  %v5269 = vshll.u32 %v5197, 16
  %v5271 = vrot.slane %v5269, 5
  %v5272 = vor.u32 %v5268, %v5271
  %v5273 = vrot.slane %v5272, 4
  %v5275 = vshll.u32 %v5198, 16
  %v5277 = vrot.slane %v5275, 5
  %v5278 = vsel %vm2390, %v5273, %v5277
  %v5280 = vshrl.u32 %v5199, 16
  %v5282 = vrot.slane %v5280, 4
  %v5283 = vshll.u32 %v5199, 16
  %v5285 = vrot.slane %v5283, 5
  %v5286 = vor.u32 %v5282, %v5285
  %v5287 = vrot.slane %v5286, 4
  %v5289 = vshll.u32 %v5200, 16
  %v5291 = vrot.slane %v5289, 5
  %v5292 = vsel %vm2390, %v5287, %v5291
  %v5294 = vshrl.u32 %v5201, 16
  %v5296 = vrot.slane %v5294, 4
  %v5297 = vshll.u32 %v5201, 16
  %v5299 = vrot.slane %v5297, 5
  %v5300 = vor.u32 %v5296, %v5299
  %v5301 = vrot.slane %v5300, 4
  %v5303 = vshll.u32 %v5202, 16
  %v5305 = vrot.slane %v5303, 5
  %v5306 = vsel %vm2390, %v5301, %v5305
  %v5308 = vshrl.u32 %v5203, 16
  %v5310 = vrot.slane %v5308, 4
  %v5311 = vshll.u32 %v5203, 16
  %v5313 = vrot.slane %v5311, 5
  %v5314 = vor.u32 %v5310, %v5313
  %v5315 = vrot.slane %v5314, 4
  %v5317 = vshll.u32 %v5204, 16
  %v5319 = vrot.slane %v5317, 5
  %v5320 = vsel %vm2390, %v5315, %v5319
  %v5322 = vshrl.u32 %v5205, 16
  %v5324 = vrot.slane %v5322, 4
  %v5325 = vshll.u32 %v5205, 16
  %v5327 = vrot.slane %v5325, 5
  %v5328 = vor.u32 %v5324, %v5327
  %v5329 = vrot.slane %v5328, 4
  %v5331 = vshll.u32 %v5206, 16
  %v5333 = vrot.slane %v5331, 5
  %v5334 = vsel %vm2390, %v5329, %v5333
  %v5336 = vshrl.u32 %v5207, 16
  %v5338 = vrot.slane %v5336, 4
  %v5339 = vshll.u32 %v5207, 16
  %v5341 = vrot.slane %v5339, 5
  %v5342 = vor.u32 %v5338, %v5341
  %v5343 = vrot.slane %v5342, 4
  %v5345 = vshll.u32 %v5208, 16
  %v5347 = vrot.slane %v5345, 5
  %v5348 = vsel %vm2390, %v5343, %v5347
  %v5350 = vshrl.u32 %v5209, 16
  %v5352 = vrot.slane %v5350, 4
  %v5353 = vshll.u32 %v5209, 16
  %v5355 = vrot.slane %v5353, 5
  %v5356 = vor.u32 %v5352, %v5355
  %v5357 = vrot.slane %v5356, 4
  %v5359 = vshll.u32 %v5210, 16
  %v5361 = vrot.slane %v5359, 5
  %v5362 = vsel %vm2390, %v5357, %v5361
  %v5364 = vshrl.u32 %v5211, 16
  %v5366 = vrot.slane %v5364, 4
  %v5367 = vshll.u32 %v5211, 16
  %v5369 = vrot.slane %v5367, 5
  %v5370 = vor.u32 %v5366, %v5369
  %v5371 = vrot.slane %v5370, 4
  %v5373 = vshll.u32 %v5212, 16
  %v5375 = vrot.slane %v5373, 5
  %v5376 = vsel %vm2390, %v5371, %v5375
  %v5378 = vshrl.u32 %v5213, 16
  %v5380 = vrot.slane %v5378, 4
  %v5381 = vshll.u32 %v5213, 16
  %v5383 = vrot.slane %v5381, 5
  %v5384 = vor.u32 %v5380, %v5383
  %v5385 = vrot.slane %v5384, 4
  %v5387 = vshll.u32 %v5214, 16
  %v5389 = vrot.slane %v5387, 5
  %v5390 = vsel %vm2390, %v5385, %v5389
  %v5392 = vshrl.u32 %v5215, 16
  %v5394 = vrot.slane %v5392, 4
  %v5395 = vshll.u32 %v5215, 16
  %v5397 = vrot.slane %v5395, 5
  %v5398 = vor.u32 %v5394, %v5397
  %v5399 = vrot.slane %v5398, 4
  %v5401 = vshll.u32 %v5216, 16
  %v5403 = vrot.slane %v5401, 5
  %v5404 = vsel %vm2390, %v5399, %v5403
  %v5406 = vshrl.u32 %v5217, 16
  %v5408 = vrot.slane %v5406, 4
  %v5409 = vshll.u32 %v5217, 16
  %v5411 = vrot.slane %v5409, 5
  %v5412 = vor.u32 %v5408, %v5411
  %v5413 = vrot.slane %v5412, 4
  %v5415 = vshll.u32 %v5218, 16
  %v5417 = vrot.slane %v5415, 5
  %v5418 = vsel %vm2390, %v5413, %v5417
  %v5420 = vshrl.u32 %v5219, 16
  %v5422 = vrot.slane %v5420, 4
  %v5423 = vshll.u32 %v5219, 16
  %v5425 = vrot.slane %v5423, 5
  %v5426 = vor.u32 %v5422, %v5425
  %v5427 = vrot.slane %v5426, 4
  %v5429 = vshll.u32 %v5220, 16
  %v5431 = vrot.slane %v5429, 5
  %v5432 = vsel %vm2390, %v5427, %v5431
  %v5434 = vshrl.u32 %v5221, 16
  %v5436 = vrot.slane %v5434, 4
  %v5437 = vshll.u32 %v5221, 16
  %v5439 = vrot.slane %v5437, 5
  %v5440 = vor.u32 %v5436, %v5439
  %v5441 = vrot.slane %v5440, 4
  %v5443 = vshll.u32 %v5222, 16
  %v5445 = vrot.slane %v5443, 5
  %v5446 = vsel %vm2390, %v5441, %v5445
  %s5447 = scalar_lea.vmem %s3, 640
  %v5448 = vld [vmem:[%s5447] sm:$0xf]
  %v5449 = vld [vmem:[%s5447 + $0x4] sm:$0xf]
  %v5450 = vld [vmem:[%s5447 + $0x8] sm:$0xf]
  %v5451 = vld [vmem:[%s5447 + $0xc] sm:$0xf]
  %v5452 = vld [vmem:[%s5447 + $0x10] sm:$0xf]
  %v5453 = vld [vmem:[%s5447 + $0x14] sm:$0xf]
  %v5454 = vld [vmem:[%s5447 + $0x18] sm:$0xf]
  %v5455 = vld [vmem:[%s5447 + $0x1c] sm:$0xf]
  %v5456 = vld [vmem:[%s5447 + $0x20] sm:$0xf]
  %v5457 = vld [vmem:[%s5447 + $0x24] sm:$0xf]
  %v5458 = vld [vmem:[%s5447 + $0x28] sm:$0xf]
  %v5459 = vld [vmem:[%s5447 + $0x2c] sm:$0xf]
  %v5460 = vld [vmem:[%s5447 + $0x30] sm:$0xf]
  %v5461 = vld [vmem:[%s5447 + $0x34] sm:$0xf]
  %v5462 = vld [vmem:[%s5447 + $0x38] sm:$0xf]
  %v5463 = vld [vmem:[%s5447 + $0x3c] sm:$0xf]
  %v5464 = vunpack.c.l.b16 %v5236
  %v5465 = vunpack.c.l.b16 %v5250
  %v5466 = vunpack.c.l.b16 %v5264
  %v5467 = vunpack.c.l.b16 %v5278
  %v5468 = vunpack.c.l.b16 %v5292
  %v5469 = vunpack.c.l.b16 %v5306
  %v5470 = vunpack.c.l.b16 %v5320
  %v5471 = vunpack.c.l.b16 %v5334
  %v5472 = vunpack.c.l.b16 %v5348
  %v5473 = vunpack.c.l.b16 %v5362
  %v5474 = vunpack.c.l.b16 %v5376
  %v5475 = vunpack.c.l.b16 %v5390
  %v5476 = vunpack.c.l.b16 %v5404
  %v5477 = vunpack.c.l.b16 %v5418
  %v5478 = vunpack.c.l.b16 %v5432
  %v5479 = vunpack.c.l.b16 %v5446
  %v5480 = vpack.c.b16 %v5465, %v5464
  %v5481 = vpack.c.b16 %v5467, %v5466
  %v5482 = vpack.c.b16 %v5469, %v5468
  %v5483 = vpack.c.b16 %v5471, %v5470
  %v5484 = vpack.c.b16 %v5473, %v5472
  %v5485 = vpack.c.b16 %v5475, %v5474
  %v5486 = vpack.c.b16 %v5477, %v5476
  %v5487 = vpack.c.b16 %v5479, %v5478
  %v5512 = vunpack.c.l.b16 %v5448
  %v5513 = vunpack.c.l.b16 %v5449
  %v5514 = vunpack.c.l.b16 %v5450
  %v5515 = vunpack.c.l.b16 %v5451
  %v5516 = vunpack.c.l.b16 %v5452
  %v5517 = vunpack.c.l.b16 %v5453
  %v5518 = vunpack.c.l.b16 %v5454
  %v5519 = vunpack.c.l.b16 %v5455
  %v5520 = vunpack.c.l.b16 %v5456
  %v5521 = vunpack.c.l.b16 %v5457
  %v5522 = vunpack.c.l.b16 %v5458
  %v5523 = vunpack.c.l.b16 %v5459
  %v5524 = vunpack.c.l.b16 %v5460
  %v5525 = vunpack.c.l.b16 %v5461
  %v5526 = vunpack.c.l.b16 %v5462
  %v5527 = vunpack.c.l.b16 %v5463
  %v5528 = vpack.c.b16 %v5513, %v5512
  %v5529 = vpack.c.b16 %v5515, %v5514
  %v5530 = vpack.c.b16 %v5517, %v5516
  %v5531 = vpack.c.b16 %v5519, %v5518
  %v5532 = vpack.c.b16 %v5521, %v5520
  %v5533 = vpack.c.b16 %v5523, %v5522
  %v5534 = vpack.c.b16 %v5525, %v5524
  %v5535 = vpack.c.b16 %v5527, %v5526
  %5544 = vmatprep.subr.bf16.mxu0 0
  %5545 = vmatpush1.bf16.msra.mxu0 %v5528
  %5546 = vmatprep.subr.bf16.mxu0 0
  %5547 = vmatpush1.bf16.msra.mxu0 %v5529
  %5548 = vmatprep.subr.bf16.mxu0 0
  %5549 = vmatpush1.bf16.msra.mxu0 %v5530
  %5550 = vmatprep.subr.bf16.mxu0 0
  %5551 = vmatpush1.bf16.msra.mxu0 %v5531
  %5552 = vmatprep.subr.bf16.mxu0 0
  %5553 = vmatpush1.bf16.msra.mxu0 %v5532
  %5554 = vmatprep.subr.bf16.mxu0 0
  %5555 = vmatpush1.bf16.msra.mxu0 %v5533
  %5556 = vmatprep.subr.bf16.mxu0 0
  %5557 = vmatpush1.bf16.msra.mxu0 %v5534
  %5558 = vmatprep.subr.bf16.mxu0 0
  %5559 = vmatpush1.bf16.msra.mxu0 %v5535
  %5560 = vmatprep.subr.bf16.mxu0 0
  %5561 = vmatpush1.bf16.msra.mxu0 0
  %5562 = vmatprep.subr.bf16.mxu0 0
  %5563 = vmatpush1.bf16.msra.mxu0 0
  %5564 = vmatprep.subr.bf16.mxu0 0
  %5565 = vmatpush1.bf16.msra.mxu0 0
  %5566 = vmatprep.subr.bf16.mxu0 0
  %5567 = vmatpush1.bf16.msra.mxu0 0
  %5568 = vmatprep.subr.bf16.mxu0 0
  %5569 = vmatpush1.bf16.msra.mxu0 0
  %5570 = vmatprep.subr.bf16.mxu0 0
  %5571 = vmatpush1.bf16.msra.mxu0 0
  %5572 = vmatprep.subr.bf16.mxu0 0
  %5573 = vmatpush1.bf16.msra.mxu0 0
  %5574 = vmatprep.subr.bf16.mxu0 0
  %5575 = vmatpush1.bf16.msra.mxu0 0
  %5576 = vmatprep.mubr.bf16.mxu0 0
  %5577 = vmatmul.mubr.bf16.gmra.mrb[0].mxu0 %v5480
  %v5578 = vpop.f32.mrb[0].mxu0
  %v5579 = vadd.f32 0.0, %v5578
  %v5580 = vpop.f32.mrb[0].mxu0
  %v5581 = vpop.f32.mrb[0].mxu0
  %v5582 = vadd.f32 0.0, %v5581
  %v5583 = vpop.f32.mrb[0].mxu0
  %5584 = vmatprep.mubr.bf16.mxu0 0
  %5585 = vmatmul.mubr.bf16.gmra.mrb[0].mxu0 %v5481
  %v5586 = vpop.f32.mrb[0].mxu0
  %v5587 = vadd.f32 0.0, %v5586
  %v5588 = vpop.f32.mrb[0].mxu0
  %v5589 = vpop.f32.mrb[0].mxu0
  %v5590 = vadd.f32 0.0, %v5589
  %v5591 = vpop.f32.mrb[0].mxu0
  %5592 = vmatprep.mubr.bf16.mxu0 0
  %5593 = vmatmul.mubr.bf16.gmra.mrb[0].mxu0 %v5482
  %v5594 = vpop.f32.mrb[0].mxu0
  %v5595 = vadd.f32 0.0, %v5594
  %v5596 = vpop.f32.mrb[0].mxu0
  %v5597 = vpop.f32.mrb[0].mxu0
  %v5598 = vadd.f32 0.0, %v5597
  %v5599 = vpop.f32.mrb[0].mxu0
  %5600 = vmatprep.mubr.bf16.mxu0 0
  %5601 = vmatmul.mubr.bf16.gmra.mrb[0].mxu0 %v5483
  %v5602 = vpop.f32.mrb[0].mxu0
  %v5603 = vadd.f32 0.0, %v5602
  %v5604 = vpop.f32.mrb[0].mxu0
  %v5605 = vpop.f32.mrb[0].mxu0
  %v5606 = vadd.f32 0.0, %v5605
  %v5607 = vpop.f32.mrb[0].mxu0
  %5608 = vmatprep.mubr.bf16.mxu0 0
  %5609 = vmatmul.mubr.bf16.gmra.mrb[0].mxu0 %v5484
  %v5610 = vpop.f32.mrb[0].mxu0
  %v5611 = vadd.f32 0.0, %v5610
  %v5612 = vpop.f32.mrb[0].mxu0
  %v5613 = vpop.f32.mrb[0].mxu0
  %v5614 = vadd.f32 0.0, %v5613
  %v5615 = vpop.f32.mrb[0].mxu0
  %5616 = vmatprep.mubr.bf16.mxu0 0
  %5617 = vmatmul.mubr.bf16.gmra.mrb[0].mxu0 %v5485
  %v5618 = vpop.f32.mrb[0].mxu0
  %v5619 = vadd.f32 0.0, %v5618
  %v5620 = vpop.f32.mrb[0].mxu0
  %v5621 = vpop.f32.mrb[0].mxu0
  %v5622 = vadd.f32 0.0, %v5621
  %v5623 = vpop.f32.mrb[0].mxu0
  %5624 = vmatprep.mubr.bf16.mxu0 0
  %5625 = vmatmul.mubr.bf16.gmra.mrb[0].mxu0 %v5486
  %v5626 = vpop.f32.mrb[0].mxu0
  %v5627 = vadd.f32 0.0, %v5626
  %v5628 = vpop.f32.mrb[0].mxu0
  %v5629 = vpop.f32.mrb[0].mxu0
  %v5630 = vadd.f32 0.0, %v5629
  %v5631 = vpop.f32.mrb[0].mxu0
  %5632 = vmatprep.mubr.bf16.mxu0 0
  %5633 = vmatmul.mubr.bf16.gmra.mrb[0].mxu0 %v5487
  %v5634 = vpop.f32.mrb[0].mxu0
  %v5635 = vadd.f32 0.0, %v5634
  %v5636 = vpop.f32.mrb[0].mxu0
  %v5637 = vpop.f32.mrb[0].mxu0
  %v5638 = vadd.f32 0.0, %v5637
  %v5639 = vpop.f32.mrb[0].mxu0
  %5640 = vdwg.mxu0
  %v5641 = vadd.f32 %v5175, %v5579
  %v5642 = vadd.f32 %v5176, %v5582
  %v5643 = vadd.f32 %v5177, %v5587
  %v5644 = vadd.f32 %v5178, %v5590
  %v5645 = vadd.f32 %v5179, %v5595
  %v5646 = vadd.f32 %v5180, %v5598
  %v5647 = vadd.f32 %v5181, %v5603
  %v5648 = vadd.f32 %v5182, %v5606
  %v5649 = vadd.f32 %v5183, %v5611
  %v5650 = vadd.f32 %v5184, %v5614
  %v5651 = vadd.f32 %v5185, %v5619
  %v5652 = vadd.f32 %v5186, %v5622
  %v5653 = vadd.f32 %v5187, %v5627
  %v5654 = vadd.f32 %v5188, %v5630
  %v5655 = vadd.f32 %v5189, %v5635
  %v5656 = vadd.f32 %v5190, %v5638
  %v5657 = vld [vmem:[%s1613] sm:$0xf]
  %v5658 = vld [vmem:[%s1613 + $0x4] sm:$0x1]
  %v5659 = vld [vmem:[%s1613 + $0x8] sm:$0xf]
  %v5660 = vld [vmem:[%s1613 + $0xc] sm:$0x1]
  %v5661 = vld [vmem:[%s1613 + $0x10] sm:$0xf]
  %v5662 = vld [vmem:[%s1613 + $0x14] sm:$0x1]
  %v5663 = vld [vmem:[%s1613 + $0x18] sm:$0xf]
  %v5664 = vld [vmem:[%s1613 + $0x1c] sm:$0x1]
  %v5665 = vld [vmem:[%s1613 + $0x20] sm:$0xf]
  %v5666 = vld [vmem:[%s1613 + $0x24] sm:$0x1]
  %v5667 = vld [vmem:[%s1613 + $0x28] sm:$0xf]
  %v5668 = vld [vmem:[%s1613 + $0x2c] sm:$0x1]
  %v5669 = vld [vmem:[%s1613 + $0x30] sm:$0xf]
  %v5670 = vld [vmem:[%s1613 + $0x34] sm:$0x1]
  %v5671 = vld [vmem:[%s1613 + $0x38] sm:$0xf]
  %v5672 = vld [vmem:[%s1613 + $0x3c] sm:$0x1]
  %v5673 = vld [vmem:[%s1613 + $0x120] sm:$0xf]
  %v5674 = vld [vmem:[%s1613 + $0x124] sm:$0x1]
  %v5675 = vld [vmem:[%s1613 + $0x128] sm:$0xf]
  %v5676 = vld [vmem:[%s1613 + $0x12c] sm:$0x1]
  %v5677 = vld [vmem:[%s1613 + $0x130] sm:$0xf]
  %v5678 = vld [vmem:[%s1613 + $0x134] sm:$0x1]
  %v5679 = vld [vmem:[%s1613 + $0x138] sm:$0xf]
  %v5680 = vld [vmem:[%s1613 + $0x13c] sm:$0x1]
  %v5681 = vld [vmem:[%s1613 + $0x140] sm:$0xf]
  %v5682 = vld [vmem:[%s1613 + $0x144] sm:$0x1]
  %v5683 = vld [vmem:[%s1613 + $0x148] sm:$0xf]
  %v5684 = vld [vmem:[%s1613 + $0x14c] sm:$0x1]
  %v5685 = vld [vmem:[%s1613 + $0x150] sm:$0xf]
  %v5686 = vld [vmem:[%s1613 + $0x154] sm:$0x1]
  %v5687 = vld [vmem:[%s1613 + $0x158] sm:$0xf]
  %v5688 = vld [vmem:[%s1613 + $0x15c] sm:$0x1]
  %v5690 = vshrl.u32 %v5657, 16
  %v5692 = vrot.slane %v5690, 4
  %v5693 = vshll.u32 %v5657, 16
  %v5695 = vrot.slane %v5693, 5
  %v5696 = vor.u32 %v5692, %v5695
  %v5697 = vrot.slane %v5696, 4
  %v5699 = vshll.u32 %v5658, 16
  %v5701 = vrot.slane %v5699, 5
  %v5702 = vsel %vm2390, %v5697, %v5701
  %v5704 = vshrl.u32 %v5659, 16
  %v5706 = vrot.slane %v5704, 4
  %v5707 = vshll.u32 %v5659, 16
  %v5709 = vrot.slane %v5707, 5
  %v5710 = vor.u32 %v5706, %v5709
  %v5711 = vrot.slane %v5710, 4
  %v5713 = vshll.u32 %v5660, 16
  %v5715 = vrot.slane %v5713, 5
  %v5716 = vsel %vm2390, %v5711, %v5715
  %v5718 = vshrl.u32 %v5661, 16
  %v5720 = vrot.slane %v5718, 4
  %v5721 = vshll.u32 %v5661, 16
  %v5723 = vrot.slane %v5721, 5
  %v5724 = vor.u32 %v5720, %v5723
  %v5725 = vrot.slane %v5724, 4
  %v5727 = vshll.u32 %v5662, 16
  %v5729 = vrot.slane %v5727, 5
  %v5730 = vsel %vm2390, %v5725, %v5729
  %v5732 = vshrl.u32 %v5663, 16
  %v5734 = vrot.slane %v5732, 4
  %v5735 = vshll.u32 %v5663, 16
  %v5737 = vrot.slane %v5735, 5
  %v5738 = vor.u32 %v5734, %v5737
  %v5739 = vrot.slane %v5738, 4
  %v5741 = vshll.u32 %v5664, 16
  %v5743 = vrot.slane %v5741, 5
  %v5744 = vsel %vm2390, %v5739, %v5743
  %v5746 = vshrl.u32 %v5665, 16
  %v5748 = vrot.slane %v5746, 4
  %v5749 = vshll.u32 %v5665, 16
  %v5751 = vrot.slane %v5749, 5
  %v5752 = vor.u32 %v5748, %v5751
  %v5753 = vrot.slane %v5752, 4
  %v5755 = vshll.u32 %v5666, 16
  %v5757 = vrot.slane %v5755, 5
  %v5758 = vsel %vm2390, %v5753, %v5757
  %v5760 = vshrl.u32 %v5667, 16
  %v5762 = vrot.slane %v5760, 4
  %v5763 = vshll.u32 %v5667, 16
  %v5765 = vrot.slane %v5763, 5
  %v5766 = vor.u32 %v5762, %v5765
  %v5767 = vrot.slane %v5766, 4
  %v5769 = vshll.u32 %v5668, 16
  %v5771 = vrot.slane %v5769, 5
  %v5772 = vsel %vm2390, %v5767, %v5771
  %v5774 = vshrl.u32 %v5669, 16
  %v5776 = vrot.slane %v5774, 4
  %v5777 = vshll.u32 %v5669, 16
  %v5779 = vrot.slane %v5777, 5
  %v5780 = vor.u32 %v5776, %v5779
  %v5781 = vrot.slane %v5780, 4
  %v5783 = vshll.u32 %v5670, 16
  %v5785 = vrot.slane %v5783, 5
  %v5786 = vsel %vm2390, %v5781, %v5785
  %v5788 = vshrl.u32 %v5671, 16
  %v5790 = vrot.slane %v5788, 4
  %v5791 = vshll.u32 %v5671, 16
  %v5793 = vrot.slane %v5791, 5
  %v5794 = vor.u32 %v5790, %v5793
  %v5795 = vrot.slane %v5794, 4
  %v5797 = vshll.u32 %v5672, 16
  %v5799 = vrot.slane %v5797, 5
  %v5800 = vsel %vm2390, %v5795, %v5799
  %v5802 = vshrl.u32 %v5673, 16
  %v5804 = vrot.slane %v5802, 4
  %v5805 = vshll.u32 %v5673, 16
  %v5807 = vrot.slane %v5805, 5
  %v5808 = vor.u32 %v5804, %v5807
  %v5809 = vrot.slane %v5808, 4
  %v5811 = vshll.u32 %v5674, 16
  %v5813 = vrot.slane %v5811, 5
  %v5814 = vsel %vm2390, %v5809, %v5813
  %v5816 = vshrl.u32 %v5675, 16
  %v5818 = vrot.slane %v5816, 4
  %v5819 = vshll.u32 %v5675, 16
  %v5821 = vrot.slane %v5819, 5
  %v5822 = vor.u32 %v5818, %v5821
  %v5823 = vrot.slane %v5822, 4
  %v5825 = vshll.u32 %v5676, 16
  %v5827 = vrot.slane %v5825, 5
  %v5828 = vsel %vm2390, %v5823, %v5827
  %v5830 = vshrl.u32 %v5677, 16
  %v5832 = vrot.slane %v5830, 4
  %v5833 = vshll.u32 %v5677, 16
  %v5835 = vrot.slane %v5833, 5
  %v5836 = vor.u32 %v5832, %v5835
  %v5837 = vrot.slane %v5836, 4
  %v5839 = vshll.u32 %v5678, 16
  %v5841 = vrot.slane %v5839, 5
  %v5842 = vsel %vm2390, %v5837, %v5841
  %v5844 = vshrl.u32 %v5679, 16
  %v5846 = vrot.slane %v5844, 4
  %v5847 = vshll.u32 %v5679, 16
  %v5849 = vrot.slane %v5847, 5
  %v5850 = vor.u32 %v5846, %v5849
  %v5851 = vrot.slane %v5850, 4
  %v5853 = vshll.u32 %v5680, 16
  %v5855 = vrot.slane %v5853, 5
  %v5856 = vsel %vm2390, %v5851, %v5855
  %v5858 = vshrl.u32 %v5681, 16
  %v5860 = vrot.slane %v5858, 4
  %v5861 = vshll.u32 %v5681, 16
  %v5863 = vrot.slane %v5861, 5
  %v5864 = vor.u32 %v5860, %v5863
  %v5865 = vrot.slane %v5864, 4
  %v5867 = vshll.u32 %v5682, 16
  %v5869 = vrot.slane %v5867, 5
  %v5870 = vsel %vm2390, %v5865, %v5869
  %v5872 = vshrl.u32 %v5683, 16
  %v5874 = vrot.slane %v5872, 4
  %v5875 = vshll.u32 %v5683, 16
  %v5877 = vrot.slane %v5875, 5
  %v5878 = vor.u32 %v5874, %v5877
  %v5879 = vrot.slane %v5878, 4
  %v5881 = vshll.u32 %v5684, 16
  %v5883 = vrot.slane %v5881, 5
  %v5884 = vsel %vm2390, %v5879, %v5883
  %v5886 = vshrl.u32 %v5685, 16
  %v5888 = vrot.slane %v5886, 4
  %v5889 = vshll.u32 %v5685, 16
  %v5891 = vrot.slane %v5889, 5
  %v5892 = vor.u32 %v5888, %v5891
  %v5893 = vrot.slane %v5892, 4
  %v5895 = vshll.u32 %v5686, 16
  %v5897 = vrot.slane %v5895, 5
  %v5898 = vsel %vm2390, %v5893, %v5897
  %v5900 = vshrl.u32 %v5687, 16
  %v5902 = vrot.slane %v5900, 4
  %v5903 = vshll.u32 %v5687, 16
  %v5905 = vrot.slane %v5903, 5
  %v5906 = vor.u32 %v5902, %v5905
  %v5907 = vrot.slane %v5906, 4
  %v5909 = vshll.u32 %v5688, 16
  %v5911 = vrot.slane %v5909, 5
  %v5912 = vsel %vm2390, %v5907, %v5911
  %s5913 = scalar_lea.vmem %s3, 704
  %v5914 = vld [vmem:[%s5913] sm:$0xf]
  %v5915 = vld [vmem:[%s5913 + $0x4] sm:$0xf]
  %v5916 = vld [vmem:[%s5913 + $0x8] sm:$0xf]
  %v5917 = vld [vmem:[%s5913 + $0xc] sm:$0xf]
  %v5918 = vld [vmem:[%s5913 + $0x10] sm:$0xf]
  %v5919 = vld [vmem:[%s5913 + $0x14] sm:$0xf]
  %v5920 = vld [vmem:[%s5913 + $0x18] sm:$0xf]
  %v5921 = vld [vmem:[%s5913 + $0x1c] sm:$0xf]
  %v5922 = vld [vmem:[%s5913 + $0x20] sm:$0xf]
  %v5923 = vld [vmem:[%s5913 + $0x24] sm:$0xf]
  %v5924 = vld [vmem:[%s5913 + $0x28] sm:$0xf]
  %v5925 = vld [vmem:[%s5913 + $0x2c] sm:$0xf]
  %v5926 = vld [vmem:[%s5913 + $0x30] sm:$0xf]
  %v5927 = vld [vmem:[%s5913 + $0x34] sm:$0xf]
  %v5928 = vld [vmem:[%s5913 + $0x38] sm:$0xf]
  %v5929 = vld [vmem:[%s5913 + $0x3c] sm:$0xf]
  %v5930 = vunpack.c.l.b16 %v5702
  %v5931 = vunpack.c.l.b16 %v5716
  %v5932 = vunpack.c.l.b16 %v5730
  %v5933 = vunpack.c.l.b16 %v5744
  %v5934 = vunpack.c.l.b16 %v5758
  %v5935 = vunpack.c.l.b16 %v5772
  %v5936 = vunpack.c.l.b16 %v5786
  %v5937 = vunpack.c.l.b16 %v5800
  %v5938 = vunpack.c.l.b16 %v5814
  %v5939 = vunpack.c.l.b16 %v5828
  %v5940 = vunpack.c.l.b16 %v5842
  %v5941 = vunpack.c.l.b16 %v5856
  %v5942 = vunpack.c.l.b16 %v5870
  %v5943 = vunpack.c.l.b16 %v5884
  %v5944 = vunpack.c.l.b16 %v5898
  %v5945 = vunpack.c.l.b16 %v5912
  %v5946 = vpack.c.b16 %v5931, %v5930
  %v5947 = vpack.c.b16 %v5933, %v5932
  %v5948 = vpack.c.b16 %v5935, %v5934
  %v5949 = vpack.c.b16 %v5937, %v5936
  %v5950 = vpack.c.b16 %v5939, %v5938
  %v5951 = vpack.c.b16 %v5941, %v5940
  %v5952 = vpack.c.b16 %v5943, %v5942
  %v5953 = vpack.c.b16 %v5945, %v5944
  %v5978 = vunpack.c.l.b16 %v5914
  %v5979 = vunpack.c.l.b16 %v5915
  %v5980 = vunpack.c.l.b16 %v5916
  %v5981 = vunpack.c.l.b16 %v5917
  %v5982 = vunpack.c.l.b16 %v5918
  %v5983 = vunpack.c.l.b16 %v5919
  %v5984 = vunpack.c.l.b16 %v5920
  %v5985 = vunpack.c.l.b16 %v5921
  %v5986 = vunpack.c.l.b16 %v5922
  %v5987 = vunpack.c.l.b16 %v5923
  %v5988 = vunpack.c.l.b16 %v5924
  %v5989 = vunpack.c.l.b16 %v5925
  %v5990 = vunpack.c.l.b16 %v5926
  %v5991 = vunpack.c.l.b16 %v5927
  %v5992 = vunpack.c.l.b16 %v5928
  %v5993 = vunpack.c.l.b16 %v5929
  %v5994 = vpack.c.b16 %v5979, %v5978
  %v5995 = vpack.c.b16 %v5981, %v5980
  %v5996 = vpack.c.b16 %v5983, %v5982
  %v5997 = vpack.c.b16 %v5985, %v5984
  %v5998 = vpack.c.b16 %v5987, %v5986
  %v5999 = vpack.c.b16 %v5989, %v5988
  %v6000 = vpack.c.b16 %v5991, %v5990
  %v6001 = vpack.c.b16 %v5993, %v5992
  %6010 = vmatprep.subr.bf16.mxu0 0
  %6011 = vmatpush1.bf16.msra.mxu0 %v5994
  %6012 = vmatprep.subr.bf16.mxu0 0
  %6013 = vmatpush1.bf16.msra.mxu0 %v5995
  %6014 = vmatprep.subr.bf16.mxu0 0
  %6015 = vmatpush1.bf16.msra.mxu0 %v5996
  %6016 = vmatprep.subr.bf16.mxu0 0
  %6017 = vmatpush1.bf16.msra.mxu0 %v5997
  %6018 = vmatprep.subr.bf16.mxu0 0
  %6019 = vmatpush1.bf16.msra.mxu0 %v5998
  %6020 = vmatprep.subr.bf16.mxu0 0
  %6021 = vmatpush1.bf16.msra.mxu0 %v5999
  %6022 = vmatprep.subr.bf16.mxu0 0
  %6023 = vmatpush1.bf16.msra.mxu0 %v6000
  %6024 = vmatprep.subr.bf16.mxu0 0
  %6025 = vmatpush1.bf16.msra.mxu0 %v6001
  %6026 = vmatprep.subr.bf16.mxu0 0
  %6027 = vmatpush1.bf16.msra.mxu0 0
  %6028 = vmatprep.subr.bf16.mxu0 0
  %6029 = vmatpush1.bf16.msra.mxu0 0
  %6030 = vmatprep.subr.bf16.mxu0 0
  %6031 = vmatpush1.bf16.msra.mxu0 0
  %6032 = vmatprep.subr.bf16.mxu0 0
  %6033 = vmatpush1.bf16.msra.mxu0 0
  %6034 = vmatprep.subr.bf16.mxu0 0
  %6035 = vmatpush1.bf16.msra.mxu0 0
  %6036 = vmatprep.subr.bf16.mxu0 0
  %6037 = vmatpush1.bf16.msra.mxu0 0
  %6038 = vmatprep.subr.bf16.mxu0 0
  %6039 = vmatpush1.bf16.msra.mxu0 0
  %6040 = vmatprep.subr.bf16.mxu0 0
  %6041 = vmatpush1.bf16.msra.mxu0 0
  %6042 = vmatprep.mubr.bf16.mxu0 0
  %6043 = vmatmul.mubr.bf16.gmra.mrb[0].mxu0 %v5946
  %v6044 = vpop.f32.mrb[0].mxu0
  %v6045 = vadd.f32 0.0, %v6044
  %v6046 = vpop.f32.mrb[0].mxu0
  %v6047 = vpop.f32.mrb[0].mxu0
  %v6048 = vadd.f32 0.0, %v6047
  %v6049 = vpop.f32.mrb[0].mxu0
  %6050 = vmatprep.mubr.bf16.mxu0 0
  %6051 = vmatmul.mubr.bf16.gmra.mrb[0].mxu0 %v5947
  %v6052 = vpop.f32.mrb[0].mxu0
  %v6053 = vadd.f32 0.0, %v6052
  %v6054 = vpop.f32.mrb[0].mxu0
  %v6055 = vpop.f32.mrb[0].mxu0
  %v6056 = vadd.f32 0.0, %v6055
  %v6057 = vpop.f32.mrb[0].mxu0
  %6058 = vmatprep.mubr.bf16.mxu0 0
  %6059 = vmatmul.mubr.bf16.gmra.mrb[0].mxu0 %v5948
  %v6060 = vpop.f32.mrb[0].mxu0
  %v6061 = vadd.f32 0.0, %v6060
  %v6062 = vpop.f32.mrb[0].mxu0
  %v6063 = vpop.f32.mrb[0].mxu0
  %v6064 = vadd.f32 0.0, %v6063
  %v6065 = vpop.f32.mrb[0].mxu0
  %6066 = vmatprep.mubr.bf16.mxu0 0
  %6067 = vmatmul.mubr.bf16.gmra.mrb[0].mxu0 %v5949
  %v6068 = vpop.f32.mrb[0].mxu0
  %v6069 = vadd.f32 0.0, %v6068
  %v6070 = vpop.f32.mrb[0].mxu0
  %v6071 = vpop.f32.mrb[0].mxu0
  %v6072 = vadd.f32 0.0, %v6071
  %v6073 = vpop.f32.mrb[0].mxu0
  %6074 = vmatprep.mubr.bf16.mxu0 0
  %6075 = vmatmul.mubr.bf16.gmra.mrb[0].mxu0 %v5950
  %v6076 = vpop.f32.mrb[0].mxu0
  %v6077 = vadd.f32 0.0, %v6076
  %v6078 = vpop.f32.mrb[0].mxu0
  %v6079 = vpop.f32.mrb[0].mxu0
  %v6080 = vadd.f32 0.0, %v6079
  %v6081 = vpop.f32.mrb[0].mxu0
  %6082 = vmatprep.mubr.bf16.mxu0 0
  %6083 = vmatmul.mubr.bf16.gmra.mrb[0].mxu0 %v5951
  %v6084 = vpop.f32.mrb[0].mxu0
  %v6085 = vadd.f32 0.0, %v6084
  %v6086 = vpop.f32.mrb[0].mxu0
  %v6087 = vpop.f32.mrb[0].mxu0
  %v6088 = vadd.f32 0.0, %v6087
  %v6089 = vpop.f32.mrb[0].mxu0
  %6090 = vmatprep.mubr.bf16.mxu0 0
  %6091 = vmatmul.mubr.bf16.gmra.mrb[0].mxu0 %v5952
  %v6092 = vpop.f32.mrb[0].mxu0
  %v6093 = vadd.f32 0.0, %v6092
  %v6094 = vpop.f32.mrb[0].mxu0
  %v6095 = vpop.f32.mrb[0].mxu0
  %v6096 = vadd.f32 0.0, %v6095
  %v6097 = vpop.f32.mrb[0].mxu0
  %6098 = vmatprep.mubr.bf16.mxu0 0
  %6099 = vmatmul.mubr.bf16.gmra.mrb[0].mxu0 %v5953
  %v6100 = vpop.f32.mrb[0].mxu0
  %v6101 = vadd.f32 0.0, %v6100
  %v6102 = vpop.f32.mrb[0].mxu0
  %v6103 = vpop.f32.mrb[0].mxu0
  %v6104 = vadd.f32 0.0, %v6103
  %v6105 = vpop.f32.mrb[0].mxu0
  %6106 = vdwg.mxu0
  %v6107 = vadd.f32 %v5641, %v6045
  %v6108 = vadd.f32 %v5642, %v6048
  %v6109 = vadd.f32 %v5643, %v6053
  %v6110 = vadd.f32 %v5644, %v6056
  %v6111 = vadd.f32 %v5645, %v6061
  %v6112 = vadd.f32 %v5646, %v6064
  %v6113 = vadd.f32 %v5647, %v6069
  %v6114 = vadd.f32 %v5648, %v6072
  %v6115 = vadd.f32 %v5649, %v6077
  %v6116 = vadd.f32 %v5650, %v6080
  %v6117 = vadd.f32 %v5651, %v6085
  %v6118 = vadd.f32 %v5652, %v6088
  %v6119 = vadd.f32 %v5653, %v6093
  %v6120 = vadd.f32 %v5654, %v6096
  %v6121 = vadd.f32 %v5655, %v6101
  %v6122 = vadd.f32 %v5656, %v6104
  %s6123 = scalar_lea.vmem [#allocation2], 152
  %v6124 = vld [vmem:[%s6123] sm:$0xf]
  %v6125 = vld [vmem:[%s6123 + $0x8] sm:$0xf]
  %v6126 = vld [vmem:[%s6123 + $0x10] sm:$0xf]
  %v6127 = vld [vmem:[%s6123 + $0x18] sm:$0xf]
  %v6128 = vld [vmem:[%s6123 + $0x20] sm:$0xf]
  %v6129 = vld [vmem:[%s6123 + $0x28] sm:$0xf]
  %v6130 = vld [vmem:[%s6123 + $0x30] sm:$0xf]
  %v6131 = vld [vmem:[%s6123 + $0x38] sm:$0xf]
  %v6132 = vld [vmem:[%s6123 + $0x120] sm:$0xf]
  %v6133 = vld [vmem:[%s6123 + $0x128] sm:$0xf]
  %v6134 = vld [vmem:[%s6123 + $0x130] sm:$0xf]
  %v6135 = vld [vmem:[%s6123 + $0x138] sm:$0xf]
  %v6136 = vld [vmem:[%s6123 + $0x140] sm:$0xf]
  %v6137 = vld [vmem:[%s6123 + $0x148] sm:$0xf]
  %v6138 = vld [vmem:[%s6123 + $0x150] sm:$0xf]
  %v6139 = vld [vmem:[%s6123 + $0x158] sm:$0xf]
  %s6140 = scalar_lea.vmem %s3, 768
  %v6141 = vld [vmem:[%s6140] sm:$0xf]
  %v6142 = vld [vmem:[%s6140 + $0x4] sm:$0xf]
  %v6143 = vld [vmem:[%s6140 + $0x8] sm:$0xf]
  %v6144 = vld [vmem:[%s6140 + $0xc] sm:$0xf]
  %v6145 = vld [vmem:[%s6140 + $0x10] sm:$0xf]
  %v6146 = vld [vmem:[%s6140 + $0x14] sm:$0xf]
  %v6147 = vld [vmem:[%s6140 + $0x18] sm:$0xf]
  %v6148 = vld [vmem:[%s6140 + $0x1c] sm:$0xf]
  %v6149 = vld [vmem:[%s6140 + $0x20] sm:$0xf]
  %v6150 = vld [vmem:[%s6140 + $0x24] sm:$0xf]
  %v6151 = vld [vmem:[%s6140 + $0x28] sm:$0xf]
  %v6152 = vld [vmem:[%s6140 + $0x2c] sm:$0xf]
  %v6153 = vld [vmem:[%s6140 + $0x30] sm:$0xf]
  %v6154 = vld [vmem:[%s6140 + $0x34] sm:$0xf]
  %v6155 = vld [vmem:[%s6140 + $0x38] sm:$0xf]
  %v6156 = vld [vmem:[%s6140 + $0x3c] sm:$0xf]
  %v6173 = vunpack.c.l.b16 %v6124
  %v6174 = vunpack.c.l.b16 %v6125
  %v6175 = vunpack.c.l.b16 %v6126
  %v6176 = vunpack.c.l.b16 %v6127
  %v6177 = vunpack.c.l.b16 %v6128
  %v6178 = vunpack.c.l.b16 %v6129
  %v6179 = vunpack.c.l.b16 %v6130
  %v6180 = vunpack.c.l.b16 %v6131
  %v6181 = vunpack.c.l.b16 %v6132
  %v6182 = vunpack.c.l.b16 %v6133
  %v6183 = vunpack.c.l.b16 %v6134
  %v6184 = vunpack.c.l.b16 %v6135
  %v6185 = vunpack.c.l.b16 %v6136
  %v6186 = vunpack.c.l.b16 %v6137
  %v6187 = vunpack.c.l.b16 %v6138
  %v6188 = vunpack.c.l.b16 %v6139
  %v6189 = vpack.c.b16 %v6174, %v6173
  %v6190 = vpack.c.b16 %v6176, %v6175
  %v6191 = vpack.c.b16 %v6178, %v6177
  %v6192 = vpack.c.b16 %v6180, %v6179
  %v6193 = vpack.c.b16 %v6182, %v6181
  %v6194 = vpack.c.b16 %v6184, %v6183
  %v6195 = vpack.c.b16 %v6186, %v6185
  %v6196 = vpack.c.b16 %v6188, %v6187
  %v6221 = vunpack.c.l.b16 %v6141
  %v6222 = vunpack.c.l.b16 %v6142
  %v6223 = vunpack.c.l.b16 %v6143
  %v6224 = vunpack.c.l.b16 %v6144
  %v6225 = vunpack.c.l.b16 %v6145
  %v6226 = vunpack.c.l.b16 %v6146
  %v6227 = vunpack.c.l.b16 %v6147
  %v6228 = vunpack.c.l.b16 %v6148
  %v6229 = vunpack.c.l.b16 %v6149
  %v6230 = vunpack.c.l.b16 %v6150
  %v6231 = vunpack.c.l.b16 %v6151
  %v6232 = vunpack.c.l.b16 %v6152
  %v6233 = vunpack.c.l.b16 %v6153
  %v6234 = vunpack.c.l.b16 %v6154
  %v6235 = vunpack.c.l.b16 %v6155
  %v6236 = vunpack.c.l.b16 %v6156
  %v6237 = vpack.c.b16 %v6222, %v6221
  %v6238 = vpack.c.b16 %v6224, %v6223
  %v6239 = vpack.c.b16 %v6226, %v6225
  %v6240 = vpack.c.b16 %v6228, %v6227
  %v6241 = vpack.c.b16 %v6230, %v6229
  %v6242 = vpack.c.b16 %v6232, %v6231
  %v6243 = vpack.c.b16 %v6234, %v6233
  %v6244 = vpack.c.b16 %v6236, %v6235
  %6253 = vmatprep.subr.bf16.mxu0 0
  %6254 = vmatpush1.bf16.msra.mxu0 %v6237
  %6255 = vmatprep.subr.bf16.mxu0 0
  %6256 = vmatpush1.bf16.msra.mxu0 %v6238
  %6257 = vmatprep.subr.bf16.mxu0 0
  %6258 = vmatpush1.bf16.msra.mxu0 %v6239
  %6259 = vmatprep.subr.bf16.mxu0 0
  %6260 = vmatpush1.bf16.msra.mxu0 %v6240
  %6261 = vmatprep.subr.bf16.mxu0 0
  %6262 = vmatpush1.bf16.msra.mxu0 %v6241
  %6263 = vmatprep.subr.bf16.mxu0 0
  %6264 = vmatpush1.bf16.msra.mxu0 %v6242
  %6265 = vmatprep.subr.bf16.mxu0 0
  %6266 = vmatpush1.bf16.msra.mxu0 %v6243
  %6267 = vmatprep.subr.bf16.mxu0 0
  %6268 = vmatpush1.bf16.msra.mxu0 %v6244
  %6269 = vmatprep.subr.bf16.mxu0 0
  %6270 = vmatpush1.bf16.msra.mxu0 0
  %6271 = vmatprep.subr.bf16.mxu0 0
  %6272 = vmatpush1.bf16.msra.mxu0 0
  %6273 = vmatprep.subr.bf16.mxu0 0
  %6274 = vmatpush1.bf16.msra.mxu0 0
  %6275 = vmatprep.subr.bf16.mxu0 0
  %6276 = vmatpush1.bf16.msra.mxu0 0
  %6277 = vmatprep.subr.bf16.mxu0 0
  %6278 = vmatpush1.bf16.msra.mxu0 0
  %6279 = vmatprep.subr.bf16.mxu0 0
  %6280 = vmatpush1.bf16.msra.mxu0 0
  %6281 = vmatprep.subr.bf16.mxu0 0
  %6282 = vmatpush1.bf16.msra.mxu0 0
  %6283 = vmatprep.subr.bf16.mxu0 0
  %6284 = vmatpush1.bf16.msra.mxu0 0
  %6285 = vmatprep.mubr.bf16.mxu0 0
  %6286 = vmatmul.mubr.bf16.gmra.mrb[0].mxu0 %v6189
  %v6287 = vpop.f32.mrb[0].mxu0
  %v6288 = vadd.f32 0.0, %v6287
  %v6289 = vpop.f32.mrb[0].mxu0
  %v6290 = vpop.f32.mrb[0].mxu0
  %v6291 = vadd.f32 0.0, %v6290
  %v6292 = vpop.f32.mrb[0].mxu0
  %6293 = vmatprep.mubr.bf16.mxu0 0
  %6294 = vmatmul.mubr.bf16.gmra.mrb[0].mxu0 %v6190
  %v6295 = vpop.f32.mrb[0].mxu0
  %v6296 = vadd.f32 0.0, %v6295
  %v6297 = vpop.f32.mrb[0].mxu0
  %v6298 = vpop.f32.mrb[0].mxu0
  %v6299 = vadd.f32 0.0, %v6298
  %v6300 = vpop.f32.mrb[0].mxu0
  %6301 = vmatprep.mubr.bf16.mxu0 0
  %6302 = vmatmul.mubr.bf16.gmra.mrb[0].mxu0 %v6191
  %v6303 = vpop.f32.mrb[0].mxu0
  %v6304 = vadd.f32 0.0, %v6303
  %v6305 = vpop.f32.mrb[0].mxu0
  %v6306 = vpop.f32.mrb[0].mxu0
  %v6307 = vadd.f32 0.0, %v6306
  %v6308 = vpop.f32.mrb[0].mxu0
  %6309 = vmatprep.mubr.bf16.mxu0 0
  %6310 = vmatmul.mubr.bf16.gmra.mrb[0].mxu0 %v6192
  %v6311 = vpop.f32.mrb[0].mxu0
  %v6312 = vadd.f32 0.0, %v6311
  %v6313 = vpop.f32.mrb[0].mxu0
  %v6314 = vpop.f32.mrb[0].mxu0
  %v6315 = vadd.f32 0.0, %v6314
  %v6316 = vpop.f32.mrb[0].mxu0
  %6317 = vmatprep.mubr.bf16.mxu0 0
  %6318 = vmatmul.mubr.bf16.gmra.mrb[0].mxu0 %v6193
  %v6319 = vpop.f32.mrb[0].mxu0
  %v6320 = vadd.f32 0.0, %v6319
  %v6321 = vpop.f32.mrb[0].mxu0
  %v6322 = vpop.f32.mrb[0].mxu0
  %v6323 = vadd.f32 0.0, %v6322
  %v6324 = vpop.f32.mrb[0].mxu0
  %6325 = vmatprep.mubr.bf16.mxu0 0
  %6326 = vmatmul.mubr.bf16.gmra.mrb[0].mxu0 %v6194
  %v6327 = vpop.f32.mrb[0].mxu0
  %v6328 = vadd.f32 0.0, %v6327
  %v6329 = vpop.f32.mrb[0].mxu0
  %v6330 = vpop.f32.mrb[0].mxu0
  %v6331 = vadd.f32 0.0, %v6330
  %v6332 = vpop.f32.mrb[0].mxu0
  %6333 = vmatprep.mubr.bf16.mxu0 0
  %6334 = vmatmul.mubr.bf16.gmra.mrb[0].mxu0 %v6195
  %v6335 = vpop.f32.mrb[0].mxu0
  %v6336 = vadd.f32 0.0, %v6335
  %v6337 = vpop.f32.mrb[0].mxu0
  %v6338 = vpop.f32.mrb[0].mxu0
  %v6339 = vadd.f32 0.0, %v6338
  %v6340 = vpop.f32.mrb[0].mxu0
  %6341 = vmatprep.mubr.bf16.mxu0 0
  %6342 = vmatmul.mubr.bf16.gmra.mrb[0].mxu0 %v6196
  %v6343 = vpop.f32.mrb[0].mxu0
  %v6344 = vadd.f32 0.0, %v6343
  %v6345 = vpop.f32.mrb[0].mxu0
  %v6346 = vpop.f32.mrb[0].mxu0
  %v6347 = vadd.f32 0.0, %v6346
  %v6348 = vpop.f32.mrb[0].mxu0
  %6349 = vdwg.mxu0
  %v6350 = vadd.f32 %v6107, %v6288
  %v6351 = vadd.f32 %v6108, %v6291
  %v6352 = vadd.f32 %v6109, %v6296
  %v6353 = vadd.f32 %v6110, %v6299
  %v6354 = vadd.f32 %v6111, %v6304
  %v6355 = vadd.f32 %v6112, %v6307
  %v6356 = vadd.f32 %v6113, %v6312
  %v6357 = vadd.f32 %v6114, %v6315
  %v6358 = vadd.f32 %v6115, %v6320
  %v6359 = vadd.f32 %v6116, %v6323
  %v6360 = vadd.f32 %v6117, %v6328
  %v6361 = vadd.f32 %v6118, %v6331
  %v6362 = vadd.f32 %v6119, %v6336
  %v6363 = vadd.f32 %v6120, %v6339
  %v6364 = vadd.f32 %v6121, %v6344
  %v6365 = vadd.f32 %v6122, %v6347
  %s6366 = scalar_lea.vmem [#allocation2], 224
  %v6367 = vld [vmem:[%s6366] sm:$0xf]
  %v6368 = vld [vmem:[%s6366 + $0x8] sm:$0xf]
  %v6369 = vld [vmem:[%s6366 + $0x10] sm:$0xf]
  %v6370 = vld [vmem:[%s6366 + $0x18] sm:$0xf]
  %v6371 = vld [vmem:[%s6366 + $0x20] sm:$0xf]
  %v6372 = vld [vmem:[%s6366 + $0x28] sm:$0xf]
  %v6373 = vld [vmem:[%s6366 + $0x30] sm:$0xf]
  %v6374 = vld [vmem:[%s6366 + $0x38] sm:$0xf]
  %v6375 = vld [vmem:[%s6366 + $0x120] sm:$0xf]
  %v6376 = vld [vmem:[%s6366 + $0x128] sm:$0xf]
  %v6377 = vld [vmem:[%s6366 + $0x130] sm:$0xf]
  %v6378 = vld [vmem:[%s6366 + $0x138] sm:$0xf]
  %v6379 = vld [vmem:[%s6366 + $0x140] sm:$0xf]
  %v6380 = vld [vmem:[%s6366 + $0x148] sm:$0xf]
  %v6381 = vld [vmem:[%s6366 + $0x150] sm:$0xf]
  %v6382 = vld [vmem:[%s6366 + $0x158] sm:$0xf]
  %s6383 = scalar_lea.vmem %s3, 832
  %v6384 = vld [vmem:[%s6383] sm:$0xf]
  %v6385 = vld [vmem:[%s6383 + $0x4] sm:$0xf]
  %v6386 = vld [vmem:[%s6383 + $0x8] sm:$0xf]
  %v6387 = vld [vmem:[%s6383 + $0xc] sm:$0xf]
  %v6388 = vld [vmem:[%s6383 + $0x10] sm:$0xf]
  %v6389 = vld [vmem:[%s6383 + $0x14] sm:$0xf]
  %v6390 = vld [vmem:[%s6383 + $0x18] sm:$0xf]
  %v6391 = vld [vmem:[%s6383 + $0x1c] sm:$0xf]
  %v6392 = vld [vmem:[%s6383 + $0x20] sm:$0xf]
  %v6393 = vld [vmem:[%s6383 + $0x24] sm:$0xf]
  %v6394 = vld [vmem:[%s6383 + $0x28] sm:$0xf]
  %v6395 = vld [vmem:[%s6383 + $0x2c] sm:$0xf]
  %v6396 = vld [vmem:[%s6383 + $0x30] sm:$0xf]
  %v6397 = vld [vmem:[%s6383 + $0x34] sm:$0xf]
  %v6398 = vld [vmem:[%s6383 + $0x38] sm:$0xf]
  %v6399 = vld [vmem:[%s6383 + $0x3c] sm:$0xf]
  %v6416 = vunpack.c.l.b16 %v6367
  %v6417 = vunpack.c.l.b16 %v6368
  %v6418 = vunpack.c.l.b16 %v6369
  %v6419 = vunpack.c.l.b16 %v6370
  %v6420 = vunpack.c.l.b16 %v6371
  %v6421 = vunpack.c.l.b16 %v6372
  %v6422 = vunpack.c.l.b16 %v6373
  %v6423 = vunpack.c.l.b16 %v6374
  %v6424 = vunpack.c.l.b16 %v6375
  %v6425 = vunpack.c.l.b16 %v6376
  %v6426 = vunpack.c.l.b16 %v6377
  %v6427 = vunpack.c.l.b16 %v6378
  %v6428 = vunpack.c.l.b16 %v6379
  %v6429 = vunpack.c.l.b16 %v6380
  %v6430 = vunpack.c.l.b16 %v6381
  %v6431 = vunpack.c.l.b16 %v6382
  %v6432 = vpack.c.b16 %v6417, %v6416
  %v6433 = vpack.c.b16 %v6419, %v6418
  %v6434 = vpack.c.b16 %v6421, %v6420
  %v6435 = vpack.c.b16 %v6423, %v6422
  %v6436 = vpack.c.b16 %v6425, %v6424
  %v6437 = vpack.c.b16 %v6427, %v6426
  %v6438 = vpack.c.b16 %v6429, %v6428
  %v6439 = vpack.c.b16 %v6431, %v6430
  %v6464 = vunpack.c.l.b16 %v6384
  %v6465 = vunpack.c.l.b16 %v6385
  %v6466 = vunpack.c.l.b16 %v6386
  %v6467 = vunpack.c.l.b16 %v6387
  %v6468 = vunpack.c.l.b16 %v6388
  %v6469 = vunpack.c.l.b16 %v6389
  %v6470 = vunpack.c.l.b16 %v6390
  %v6471 = vunpack.c.l.b16 %v6391
  %v6472 = vunpack.c.l.b16 %v6392
  %v6473 = vunpack.c.l.b16 %v6393
  %v6474 = vunpack.c.l.b16 %v6394
  %v6475 = vunpack.c.l.b16 %v6395
  %v6476 = vunpack.c.l.b16 %v6396
  %v6477 = vunpack.c.l.b16 %v6397
  %v6478 = vunpack.c.l.b16 %v6398
  %v6479 = vunpack.c.l.b16 %v6399
  %v6480 = vpack.c.b16 %v6465, %v6464
  %v6481 = vpack.c.b16 %v6467, %v6466
  %v6482 = vpack.c.b16 %v6469, %v6468
  %v6483 = vpack.c.b16 %v6471, %v6470
  %v6484 = vpack.c.b16 %v6473, %v6472
  %v6485 = vpack.c.b16 %v6475, %v6474
  %v6486 = vpack.c.b16 %v6477, %v6476
  %v6487 = vpack.c.b16 %v6479, %v6478
  %6496 = vmatprep.subr.bf16.mxu0 0
  %6497 = vmatpush1.bf16.msra.mxu0 %v6480
  %6498 = vmatprep.subr.bf16.mxu0 0
  %6499 = vmatpush1.bf16.msra.mxu0 %v6481
  %6500 = vmatprep.subr.bf16.mxu0 0
  %6501 = vmatpush1.bf16.msra.mxu0 %v6482
  %6502 = vmatprep.subr.bf16.mxu0 0
  %6503 = vmatpush1.bf16.msra.mxu0 %v6483
  %6504 = vmatprep.subr.bf16.mxu0 0
  %6505 = vmatpush1.bf16.msra.mxu0 %v6484
  %6506 = vmatprep.subr.bf16.mxu0 0
  %6507 = vmatpush1.bf16.msra.mxu0 %v6485
  %6508 = vmatprep.subr.bf16.mxu0 0
  %6509 = vmatpush1.bf16.msra.mxu0 %v6486
  %6510 = vmatprep.subr.bf16.mxu0 0
  %6511 = vmatpush1.bf16.msra.mxu0 %v6487
  %6512 = vmatprep.subr.bf16.mxu0 0
  %6513 = vmatpush1.bf16.msra.mxu0 0
  %6514 = vmatprep.subr.bf16.mxu0 0
  %6515 = vmatpush1.bf16.msra.mxu0 0
  %6516 = vmatprep.subr.bf16.mxu0 0
  %6517 = vmatpush1.bf16.msra.mxu0 0
  %6518 = vmatprep.subr.bf16.mxu0 0
  %6519 = vmatpush1.bf16.msra.mxu0 0
  %6520 = vmatprep.subr.bf16.mxu0 0
  %6521 = vmatpush1.bf16.msra.mxu0 0
  %6522 = vmatprep.subr.bf16.mxu0 0
  %6523 = vmatpush1.bf16.msra.mxu0 0
  %6524 = vmatprep.subr.bf16.mxu0 0
  %6525 = vmatpush1.bf16.msra.mxu0 0
  %6526 = vmatprep.subr.bf16.mxu0 0
  %6527 = vmatpush1.bf16.msra.mxu0 0
  %6528 = vmatprep.mubr.bf16.mxu0 0
  %6529 = vmatmul.mubr.bf16.gmra.mrb[0].mxu0 %v6432
  %v6530 = vpop.f32.mrb[0].mxu0
  %v6531 = vadd.f32 0.0, %v6530
  %v6532 = vpop.f32.mrb[0].mxu0
  %v6533 = vpop.f32.mrb[0].mxu0
  %v6534 = vadd.f32 0.0, %v6533
  %v6535 = vpop.f32.mrb[0].mxu0
  %6536 = vmatprep.mubr.bf16.mxu0 0
  %6537 = vmatmul.mubr.bf16.gmra.mrb[0].mxu0 %v6433
  %v6538 = vpop.f32.mrb[0].mxu0
  %v6539 = vadd.f32 0.0, %v6538
  %v6540 = vpop.f32.mrb[0].mxu0
  %v6541 = vpop.f32.mrb[0].mxu0
  %v6542 = vadd.f32 0.0, %v6541
  %v6543 = vpop.f32.mrb[0].mxu0
  %6544 = vmatprep.mubr.bf16.mxu0 0
  %6545 = vmatmul.mubr.bf16.gmra.mrb[0].mxu0 %v6434
  %v6546 = vpop.f32.mrb[0].mxu0
  %v6547 = vadd.f32 0.0, %v6546
  %v6548 = vpop.f32.mrb[0].mxu0
  %v6549 = vpop.f32.mrb[0].mxu0
  %v6550 = vadd.f32 0.0, %v6549
  %v6551 = vpop.f32.mrb[0].mxu0
  %6552 = vmatprep.mubr.bf16.mxu0 0
  %6553 = vmatmul.mubr.bf16.gmra.mrb[0].mxu0 %v6435
  %v6554 = vpop.f32.mrb[0].mxu0
  %v6555 = vadd.f32 0.0, %v6554
  %v6556 = vpop.f32.mrb[0].mxu0
  %v6557 = vpop.f32.mrb[0].mxu0
  %v6558 = vadd.f32 0.0, %v6557
  %v6559 = vpop.f32.mrb[0].mxu0
  %6560 = vmatprep.mubr.bf16.mxu0 0
  %6561 = vmatmul.mubr.bf16.gmra.mrb[0].mxu0 %v6436
  %v6562 = vpop.f32.mrb[0].mxu0
  %v6563 = vadd.f32 0.0, %v6562
  %v6564 = vpop.f32.mrb[0].mxu0
  %v6565 = vpop.f32.mrb[0].mxu0
  %v6566 = vadd.f32 0.0, %v6565
  %v6567 = vpop.f32.mrb[0].mxu0
  %6568 = vmatprep.mubr.bf16.mxu0 0
  %6569 = vmatmul.mubr.bf16.gmra.mrb[0].mxu0 %v6437
  %v6570 = vpop.f32.mrb[0].mxu0
  %v6571 = vadd.f32 0.0, %v6570
  %v6572 = vpop.f32.mrb[0].mxu0
  %v6573 = vpop.f32.mrb[0].mxu0
  %v6574 = vadd.f32 0.0, %v6573
  %v6575 = vpop.f32.mrb[0].mxu0
  %6576 = vmatprep.mubr.bf16.mxu0 0
  %6577 = vmatmul.mubr.bf16.gmra.mrb[0].mxu0 %v6438
  %v6578 = vpop.f32.mrb[0].mxu0
  %v6579 = vadd.f32 0.0, %v6578
  %v6580 = vpop.f32.mrb[0].mxu0
  %v6581 = vpop.f32.mrb[0].mxu0
  %v6582 = vadd.f32 0.0, %v6581
  %v6583 = vpop.f32.mrb[0].mxu0
  %6584 = vmatprep.mubr.bf16.mxu0 0
  %6585 = vmatmul.mubr.bf16.gmra.mrb[0].mxu0 %v6439
  %v6586 = vpop.f32.mrb[0].mxu0
  %v6587 = vadd.f32 0.0, %v6586
  %v6588 = vpop.f32.mrb[0].mxu0
  %v6589 = vpop.f32.mrb[0].mxu0
  %v6590 = vadd.f32 0.0, %v6589
  %v6591 = vpop.f32.mrb[0].mxu0
  %6592 = vdwg.mxu0
  %v6593 = vadd.f32 %v6350, %v6531
  %v6594 = vadd.f32 %v6351, %v6534
  %v6595 = vadd.f32 %v6352, %v6539
  %v6596 = vadd.f32 %v6353, %v6542
  %v6597 = vadd.f32 %v6354, %v6547
  %v6598 = vadd.f32 %v6355, %v6550
  %v6599 = vadd.f32 %v6356, %v6555
  %v6600 = vadd.f32 %v6357, %v6558
  %v6601 = vadd.f32 %v6358, %v6563
  %v6602 = vadd.f32 %v6359, %v6566
  %v6603 = vadd.f32 %v6360, %v6571
  %v6604 = vadd.f32 %v6361, %v6574
  %v6605 = vadd.f32 %v6362, %v6579
  %v6606 = vadd.f32 %v6363, %v6582
  %v6607 = vadd.f32 %v6364, %v6587
  %v6608 = vadd.f32 %v6365, %v6590
  %v6609 = vld [vmem:[%s6123] sm:$0xf]
  %v6610 = vld [vmem:[%s6123 + $0x4] sm:$0x1]
  %v6611 = vld [vmem:[%s6123 + $0x8] sm:$0xf]
  %v6612 = vld [vmem:[%s6123 + $0xc] sm:$0x1]
  %v6613 = vld [vmem:[%s6123 + $0x10] sm:$0xf]
  %v6614 = vld [vmem:[%s6123 + $0x14] sm:$0x1]
  %v6615 = vld [vmem:[%s6123 + $0x18] sm:$0xf]
  %v6616 = vld [vmem:[%s6123 + $0x1c] sm:$0x1]
  %v6617 = vld [vmem:[%s6123 + $0x20] sm:$0xf]
  %v6618 = vld [vmem:[%s6123 + $0x24] sm:$0x1]
  %v6619 = vld [vmem:[%s6123 + $0x28] sm:$0xf]
  %v6620 = vld [vmem:[%s6123 + $0x2c] sm:$0x1]
  %v6621 = vld [vmem:[%s6123 + $0x30] sm:$0xf]
  %v6622 = vld [vmem:[%s6123 + $0x34] sm:$0x1]
  %v6623 = vld [vmem:[%s6123 + $0x38] sm:$0xf]
  %v6624 = vld [vmem:[%s6123 + $0x3c] sm:$0x1]
  %v6625 = vld [vmem:[%s6123 + $0x120] sm:$0xf]
  %v6626 = vld [vmem:[%s6123 + $0x124] sm:$0x1]
  %v6627 = vld [vmem:[%s6123 + $0x128] sm:$0xf]
  %v6628 = vld [vmem:[%s6123 + $0x12c] sm:$0x1]
  %v6629 = vld [vmem:[%s6123 + $0x130] sm:$0xf]
  %v6630 = vld [vmem:[%s6123 + $0x134] sm:$0x1]
  %v6631 = vld [vmem:[%s6123 + $0x138] sm:$0xf]
  %v6632 = vld [vmem:[%s6123 + $0x13c] sm:$0x1]
  %v6633 = vld [vmem:[%s6123 + $0x140] sm:$0xf]
  %v6634 = vld [vmem:[%s6123 + $0x144] sm:$0x1]
  %v6635 = vld [vmem:[%s6123 + $0x148] sm:$0xf]
  %v6636 = vld [vmem:[%s6123 + $0x14c] sm:$0x1]
  %v6637 = vld [vmem:[%s6123 + $0x150] sm:$0xf]
  %v6638 = vld [vmem:[%s6123 + $0x154] sm:$0x1]
  %v6639 = vld [vmem:[%s6123 + $0x158] sm:$0xf]
  %v6640 = vld [vmem:[%s6123 + $0x15c] sm:$0x1]
  %v6642 = vshrl.u32 %v6609, 16
  %v6644 = vrot.slane %v6642, 4
  %v6645 = vshll.u32 %v6609, 16
  %v6647 = vrot.slane %v6645, 5
  %v6648 = vor.u32 %v6644, %v6647
  %v6649 = vrot.slane %v6648, 4
  %v6651 = vshll.u32 %v6610, 16
  %v6653 = vrot.slane %v6651, 5
  %v6654 = vsel %vm2390, %v6649, %v6653
  %v6656 = vshrl.u32 %v6611, 16
  %v6658 = vrot.slane %v6656, 4
  %v6659 = vshll.u32 %v6611, 16
  %v6661 = vrot.slane %v6659, 5
  %v6662 = vor.u32 %v6658, %v6661
  %v6663 = vrot.slane %v6662, 4
  %v6665 = vshll.u32 %v6612, 16
  %v6667 = vrot.slane %v6665, 5
  %v6668 = vsel %vm2390, %v6663, %v6667
  %v6670 = vshrl.u32 %v6613, 16
  %v6672 = vrot.slane %v6670, 4
  %v6673 = vshll.u32 %v6613, 16
  %v6675 = vrot.slane %v6673, 5
  %v6676 = vor.u32 %v6672, %v6675
  %v6677 = vrot.slane %v6676, 4
  %v6679 = vshll.u32 %v6614, 16
  %v6681 = vrot.slane %v6679, 5
  %v6682 = vsel %vm2390, %v6677, %v6681
  %v6684 = vshrl.u32 %v6615, 16
  %v6686 = vrot.slane %v6684, 4
  %v6687 = vshll.u32 %v6615, 16
  %v6689 = vrot.slane %v6687, 5
  %v6690 = vor.u32 %v6686, %v6689
  %v6691 = vrot.slane %v6690, 4
  %v6693 = vshll.u32 %v6616, 16
  %v6695 = vrot.slane %v6693, 5
  %v6696 = vsel %vm2390, %v6691, %v6695
  %v6698 = vshrl.u32 %v6617, 16
  %v6700 = vrot.slane %v6698, 4
  %v6701 = vshll.u32 %v6617, 16
  %v6703 = vrot.slane %v6701, 5
  %v6704 = vor.u32 %v6700, %v6703
  %v6705 = vrot.slane %v6704, 4
  %v6707 = vshll.u32 %v6618, 16
  %v6709 = vrot.slane %v6707, 5
  %v6710 = vsel %vm2390, %v6705, %v6709
  %v6712 = vshrl.u32 %v6619, 16
  %v6714 = vrot.slane %v6712, 4
  %v6715 = vshll.u32 %v6619, 16
  %v6717 = vrot.slane %v6715, 5
  %v6718 = vor.u32 %v6714, %v6717
  %v6719 = vrot.slane %v6718, 4
  %v6721 = vshll.u32 %v6620, 16
  %v6723 = vrot.slane %v6721, 5
  %v6724 = vsel %vm2390, %v6719, %v6723
  %v6726 = vshrl.u32 %v6621, 16
  %v6728 = vrot.slane %v6726, 4
  %v6729 = vshll.u32 %v6621, 16
  %v6731 = vrot.slane %v6729, 5
  %v6732 = vor.u32 %v6728, %v6731
  %v6733 = vrot.slane %v6732, 4
  %v6735 = vshll.u32 %v6622, 16
  %v6737 = vrot.slane %v6735, 5
  %v6738 = vsel %vm2390, %v6733, %v6737
  %v6740 = vshrl.u32 %v6623, 16
  %v6742 = vrot.slane %v6740, 4
  %v6743 = vshll.u32 %v6623, 16
  %v6745 = vrot.slane %v6743, 5
  %v6746 = vor.u32 %v6742, %v6745
  %v6747 = vrot.slane %v6746, 4
  %v6749 = vshll.u32 %v6624, 16
  %v6751 = vrot.slane %v6749, 5
  %v6752 = vsel %vm2390, %v6747, %v6751
  %v6754 = vshrl.u32 %v6625, 16
  %v6756 = vrot.slane %v6754, 4
  %v6757 = vshll.u32 %v6625, 16
  %v6759 = vrot.slane %v6757, 5
  %v6760 = vor.u32 %v6756, %v6759
  %v6761 = vrot.slane %v6760, 4
  %v6763 = vshll.u32 %v6626, 16
  %v6765 = vrot.slane %v6763, 5
  %v6766 = vsel %vm2390, %v6761, %v6765
  %v6768 = vshrl.u32 %v6627, 16
  %v6770 = vrot.slane %v6768, 4
  %v6771 = vshll.u32 %v6627, 16
  %v6773 = vrot.slane %v6771, 5
  %v6774 = vor.u32 %v6770, %v6773
  %v6775 = vrot.slane %v6774, 4
  %v6777 = vshll.u32 %v6628, 16
  %v6779 = vrot.slane %v6777, 5
  %v6780 = vsel %vm2390, %v6775, %v6779
  %v6782 = vshrl.u32 %v6629, 16
  %v6784 = vrot.slane %v6782, 4
  %v6785 = vshll.u32 %v6629, 16
  %v6787 = vrot.slane %v6785, 5
  %v6788 = vor.u32 %v6784, %v6787
  %v6789 = vrot.slane %v6788, 4
  %v6791 = vshll.u32 %v6630, 16
  %v6793 = vrot.slane %v6791, 5
  %v6794 = vsel %vm2390, %v6789, %v6793
  %v6796 = vshrl.u32 %v6631, 16
  %v6798 = vrot.slane %v6796, 4
  %v6799 = vshll.u32 %v6631, 16
  %v6801 = vrot.slane %v6799, 5
  %v6802 = vor.u32 %v6798, %v6801
  %v6803 = vrot.slane %v6802, 4
  %v6805 = vshll.u32 %v6632, 16
  %v6807 = vrot.slane %v6805, 5
  %v6808 = vsel %vm2390, %v6803, %v6807
  %v6810 = vshrl.u32 %v6633, 16
  %v6812 = vrot.slane %v6810, 4
  %v6813 = vshll.u32 %v6633, 16
  %v6815 = vrot.slane %v6813, 5
  %v6816 = vor.u32 %v6812, %v6815
  %v6817 = vrot.slane %v6816, 4
  %v6819 = vshll.u32 %v6634, 16
  %v6821 = vrot.slane %v6819, 5
  %v6822 = vsel %vm2390, %v6817, %v6821
  %v6824 = vshrl.u32 %v6635, 16
  %v6826 = vrot.slane %v6824, 4
  %v6827 = vshll.u32 %v6635, 16
  %v6829 = vrot.slane %v6827, 5
  %v6830 = vor.u32 %v6826, %v6829
  %v6831 = vrot.slane %v6830, 4
  %v6833 = vshll.u32 %v6636, 16
  %v6835 = vrot.slane %v6833, 5
  %v6836 = vsel %vm2390, %v6831, %v6835
  %v6838 = vshrl.u32 %v6637, 16
  %v6840 = vrot.slane %v6838, 4
  %v6841 = vshll.u32 %v6637, 16
  %v6843 = vrot.slane %v6841, 5
  %v6844 = vor.u32 %v6840, %v6843
  %v6845 = vrot.slane %v6844, 4
  %v6847 = vshll.u32 %v6638, 16
  %v6849 = vrot.slane %v6847, 5
  %v6850 = vsel %vm2390, %v6845, %v6849
  %v6852 = vshrl.u32 %v6639, 16
  %v6854 = vrot.slane %v6852, 4
  %v6855 = vshll.u32 %v6639, 16
  %v6857 = vrot.slane %v6855, 5
  %v6858 = vor.u32 %v6854, %v6857
  %v6859 = vrot.slane %v6858, 4
  %v6861 = vshll.u32 %v6640, 16
  %v6863 = vrot.slane %v6861, 5
  %v6864 = vsel %vm2390, %v6859, %v6863
  %s6865 = scalar_lea.vmem %s3, 896
  %v6866 = vld [vmem:[%s6865] sm:$0xf]
  %v6867 = vld [vmem:[%s6865 + $0x4] sm:$0xf]
  %v6868 = vld [vmem:[%s6865 + $0x8] sm:$0xf]
  %v6869 = vld [vmem:[%s6865 + $0xc] sm:$0xf]
  %v6870 = vld [vmem:[%s6865 + $0x10] sm:$0xf]
  %v6871 = vld [vmem:[%s6865 + $0x14] sm:$0xf]
  %v6872 = vld [vmem:[%s6865 + $0x18] sm:$0xf]
  %v6873 = vld [vmem:[%s6865 + $0x1c] sm:$0xf]
  %v6874 = vld [vmem:[%s6865 + $0x20] sm:$0xf]
  %v6875 = vld [vmem:[%s6865 + $0x24] sm:$0xf]
  %v6876 = vld [vmem:[%s6865 + $0x28] sm:$0xf]
  %v6877 = vld [vmem:[%s6865 + $0x2c] sm:$0xf]
  %v6878 = vld [vmem:[%s6865 + $0x30] sm:$0xf]
  %v6879 = vld [vmem:[%s6865 + $0x34] sm:$0xf]
  %v6880 = vld [vmem:[%s6865 + $0x38] sm:$0xf]
  %v6881 = vld [vmem:[%s6865 + $0x3c] sm:$0xf]
  %v6882 = vunpack.c.l.b16 %v6654
  %v6883 = vunpack.c.l.b16 %v6668
  %v6884 = vunpack.c.l.b16 %v6682
  %v6885 = vunpack.c.l.b16 %v6696
  %v6886 = vunpack.c.l.b16 %v6710
  %v6887 = vunpack.c.l.b16 %v6724
  %v6888 = vunpack.c.l.b16 %v6738
  %v6889 = vunpack.c.l.b16 %v6752
  %v6890 = vunpack.c.l.b16 %v6766
  %v6891 = vunpack.c.l.b16 %v6780
  %v6892 = vunpack.c.l.b16 %v6794
  %v6893 = vunpack.c.l.b16 %v6808
  %v6894 = vunpack.c.l.b16 %v6822
  %v6895 = vunpack.c.l.b16 %v6836
  %v6896 = vunpack.c.l.b16 %v6850
  %v6897 = vunpack.c.l.b16 %v6864
  %v6898 = vpack.c.b16 %v6883, %v6882
  %v6899 = vpack.c.b16 %v6885, %v6884
  %v6900 = vpack.c.b16 %v6887, %v6886
  %v6901 = vpack.c.b16 %v6889, %v6888
  %v6902 = vpack.c.b16 %v6891, %v6890
  %v6903 = vpack.c.b16 %v6893, %v6892
  %v6904 = vpack.c.b16 %v6895, %v6894
  %v6905 = vpack.c.b16 %v6897, %v6896
  %v6930 = vunpack.c.l.b16 %v6866
  %v6931 = vunpack.c.l.b16 %v6867
  %v6932 = vunpack.c.l.b16 %v6868
  %v6933 = vunpack.c.l.b16 %v6869
  %v6934 = vunpack.c.l.b16 %v6870
  %v6935 = vunpack.c.l.b16 %v6871
  %v6936 = vunpack.c.l.b16 %v6872
  %v6937 = vunpack.c.l.b16 %v6873
  %v6938 = vunpack.c.l.b16 %v6874
  %v6939 = vunpack.c.l.b16 %v6875
  %v6940 = vunpack.c.l.b16 %v6876
  %v6941 = vunpack.c.l.b16 %v6877
  %v6942 = vunpack.c.l.b16 %v6878
  %v6943 = vunpack.c.l.b16 %v6879
  %v6944 = vunpack.c.l.b16 %v6880
  %v6945 = vunpack.c.l.b16 %v6881
  %v6946 = vpack.c.b16 %v6931, %v6930
  %v6947 = vpack.c.b16 %v6933, %v6932
  %v6948 = vpack.c.b16 %v6935, %v6934
  %v6949 = vpack.c.b16 %v6937, %v6936
  %v6950 = vpack.c.b16 %v6939, %v6938
  %v6951 = vpack.c.b16 %v6941, %v6940
  %v6952 = vpack.c.b16 %v6943, %v6942
  %v6953 = vpack.c.b16 %v6945, %v6944
  %6962 = vmatprep.subr.bf16.mxu0 0
  %6963 = vmatpush1.bf16.msra.mxu0 %v6946
  %6964 = vmatprep.subr.bf16.mxu0 0
  %6965 = vmatpush1.bf16.msra.mxu0 %v6947
  %6966 = vmatprep.subr.bf16.mxu0 0
  %6967 = vmatpush1.bf16.msra.mxu0 %v6948
  %6968 = vmatprep.subr.bf16.mxu0 0
  %6969 = vmatpush1.bf16.msra.mxu0 %v6949
  %6970 = vmatprep.subr.bf16.mxu0 0
  %6971 = vmatpush1.bf16.msra.mxu0 %v6950
  %6972 = vmatprep.subr.bf16.mxu0 0
  %6973 = vmatpush1.bf16.msra.mxu0 %v6951
  %6974 = vmatprep.subr.bf16.mxu0 0
  %6975 = vmatpush1.bf16.msra.mxu0 %v6952
  %6976 = vmatprep.subr.bf16.mxu0 0
  %6977 = vmatpush1.bf16.msra.mxu0 %v6953
  %6978 = vmatprep.subr.bf16.mxu0 0
  %6979 = vmatpush1.bf16.msra.mxu0 0
  %6980 = vmatprep.subr.bf16.mxu0 0
  %6981 = vmatpush1.bf16.msra.mxu0 0
  %6982 = vmatprep.subr.bf16.mxu0 0
  %6983 = vmatpush1.bf16.msra.mxu0 0
  %6984 = vmatprep.subr.bf16.mxu0 0
  %6985 = vmatpush1.bf16.msra.mxu0 0
  %6986 = vmatprep.subr.bf16.mxu0 0
  %6987 = vmatpush1.bf16.msra.mxu0 0
  %6988 = vmatprep.subr.bf16.mxu0 0
  %6989 = vmatpush1.bf16.msra.mxu0 0
  %6990 = vmatprep.subr.bf16.mxu0 0
  %6991 = vmatpush1.bf16.msra.mxu0 0
  %6992 = vmatprep.subr.bf16.mxu0 0
  %6993 = vmatpush1.bf16.msra.mxu0 0
  %6994 = vmatprep.mubr.bf16.mxu0 0
  %6995 = vmatmul.mubr.bf16.gmra.mrb[0].mxu0 %v6898
  %v6996 = vpop.f32.mrb[0].mxu0
  %v6997 = vadd.f32 0.0, %v6996
  %v6998 = vpop.f32.mrb[0].mxu0
  %v6999 = vpop.f32.mrb[0].mxu0
  %v7000 = vadd.f32 0.0, %v6999
  %v7001 = vpop.f32.mrb[0].mxu0
  %7002 = vmatprep.mubr.bf16.mxu0 0
  %7003 = vmatmul.mubr.bf16.gmra.mrb[0].mxu0 %v6899
  %v7004 = vpop.f32.mrb[0].mxu0
  %v7005 = vadd.f32 0.0, %v7004
  %v7006 = vpop.f32.mrb[0].mxu0
  %v7007 = vpop.f32.mrb[0].mxu0
  %v7008 = vadd.f32 0.0, %v7007
  %v7009 = vpop.f32.mrb[0].mxu0
  %7010 = vmatprep.mubr.bf16.mxu0 0
  %7011 = vmatmul.mubr.bf16.gmra.mrb[0].mxu0 %v6900
  %v7012 = vpop.f32.mrb[0].mxu0
  %v7013 = vadd.f32 0.0, %v7012
  %v7014 = vpop.f32.mrb[0].mxu0
  %v7015 = vpop.f32.mrb[0].mxu0
  %v7016 = vadd.f32 0.0, %v7015
  %v7017 = vpop.f32.mrb[0].mxu0
  %7018 = vmatprep.mubr.bf16.mxu0 0
  %7019 = vmatmul.mubr.bf16.gmra.mrb[0].mxu0 %v6901
  %v7020 = vpop.f32.mrb[0].mxu0
  %v7021 = vadd.f32 0.0, %v7020
  %v7022 = vpop.f32.mrb[0].mxu0
  %v7023 = vpop.f32.mrb[0].mxu0
  %v7024 = vadd.f32 0.0, %v7023
  %v7025 = vpop.f32.mrb[0].mxu0
  %7026 = vmatprep.mubr.bf16.mxu0 0
  %7027 = vmatmul.mubr.bf16.gmra.mrb[0].mxu0 %v6902
  %v7028 = vpop.f32.mrb[0].mxu0
  %v7029 = vadd.f32 0.0, %v7028
  %v7030 = vpop.f32.mrb[0].mxu0
  %v7031 = vpop.f32.mrb[0].mxu0
  %v7032 = vadd.f32 0.0, %v7031
  %v7033 = vpop.f32.mrb[0].mxu0
  %7034 = vmatprep.mubr.bf16.mxu0 0
  %7035 = vmatmul.mubr.bf16.gmra.mrb[0].mxu0 %v6903
  %v7036 = vpop.f32.mrb[0].mxu0
  %v7037 = vadd.f32 0.0, %v7036
  %v7038 = vpop.f32.mrb[0].mxu0
  %v7039 = vpop.f32.mrb[0].mxu0
  %v7040 = vadd.f32 0.0, %v7039
  %v7041 = vpop.f32.mrb[0].mxu0
  %7042 = vmatprep.mubr.bf16.mxu0 0
  %7043 = vmatmul.mubr.bf16.gmra.mrb[0].mxu0 %v6904
  %v7044 = vpop.f32.mrb[0].mxu0
  %v7045 = vadd.f32 0.0, %v7044
  %v7046 = vpop.f32.mrb[0].mxu0
  %v7047 = vpop.f32.mrb[0].mxu0
  %v7048 = vadd.f32 0.0, %v7047
  %v7049 = vpop.f32.mrb[0].mxu0
  %7050 = vmatprep.mubr.bf16.mxu0 0
  %7051 = vmatmul.mubr.bf16.gmra.mrb[0].mxu0 %v6905
  %v7052 = vpop.f32.mrb[0].mxu0
  %v7053 = vadd.f32 0.0, %v7052
  %v7054 = vpop.f32.mrb[0].mxu0
  %v7055 = vpop.f32.mrb[0].mxu0
  %v7056 = vadd.f32 0.0, %v7055
  %v7057 = vpop.f32.mrb[0].mxu0
  %7058 = vdwg.mxu0
  %v7059 = vadd.f32 %v6593, %v6997
  %v7060 = vadd.f32 %v6594, %v7000
  %v7061 = vadd.f32 %v6595, %v7005
  %v7062 = vadd.f32 %v6596, %v7008
  %v7063 = vadd.f32 %v6597, %v7013
  %v7064 = vadd.f32 %v6598, %v7016
  %v7065 = vadd.f32 %v6599, %v7021
  %v7066 = vadd.f32 %v6600, %v7024
  %v7067 = vadd.f32 %v6601, %v7029
  %v7068 = vadd.f32 %v6602, %v7032
  %v7069 = vadd.f32 %v6603, %v7037
  %v7070 = vadd.f32 %v6604, %v7040
  %v7071 = vadd.f32 %v6605, %v7045
  %v7072 = vadd.f32 %v6606, %v7048
  %v7073 = vadd.f32 %v6607, %v7053
  %v7074 = vadd.f32 %v6608, %v7056
  %v7075 = vld [vmem:[%s6366] sm:$0xf]
  %v7076 = vld [vmem:[%s6366 + $0x4] sm:$0x1]
  %v7077 = vld [vmem:[%s6366 + $0x8] sm:$0xf]
  %v7078 = vld [vmem:[%s6366 + $0xc] sm:$0x1]
  %v7079 = vld [vmem:[%s6366 + $0x10] sm:$0xf]
  %v7080 = vld [vmem:[%s6366 + $0x14] sm:$0x1]
  %v7081 = vld [vmem:[%s6366 + $0x18] sm:$0xf]
  %v7082 = vld [vmem:[%s6366 + $0x1c] sm:$0x1]
  %v7083 = vld [vmem:[%s6366 + $0x20] sm:$0xf]
  %v7084 = vld [vmem:[%s6366 + $0x24] sm:$0x1]
  %v7085 = vld [vmem:[%s6366 + $0x28] sm:$0xf]
  %v7086 = vld [vmem:[%s6366 + $0x2c] sm:$0x1]
  %v7087 = vld [vmem:[%s6366 + $0x30] sm:$0xf]
  %v7088 = vld [vmem:[%s6366 + $0x34] sm:$0x1]
  %v7089 = vld [vmem:[%s6366 + $0x38] sm:$0xf]
  %v7090 = vld [vmem:[%s6366 + $0x3c] sm:$0x1]
  %v7091 = vld [vmem:[%s6366 + $0x120] sm:$0xf]
  %v7092 = vld [vmem:[%s6366 + $0x124] sm:$0x1]
  %v7093 = vld [vmem:[%s6366 + $0x128] sm:$0xf]
  %v7094 = vld [vmem:[%s6366 + $0x12c] sm:$0x1]
  %v7095 = vld [vmem:[%s6366 + $0x130] sm:$0xf]
  %v7096 = vld [vmem:[%s6366 + $0x134] sm:$0x1]
  %v7097 = vld [vmem:[%s6366 + $0x138] sm:$0xf]
  %v7098 = vld [vmem:[%s6366 + $0x13c] sm:$0x1]
  %v7099 = vld [vmem:[%s6366 + $0x140] sm:$0xf]
  %v7100 = vld [vmem:[%s6366 + $0x144] sm:$0x1]
  %v7101 = vld [vmem:[%s6366 + $0x148] sm:$0xf]
  %v7102 = vld [vmem:[%s6366 + $0x14c] sm:$0x1]
  %v7103 = vld [vmem:[%s6366 + $0x150] sm:$0xf]
  %v7104 = vld [vmem:[%s6366 + $0x154] sm:$0x1]
  %v7105 = vld [vmem:[%s6366 + $0x158] sm:$0xf]
  %v7106 = vld [vmem:[%s6366 + $0x15c] sm:$0x1]
  %v7108 = vshrl.u32 %v7075, 16
  %v7110 = vrot.slane %v7108, 4
  %v7111 = vshll.u32 %v7075, 16
  %v7113 = vrot.slane %v7111, 5
  %v7114 = vor.u32 %v7110, %v7113
  %v7115 = vrot.slane %v7114, 4
  %v7117 = vshll.u32 %v7076, 16
  %v7119 = vrot.slane %v7117, 5
  %v7120 = vsel %vm2390, %v7115, %v7119
  %v7122 = vshrl.u32 %v7077, 16
  %v7124 = vrot.slane %v7122, 4
  %v7125 = vshll.u32 %v7077, 16
  %v7127 = vrot.slane %v7125, 5
  %v7128 = vor.u32 %v7124, %v7127
  %v7129 = vrot.slane %v7128, 4
  %v7131 = vshll.u32 %v7078, 16
  %v7133 = vrot.slane %v7131, 5
  %v7134 = vsel %vm2390, %v7129, %v7133
  %v7136 = vshrl.u32 %v7079, 16
  %v7138 = vrot.slane %v7136, 4
  %v7139 = vshll.u32 %v7079, 16
  %v7141 = vrot.slane %v7139, 5
  %v7142 = vor.u32 %v7138, %v7141
  %v7143 = vrot.slane %v7142, 4
  %v7145 = vshll.u32 %v7080, 16
  %v7147 = vrot.slane %v7145, 5
  %v7148 = vsel %vm2390, %v7143, %v7147
  %v7150 = vshrl.u32 %v7081, 16
  %v7152 = vrot.slane %v7150, 4
  %v7153 = vshll.u32 %v7081, 16
  %v7155 = vrot.slane %v7153, 5
  %v7156 = vor.u32 %v7152, %v7155
  %v7157 = vrot.slane %v7156, 4
  %v7159 = vshll.u32 %v7082, 16
  %v7161 = vrot.slane %v7159, 5
  %v7162 = vsel %vm2390, %v7157, %v7161
  %v7164 = vshrl.u32 %v7083, 16
  %v7166 = vrot.slane %v7164, 4
  %v7167 = vshll.u32 %v7083, 16
  %v7169 = vrot.slane %v7167, 5
  %v7170 = vor.u32 %v7166, %v7169
  %v7171 = vrot.slane %v7170, 4
  %v7173 = vshll.u32 %v7084, 16
  %v7175 = vrot.slane %v7173, 5
  %v7176 = vsel %vm2390, %v7171, %v7175
  %v7178 = vshrl.u32 %v7085, 16
  %v7180 = vrot.slane %v7178, 4
  %v7181 = vshll.u32 %v7085, 16
  %v7183 = vrot.slane %v7181, 5
  %v7184 = vor.u32 %v7180, %v7183
  %v7185 = vrot.slane %v7184, 4
  %v7187 = vshll.u32 %v7086, 16
  %v7189 = vrot.slane %v7187, 5
  %v7190 = vsel %vm2390, %v7185, %v7189
  %v7192 = vshrl.u32 %v7087, 16
  %v7194 = vrot.slane %v7192, 4
  %v7195 = vshll.u32 %v7087, 16
  %v7197 = vrot.slane %v7195, 5
  %v7198 = vor.u32 %v7194, %v7197
  %v7199 = vrot.slane %v7198, 4
  %v7201 = vshll.u32 %v7088, 16
  %v7203 = vrot.slane %v7201, 5
  %v7204 = vsel %vm2390, %v7199, %v7203
  %v7206 = vshrl.u32 %v7089, 16
  %v7208 = vrot.slane %v7206, 4
  %v7209 = vshll.u32 %v7089, 16
  %v7211 = vrot.slane %v7209, 5
  %v7212 = vor.u32 %v7208, %v7211
  %v7213 = vrot.slane %v7212, 4
  %v7215 = vshll.u32 %v7090, 16
  %v7217 = vrot.slane %v7215, 5
  %v7218 = vsel %vm2390, %v7213, %v7217
  %v7220 = vshrl.u32 %v7091, 16
  %v7222 = vrot.slane %v7220, 4
  %v7223 = vshll.u32 %v7091, 16
  %v7225 = vrot.slane %v7223, 5
  %v7226 = vor.u32 %v7222, %v7225
  %v7227 = vrot.slane %v7226, 4
  %v7229 = vshll.u32 %v7092, 16
  %v7231 = vrot.slane %v7229, 5
  %v7232 = vsel %vm2390, %v7227, %v7231
  %v7234 = vshrl.u32 %v7093, 16
  %v7236 = vrot.slane %v7234, 4
  %v7237 = vshll.u32 %v7093, 16
  %v7239 = vrot.slane %v7237, 5
  %v7240 = vor.u32 %v7236, %v7239
  %v7241 = vrot.slane %v7240, 4
  %v7243 = vshll.u32 %v7094, 16
  %v7245 = vrot.slane %v7243, 5
  %v7246 = vsel %vm2390, %v7241, %v7245
  %v7248 = vshrl.u32 %v7095, 16
  %v7250 = vrot.slane %v7248, 4
  %v7251 = vshll.u32 %v7095, 16
  %v7253 = vrot.slane %v7251, 5
  %v7254 = vor.u32 %v7250, %v7253
  %v7255 = vrot.slane %v7254, 4
  %v7257 = vshll.u32 %v7096, 16
  %v7259 = vrot.slane %v7257, 5
  %v7260 = vsel %vm2390, %v7255, %v7259
  %v7262 = vshrl.u32 %v7097, 16
  %v7264 = vrot.slane %v7262, 4
  %v7265 = vshll.u32 %v7097, 16
  %v7267 = vrot.slane %v7265, 5
  %v7268 = vor.u32 %v7264, %v7267
  %v7269 = vrot.slane %v7268, 4
  %v7271 = vshll.u32 %v7098, 16
  %v7273 = vrot.slane %v7271, 5
  %v7274 = vsel %vm2390, %v7269, %v7273
  %v7276 = vshrl.u32 %v7099, 16
  %v7278 = vrot.slane %v7276, 4
  %v7279 = vshll.u32 %v7099, 16
  %v7281 = vrot.slane %v7279, 5
  %v7282 = vor.u32 %v7278, %v7281
  %v7283 = vrot.slane %v7282, 4
  %v7285 = vshll.u32 %v7100, 16
  %v7287 = vrot.slane %v7285, 5
  %v7288 = vsel %vm2390, %v7283, %v7287
  %v7290 = vshrl.u32 %v7101, 16
  %v7292 = vrot.slane %v7290, 4
  %v7293 = vshll.u32 %v7101, 16
  %v7295 = vrot.slane %v7293, 5
  %v7296 = vor.u32 %v7292, %v7295
  %v7297 = vrot.slane %v7296, 4
  %v7299 = vshll.u32 %v7102, 16
  %v7301 = vrot.slane %v7299, 5
  %v7302 = vsel %vm2390, %v7297, %v7301
  %v7304 = vshrl.u32 %v7103, 16
  %v7306 = vrot.slane %v7304, 4
  %v7307 = vshll.u32 %v7103, 16
  %v7309 = vrot.slane %v7307, 5
  %v7310 = vor.u32 %v7306, %v7309
  %v7311 = vrot.slane %v7310, 4
  %v7313 = vshll.u32 %v7104, 16
  %v7315 = vrot.slane %v7313, 5
  %v7316 = vsel %vm2390, %v7311, %v7315
  %v7318 = vshrl.u32 %v7105, 16
  %v7320 = vrot.slane %v7318, 4
  %v7321 = vshll.u32 %v7105, 16
  %v7323 = vrot.slane %v7321, 5
  %v7324 = vor.u32 %v7320, %v7323
  %v7325 = vrot.slane %v7324, 4
  %v7327 = vshll.u32 %v7106, 16
  %v7329 = vrot.slane %v7327, 5
  %v7330 = vsel %vm2390, %v7325, %v7329
  %s7331 = scalar_lea.vmem %s3, 960
  %v7332 = vld [vmem:[%s7331] sm:$0xf]
  %v7333 = vld [vmem:[%s7331 + $0x4] sm:$0xf]
  %v7334 = vld [vmem:[%s7331 + $0x8] sm:$0xf]
  %v7335 = vld [vmem:[%s7331 + $0xc] sm:$0xf]
  %v7336 = vld [vmem:[%s7331 + $0x10] sm:$0xf]
  %v7337 = vld [vmem:[%s7331 + $0x14] sm:$0xf]
  %v7338 = vld [vmem:[%s7331 + $0x18] sm:$0xf]
  %v7339 = vld [vmem:[%s7331 + $0x1c] sm:$0xf]
  %v7340 = vld [vmem:[%s7331 + $0x20] sm:$0xf]
  %v7341 = vld [vmem:[%s7331 + $0x24] sm:$0xf]
  %v7342 = vld [vmem:[%s7331 + $0x28] sm:$0xf]
  %v7343 = vld [vmem:[%s7331 + $0x2c] sm:$0xf]
  %v7344 = vld [vmem:[%s7331 + $0x30] sm:$0xf]
  %v7345 = vld [vmem:[%s7331 + $0x34] sm:$0xf]
  %v7346 = vld [vmem:[%s7331 + $0x38] sm:$0xf]
  %v7347 = vld [vmem:[%s7331 + $0x3c] sm:$0xf]
  %v7348 = vunpack.c.l.b16 %v7120
  %v7349 = vunpack.c.l.b16 %v7134
  %v7350 = vunpack.c.l.b16 %v7148
  %v7351 = vunpack.c.l.b16 %v7162
  %v7352 = vunpack.c.l.b16 %v7176
  %v7353 = vunpack.c.l.b16 %v7190
  %v7354 = vunpack.c.l.b16 %v7204
  %v7355 = vunpack.c.l.b16 %v7218
  %v7356 = vunpack.c.l.b16 %v7232
  %v7357 = vunpack.c.l.b16 %v7246
  %v7358 = vunpack.c.l.b16 %v7260
  %v7359 = vunpack.c.l.b16 %v7274
  %v7360 = vunpack.c.l.b16 %v7288
  %v7361 = vunpack.c.l.b16 %v7302
  %v7362 = vunpack.c.l.b16 %v7316
  %v7363 = vunpack.c.l.b16 %v7330
  %v7364 = vpack.c.b16 %v7349, %v7348
  %v7365 = vpack.c.b16 %v7351, %v7350
  %v7366 = vpack.c.b16 %v7353, %v7352
  %v7367 = vpack.c.b16 %v7355, %v7354
  %v7368 = vpack.c.b16 %v7357, %v7356
  %v7369 = vpack.c.b16 %v7359, %v7358
  %v7370 = vpack.c.b16 %v7361, %v7360
  %v7371 = vpack.c.b16 %v7363, %v7362
  %v7396 = vunpack.c.l.b16 %v7332
  %v7397 = vunpack.c.l.b16 %v7333
  %v7398 = vunpack.c.l.b16 %v7334
  %v7399 = vunpack.c.l.b16 %v7335
  %v7400 = vunpack.c.l.b16 %v7336
  %v7401 = vunpack.c.l.b16 %v7337
  %v7402 = vunpack.c.l.b16 %v7338
  %v7403 = vunpack.c.l.b16 %v7339
  %v7404 = vunpack.c.l.b16 %v7340
  %v7405 = vunpack.c.l.b16 %v7341
  %v7406 = vunpack.c.l.b16 %v7342
  %v7407 = vunpack.c.l.b16 %v7343
  %v7408 = vunpack.c.l.b16 %v7344
  %v7409 = vunpack.c.l.b16 %v7345
  %v7410 = vunpack.c.l.b16 %v7346
  %v7411 = vunpack.c.l.b16 %v7347
  %v7412 = vpack.c.b16 %v7397, %v7396
  %v7413 = vpack.c.b16 %v7399, %v7398
  %v7414 = vpack.c.b16 %v7401, %v7400
  %v7415 = vpack.c.b16 %v7403, %v7402
  %v7416 = vpack.c.b16 %v7405, %v7404
  %v7417 = vpack.c.b16 %v7407, %v7406
  %v7418 = vpack.c.b16 %v7409, %v7408
  %v7419 = vpack.c.b16 %v7411, %v7410
  %7428 = vmatprep.subr.bf16.mxu0 0
  %7429 = vmatpush1.bf16.msra.mxu0 %v7412
  %7430 = vmatprep.subr.bf16.mxu0 0
  %7431 = vmatpush1.bf16.msra.mxu0 %v7413
  %7432 = vmatprep.subr.bf16.mxu0 0
  %7433 = vmatpush1.bf16.msra.mxu0 %v7414
  %7434 = vmatprep.subr.bf16.mxu0 0
  %7435 = vmatpush1.bf16.msra.mxu0 %v7415
  %7436 = vmatprep.subr.bf16.mxu0 0
  %7437 = vmatpush1.bf16.msra.mxu0 %v7416
  %7438 = vmatprep.subr.bf16.mxu0 0
  %7439 = vmatpush1.bf16.msra.mxu0 %v7417
  %7440 = vmatprep.subr.bf16.mxu0 0
  %7441 = vmatpush1.bf16.msra.mxu0 %v7418
  %7442 = vmatprep.subr.bf16.mxu0 0
  %7443 = vmatpush1.bf16.msra.mxu0 %v7419
  %7444 = vmatprep.subr.bf16.mxu0 0
  %7445 = vmatpush1.bf16.msra.mxu0 0
  %7446 = vmatprep.subr.bf16.mxu0 0
  %7447 = vmatpush1.bf16.msra.mxu0 0
  %7448 = vmatprep.subr.bf16.mxu0 0
  %7449 = vmatpush1.bf16.msra.mxu0 0
  %7450 = vmatprep.subr.bf16.mxu0 0
  %7451 = vmatpush1.bf16.msra.mxu0 0
  %7452 = vmatprep.subr.bf16.mxu0 0
  %7453 = vmatpush1.bf16.msra.mxu0 0
  %7454 = vmatprep.subr.bf16.mxu0 0
  %7455 = vmatpush1.bf16.msra.mxu0 0
  %7456 = vmatprep.subr.bf16.mxu0 0
  %7457 = vmatpush1.bf16.msra.mxu0 0
  %7458 = vmatprep.subr.bf16.mxu0 0
  %7459 = vmatpush1.bf16.msra.mxu0 0
  %7460 = vmatprep.mubr.bf16.mxu0 0
  %7461 = vmatmul.mubr.bf16.gmra.mrb[0].mxu0 %v7364
  %v7462 = vpop.f32.mrb[0].mxu0
  %v7463 = vadd.f32 0.0, %v7462
  %v7464 = vpop.f32.mrb[0].mxu0
  %v7465 = vpop.f32.mrb[0].mxu0
  %v7466 = vadd.f32 0.0, %v7465
  %v7467 = vpop.f32.mrb[0].mxu0
  %7468 = vmatprep.mubr.bf16.mxu0 0
  %7469 = vmatmul.mubr.bf16.gmra.mrb[0].mxu0 %v7365
  %v7470 = vpop.f32.mrb[0].mxu0
  %v7471 = vadd.f32 0.0, %v7470
  %v7472 = vpop.f32.mrb[0].mxu0
  %v7473 = vpop.f32.mrb[0].mxu0
  %v7474 = vadd.f32 0.0, %v7473
  %v7475 = vpop.f32.mrb[0].mxu0
  %7476 = vmatprep.mubr.bf16.mxu0 0
  %7477 = vmatmul.mubr.bf16.gmra.mrb[0].mxu0 %v7366
  %v7478 = vpop.f32.mrb[0].mxu0
  %v7479 = vadd.f32 0.0, %v7478
  %v7480 = vpop.f32.mrb[0].mxu0
  %v7481 = vpop.f32.mrb[0].mxu0
  %v7482 = vadd.f32 0.0, %v7481
  %v7483 = vpop.f32.mrb[0].mxu0
  %7484 = vmatprep.mubr.bf16.mxu0 0
  %7485 = vmatmul.mubr.bf16.gmra.mrb[0].mxu0 %v7367
  %v7486 = vpop.f32.mrb[0].mxu0
  %v7487 = vadd.f32 0.0, %v7486
  %v7488 = vpop.f32.mrb[0].mxu0
  %v7489 = vpop.f32.mrb[0].mxu0
  %v7490 = vadd.f32 0.0, %v7489
  %v7491 = vpop.f32.mrb[0].mxu0
  %7492 = vmatprep.mubr.bf16.mxu0 0
  %7493 = vmatmul.mubr.bf16.gmra.mrb[0].mxu0 %v7368
  %v7494 = vpop.f32.mrb[0].mxu0
  %v7495 = vadd.f32 0.0, %v7494
  %v7496 = vpop.f32.mrb[0].mxu0
  %v7497 = vpop.f32.mrb[0].mxu0
  %v7498 = vadd.f32 0.0, %v7497
  %v7499 = vpop.f32.mrb[0].mxu0
  %7500 = vmatprep.mubr.bf16.mxu0 0
  %7501 = vmatmul.mubr.bf16.gmra.mrb[0].mxu0 %v7369
  %v7502 = vpop.f32.mrb[0].mxu0
  %v7503 = vadd.f32 0.0, %v7502
  %v7504 = vpop.f32.mrb[0].mxu0
  %v7505 = vpop.f32.mrb[0].mxu0
  %v7506 = vadd.f32 0.0, %v7505
  %v7507 = vpop.f32.mrb[0].mxu0
  %7508 = vmatprep.mubr.bf16.mxu0 0
  %7509 = vmatmul.mubr.bf16.gmra.mrb[0].mxu0 %v7370
  %v7510 = vpop.f32.mrb[0].mxu0
  %v7511 = vadd.f32 0.0, %v7510
  %v7512 = vpop.f32.mrb[0].mxu0
  %v7513 = vpop.f32.mrb[0].mxu0
  %v7514 = vadd.f32 0.0, %v7513
  %v7515 = vpop.f32.mrb[0].mxu0
  %7516 = vmatprep.mubr.bf16.mxu0 0
  %7517 = vmatmul.mubr.bf16.gmra.mrb[0].mxu0 %v7371
  %v7518 = vpop.f32.mrb[0].mxu0
  %v7519 = vadd.f32 0.0, %v7518
  %v7520 = vpop.f32.mrb[0].mxu0
  %v7521 = vpop.f32.mrb[0].mxu0
  %v7522 = vadd.f32 0.0, %v7521
  %v7523 = vpop.f32.mrb[0].mxu0
  %7524 = vdwg.mxu0
  %v7525 = vadd.f32 %v7059, %v7463
  %v7526 = vadd.f32 %v7060, %v7466
  %v7527 = vadd.f32 %v7061, %v7471
  %v7528 = vadd.f32 %v7062, %v7474
  %v7529 = vadd.f32 %v7063, %v7479
  %v7530 = vadd.f32 %v7064, %v7482
  %v7531 = vadd.f32 %v7065, %v7487
  %v7532 = vadd.f32 %v7066, %v7490
  %v7533 = vadd.f32 %v7067, %v7495
  %v7534 = vadd.f32 %v7068, %v7498
  %v7535 = vadd.f32 %v7069, %v7503
  %v7536 = vadd.f32 %v7070, %v7506
  %v7537 = vadd.f32 %v7071, %v7511
  %v7538 = vadd.f32 %v7072, %v7514
  %v7539 = vadd.f32 %v7073, %v7519
  %v7540 = vadd.f32 %v7074, %v7522
  %v7541 = vld [vmem:[%s4] sm:$0x1]
  %v7543 = vlaneseq
  %v7544 = vshrl.u32 %v7543, 7
  %v7545 = vsub.s32 0, %v7544
  %v7546 = vrot.slane %v7541, %v7545
  %v7548 = vadd.f32 %v7525, %v7546
  %v7549 = vadd.f32 %v7526, %v7546
  %v7550 = vadd.f32 %v7527, %v7546
  %v7551 = vadd.f32 %v7528, %v7546
  %v7552 = vadd.f32 %v7529, %v7546
  %v7553 = vadd.f32 %v7530, %v7546
  %v7554 = vadd.f32 %v7531, %v7546
  %v7555 = vadd.f32 %v7532, %v7546
  %v7556 = vadd.f32 %v7533, %v7546
  %v7557 = vadd.f32 %v7534, %v7546
  %v7558 = vadd.f32 %v7535, %v7546
  %v7559 = vadd.f32 %v7536, %v7546
  %v7560 = vadd.f32 %v7537, %v7546
  %v7561 = vadd.f32 %v7538, %v7546
  %v7562 = vadd.f32 %v7539, %v7546
  %v7563 = vadd.f32 %v7540, %v7546
  %vm7564 = vcmp.ge.f32.partialorder %v7548, 0.0
  %vm7565 = vcmp.ge.f32.partialorder %v7549, 0.0
  %vm7566 = vcmp.ge.f32.partialorder %v7550, 0.0
  %vm7567 = vcmp.ge.f32.partialorder %v7551, 0.0
  %vm7568 = vcmp.ge.f32.partialorder %v7552, 0.0
  %vm7569 = vcmp.ge.f32.partialorder %v7553, 0.0
  %vm7570 = vcmp.ge.f32.partialorder %v7554, 0.0
  %vm7571 = vcmp.ge.f32.partialorder %v7555, 0.0
  %vm7572 = vcmp.ge.f32.partialorder %v7556, 0.0
  %vm7573 = vcmp.ge.f32.partialorder %v7557, 0.0
  %vm7574 = vcmp.ge.f32.partialorder %v7558, 0.0
  %vm7575 = vcmp.ge.f32.partialorder %v7559, 0.0
  %vm7576 = vcmp.ge.f32.partialorder %v7560, 0.0
  %vm7577 = vcmp.ge.f32.partialorder %v7561, 0.0
  %vm7578 = vcmp.ge.f32.partialorder %v7562, 0.0
  %vm7579 = vcmp.ge.f32.partialorder %v7563, 0.0
  %v7580 = vmul.f32 %v7548, 0.2
  %v7581 = vmul.f32 %v7549, 0.2
  %v7582 = vmul.f32 %v7550, 0.2
  %v7583 = vmul.f32 %v7551, 0.2
  %v7584 = vmul.f32 %v7552, 0.2
  %v7585 = vmul.f32 %v7553, 0.2
  %v7586 = vmul.f32 %v7554, 0.2
  %v7587 = vmul.f32 %v7555, 0.2
  %v7588 = vmul.f32 %v7556, 0.2
  %v7589 = vmul.f32 %v7557, 0.2
  %v7590 = vmul.f32 %v7558, 0.2
  %v7591 = vmul.f32 %v7559, 0.2
  %v7592 = vmul.f32 %v7560, 0.2
  %v7593 = vmul.f32 %v7561, 0.2
  %v7594 = vmul.f32 %v7562, 0.2
  %v7595 = vmul.f32 %v7563, 0.2
  %v7596 = vsel %vm7564, %v7548, %v7580
  %v7597 = vsel %vm7565, %v7549, %v7581
  %v7598 = vsel %vm7566, %v7550, %v7582
  %v7599 = vsel %vm7567, %v7551, %v7583
  %v7600 = vsel %vm7568, %v7552, %v7584
  %v7601 = vsel %vm7569, %v7553, %v7585
  %v7602 = vsel %vm7570, %v7554, %v7586
  %v7603 = vsel %vm7571, %v7555, %v7587
  %v7604 = vsel %vm7572, %v7556, %v7588
  %v7605 = vsel %vm7573, %v7557, %v7589
  %v7606 = vsel %vm7574, %v7558, %v7590
  %v7607 = vsel %vm7575, %v7559, %v7591
  %v7608 = vsel %vm7576, %v7560, %v7592
  %v7609 = vsel %vm7577, %v7561, %v7593
  %v7610 = vsel %vm7578, %v7562, %v7594
  %v7611 = vsel %vm7579, %v7563, %v7595
  %v7612 = vpack.c.bf16 %v7597, %v7596
  %v7613 = vpack.c.bf16 %v7599, %v7598
  %v7614 = vpack.c.bf16 %v7601, %v7600
  %v7615 = vpack.c.bf16 %v7603, %v7602
  %v7616 = vpack.c.bf16 %v7605, %v7604
  %v7617 = vpack.c.bf16 %v7607, %v7606
  %v7618 = vpack.c.bf16 %v7609, %v7608
  %v7619 = vpack.c.bf16 %v7611, %v7610
  %v7628 = vunpack.c.l.b16 %v7612
  %v7629 = vunpack.c.h.b16 %v7612
  %v7630 = vunpack.c.l.b16 %v7613
  %v7631 = vunpack.c.h.b16 %v7613
  %v7632 = vunpack.c.l.b16 %v7614
  %v7633 = vunpack.c.h.b16 %v7614
  %v7634 = vunpack.c.l.b16 %v7615
  %v7635 = vunpack.c.h.b16 %v7615
  %v7636 = vunpack.c.l.b16 %v7616
  %v7637 = vunpack.c.h.b16 %v7616
  %v7638 = vunpack.c.l.b16 %v7617
  %v7639 = vunpack.c.h.b16 %v7617
  %v7640 = vunpack.c.l.b16 %v7618
  %v7641 = vunpack.c.h.b16 %v7618
  %v7642 = vunpack.c.l.b16 %v7619
  %v7643 = vunpack.c.h.b16 %v7619
  %v7644 = vpack.c.b16 %v7628, %v7628
  %v7645 = vpack.c.b16 %v7629, %v7629
  %v7646 = vpack.c.b16 %v7630, %v7630
  %v7647 = vpack.c.b16 %v7631, %v7631
  %v7648 = vpack.c.b16 %v7632, %v7632
  %v7649 = vpack.c.b16 %v7633, %v7633
  %v7650 = vpack.c.b16 %v7634, %v7634
  %v7651 = vpack.c.b16 %v7635, %v7635
  %v7652 = vpack.c.b16 %v7636, %v7636
  %v7653 = vpack.c.b16 %v7637, %v7637
  %v7654 = vpack.c.b16 %v7638, %v7638
  %v7655 = vpack.c.b16 %v7639, %v7639
  %v7656 = vpack.c.b16 %v7640, %v7640
  %v7657 = vpack.c.b16 %v7641, %v7641
  %v7658 = vpack.c.b16 %v7642, %v7642
  %v7659 = vpack.c.b16 %v7643, %v7643
  %7676 = vst [vmem:[%s5] sm:$0xf] %v7644
  %7677 = vst [vmem:[%s5 + $0x4] sm:$0xf] %v7645
  %7678 = vst [vmem:[%s5 + $0x8] sm:$0xf] %v7646
  %7679 = vst [vmem:[%s5 + $0xc] sm:$0xf] %v7647
  %7680 = vst [vmem:[%s5 + $0x10] sm:$0xf] %v7648
  %7681 = vst [vmem:[%s5 + $0x14] sm:$0xf] %v7649
  %7682 = vst [vmem:[%s5 + $0x18] sm:$0xf] %v7650
  %7683 = vst [vmem:[%s5 + $0x1c] sm:$0xf] %v7651
  %7684 = vst [vmem:[%s5 + $0x20] sm:$0xf] %v7652
  %7685 = vst [vmem:[%s5 + $0x24] sm:$0xf] %v7653
  %7686 = vst [vmem:[%s5 + $0x28] sm:$0xf] %v7654
  %7687 = vst [vmem:[%s5 + $0x2c] sm:$0xf] %v7655
  %7688 = vst [vmem:[%s5 + $0x30] sm:$0xf] %v7656
  %7689 = vst [vmem:[%s5 + $0x34] sm:$0xf] %v7657
  %7690 = vst [vmem:[%s5 + $0x38] sm:$0xf] %v7658
  %7691 = vst [vmem:[%s5 + $0x3c] sm:$0xf] %v7659
  // Predicated region
  $region22: #{discriminator_forward.2} parent=0 // pred_check
    _
  $region23: #{discriminator_forward.2} parent=0 // pred_check_branch
    %7693 = sbr.rel (0) target = $region25
  $region24: #{discriminator_forward.2} parent=0 // pred_region
    _
  $region25: #{discriminator_forward.2} parent=0 // pred_fallthru
    _
  // Predicated region
  $region26: #{discriminator_forward.2} parent=0 // pred_check
    _
  $region27: #{discriminator_forward.2} parent=0 // pred_check_branch
    %7695 = sbr.rel (0) target = $region29
  $region28: #{discriminator_forward.2} parent=0 // pred_region
    _
  $region29: #{discriminator_forward.2} parent=0 // pred_fallthru
    _

</llo_original>
